<compile_context>
chip_gen: v5e
topology: v5e:2x2
jax: 0.10.0
libtpu: 0.0.40
codegen_flags: <defaults>
</compile_context>

<pallas_src>
import jax
import jax.numpy as jnp
from jax.experimental import pallas as pl
from jax.experimental.pallas import tpu as pltpu


def conv_relu_pool_kernel(xq_ref, w_ref, o_ref):
    # xq_ref: (1, 1, 2, 2, TH+1, W2+1)  parity-split zero-padded input rows for
    #         this (batch, row-tile): xq[pr, pc, i, j] = xpad[2*i + pr, 2*j + pc]
    # w_ref : (C_out, 9)                conv weights, tap index = kh*3 + kw
    # o_ref : (1, C_out, TH, W2)        ReLU + 2x2-max-pooled conv output
    TH = o_ref.shape[2]
    W2 = o_ref.shape[3]

    w = w_ref[...]                                             # (C, 9) f32
    planes = [[xq_ref[0, 0, pr, pc] for pc in range(2)]        # each (TH+1, W2+1)
              for pr in range(2)]

    def conv_at(di, dj):
        # conv output (pre-pool) restricted to pixels (2i+di, 2j+dj):
        #   sum_{kh,kw} w[c, kh, kw] * xpad[2i+di+kh, 2j+dj+kw]
        acc = None
        for kh in range(3):
            for kw in range(3):
                t = kh * 3 + kw
                r, c = di + kh, dj + kw                        # in {0..3}
                win = planes[r & 1][c & 1][(r >> 1):(r >> 1) + TH,
                                           (c >> 1):(c >> 1) + W2]   # (TH, W2)
                tap = w[:, t:t + 1][:, :, None] * win[None, :, :]    # (C, TH, W2)
                acc = tap if acc is None else acc + tap
        return jnp.maximum(acc, 0.0)                           # ReLU (monotone)

    # 2x2 max pool == elementwise max over the 4 pooling offsets
    pooled = jnp.maximum(jnp.maximum(conv_at(0, 0), conv_at(0, 1)),
                         jnp.maximum(conv_at(1, 0), conv_at(1, 1)))
    o_ref[0] = pooled.astype(o_ref.dtype)


def linear_kernel(x_ref, w_ref, b_ref, o_ref, acc_ref):
    # x_ref: (B, tk) bf16, w_ref: (tk, tn) bf16, b_ref: (1, tn) f32
    # o_ref: (B, tn) f32, acc_ref: (B, tn) f32 scratch (persists across K steps)
    k = pl.program_id(1)

    @pl.when(k == 0)
    def _():
        acc_ref[...] = jnp.zeros_like(acc_ref)

    acc_ref[...] += jnp.dot(x_ref[...], w_ref[...],
                            preferred_element_type=jnp.float32)

    @pl.when(k == pl.num_programs(1) - 1)
    def _():
        o_ref[...] = (acc_ref[...] + b_ref[...]).astype(o_ref.dtype)


def vgg_forward(x, conv_w, fc_w, fc_b, *, row_tile=None, fc_k_tile=512):
    """x: (B, 1, H, W) float32 (PyTorch NCHW). Returns (B, num_classes) float32."""
    B, c_in, H, W = x.shape
    assert c_in == 1 and H % 2 == 0 and W % 2 == 0
    c_out = conv_w.shape[0]
    H2, W2 = H // 2, W // 2

    # ---- glue: zero-pad + split by parity: xq[b,pr,pc,i,j] = xpad[b, 2i+pr, 2j+pc]
    xp = jnp.pad(x[:, 0], ((0, 0), (1, 1), (1, 1)))                   # (B, H+2, W+2)
    xq = xp.reshape(B, H2 + 1, 2, W2 + 1, 2).transpose(0, 2, 4, 1, 3)  # (B,2,2,H2+1,W2+1)

    # row tiling of the pooled output (each tile needs one extra parity row)
    if row_tile is None or row_tile >= H2:
        TH, R = H2, 1
    else:
        TH = row_tile
        assert H2 % TH == 0 and TH % 8 == 0
        R = H2 // TH
    if R == 1:
        xq_t = xq[:, None]                                            # (B,1,2,2,H2+1,W2+1)
    else:
        xq_t = jnp.stack(
            [xq[:, :, :, t * TH:t * TH + TH + 1, :] for t in range(R)], axis=1)

    w9 = conv_w.reshape(c_out, 9)                                     # tap = kh*3 + kw

    pooled = pl.pallas_call(
        conv_relu_pool_kernel,
        out_shape=jax.ShapeDtypeStruct((B, c_out, H2, W2), jnp.bfloat16),
        grid_spec=pltpu.PrefetchScalarGridSpec(
            num_scalar_prefetch=0,
            grid=(B, R),
            in_specs=[
                pl.BlockSpec((1, 1, 2, 2, TH + 1, W2 + 1),
                             lambda b, r: (b, r, 0, 0, 0, 0)),
                pl.BlockSpec((c_out, 9), lambda b, r: (0, 0)),
            ],
            out_specs=pl.BlockSpec((1, c_out, TH, W2), lambda b, r: (b, 0, r, 0)),
        ),
        compiler_params=pltpu.CompilerParams(
            dimension_semantics=("parallel", "parallel"),
            vmem_limit_bytes=32 * 1024 * 1024),
    )(xq_t, w9)

    # ---- FC: flatten is a contiguous NCHW reshape (idx = c*(H2*W2) + h*W2 + w)
    D = c_out * H2 * W2
    flat = pooled.reshape(B, D)                                       # bf16 handoff

    num_classes = fc_w.shape[0]
    n_pad = ((num_classes + 127) // 128) * 128                        # lane-dense classes
    wt = jnp.zeros((D, n_pad), jnp.bfloat16)
    wt = wt.at[:, :num_classes].set(fc_w.T.astype(jnp.bfloat16))
    bias = jnp.zeros((1, n_pad), jnp.float32)
    bias = bias.at[:, :num_classes].set(fc_b)

    tk = fc_k_tile if (D % fc_k_tile == 0 and fc_k_tile % 128 == 0) else D
    tn = 128
    grid = (n_pad // tn, D // tk)                                     # (class tiles, K tiles)

    out_p = pl.pallas_call(
        linear_kernel,
        out_shape=jax.ShapeDtypeStruct((B, n_pad), jnp.float32),
        grid_spec=pltpu.PrefetchScalarGridSpec(
            num_scalar_prefetch=0,
            grid=grid,
            in_specs=[
                pl.BlockSpec((B, tk), lambda j, k: (0, k)),
                pl.BlockSpec((tk, tn), lambda j, k: (k, j)),
                pl.BlockSpec((1, tn), lambda j, k: (0, j)),
            ],
            out_specs=pl.BlockSpec((B, tn), lambda j, k: (0, j)),
            scratch_shapes=[pltpu.VMEM((B, tn), jnp.float32)],
        ),
        compiler_params=pltpu.CompilerParams(
            dimension_semantics=("parallel", "arbitrary"),
            vmem_limit_bytes=32 * 1024 * 1024),
    )(flat, wt, bias)

    return out_p[:, :num_classes]


def vgg_reference(x, conv_w, fc_w, fc_b):
    """Pure-JAX f32 reference of the PyTorch module's forward."""
    conv = jax.lax.conv_general_dilated(
        x, conv_w, window_strides=(1, 1), padding=((1, 1), (1, 1)),
        dimension_numbers=("NCHW", "OIHW", "NCHW"))
    act = jnp.maximum(conv, 0.0)
    B, C, H, W = act.shape
    pooled = act.reshape(B, C, H // 2, 2, W // 2, 2).max(axis=(3, 5))
    flat = pooled.reshape(B, -1)
    return flat @ fc_w.T + fc_b[None, :]


if __name__ == "__main__":
    # Small shapes consistent with the module's forward (conv expects 1 input
    # channel; fc input dim scales with spatial size, here 16x16 -> 8*8*32).
    B, H, W = 2, 16, 16
    C_OUT = 32
    NUM_CLASSES = 10            # scaled down from 1000 for the small test
    D = C_OUT * (H // 2) * (W // 2)

    key = jax.random.PRNGKey(0)
    k_conv, k_fc, k_x = jax.random.split(key, 3)

    # Deterministic init mirroring the PyTorch module:
    #  - Conv2d: kaiming_normal_(mode='fan_out', relu) -> N(0, sqrt(2/fan_out)), no bias
    #  - Linear: N(0, 0.01) weight, zero bias
    fan_out = C_OUT * 3 * 3
    conv_w = jax.random.normal(k_conv, (C_OUT, 1, 3, 3), jnp.float32) * jnp.sqrt(2.0 / fan_out)
    fc_w = jax.random.normal(k_fc, (NUM_CLASSES, D), jnp.float32) * 0.01
    fc_b = jnp.zeros((NUM_CLASSES,), jnp.float32)

    x = jax.random.normal(k_x, (B, 1, H, W), jnp.float32)

    y = jax.jit(vgg_forward)(x, conv_w, fc_w, fc_b)
    jax.block_until_ready(y)
    assert y.shape == (B, NUM_CLASSES) and y.dtype == jnp.float32

    # Loose tolerance: FC weights/activations are streamed in bf16 (f32 accum).
    y_ref = vgg_reference(x, conv_w, fc_w, fc_b)
    max_err = float(jnp.max(jnp.abs(y - y_ref)))
    assert jnp.allclose(y, y_ref, rtol=5e-2, atol=1e-2), f"max abs err {max_err}"

    print("KERNEL_OK")
</pallas_src>

<mosaic_0001>
module attributes {stable_mosaic.version = 11 : i64} {
  func.func @linear_kernel(%arg0: i32, %arg1: i32, %arg2: memref<2x512xbf16, #tpu.memory_space<vmem>>, %arg3: memref<512x128xbf16, #tpu.memory_space<vmem>>, %arg4: memref<1x128xf32, #tpu.memory_space<vmem>>, %arg5: memref<2x128xf32, #tpu.memory_space<vmem>>, %arg6: memref<2x128xf32, #tpu.memory_space<vmem>>) attributes {dimension_semantics = [#tpu.dimension_semantics<parallel>, #tpu.dimension_semantics<arbitrary>], iteration_bounds = array<i64: 1, 4>, scalar_prefetch = 0 : i64, scratch_operands = 1 : i64, tpu.core_type = #tpu.core_type<tc>, window_params = [{transform_indices = @transform_0, window_bounds = array<i64: 2, 512>}, {transform_indices = @transform_1, window_bounds = array<i64: 512, 128>}, {transform_indices = @transform_2, window_bounds = array<i64: 1, 128>}, {transform_indices = @transform_3, window_bounds = array<i64: 2, 128>}]} {
    %c0_i32 = arith.constant 0 : i32
    %0 = arith.cmpi eq, %arg1, %c0_i32 : i32
    %1 = arith.extui %0 : i1 to i32
    %c0_i32_0 = arith.constant 0 : i32
    %2 = arith.cmpi ne, %1, %c0_i32_0 : i32
    scf.if %2 {
      %cst_9 = arith.constant 0.000000e+00 : f32
      %12 = vector.broadcast %cst_9 : f32 to vector<2x128xf32>
      %c0_10 = arith.constant 0 : index
      %c0_11 = arith.constant 0 : index
      %13 = vector.load %arg6[%c0_10, %c0_11] : memref<2x128xf32, #tpu.memory_space<vmem>>, vector<2x128xf32>
      tpu.vector_store %arg6[%c0_10, %c0_11], %12 {strides = array<i32>} : memref<2x128xf32, #tpu.memory_space<vmem>>, vector<2x128xf32>,
    } else {
    }
    %c0 = arith.constant 0 : index
    %c0_1 = arith.constant 0 : index
    %3 = vector.load %arg6[%c0, %c0_1] : memref<2x128xf32, #tpu.memory_space<vmem>>, vector<2x128xf32>
    %c0_2 = arith.constant 0 : index
    %c0_3 = arith.constant 0 : index
    %4 = vector.load %arg2[%c0_2, %c0_3] : memref<2x512xbf16, #tpu.memory_space<vmem>>, vector<2x512xbf16>
    %c0_4 = arith.constant 0 : index
    %c0_5 = arith.constant 0 : index
    %5 = vector.load %arg3[%c0_4, %c0_5] : memref<512x128xbf16, #tpu.memory_space<vmem>>, vector<512x128xbf16>
    %cst = arith.constant dense<0.000000e+00> : vector<2x128xf32>
    %6 = tpu.matmul %4, %5, %cst {dimension_numbers = #tpu.dot_dimension_numbers<[1], [0], [0], [1], [0, 0, 1, 1], [], []>} : vector<2x512xbf16>, vector<512x128xbf16>, vector<2x128xf32> -> vector<2x128xf32>
    %7 = arith.addf %3, %6 : vector<2x128xf32>
    %c0_6 = arith.constant 0 : index
    %c0_7 = arith.constant 0 : index
    %8 = vector.load %arg6[%c0_6, %c0_7] : memref<2x128xf32, #tpu.memory_space<vmem>>, vector<2x128xf32>
    tpu.vector_store %arg6[%c0_6, %c0_7], %7 {strides = array<i32>} : memref<2x128xf32, #tpu.memory_space<vmem>>, vector<2x128xf32>,
    %c3_i32 = arith.constant 3 : i32
    %9 = arith.cmpi eq, %arg1, %c3_i32 : i32
    %10 = arith.extui %9 : i1 to i32
    %c0_i32_8 = arith.constant 0 : i32
    %11 = arith.cmpi ne, %10, %c0_i32_8 : i32
    scf.if %11 {
      %c0_9 = arith.constant 0 : index
      %c0_10 = arith.constant 0 : index
      %12 = vector.load %arg6[%c0_9, %c0_10] : memref<2x128xf32, #tpu.memory_space<vmem>>, vector<2x128xf32>
      %c0_11 = arith.constant 0 : index
      %c0_12 = arith.constant 0 : index
      %13 = vector.load %arg4[%c0_11, %c0_12] : memref<1x128xf32, #tpu.memory_space<vmem>>, vector<1x128xf32>
      %14 = vector.broadcast %13 : vector<1x128xf32> to vector<2x128xf32>
      %15 = arith.addf %12, %14 : vector<2x128xf32>
      %c0_13 = arith.constant 0 : index
      %c0_14 = arith.constant 0 : index
      %16 = vector.load %arg5[%c0_13, %c0_14] : memref<2x128xf32, #tpu.memory_space<vmem>>, vector<2x128xf32>
      tpu.vector_store %arg5[%c0_13, %c0_14], %15 {strides = array<i32>} : memref<2x128xf32, #tpu.memory_space<vmem>>, vector<2x128xf32>,
    } else {
    }
    return
  }
  func.func @transform_0(%arg0: i32, %arg1: i32) -> (i32, i32) {
    %c0_i32 = arith.constant 0 : i32
    %c0_i32_0 = arith.constant 0 : i32
    return %c0_i32, %arg1 : i32, i32
  }
  func.func @transform_1(%arg0: i32, %arg1: i32) -> (i32, i32) {
    %c0_i32 = arith.constant 0 : i32
    return %arg1, %arg0 : i32, i32
  }
  func.func @transform_2(%arg0: i32, %arg1: i32) -> (i32, i32) {
    %c0_i32 = arith.constant 0 : i32
    %c0_i32_0 = arith.constant 0 : i32
    return %c0_i32, %arg0 : i32, i32
  }
  func.func @transform_3(%arg0: i32, %arg1: i32) -> (i32, i32) {
    %c0_i32 = arith.constant 0 : i32
    %c0_i32_0 = arith.constant 0 : i32
    return %c0_i32, %arg0 : i32, i32
  }
}

module attributes {stable_mosaic.version = 11 : i64} {
  func.func @conv_relu_pool_kernel(%arg0: i32, %arg1: i32, %arg2: memref<1x1x2x2x9x9xf32, #tpu.memory_space<vmem>>, %arg3: memref<32x9xf32, #tpu.memory_space<vmem>>, %arg4: memref<1x32x8x8xbf16, #tpu.memory_space<vmem>>) attributes {dimension_semantics = [#tpu.dimension_semantics<parallel>, #tpu.dimension_semantics<parallel>], iteration_bounds = array<i64: 2, 1>, scalar_prefetch = 0 : i64, scratch_operands = 0 : i64, tpu.core_type = #tpu.core_type<tc>, window_params = [{transform_indices = @transform_0, window_bounds = array<i64: 1, 1, 2, 2, 9, 9>}, {pipeline_mode = #tpu.pipeline_mode<synchronous>, transform_indices = @transform_1, window_bounds = array<i64: 32, 9>}, {transform_indices = @transform_2, window_bounds = array<i64: 1, 32, 8, 8>}]} {
    %c0 = arith.constant 0 : index
    %c0_0 = arith.constant 0 : index
    %0 = vector.load %arg3[%c0, %c0_0] : memref<32x9xf32, #tpu.memory_space<vmem>>, vector<32x9xf32>
    %c0_1 = arith.constant 0 : index
    %c0_2 = arith.constant 0 : index
    %c0_3 = arith.constant 0 : index
    %c0_4 = arith.constant 0 : index
    %c0_5 = arith.constant 0 : index
    %c0_6 = arith.constant 0 : index
    %1 = vector.load %arg2[%c0_1, %c0_2, %c0_3, %c0_4, %c0_5, %c0_6] : memref<1x1x2x2x9x9xf32, #tpu.memory_space<vmem>>, vector<1x1x1x1x9x9xf32>
    %2 = vector.shape_cast %1 : vector<1x1x1x1x9x9xf32> to vector<9x9xf32>
    %c0_7 = arith.constant 0 : index
    %c0_8 = arith.constant 0 : index
    %c0_9 = arith.constant 0 : index
    %c1 = arith.constant 1 : index
    %c0_10 = arith.constant 0 : index
    %c0_11 = arith.constant 0 : index
    %3 = vector.load %arg2[%c0_7, %c0_8, %c0_9, %c1, %c0_10, %c0_11] : memref<1x1x2x2x9x9xf32, #tpu.memory_space<vmem>>, vector<1x1x1x1x9x9xf32>
    %4 = vector.shape_cast %3 : vector<1x1x1x1x9x9xf32> to vector<9x9xf32>
    %c0_12 = arith.constant 0 : index
    %c0_13 = arith.constant 0 : index
    %c1_14 = arith.constant 1 : index
    %c0_15 = arith.constant 0 : index
    %c0_16 = arith.constant 0 : index
    %c0_17 = arith.constant 0 : index
    %5 = vector.load %arg2[%c0_12, %c0_13, %c1_14, %c0_15, %c0_16, %c0_17] : memref<1x1x2x2x9x9xf32, #tpu.memory_space<vmem>>, vector<1x1x1x1x9x9xf32>
    %6 = vector.shape_cast %5 : vector<1x1x1x1x9x9xf32> to vector<9x9xf32>
    %c0_18 = arith.constant 0 : index
    %c0_19 = arith.constant 0 : index
    %c1_20 = arith.constant 1 : index
    %c1_21 = arith.constant 1 : index
    %c0_22 = arith.constant 0 : index
    %c0_23 = arith.constant 0 : index
    %7 = vector.load %arg2[%c0_18, %c0_19, %c1_20, %c1_21, %c0_22, %c0_23] : memref<1x1x2x2x9x9xf32, #tpu.memory_space<vmem>>, vector<1x1x1x1x9x9xf32>
    %8 = vector.shape_cast %7 : vector<1x1x1x1x9x9xf32> to vector<9x9xf32>
    %9 = vector.extract_strided_slice %2 {offsets = [0, 0], sizes = [8, 8], strides = [1, 1]} : vector<9x9xf32> to vector<8x8xf32>
    %10 = vector.extract_strided_slice %0 {offsets = [0, 0], sizes = [32, 1], strides = [1, 1]} : vector<32x9xf32> to vector<32x1xf32>
    %11 = vector.shape_cast %10 : vector<32x1xf32> to vector<32x1x1xf32>
    %12 = vector.shape_cast %9 : vector<8x8xf32> to vector<1x8x8xf32>
    %13 = vector.broadcast %11 : vector<32x1x1xf32> to vector<32x8x8xf32>
    %14 = vector.broadcast %12 : vector<1x8x8xf32> to vector<32x8x8xf32>
    %15 = arith.mulf %13, %14 : vector<32x8x8xf32>
    %16 = vector.extract_strided_slice %4 {offsets = [0, 0], sizes = [8, 8], strides = [1, 1]} : vector<9x9xf32> to vector<8x8xf32>
    %17 = vector.extract_strided_slice %0 {offsets = [0, 1], sizes = [32, 1], strides = [1, 1]} : vector<32x9xf32> to vector<32x1xf32>
    %18 = vector.shape_cast %17 : vector<32x1xf32> to vector<32x1x1xf32>
    %19 = vector.shape_cast %16 : vector<8x8xf32> to vector<1x8x8xf32>
    %20 = vector.broadcast %18 : vector<32x1x1xf32> to vector<32x8x8xf32>
    %21 = vector.broadcast %19 : vector<1x8x8xf32> to vector<32x8x8xf32>
    %22 = arith.mulf %20, %21 : vector<32x8x8xf32>
    %23 = arith.addf %15, %22 : vector<32x8x8xf32>
    %24 = vector.extract_strided_slice %2 {offsets = [0, 1], sizes = [8, 8], strides = [1, 1]} : vector<9x9xf32> to vector<8x8xf32>
    %25 = vector.extract_strided_slice %0 {offsets = [0, 2], sizes = [32, 1], strides = [1, 1]} : vector<32x9xf32> to vector<32x1xf32>
    %26 = vector.shape_cast %25 : vector<32x1xf32> to vector<32x1x1xf32>
    %27 = vector.shape_cast %24 : vector<8x8xf32> to vector<1x8x8xf32>
    %28 = vector.broadcast %26 : vector<32x1x1xf32> to vector<32x8x8xf32>
    %29 = vector.broadcast %27 : vector<1x8x8xf32> to vector<32x8x8xf32>
    %30 = arith.mulf %28, %29 : vector<32x8x8xf32>
    %31 = arith.addf %23, %30 : vector<32x8x8xf32>
    %32 = vector.extract_strided_slice %6 {offsets = [0, 0], sizes = [8, 8], strides = [1, 1]} : vector<9x9xf32> to vector<8x8xf32>
    %33 = vector.extract_strided_slice %0 {offsets = [0, 3], sizes = [32, 1], strides = [1, 1]} : vector<32x9xf32> to vector<32x1xf32>
    %34 = vector.shape_cast %33 : vector<32x1xf32> to vector<32x1x1xf32>
    %35 = vector.shape_cast %32 : vector<8x8xf32> to vector<1x8x8xf32>
    %36 = vector.broadcast %34 : vector<32x1x1xf32> to vector<32x8x8xf32>
    %37 = vector.broadcast %35 : vector<1x8x8xf32> to vector<32x8x8xf32>
    %38 = arith.mulf %36, %37 : vector<32x8x8xf32>
    %39 = arith.addf %31, %38 : vector<32x8x8xf32>
    %40 = vector.extract_strided_slice %8 {offsets = [0, 0], sizes = [8, 8], strides = [1, 1]} : vector<9x9xf32> to vector<8x8xf32>
    %41 = vector.extract_strided_slice %0 {offsets = [0, 4], sizes = [32, 1], strides = [1, 1]} : vector<32x9xf32> to vector<32x1xf32>
    %42 = vector.shape_cast %41 : vector<32x1xf32> to vector<32x1x1xf32>
    %43 = vector.shape_cast %40 : vector<8x8xf32> to vector<1x8x8xf32>
    %44 = vector.broadcast %42 : vector<32x1x1xf32> to vector<32x8x8xf32>
    %45 = vector.broadcast %43 : vector<1x8x8xf32> to vector<32x8x8xf32>
    %46 = arith.mulf %44, %45 : vector<32x8x8xf32>
    %47 = arith.addf %39, %46 : vector<32x8x8xf32>
    %48 = vector.extract_strided_slice %6 {offsets = [0, 1], sizes = [8, 8], strides = [1, 1]} : vector<9x9xf32> to vector<8x8xf32>
    %49 = vector.extract_strided_slice %0 {offsets = [0, 5], sizes = [32, 1], strides = [1, 1]} : vector<32x9xf32> to vector<32x1xf32>
    %50 = vector.shape_cast %49 : vector<32x1xf32> to vector<32x1x1xf32>
    %51 = vector.shape_cast %48 : vector<8x8xf32> to vector<1x8x8xf32>
    %52 = vector.broadcast %50 : vector<32x1x1xf32> to vector<32x8x8xf32>
    %53 = vector.broadcast %51 : vector<1x8x8xf32> to vector<32x8x8xf32>
    %54 = arith.mulf %52, %53 : vector<32x8x8xf32>
    %55 = arith.addf %47, %54 : vector<32x8x8xf32>
    %56 = vector.extract_strided_slice %2 {offsets = [1, 0], sizes = [8, 8], strides = [1, 1]} : vector<9x9xf32> to vector<8x8xf32>
    %57 = vector.extract_strided_slice %0 {offsets = [0, 6], sizes = [32, 1], strides = [1, 1]} : vector<32x9xf32> to vector<32x1xf32>
    %58 = vector.shape_cast %57 : vector<32x1xf32> to vector<32x1x1xf32>
    %59 = vector.shape_cast %56 : vector<8x8xf32> to vector<1x8x8xf32>
    %60 = vector.broadcast %58 : vector<32x1x1xf32> to vector<32x8x8xf32>
    %61 = vector.broadcast %59 : vector<1x8x8xf32> to vector<32x8x8xf32>
    %62 = arith.mulf %60, %61 : vector<32x8x8xf32>
    %63 = arith.addf %55, %62 : vector<32x8x8xf32>
    %64 = vector.extract_strided_slice %4 {offsets = [1, 0], sizes = [8, 8], strides = [1, 1]} : vector<9x9xf32> to vector<8x8xf32>
    %65 = vector.extract_strided_slice %0 {offsets = [0, 7], sizes = [32, 1], strides = [1, 1]} : vector<32x9xf32> to vector<32x1xf32>
    %66 = vector.shape_cast %65 : vector<32x1xf32> to vector<32x1x1xf32>
    %67 = vector.shape_cast %64 : vector<8x8xf32> to vector<1x8x8xf32>
    %68 = vector.broadcast %66 : vector<32x1x1xf32> to vector<32x8x8xf32>
    %69 = vector.broadcast %67 : vector<1x8x8xf32> to vector<32x8x8xf32>
    %70 = arith.mulf %68, %69 : vector<32x8x8xf32>
    %71 = arith.addf %63, %70 : vector<32x8x8xf32>
    %72 = vector.extract_strided_slice %2 {offsets = [1, 1], sizes = [8, 8], strides = [1, 1]} : vector<9x9xf32> to vector<8x8xf32>
    %73 = vector.extract_strided_slice %0 {offsets = [0, 8], sizes = [32, 1], strides = [1, 1]} : vector<32x9xf32> to vector<32x1xf32>
    %74 = vector.shape_cast %73 : vector<32x1xf32> to vector<32x1x1xf32>
    %75 = vector.shape_cast %72 : vector<8x8xf32> to vector<1x8x8xf32>
    %76 = vector.broadcast %74 : vector<32x1x1xf32> to vector<32x8x8xf32>
    %77 = vector.broadcast %75 : vector<1x8x8xf32> to vector<32x8x8xf32>
    %78 = arith.mulf %76, %77 : vector<32x8x8xf32>
    %79 = arith.addf %71, %78 : vector<32x8x8xf32>
    %cst = arith.constant 0.000000e+00 : f32
    %80 = vector.broadcast %cst : f32 to vector<32x8x8xf32>
    %81 = arith.maximumf %79, %80 : vector<32x8x8xf32>
    %82 = vector.extract_strided_slice %4 {offsets = [0, 0], sizes = [8, 8], strides = [1, 1]} : vector<9x9xf32> to vector<8x8xf32>
    %83 = vector.extract_strided_slice %0 {offsets = [0, 0], sizes = [32, 1], strides = [1, 1]} : vector<32x9xf32> to vector<32x1xf32>
    %84 = vector.shape_cast %83 : vector<32x1xf32> to vector<32x1x1xf32>
    %85 = vector.shape_cast %82 : vector<8x8xf32> to vector<1x8x8xf32>
    %86 = vector.broadcast %84 : vector<32x1x1xf32> to vector<32x8x8xf32>
    %87 = vector.broadcast %85 : vector<1x8x8xf32> to vector<32x8x8xf32>
    %88 = arith.mulf %86, %87 : vector<32x8x8xf32>
    %89 = vector.extract_strided_slice %2 {offsets = [0, 1], sizes = [8, 8], strides = [1, 1]} : vector<9x9xf32> to vector<8x8xf32>
    %90 = vector.extract_strided_slice %0 {offsets = [0, 1], sizes = [32, 1], strides = [1, 1]} : vector<32x9xf32> to vector<32x1xf32>
    %91 = vector.shape_cast %90 : vector<32x1xf32> to vector<32x1x1xf32>
    %92 = vector.shape_cast %89 : vector<8x8xf32> to vector<1x8x8xf32>
    %93 = vector.broadcast %91 : vector<32x1x1xf32> to vector<32x8x8xf32>
    %94 = vector.broadcast %92 : vector<1x8x8xf32> to vector<32x8x8xf32>
    %95 = arith.mulf %93, %94 : vector<32x8x8xf32>
    %96 = arith.addf %88, %95 : vector<32x8x8xf32>
    %97 = vector.extract_strided_slice %4 {offsets = [0, 1], sizes = [8, 8], strides = [1, 1]} : vector<9x9xf32> to vector<8x8xf32>
    %98 = vector.extract_strided_slice %0 {offsets = [0, 2], sizes = [32, 1], strides = [1, 1]} : vector<32x9xf32> to vector<32x1xf32>
    %99 = vector.shape_cast %98 : vector<32x1xf32> to vector<32x1x1xf32>
    %100 = vector.shape_cast %97 : vector<8x8xf32> to vector<1x8x8xf32>
    %101 = vector.broadcast %99 : vector<32x1x1xf32> to vector<32x8x8xf32>
    %102 = vector.broadcast %100 : vector<1x8x8xf32> to vector<32x8x8xf32>
    %103 = arith.mulf %101, %102 : vector<32x8x8xf32>
    %104 = arith.addf %96, %103 : vector<32x8x8xf32>
    %105 = vector.extract_strided_slice %8 {offsets = [0, 0], sizes = [8, 8], strides = [1, 1]} : vector<9x9xf32> to vector<8x8xf32>
    %106 = vector.extract_strided_slice %0 {offsets = [0, 3], sizes = [32, 1], strides = [1, 1]} : vector<32x9xf32> to vector<32x1xf32>
    %107 = vector.shape_cast %106 : vector<32x1xf32> to vector<32x1x1xf32>
    %108 = vector.shape_cast %105 : vector<8x8xf32> to vector<1x8x8xf32>
    %109 = vector.broadcast %107 : vector<32x1x1xf32> to vector<32x8x8xf32>
    %110 = vector.broadcast %108 : vector<1x8x8xf32> to vector<32x8x8xf32>
    %111 = arith.mulf %109, %110 : vector<32x8x8xf32>
    %112 = arith.addf %104, %111 : vector<32x8x8xf32>
    %113 = vector.extract_strided_slice %6 {offsets = [0, 1], sizes = [8, 8], strides = [1, 1]} : vector<9x9xf32> to vector<8x8xf32>
    %114 = vector.extract_strided_slice %0 {offsets = [0, 4], sizes = [32, 1], strides = [1, 1]} : vector<32x9xf32> to vector<32x1xf32>
    %115 = vector.shape_cast %114 : vector<32x1xf32> to vector<32x1x1xf32>
    %116 = vector.shape_cast %113 : vector<8x8xf32> to vector<1x8x8xf32>
    %117 = vector.broadcast %115 : vector<32x1x1xf32> to vector<32x8x8xf32>
    %118 = vector.broadcast %116 : vector<1x8x8xf32> to vector<32x8x8xf32>
    %119 = arith.mulf %117, %118 : vector<32x8x8xf32>
    %120 = arith.addf %112, %119 : vector<32x8x8xf32>
    %121 = vector.extract_strided_slice %8 {offsets = [0, 1], sizes = [8, 8], strides = [1, 1]} : vector<9x9xf32> to vector<8x8xf32>
    %122 = vector.extract_strided_slice %0 {offsets = [0, 5], sizes = [32, 1], strides = [1, 1]} : vector<32x9xf32> to vector<32x1xf32>
    %123 = vector.shape_cast %122 : vector<32x1xf32> to vector<32x1x1xf32>
    %124 = vector.shape_cast %121 : vector<8x8xf32> to vector<1x8x8xf32>
    %125 = vector.broadcast %123 : vector<32x1x1xf32> to vector<32x8x8xf32>
    %126 = vector.broadcast %124 : vector<1x8x8xf32> to vector<32x8x8xf32>
    %127 = arith.mulf %125, %126 : vector<32x8x8xf32>
    %128 = arith.addf %120, %127 : vector<32x8x8xf32>
    %129 = vector.extract_strided_slice %4 {offsets = [1, 0], sizes = [8, 8], strides = [1, 1]} : vector<9x9xf32> to vector<8x8xf32>
    %130 = vector.extract_strided_slice %0 {offsets = [0, 6], sizes = [32, 1], strides = [1, 1]} : vector<32x9xf32> to vector<32x1xf32>
    %131 = vector.shape_cast %130 : vector<32x1xf32> to vector<32x1x1xf32>
    %132 = vector.shape_cast %129 : vector<8x8xf32> to vector<1x8x8xf32>
    %133 = vector.broadcast %131 : vector<32x1x1xf32> to vector<32x8x8xf32>
    %134 = vector.broadcast %132 : vector<1x8x8xf32> to vector<32x8x8xf32>
    %135 = arith.mulf %133, %134 : vector<32x8x8xf32>
    %136 = arith.addf %128, %135 : vector<32x8x8xf32>
    %137 = vector.extract_strided_slice %2 {offsets = [1, 1], sizes = [8, 8], strides = [1, 1]} : vector<9x9xf32> to vector<8x8xf32>
    %138 = vector.extract_strided_slice %0 {offsets = [0, 7], sizes = [32, 1], strides = [1, 1]} : vector<32x9xf32> to vector<32x1xf32>
    %139 = vector.shape_cast %138 : vector<32x1xf32> to vector<32x1x1xf32>
    %140 = vector.shape_cast %137 : vector<8x8xf32> to vector<1x8x8xf32>
    %141 = vector.broadcast %139 : vector<32x1x1xf32> to vector<32x8x8xf32>
    %142 = vector.broadcast %140 : vector<1x8x8xf32> to vector<32x8x8xf32>
    %143 = arith.mulf %141, %142 : vector<32x8x8xf32>
    %144 = arith.addf %136, %143 : vector<32x8x8xf32>
    %145 = vector.extract_strided_slice %4 {offsets = [1, 1], sizes = [8, 8], strides = [1, 1]} : vector<9x9xf32> to vector<8x8xf32>
    %146 = vector.extract_strided_slice %0 {offsets = [0, 8], sizes = [32, 1], strides = [1, 1]} : vector<32x9xf32> to vector<32x1xf32>
    %147 = vector.shape_cast %146 : vector<32x1xf32> to vector<32x1x1xf32>
    %148 = vector.shape_cast %145 : vector<8x8xf32> to vector<1x8x8xf32>
    %149 = vector.broadcast %147 : vector<32x1x1xf32> to vector<32x8x8xf32>
    %150 = vector.broadcast %148 : vector<1x8x8xf32> to vector<32x8x8xf32>
    %151 = arith.mulf %149, %150 : vector<32x8x8xf32>
    %152 = arith.addf %144, %151 : vector<32x8x8xf32>
    %cst_24 = arith.constant 0.000000e+00 : f32
    %153 = vector.broadcast %cst_24 : f32 to vector<32x8x8xf32>
    %154 = arith.maximumf %152, %153 : vector<32x8x8xf32>
    %155 = arith.maximumf %81, %154 : vector<32x8x8xf32>
    %156 = vector.extract_strided_slice %6 {offsets = [0, 0], sizes = [8, 8], strides = [1, 1]} : vector<9x9xf32> to vector<8x8xf32>
    %157 = vector.extract_strided_slice %0 {offsets = [0, 0], sizes = [32, 1], strides = [1, 1]} : vector<32x9xf32> to vector<32x1xf32>
    %158 = vector.shape_cast %157 : vector<32x1xf32> to vector<32x1x1xf32>
    %159 = vector.shape_cast %156 : vector<8x8xf32> to vector<1x8x8xf32>
    %160 = vector.broadcast %158 : vector<32x1x1xf32> to vector<32x8x8xf32>
    %161 = vector.broadcast %159 : vector<1x8x8xf32> to vector<32x8x8xf32>
    %162 = arith.mulf %160, %161 : vector<32x8x8xf32>
    %163 = vector.extract_strided_slice %8 {offsets = [0, 0], sizes = [8, 8], strides = [1, 1]} : vector<9x9xf32> to vector<8x8xf32>
    %164 = vector.extract_strided_slice %0 {offsets = [0, 1], sizes = [32, 1], strides = [1, 1]} : vector<32x9xf32> to vector<32x1xf32>
    %165 = vector.shape_cast %164 : vector<32x1xf32> to vector<32x1x1xf32>
    %166 = vector.shape_cast %163 : vector<8x8xf32> to vector<1x8x8xf32>
    %167 = vector.broadcast %165 : vector<32x1x1xf32> to vector<32x8x8xf32>
    %168 = vector.broadcast %166 : vector<1x8x8xf32> to vector<32x8x8xf32>
    %169 = arith.mulf %167, %168 : vector<32x8x8xf32>
    %170 = arith.addf %162, %169 : vector<32x8x8xf32>
    %171 = vector.extract_strided_slice %6 {offsets = [0, 1], sizes = [8, 8], strides = [1, 1]} : vector<9x9xf32> to vector<8x8xf32>
    %172 = vector.extract_strided_slice %0 {offsets = [0, 2], sizes = [32, 1], strides = [1, 1]} : vector<32x9xf32> to vector<32x1xf32>
    %173 = vector.shape_cast %172 : vector<32x1xf32> to vector<32x1x1xf32>
    %174 = vector.shape_cast %171 : vector<8x8xf32> to vector<1x8x8xf32>
    %175 = vector.broadcast %173 : vector<32x1x1xf32> to vector<32x8x8xf32>
    %176 = vector.broadcast %174 : vector<1x8x8xf32> to vector<32x8x8xf32>
    %177 = arith.mulf %175, %176 : vector<32x8x8xf32>
    %178 = arith.addf %170, %177 : vector<32x8x8xf32>
    %179 = vector.extract_strided_slice %2 {offsets = [1, 0], sizes = [8, 8], strides = [1, 1]} : vector<9x9xf32> to vector<8x8xf32>
    %180 = vector.extract_strided_slice %0 {offsets = [0, 3], sizes = [32, 1], strides = [1, 1]} : vector<32x9xf32> to vector<32x1xf32>
    %181 = vector.shape_cast %180 : vector<32x1xf32> to vector<32x1x1xf32>
    %182 = vector.shape_cast %179 : vector<8x8xf32> to vector<1x8x8xf32>
    %183 = vector.broadcast %181 : vector<32x1x1xf32> to vector<32x8x8xf32>
    %184 = vector.broadcast %182 : vector<1x8x8xf32> to vector<32x8x8xf32>
    %185 = arith.mulf %183, %184 : vector<32x8x8xf32>
    %186 = arith.addf %178, %185 : vector<32x8x8xf32>
    %187 = vector.extract_strided_slice %4 {offsets = [1, 0], sizes = [8, 8], strides = [1, 1]} : vector<9x9xf32> to vector<8x8xf32>
    %188 = vector.extract_strided_slice %0 {offsets = [0, 4], sizes = [32, 1], strides = [1, 1]} : vector<32x9xf32> to vector<32x1xf32>
    %189 = vector.shape_cast %188 : vector<32x1xf32> to vector<32x1x1xf32>
    %190 = vector.shape_cast %187 : vector<8x8xf32> to vector<1x8x8xf32>
    %191 = vector.broadcast %189 : vector<32x1x1xf32> to vector<32x8x8xf32>
    %192 = vector.broadcast %190 : vector<1x8x8xf32> to vector<32x8x8xf32>
    %193 = arith.mulf %191, %192 : vector<32x8x8xf32>
    %194 = arith.addf %186, %193 : vector<32x8x8xf32>
    %195 = vector.extract_strided_slice %2 {offsets = [1, 1], sizes = [8, 8], strides = [1, 1]} : vector<9x9xf32> to vector<8x8xf32>
    %196 = vector.extract_strided_slice %0 {offsets = [0, 5], sizes = [32, 1], strides = [1, 1]} : vector<32x9xf32> to vector<32x1xf32>
    %197 = vector.shape_cast %196 : vector<32x1xf32> to vector<32x1x1xf32>
    %198 = vector.shape_cast %195 : vector<8x8xf32> to vector<1x8x8xf32>
    %199 = vector.broadcast %197 : vector<32x1x1xf32> to vector<32x8x8xf32>
    %200 = vector.broadcast %198 : vector<1x8x8xf32> to vector<32x8x8xf32>
    %201 = arith.mulf %199, %200 : vector<32x8x8xf32>
    %202 = arith.addf %194, %201 : vector<32x8x8xf32>
    %203 = vector.extract_strided_slice %6 {offsets = [1, 0], sizes = [8, 8], strides = [1, 1]} : vector<9x9xf32> to vector<8x8xf32>
    %204 = vector.extract_strided_slice %0 {offsets = [0, 6], sizes = [32, 1], strides = [1, 1]} : vector<32x9xf32> to vector<32x1xf32>
    %205 = vector.shape_cast %204 : vector<32x1xf32> to vector<32x1x1xf32>
    %206 = vector.shape_cast %203 : vector<8x8xf32> to vector<1x8x8xf32>
    %207 = vector.broadcast %205 : vector<32x1x1xf32> to vector<32x8x8xf32>
    %208 = vector.broadcast %206 : vector<1x8x8xf32> to vector<32x8x8xf32>
    %209 = arith.mulf %207, %208 : vector<32x8x8xf32>
    %210 = arith.addf %202, %209 : vector<32x8x8xf32>
    %211 = vector.extract_strided_slice %8 {offsets = [1, 0], sizes = [8, 8], strides = [1, 1]} : vector<9x9xf32> to vector<8x8xf32>
    %212 = vector.extract_strided_slice %0 {offsets = [0, 7], sizes = [32, 1], strides = [1, 1]} : vector<32x9xf32> to vector<32x1xf32>
    %213 = vector.shape_cast %212 : vector<32x1xf32> to vector<32x1x1xf32>
    %214 = vector.shape_cast %211 : vector<8x8xf32> to vector<1x8x8xf32>
    %215 = vector.broadcast %213 : vector<32x1x1xf32> to vector<32x8x8xf32>
    %216 = vector.broadcast %214 : vector<1x8x8xf32> to vector<32x8x8xf32>
    %217 = arith.mulf %215, %216 : vector<32x8x8xf32>
    %218 = arith.addf %210, %217 : vector<32x8x8xf32>
    %219 = vector.extract_strided_slice %6 {offsets = [1, 1], sizes = [8, 8], strides = [1, 1]} : vector<9x9xf32> to vector<8x8xf32>
    %220 = vector.extract_strided_slice %0 {offsets = [0, 8], sizes = [32, 1], strides = [1, 1]} : vector<32x9xf32> to vector<32x1xf32>
    %221 = vector.shape_cast %220 : vector<32x1xf32> to vector<32x1x1xf32>
    %222 = vector.shape_cast %219 : vector<8x8xf32> to vector<1x8x8xf32>
    %223 = vector.broadcast %221 : vector<32x1x1xf32> to vector<32x8x8xf32>
    %224 = vector.broadcast %222 : vector<1x8x8xf32> to vector<32x8x8xf32>
    %225 = arith.mulf %223, %224 : vector<32x8x8xf32>
    %226 = arith.addf %218, %225 : vector<32x8x8xf32>
    %cst_25 = arith.constant 0.000000e+00 : f32
    %227 = vector.broadcast %cst_25 : f32 to vector<32x8x8xf32>
    %228 = arith.maximumf %226, %227 : vector<32x8x8xf32>
    %229 = vector.extract_strided_slice %8 {offsets = [0, 0], sizes = [8, 8], strides = [1, 1]} : vector<9x9xf32> to vector<8x8xf32>
    %230 = vector.extract_strided_slice %0 {offsets = [0, 0], sizes = [32, 1], strides = [1, 1]} : vector<32x9xf32> to vector<32x1xf32>
    %231 = vector.shape_cast %230 : vector<32x1xf32> to vector<32x1x1xf32>
    %232 = vector.shape_cast %229 : vector<8x8xf32> to vector<1x8x8xf32>
    %233 = vector.broadcast %231 : vector<32x1x1xf32> to vector<32x8x8xf32>
    %234 = vector.broadcast %232 : vector<1x8x8xf32> to vector<32x8x8xf32>
    %235 = arith.mulf %233, %234 : vector<32x8x8xf32>
    %236 = vector.extract_strided_slice %6 {offsets = [0, 1], sizes = [8, 8], strides = [1, 1]} : vector<9x9xf32> to vector<8x8xf32>
    %237 = vector.extract_strided_slice %0 {offsets = [0, 1], sizes = [32, 1], strides = [1, 1]} : vector<32x9xf32> to vector<32x1xf32>
    %238 = vector.shape_cast %237 : vector<32x1xf32> to vector<32x1x1xf32>
    %239 = vector.shape_cast %236 : vector<8x8xf32> to vector<1x8x8xf32>
    %240 = vector.broadcast %238 : vector<32x1x1xf32> to vector<32x8x8xf32>
    %241 = vector.broadcast %239 : vector<1x8x8xf32> to vector<32x8x8xf32>
    %242 = arith.mulf %240, %241 : vector<32x8x8xf32>
    %243 = arith.addf %235, %242 : vector<32x8x8xf32>
    %244 = vector.extract_strided_slice %8 {offsets = [0, 1], sizes = [8, 8], strides = [1, 1]} : vector<9x9xf32> to vector<8x8xf32>
    %245 = vector.extract_strided_slice %0 {offsets = [0, 2], sizes = [32, 1], strides = [1, 1]} : vector<32x9xf32> to vector<32x1xf32>
    %246 = vector.shape_cast %245 : vector<32x1xf32> to vector<32x1x1xf32>
    %247 = vector.shape_cast %244 : vector<8x8xf32> to vector<1x8x8xf32>
    %248 = vector.broadcast %246 : vector<32x1x1xf32> to vector<32x8x8xf32>
    %249 = vector.broadcast %247 : vector<1x8x8xf32> to vector<32x8x8xf32>
    %250 = arith.mulf %248, %249 : vector<32x8x8xf32>
    %251 = arith.addf %243, %250 : vector<32x8x8xf32>
    %252 = vector.extract_strided_slice %4 {offsets = [1, 0], sizes = [8, 8], strides = [1, 1]} : vector<9x9xf32> to vector<8x8xf32>
    %253 = vector.extract_strided_slice %0 {offsets = [0, 3], sizes = [32, 1], strides = [1, 1]} : vector<32x9xf32> to vector<32x1xf32>
    %254 = vector.shape_cast %253 : vector<32x1xf32> to vector<32x1x1xf32>
    %255 = vector.shape_cast %252 : vector<8x8xf32> to vector<1x8x8xf32>
    %256 = vector.broadcast %254 : vector<32x1x1xf32> to vector<32x8x8xf32>
    %257 = vector.broadcast %255 : vector<1x8x8xf32> to vector<32x8x8xf32>
    %258 = arith.mulf %256, %257 : vector<32x8x8xf32>
    %259 = arith.addf %251, %258 : vector<32x8x8xf32>
    %260 = vector.extract_strided_slice %2 {offsets = [1, 1], sizes = [8, 8], strides = [1, 1]} : vector<9x9xf32> to vector<8x8xf32>
    %261 = vector.extract_strided_slice %0 {offsets = [0, 4], sizes = [32, 1], strides = [1, 1]} : vector<32x9xf32> to vector<32x1xf32>
    %262 = vector.shape_cast %261 : vector<32x1xf32> to vector<32x1x1xf32>
    %263 = vector.shape_cast %260 : vector<8x8xf32> to vector<1x8x8xf32>
    %264 = vector.broadcast %262 : vector<32x1x1xf32> to vector<32x8x8xf32>
    %265 = vector.broadcast %263 : vector<1x8x8xf32> to vector<32x8x8xf32>
    %266 = arith.mulf %264, %265 : vector<32x8x8xf32>
    %267 = arith.addf %259, %266 : vector<32x8x8xf32>
    %268 = vector.extract_strided_slice %4 {offsets = [1, 1], sizes = [8, 8], strides = [1, 1]} : vector<9x9xf32> to vector<8x8xf32>
    %269 = vector.extract_strided_slice %0 {offsets = [0, 5], sizes = [32, 1], strides = [1, 1]} : vector<32x9xf32> to vector<32x1xf32>
    %270 = vector.shape_cast %269 : vector<32x1xf32> to vector<32x1x1xf32>
    %271 = vector.shape_cast %268 : vector<8x8xf32> to vector<1x8x8xf32>
    %272 = vector.broadcast %270 : vector<32x1x1xf32> to vector<32x8x8xf32>
    %273 = vector.broadcast %271 : vector<1x8x8xf32> to vector<32x8x8xf32>
    %274 = arith.mulf %272, %273 : vector<32x8x8xf32>
    %275 = arith.addf %267, %274 : vector<32x8x8xf32>
    %276 = vector.extract_strided_slice %8 {offsets = [1, 0], sizes = [8, 8], strides = [1, 1]} : vector<9x9xf32> to vector<8x8xf32>
    %277 = vector.extract_strided_slice %0 {offsets = [0, 6], sizes = [32, 1], strides = [1, 1]} : vector<32x9xf32> to vector<32x1xf32>
    %278 = vector.shape_cast %277 : vector<32x1xf32> to vector<32x1x1xf32>
    %279 = vector.shape_cast %276 : vector<8x8xf32> to vector<1x8x8xf32>
    %280 = vector.broadcast %278 : vector<32x1x1xf32> to vector<32x8x8xf32>
    %281 = vector.broadcast %279 : vector<1x8x8xf32> to vector<32x8x8xf32>
    %282 = arith.mulf %280, %281 : vector<32x8x8xf32>
    %283 = arith.addf %275, %282 : vector<32x8x8xf32>
    %284 = vector.extract_strided_slice %6 {offsets = [1, 1], sizes = [8, 8], strides = [1, 1]} : vector<9x9xf32> to vector<8x8xf32>
    %285 = vector.extract_strided_slice %0 {offsets = [0, 7], sizes = [32, 1], strides = [1, 1]} : vector<32x9xf32> to vector<32x1xf32>
    %286 = vector.shape_cast %285 : vector<32x1xf32> to vector<32x1x1xf32>
    %287 = vector.shape_cast %284 : vector<8x8xf32> to vector<1x8x8xf32>
    %288 = vector.broadcast %286 : vector<32x1x1xf32> to vector<32x8x8xf32>
    %289 = vector.broadcast %287 : vector<1x8x8xf32> to vector<32x8x8xf32>
    %290 = arith.mulf %288, %289 : vector<32x8x8xf32>
    %291 = arith.addf %283, %290 : vector<32x8x8xf32>
    %292 = vector.extract_strided_slice %8 {offsets = [1, 1], sizes = [8, 8], strides = [1, 1]} : vector<9x9xf32> to vector<8x8xf32>
    %293 = vector.extract_strided_slice %0 {offsets = [0, 8], sizes = [32, 1], strides = [1, 1]} : vector<32x9xf32> to vector<32x1xf32>
    %294 = vector.shape_cast %293 : vector<32x1xf32> to vector<32x1x1xf32>
    %295 = vector.shape_cast %292 : vector<8x8xf32> to vector<1x8x8xf32>
    %296 = vector.broadcast %294 : vector<32x1x1xf32> to vector<32x8x8xf32>
    %297 = vector.broadcast %295 : vector<1x8x8xf32> to vector<32x8x8xf32>
    %298 = arith.mulf %296, %297 : vector<32x8x8xf32>
    %299 = arith.addf %291, %298 : vector<32x8x8xf32>
    %cst_26 = arith.constant 0.000000e+00 : f32
    %300 = vector.broadcast %cst_26 : f32 to vector<32x8x8xf32>
    %301 = arith.maximumf %299, %300 : vector<32x8x8xf32>
    %302 = arith.maximumf %228, %301 : vector<32x8x8xf32>
    %303 = arith.maximumf %155, %302 : vector<32x8x8xf32>
    %304 = arith.truncf %303 : vector<32x8x8xf32> to vector<32x8x8xbf16>
    %c0_27 = arith.constant 0 : index
    %c0_28 = arith.constant 0 : index
    %c0_29 = arith.constant 0 : index
    %c0_30 = arith.constant 0 : index
    %305 = vector.load %arg4[%c0_27, %c0_28, %c0_29, %c0_30] : memref<1x32x8x8xbf16, #tpu.memory_space<vmem>>, vector<1x32x8x8xbf16>
    %306 = vector.shape_cast %305 : vector<1x32x8x8xbf16> to vector<32x8x8xbf16>
    %307 = vector.shape_cast %304 : vector<32x8x8xbf16> to vector<1x32x8x8xbf16>
    tpu.vector_store %arg4[%c0_27, %c0_28, %c0_29, %c0_30], %307 {strides = array<i32>} : memref<1x32x8x8xbf16, #tpu.memory_space<vmem>>, vector<1x32x8x8xbf16>,
    return
  }
  func.func @transform_0(%arg0: i32, %arg1: i32) -> (i32, i32, i32, i32, i32, i32) {
    %c0_i32 = arith.constant 0 : i32
    %c0_i32_0 = arith.constant 0 : i32
    %c0_i32_1 = arith.constant 0 : i32
    %c0_i32_2 = arith.constant 0 : i32
    %c0_i32_3 = arith.constant 0 : i32
    return %arg0, %arg1, %c0_i32, %c0_i32_0, %c0_i32_1, %c0_i32_2 : i32, i32, i32, i32, i32, i32
  }
  func.func @transform_1(%arg0: i32, %arg1: i32) -> (i32, i32) {
    %c0_i32 = arith.constant 0 : i32
    %c0_i32_0 = arith.constant 0 : i32
    %c0_i32_1 = arith.constant 0 : i32
    return %c0_i32, %c0_i32_0 : i32, i32
  }
  func.func @transform_2(%arg0: i32, %arg1: i32) -> (i32, i32, i32, i32) {
    %c0_i32 = arith.constant 0 : i32
    %c0_i32_0 = arith.constant 0 : i32
    %c0_i32_1 = arith.constant 0 : i32
    return %arg0, %c0_i32, %arg1, %c0_i32_0 : i32, i32, i32, i32
  }
}

</mosaic_0001>

<llo_original>
// kernel: vgg_forward.3
$region0: #{vgg_forward.3}
  #allocation0 [shape = 'u32[]', space=smem, size = 0x4, offset = 0x4, fixed_abs, tag = 'smem constant byte address 0x4 - core index']
  #allocation1 [shape = 'u32[72,128]{1,0:T(1,128)}', space=vmem, size = 0x9000, scoped, tag = 'internal scratch']
  #allocation2 [shape = 'f32[2,128]{1,0:T(2,128)}', space=vmem, size = 0x400, scoped, tag = 'scratch operand']
  %s0 = inlined_call_operand.vmem [shape: bf16[2,2048], index: 0, kind: input, shape index: {}]
  %s1 = inlined_call_operand.vmem [shape: bf16[2048,128], index: 1, kind: input, shape index: {}]
  %s2 = inlined_call_operand.vmem [shape: f32[1,128], index: 2, kind: input, shape index: {}]
  %s3 = inlined_call_operand.hbm [shape: f32[2,128], index: 3, kind: output, shape index: {}]
  %s4 = sld [smem:[#allocation0]]
  $region53: #{vgg_forward.3} parent=0
    _
  %s6 = ssub.s32 1, %s4
  %s7 = scalar_select 0, %s6, %s4
  $region1: #{vgg_forward.3} parent=0
    #allocation3 [shape = 'u8[1024]{0}', space=vmem, size = 0x400, scoped, tag = 'output window, operand 0, single buffered']
    #allocation4 [shape = 's32[2]{0}', space=sflag, size = 0x8, scoped, tag = 'scoped memory for vgg_forward.3']
    %8 = vsyncpa [#allocation4], 0
    loop: start=0, step=1, limit=6
    $region2: #{vgg_forward.3} parent=1 // loop_pre_header
      _
    $region3: #{vgg_forward.3} parent=1 // loop_header
      %s10 = sphi 0, %s14
      %p11 = scmp.ge.s32.totalorder %s10, 6
      %s17 = sphi 0, %s29
      %s18 = sphi 0, %s25
      %s19 = sphi 0, %s17
      %s20 = sphi 0, %s18
      %s21 = sphi 0, %s19
      %s22 = sphi 0, %s20
      %s32 = sphi 0, %s34
      %s35 = sphi 0, %s32
      %s36 = sphi 0, %s35
      %s52 = sphi 0, %s36
      %s60 = sphi 0, %s62
      %s63 = sphi 0, %s60
      %s64 = sphi 0, %s63
      %s80 = sphi 0, %s64
      %s86 = sphi 0, %s88
      %s89 = sphi 0, %s86
      %s90 = sphi 0, %s89
      %s106 = sphi 0, %s90
      %s112 = sphi 0, %s114
      %s115 = sphi 0, %s112
      %s116 = sphi 0, %s115
      %s132 = sphi 0, %s116
    $region4: #{vgg_forward.3} parent=1 // loop_header_branch
      %13 = sbr.rel (%p11) target = $region8
    $region5: #{vgg_forward.3} parent=1 // loop_body
      %s15 = ssub.s32 %s10, 1
      %s16 = ssub.s32 %s10, 2
      %s23 = sadd.s32 1, %s18
      %p24 = scmp.ge.s32.totalorder %s23, 4
      %s25 = scalar_select %p24, 0, %s23
      %s26 = sadd.s32 1, %s17
      %s27 = scalar_select %p24, %s26, %s17
      %p28 = scmp.ge.s32.totalorder %s27, 1
      %s29 = scalar_select %p28, 0, %s27
      %s30 = ssub.s32 %s18, %s25
      %p31 = scmp.eq.s32.totalorder %s30, 0
      %s33 = sadd.s32 %s32, 1
      %s34 = scalar_select %p31, %s32, %s33
      %p37 = pneg %p31
      %p38 = scmp.eq.s32.totalorder %s10, 3
      %p39 = por %p37, %p38
      %p40 = scmp.ne.s32.totalorder %s32, %s35
      %p41 = scmp.eq.s32.totalorder %s10, 0
      %p42 = por %p40, %p41
      %p43 = scmp.ne.s32.totalorder %s32, %s35
      %p44 = scmp.eq.s32.totalorder %s15, 3
      %p45 = por %p43, %p44
      %p46 = scmp.ne.s32.totalorder %s35, %s36
      %p47 = scmp.eq.s32.totalorder %s15, 0
      %p48 = por %p46, %p47
      %p49 = scmp.ne.s32.totalorder %s35, %s36
      %p50 = scmp.eq.s32.totalorder %s16, 3
      %p51 = por %p49, %p50
      %p53 = scmp.ne.s32.totalorder %s36, %s52
      %p54 = scmp.eq.s32.totalorder %s16, 0
      %p55 = por %p53, %p54
      %s56 = ssub.s32 %s18, %s25
      %s57 = ssub.s32 %s17, %s29
      %s58 = sor.u32 %s56, %s57
      %p59 = scmp.eq.s32.totalorder %s58, 0
      %s61 = sadd.s32 %s60, 1
      %s62 = scalar_select %p59, %s60, %s61
      %p65 = pneg %p59
      %p66 = scmp.eq.s32.totalorder %s10, 3
      %p67 = por %p65, %p66
      %p68 = scmp.ne.s32.totalorder %s60, %s63
      %p69 = scmp.eq.s32.totalorder %s10, 0
      %p70 = por %p68, %p69
      %p71 = scmp.ne.s32.totalorder %s60, %s63
      %p72 = scmp.eq.s32.totalorder %s15, 3
      %p73 = por %p71, %p72
      %p74 = scmp.ne.s32.totalorder %s63, %s64
      %p75 = scmp.eq.s32.totalorder %s15, 0
      %p76 = por %p74, %p75
      %p77 = scmp.ne.s32.totalorder %s63, %s64
      %p78 = scmp.eq.s32.totalorder %s16, 3
      %p79 = por %p77, %p78
      %p81 = scmp.ne.s32.totalorder %s64, %s80
      %p82 = scmp.eq.s32.totalorder %s16, 0
      %p83 = por %p81, %p82
      %s84 = ssub.s32 %s17, %s29
      %p85 = scmp.eq.s32.totalorder %s84, 0
      %s87 = sadd.s32 %s86, 1
      %s88 = scalar_select %p85, %s86, %s87
      %p91 = pneg %p85
      %p92 = scmp.eq.s32.totalorder %s10, 3
      %p93 = por %p91, %p92
      %p94 = scmp.ne.s32.totalorder %s86, %s89
      %p95 = scmp.eq.s32.totalorder %s10, 0
      %p96 = por %p94, %p95
      %p97 = scmp.ne.s32.totalorder %s86, %s89
      %p98 = scmp.eq.s32.totalorder %s15, 3
      %p99 = por %p97, %p98
      %p100 = scmp.ne.s32.totalorder %s89, %s90
      %p101 = scmp.eq.s32.totalorder %s15, 0
      %p102 = por %p100, %p101
      %p103 = scmp.ne.s32.totalorder %s89, %s90
      %p104 = scmp.eq.s32.totalorder %s16, 3
      %p105 = por %p103, %p104
      %p107 = scmp.ne.s32.totalorder %s90, %s106
      %p108 = scmp.eq.s32.totalorder %s16, 0
      %p109 = por %p107, %p108
      %s110 = ssub.s32 %s17, %s29
      %p111 = scmp.eq.s32.totalorder %s110, 0
      %s113 = sadd.s32 %s112, 1
      %s114 = scalar_select %p111, %s112, %s113
      %p117 = pneg %p111
      %p118 = scmp.eq.s32.totalorder %s10, 3
      %p119 = por %p117, %p118
      %p120 = scmp.ne.s32.totalorder %s112, %s115
      %p121 = scmp.eq.s32.totalorder %s10, 0
      %p122 = por %p120, %p121
      %p123 = scmp.ne.s32.totalorder %s112, %s115
      %p124 = scmp.eq.s32.totalorder %s15, 3
      %p125 = por %p123, %p124
      %p126 = scmp.ne.s32.totalorder %s115, %s116
      %p127 = scmp.eq.s32.totalorder %s15, 0
      %p128 = por %p126, %p127
      %p129 = scmp.ne.s32.totalorder %s115, %s116
      %p130 = scmp.eq.s32.totalorder %s16, 3
      %p131 = por %p129, %p130
      %p133 = scmp.ne.s32.totalorder %s116, %s132
      %p134 = scmp.eq.s32.totalorder %s16, 0
      %p135 = por %p133, %p134
      %p136 = scmp.le.s32.totalorder 1, %s10
      %p137 = scmp.lt.s32.totalorder %s10, 5
      %p138 = pnand %p136, %p137
      %p139 = pneg %p138
      // Predicated region
      $region9: #{vgg_forward.3} parent=5 // pred_check
        _
      $region10: #{vgg_forward.3} parent=5 // pred_check_branch
        %141 = sbr.rel (%p138) target = $region12
      $region11: #{vgg_forward.3} parent=5 // pred_region
        %s142 = ssub.s32 %s10, 1
        // Predicated region
        $region13: #{vgg_forward.3} parent=11 // pred_check
          %p143 = pneg %p102
        $region14: #{vgg_forward.3} parent=11 // pred_check_branch
          %145 = sbr.rel (%p143) target = $region16
        $region15: #{vgg_forward.3} parent=11 // pred_region
          %p146 = scmp.lt.s32.totalorder %s19, 0
          %s147 = scalar_select %p146, %s19, 0
          %s148 = scalar_lea.vmem %s2, %s147
        $region16: #{vgg_forward.3} parent=11 // pred_fallthru
          _
      $region12: #{vgg_forward.3} parent=5 // pred_fallthru
        _
      %p149 = scmp.lt.s32.totalorder %s10, 4
      // Predicated region
      $region17: #{vgg_forward.3} parent=5 // pred_check
        %p150 = pneg %p149
      $region18: #{vgg_forward.3} parent=5 // pred_check_branch
        %152 = sbr.rel (%p150) target = $region20
      $region19: #{vgg_forward.3} parent=5 // pred_region
        // Predicated region
        $region21: #{vgg_forward.3} parent=19 // pred_check
          %p153 = pneg %p42
        $region22: #{vgg_forward.3} parent=19 // pred_check_branch
          %155 = sbr.rel (%p153) target = $region24
        $region23: #{vgg_forward.3} parent=19 // pred_region
          %s156 = smul.u32 4, %s18
          %p157 = scmp.lt.s32.totalorder %s156, 15
          %s158 = scalar_select %p157, %s156, 15
          %s159 = scalar_lea.vmem %s0, %s158
          %s160 = smul.u32 4, %s18
        $region24: #{vgg_forward.3} parent=19 // pred_fallthru
          _
        // Predicated region
        $region25: #{vgg_forward.3} parent=19 // pred_check
          %p161 = pneg %p70
        $region26: #{vgg_forward.3} parent=19 // pred_check_branch
          %163 = sbr.rel (%p161) target = $region28
        $region27: #{vgg_forward.3} parent=19 // pred_region
          %s164 = smul.u32 64, %s18
          %p165 = scmp.lt.s32.totalorder %s164, 255
          %s166 = scalar_select %p165, %s164, 255
          %p167 = scmp.lt.s32.totalorder %s17, 0
          %s168 = scalar_select %p167, %s17, 0
          %s169 = sadd.s32 %s168, %s166
          %s170 = smul.addr %s169, 4
          %s171 = scalar_lea.vmem %s1, %s170
          %s172 = smul.u32 64, %s18
        $region28: #{vgg_forward.3} parent=19 // pred_fallthru
          _
      $region20: #{vgg_forward.3} parent=5 // pred_fallthru
        _
      %p173 = scmp.le.s32.totalorder 1, %s10
      %p174 = scmp.lt.s32.totalorder %s10, 5
      %p175 = pnand %p173, %p174
      %p176 = pneg %p175
      // Predicated region
      $region29: #{vgg_forward.3} parent=5 // pred_check
        _
      $region30: #{vgg_forward.3} parent=5 // pred_check_branch
        %178 = sbr.rel (%p175) target = $region32
      $region31: #{vgg_forward.3} parent=5 // pred_region
        %s179 = ssub.s32 %s10, 1
        %s180 = smul.u32 4, %s20
        %p181 = scmp.lt.s32.totalorder %s180, 15
        %s182 = scalar_select %p181, %s180, 15
        %s183 = scalar_lea.vmem %s0, %s182
        %p184 = pneg %p48
        %p185 = pneg %p45
        %s186 = smul.u32 64, %s20
        %p187 = scmp.lt.s32.totalorder %s186, 255
        %s188 = scalar_select %p187, %s186, 255
        %p189 = scmp.lt.s32.totalorder %s19, 0
        %s190 = scalar_select %p189, %s19, 0
        %s191 = sadd.s32 %s190, %s188
        %s192 = smul.addr %s191, 4
        %s193 = scalar_lea.vmem %s1, %s192
        %p194 = pneg %p76
        %p195 = pneg %p73
        %p196 = scmp.lt.s32.totalorder %s19, 0
        %s197 = scalar_select %p196, %s19, 0
        %s198 = scalar_lea.vmem %s2, %s197
        %p199 = pneg %p102
        %p200 = pneg %p99
        %p201 = pneg %p128
        %p202 = pneg %p125
        %s203 = smul.u32 4, %s20
        %p204 = scmp.lt.s32.totalorder %s203, 15
        %s205 = scalar_select %p204, %s203, 15
        %s206 = scalar_lea.vmem %s0, %s205
        %s207 = smul.u32 4, %s20
        %s208 = smul.u32 64, %s20
        %p209 = scmp.lt.s32.totalorder %s208, 255
        %s210 = scalar_select %p209, %s208, 255
        %p211 = scmp.lt.s32.totalorder %s19, 0
        %s212 = scalar_select %p211, %s19, 0
        %s213 = sadd.s32 %s212, %s210
        %s214 = smul.addr %s213, 4
        %s215 = scalar_lea.vmem %s1, %s214
        %s216 = smul.u32 64, %s20
        %p217 = scmp.lt.s32.totalorder %s19, 0
        %s218 = scalar_select %p217, %s19, 0
        %s219 = scalar_lea.vmem %s2, %s218
        %p220 = scmp.eq.s32.totalorder %s20, 0
        // Predicated region
        $region33: #{vgg_forward.3} parent=31 // pred_check
          %p221 = pneg %p220
        $region34: #{vgg_forward.3} parent=31 // pred_check_branch
          %223 = sbr.rel (%p221) target = $region36
        $region35: #{vgg_forward.3} parent=31 // pred_region
          %224 = vst [vmem:[#allocation2] sm:$0x3] 0.0
        $region36: #{vgg_forward.3} parent=31 // pred_fallthru
          _
        %v225 = vld [vmem:[#allocation2] sm:$0x3]
        %v226 = vld [vmem:[%s206] sm:$0xf]
        %v227 = vld [vmem:[%s215] sm:$0xf]
        %v228 = vld [vmem:[%s215 + $0x4] sm:$0xf]
        %v229 = vld [vmem:[%s215 + $0x8] sm:$0xf]
        %v230 = vld [vmem:[%s215 + $0xc] sm:$0xf]
        %v231 = vld [vmem:[%s215 + $0x10] sm:$0xf]
        %v232 = vld [vmem:[%s215 + $0x14] sm:$0xf]
        %v233 = vld [vmem:[%s215 + $0x18] sm:$0xf]
        %v234 = vld [vmem:[%s215 + $0x1c] sm:$0xf]
        %v235 = vld [vmem:[%s215 + $0x20] sm:$0xf]
        %v236 = vld [vmem:[%s215 + $0x24] sm:$0xf]
        %v237 = vld [vmem:[%s215 + $0x28] sm:$0xf]
        %v238 = vld [vmem:[%s215 + $0x2c] sm:$0xf]
        %v239 = vld [vmem:[%s215 + $0x30] sm:$0xf]
        %v240 = vld [vmem:[%s215 + $0x34] sm:$0xf]
        %v241 = vld [vmem:[%s215 + $0x38] sm:$0xf]
        %v242 = vld [vmem:[%s215 + $0x3c] sm:$0xf]
        %v243 = vld [vmem:[%s215 + $0x40] sm:$0xf]
        %v244 = vld [vmem:[%s215 + $0x44] sm:$0xf]
        %v245 = vld [vmem:[%s215 + $0x48] sm:$0xf]
        %v246 = vld [vmem:[%s215 + $0x4c] sm:$0xf]
        %v247 = vld [vmem:[%s215 + $0x50] sm:$0xf]
        %v248 = vld [vmem:[%s215 + $0x54] sm:$0xf]
        %v249 = vld [vmem:[%s215 + $0x58] sm:$0xf]
        %v250 = vld [vmem:[%s215 + $0x5c] sm:$0xf]
        %v251 = vld [vmem:[%s215 + $0x60] sm:$0xf]
        %v252 = vld [vmem:[%s215 + $0x64] sm:$0xf]
        %v253 = vld [vmem:[%s215 + $0x68] sm:$0xf]
        %v254 = vld [vmem:[%s215 + $0x6c] sm:$0xf]
        %v255 = vld [vmem:[%s215 + $0x70] sm:$0xf]
        %v256 = vld [vmem:[%s215 + $0x74] sm:$0xf]
        %v257 = vld [vmem:[%s215 + $0x78] sm:$0xf]
        %v258 = vld [vmem:[%s215 + $0x7c] sm:$0xf]
        %v259 = vld [vmem:[%s215 + $0x80] sm:$0xf]
        %v260 = vld [vmem:[%s215 + $0x84] sm:$0xf]
        %v261 = vld [vmem:[%s215 + $0x88] sm:$0xf]
        %v262 = vld [vmem:[%s215 + $0x8c] sm:$0xf]
        %v263 = vld [vmem:[%s215 + $0x90] sm:$0xf]
        %v264 = vld [vmem:[%s215 + $0x94] sm:$0xf]
        %v265 = vld [vmem:[%s215 + $0x98] sm:$0xf]
        %v266 = vld [vmem:[%s215 + $0x9c] sm:$0xf]
        %v267 = vld [vmem:[%s215 + $0xa0] sm:$0xf]
        %v268 = vld [vmem:[%s215 + $0xa4] sm:$0xf]
        %v269 = vld [vmem:[%s215 + $0xa8] sm:$0xf]
        %v270 = vld [vmem:[%s215 + $0xac] sm:$0xf]
        %v271 = vld [vmem:[%s215 + $0xb0] sm:$0xf]
        %v272 = vld [vmem:[%s215 + $0xb4] sm:$0xf]
        %v273 = vld [vmem:[%s215 + $0xb8] sm:$0xf]
        %v274 = vld [vmem:[%s215 + $0xbc] sm:$0xf]
        %v275 = vld [vmem:[%s215 + $0xc0] sm:$0xf]
        %v276 = vld [vmem:[%s215 + $0xc4] sm:$0xf]
        %v277 = vld [vmem:[%s215 + $0xc8] sm:$0xf]
        %v278 = vld [vmem:[%s215 + $0xcc] sm:$0xf]
        %v279 = vld [vmem:[%s215 + $0xd0] sm:$0xf]
        %v280 = vld [vmem:[%s215 + $0xd4] sm:$0xf]
        %v281 = vld [vmem:[%s215 + $0xd8] sm:$0xf]
        %v282 = vld [vmem:[%s215 + $0xdc] sm:$0xf]
        %v283 = vld [vmem:[%s215 + $0xe0] sm:$0xf]
        %v284 = vld [vmem:[%s215 + $0xe4] sm:$0xf]
        %v285 = vld [vmem:[%s215 + $0xe8] sm:$0xf]
        %v286 = vld [vmem:[%s215 + $0xec] sm:$0xf]
        %v287 = vld [vmem:[%s215 + $0xf0] sm:$0xf]
        %v288 = vld [vmem:[%s215 + $0xf4] sm:$0xf]
        %v289 = vld [vmem:[%s215 + $0xf8] sm:$0xf]
        %v290 = vld [vmem:[%s215 + $0xfc] sm:$0xf]
        %292 = vst [vmem:[#allocation1] ss:$9 sm:$0xff] %v226
        %v293 = vld [vmem:[#allocation1] sm:$0xff]
        %v294 = vld [vmem:[#allocation1 + $0x9] sm:$0xff]
        %v295 = vld [vmem:[#allocation1 + $0x12] sm:$0xff]
        %v296 = vld [vmem:[#allocation1 + $0x1b] sm:$0xff]
        %v365 = vunpack.c.l.b16 %v227
        %v366 = vunpack.c.l.b16 %v228
        %v367 = vunpack.c.l.b16 %v229
        %v368 = vunpack.c.l.b16 %v230
        %v369 = vunpack.c.l.b16 %v231
        %v370 = vunpack.c.l.b16 %v232
        %v371 = vunpack.c.l.b16 %v233
        %v372 = vunpack.c.l.b16 %v234
        %v373 = vunpack.c.l.b16 %v235
        %v374 = vunpack.c.l.b16 %v236
        %v375 = vunpack.c.l.b16 %v237
        %v376 = vunpack.c.l.b16 %v238
        %v377 = vunpack.c.l.b16 %v239
        %v378 = vunpack.c.l.b16 %v240
        %v379 = vunpack.c.l.b16 %v241
        %v380 = vunpack.c.l.b16 %v242
        %v381 = vunpack.c.l.b16 %v243
        %v382 = vunpack.c.l.b16 %v244
        %v383 = vunpack.c.l.b16 %v245
        %v384 = vunpack.c.l.b16 %v246
        %v385 = vunpack.c.l.b16 %v247
        %v386 = vunpack.c.l.b16 %v248
        %v387 = vunpack.c.l.b16 %v249
        %v388 = vunpack.c.l.b16 %v250
        %v389 = vunpack.c.l.b16 %v251
        %v390 = vunpack.c.l.b16 %v252
        %v391 = vunpack.c.l.b16 %v253
        %v392 = vunpack.c.l.b16 %v254
        %v393 = vunpack.c.l.b16 %v255
        %v394 = vunpack.c.l.b16 %v256
        %v395 = vunpack.c.l.b16 %v257
        %v396 = vunpack.c.l.b16 %v258
        %v397 = vunpack.c.l.b16 %v259
        %v398 = vunpack.c.l.b16 %v260
        %v399 = vunpack.c.l.b16 %v261
        %v400 = vunpack.c.l.b16 %v262
        %v401 = vunpack.c.l.b16 %v263
        %v402 = vunpack.c.l.b16 %v264
        %v403 = vunpack.c.l.b16 %v265
        %v404 = vunpack.c.l.b16 %v266
        %v405 = vunpack.c.l.b16 %v267
        %v406 = vunpack.c.l.b16 %v268
        %v407 = vunpack.c.l.b16 %v269
        %v408 = vunpack.c.l.b16 %v270
        %v409 = vunpack.c.l.b16 %v271
        %v410 = vunpack.c.l.b16 %v272
        %v411 = vunpack.c.l.b16 %v273
        %v412 = vunpack.c.l.b16 %v274
        %v413 = vunpack.c.l.b16 %v275
        %v414 = vunpack.c.l.b16 %v276
        %v415 = vunpack.c.l.b16 %v277
        %v416 = vunpack.c.l.b16 %v278
        %v417 = vunpack.c.l.b16 %v279
        %v418 = vunpack.c.l.b16 %v280
        %v419 = vunpack.c.l.b16 %v281
        %v420 = vunpack.c.l.b16 %v282
        %v421 = vunpack.c.l.b16 %v283
        %v422 = vunpack.c.l.b16 %v284
        %v423 = vunpack.c.l.b16 %v285
        %v424 = vunpack.c.l.b16 %v286
        %v425 = vunpack.c.l.b16 %v287
        %v426 = vunpack.c.l.b16 %v288
        %v427 = vunpack.c.l.b16 %v289
        %v428 = vunpack.c.l.b16 %v290
        %v429 = vpack.c.b16 %v366, %v365
        %v430 = vpack.c.b16 %v368, %v367
        %v431 = vpack.c.b16 %v370, %v369
        %v432 = vpack.c.b16 %v372, %v371
        %v433 = vpack.c.b16 %v374, %v373
        %v434 = vpack.c.b16 %v376, %v375
        %v435 = vpack.c.b16 %v378, %v377
        %v436 = vpack.c.b16 %v380, %v379
        %v437 = vpack.c.b16 %v382, %v381
        %v438 = vpack.c.b16 %v384, %v383
        %v439 = vpack.c.b16 %v386, %v385
        %v440 = vpack.c.b16 %v388, %v387
        %v441 = vpack.c.b16 %v390, %v389
        %v442 = vpack.c.b16 %v392, %v391
        %v443 = vpack.c.b16 %v394, %v393
        %v444 = vpack.c.b16 %v396, %v395
        %v445 = vpack.c.b16 %v398, %v397
        %v446 = vpack.c.b16 %v400, %v399
        %v447 = vpack.c.b16 %v402, %v401
        %v448 = vpack.c.b16 %v404, %v403
        %v449 = vpack.c.b16 %v406, %v405
        %v450 = vpack.c.b16 %v408, %v407
        %v451 = vpack.c.b16 %v410, %v409
        %v452 = vpack.c.b16 %v412, %v411
        %v453 = vpack.c.b16 %v414, %v413
        %v454 = vpack.c.b16 %v416, %v415
        %v455 = vpack.c.b16 %v418, %v417
        %v456 = vpack.c.b16 %v420, %v419
        %v457 = vpack.c.b16 %v422, %v421
        %v458 = vpack.c.b16 %v424, %v423
        %v459 = vpack.c.b16 %v426, %v425
        %v460 = vpack.c.b16 %v428, %v427
        %493 = vmatpush.bf16.msra.mxu0 %v436
        %494 = vmatpush.bf16.msra.mxu0 %v435
        %495 = vmatpush.bf16.msra.mxu0 %v434
        %496 = vmatpush.bf16.msra.mxu0 %v433
        %497 = vmatpush.bf16.msra.mxu0 %v432
        %498 = vmatpush.bf16.msra.mxu0 %v431
        %499 = vmatpush.bf16.msra.mxu0 %v430
        %500 = vmatpush.bf16.msra.mxu0 %v429
        %501 = vmatmul.bf16.gmra.mxu0 %v293
        %v502 = vpop.f32.mrf.mxu0
        %v503 = vadd.f32 0.0, %v502
        %v504 = vpop.f32.mrf.mxu0
        %505 = vdwg.mxu0
        %506 = vmatpush.bf16.msra.mxu0 %v444
        %507 = vmatpush.bf16.msra.mxu0 %v443
        %508 = vmatpush.bf16.msra.mxu0 %v442
        %509 = vmatpush.bf16.msra.mxu0 %v441
        %510 = vmatpush.bf16.msra.mxu0 %v440
        %511 = vmatpush.bf16.msra.mxu0 %v439
        %512 = vmatpush.bf16.msra.mxu0 %v438
        %513 = vmatpush.bf16.msra.mxu0 %v437
        %514 = vmatmul.bf16.gmra.mxu0 %v294
        %v515 = vpop.f32.mrf.mxu0
        %v516 = vadd.f32 %v503, %v515
        %v517 = vpop.f32.mrf.mxu0
        %518 = vdwg.mxu0
        %519 = vmatpush.bf16.msra.mxu0 %v452
        %520 = vmatpush.bf16.msra.mxu0 %v451
        %521 = vmatpush.bf16.msra.mxu0 %v450
        %522 = vmatpush.bf16.msra.mxu0 %v449
        %523 = vmatpush.bf16.msra.mxu0 %v448
        %524 = vmatpush.bf16.msra.mxu0 %v447
        %525 = vmatpush.bf16.msra.mxu0 %v446
        %526 = vmatpush.bf16.msra.mxu0 %v445
        %527 = vmatmul.bf16.gmra.mxu0 %v295
        %v528 = vpop.f32.mrf.mxu0
        %v529 = vadd.f32 %v516, %v528
        %v530 = vpop.f32.mrf.mxu0
        %531 = vdwg.mxu0
        %532 = vmatpush.bf16.msra.mxu0 %v460
        %533 = vmatpush.bf16.msra.mxu0 %v459
        %534 = vmatpush.bf16.msra.mxu0 %v458
        %535 = vmatpush.bf16.msra.mxu0 %v457
        %536 = vmatpush.bf16.msra.mxu0 %v456
        %537 = vmatpush.bf16.msra.mxu0 %v455
        %538 = vmatpush.bf16.msra.mxu0 %v454
        %539 = vmatpush.bf16.msra.mxu0 %v453
        %540 = vmatmul.bf16.gmra.mxu0 %v296
        %v541 = vpop.f32.mrf.mxu0
        %v542 = vadd.f32 %v529, %v541
        %v543 = vpop.f32.mrf.mxu0
        %544 = vdwg.mxu0
        %v545 = vadd.f32 %v225, %v542
        %546 = vst [vmem:[#allocation2] sm:$0x3] %v545
        %p547 = scmp.eq.s32.totalorder %s20, 3
        // Predicated region
        $region37: #{vgg_forward.3} parent=31 // pred_check
          %p548 = pneg %p547
        $region38: #{vgg_forward.3} parent=31 // pred_check_branch
          %550 = sbr.rel (%p548) target = $region40
        $region39: #{vgg_forward.3} parent=31 // pred_region
          %v551 = vld [vmem:[#allocation2] sm:$0x3]
          %v552 = vld [vmem:[%s219] sm:$0x1]
          %v554 = vperm.slane %v552, 0
          %v556 = vadd.f32 %v551, %v554
          %557 = vst [vmem:[#allocation3] sm:$0x3] %v556
        $region40: #{vgg_forward.3} parent=31 // pred_fallthru
          _
        // Predicated region
        $region41: #{vgg_forward.3} parent=31 // pred_check
          %p558 = pneg %p125
        $region42: #{vgg_forward.3} parent=31 // pred_check_branch
          %560 = sbr.rel (%p558) target = $region44
        $region43: #{vgg_forward.3} parent=31 // pred_region
          %562 = vsyncadd [#allocation4], 0
          %s563 = smul.addr %s19, 2
          %s564 = scalar_lea.hbm %s3, %s563
          %s566 = sshll.u32 [#allocation3], 4
          %s567 = int_to_ptr.vmem [resolvable:$true] %s566
          %s568 = sshll.u32 %s564, 4
          %s569 = int_to_ptr.hbm [resolvable:$true] %s568
          %571 = dma.vmem_to_hbm [thread:$0]  %s567, 32, %s569, [#allocation4]
        $region44: #{vgg_forward.3} parent=31 // pred_fallthru
          _
        // Predicated region
        $region45: #{vgg_forward.3} parent=31 // pred_check
          %p572 = pneg %p125
        $region46: #{vgg_forward.3} parent=31 // pred_check_branch
          %574 = sbr.rel (%p572) target = $region48
        $region47: #{vgg_forward.3} parent=31 // pred_region
          %576 = dma.done [#allocation4], 32
        $region48: #{vgg_forward.3} parent=31 // pred_fallthru
          _
      $region32: #{vgg_forward.3} parent=5 // pred_fallthru
        _
      %p577 = scmp.le.s32.totalorder 2, %s10
      // Predicated region
      $region49: #{vgg_forward.3} parent=5 // pred_check
        %p578 = pneg %p577
      $region50: #{vgg_forward.3} parent=5 // pred_check_branch
        %580 = sbr.rel (%p578) target = $region52
      $region51: #{vgg_forward.3} parent=5 // pred_region
        %s581 = ssub.s32 %s10, 2
      $region52: #{vgg_forward.3} parent=5 // pred_fallthru
        _
    $region6: #{vgg_forward.3} parent=1 // loop_footer
      %s14 = sadd.s32 1, %s10
    $region7: #{vgg_forward.3} parent=1 // loop_footer_branch
      %9 = sbr.rel target = $region3
    $region8: #{vgg_forward.3} parent=1 // loop_exit
      _
    %582 = vsyncpa [#allocation4], 1
    %s583 = scalar_lea.sflag [#allocation4], 1
    %584 = vsyncpa %s583, 1

// kernel: vgg_forward.2
$region0: #{vgg_forward.2}
  #allocation0 [shape = 'u32[]', space=smem, size = 0x4, offset = 0x4, fixed_abs, tag = 'smem constant byte address 0x4 - core index']
  #allocation1 [shape = 'u32[72,128]{1,0:T(1,128)}', space=vmem, size = 0x9000, scoped, tag = 'internal scratch']
  %s0 = inlined_call_operand.vmem [shape: f32[2,1,2,2,9,9], index: 0, kind: input, shape index: {}]
  %s1 = inlined_call_operand.vmem [shape: f32[32,9], index: 1, kind: input, shape index: {}]
  %s2 = inlined_call_operand.vmem [shape: bf16[2,32,8,8], index: 2, kind: output, shape index: {}]
  %s3 = sld [smem:[#allocation0]]
  $region41: #{vgg_forward.2} parent=0
    _
  %s5 = ssub.s32 1, %s3
  %s6 = scalar_select 0, %s5, %s3
  loop: start=0, step=1, limit=4
  $region2: #{vgg_forward.2} parent=0 // loop_pre_header
    _
  $region3: #{vgg_forward.2} parent=0 // loop_header
    %s8 = sphi 0, %s12
    %p9 = scmp.ge.s32.totalorder %s8, 4
    %s15 = sphi 0, %s27
    %s16 = sphi 0, %s23
    %s17 = sphi 0, %s15
    %s18 = sphi 0, %s16
    %s19 = sphi 0, %s17
    %s20 = sphi 0, %s18
    %s32 = sphi 0, %s34
    %s35 = sphi 0, %s32
    %s36 = sphi 0, %s35
    %s52 = sphi 0, %s36
    %s56 = sphi 0, %s56
    %s58 = sphi 0, %s56
    %s59 = sphi 0, %s58
    %s73 = sphi 0, %s59
    %s81 = sphi 0, %s83
    %s84 = sphi 0, %s81
    %s85 = sphi 0, %s84
    %s101 = sphi 0, %s85
  $region4: #{vgg_forward.2} parent=0 // loop_header_branch
    %11 = sbr.rel (%p9) target = $region8
  $region5: #{vgg_forward.2} parent=0 // loop_body
    %s13 = ssub.s32 %s8, 1
    %s14 = ssub.s32 %s8, 2
    %s21 = sadd.s32 1, %s16
    %p22 = scmp.ge.s32.totalorder %s21, 1
    %s23 = scalar_select %p22, 0, %s21
    %s24 = sadd.s32 1, %s15
    %s25 = scalar_select %p22, %s24, %s15
    %p26 = scmp.ge.s32.totalorder %s25, 2
    %s27 = scalar_select %p26, 0, %s25
    %s28 = ssub.s32 %s15, %s27
    %s29 = ssub.s32 %s16, %s23
    %s30 = sor.u32 %s28, %s29
    %p31 = scmp.eq.s32.totalorder %s30, 0
    %s33 = sadd.s32 %s32, 1
    %s34 = scalar_select %p31, %s32, %s33
    %p37 = pneg %p31
    %p38 = scmp.eq.s32.totalorder %s8, 1
    %p39 = por %p37, %p38
    %p40 = scmp.ne.s32.totalorder %s32, %s35
    %p41 = scmp.eq.s32.totalorder %s8, 0
    %p42 = por %p40, %p41
    %p43 = scmp.ne.s32.totalorder %s32, %s35
    %p44 = scmp.eq.s32.totalorder %s13, 1
    %p45 = por %p43, %p44
    %p46 = scmp.ne.s32.totalorder %s35, %s36
    %p47 = scmp.eq.s32.totalorder %s13, 0
    %p48 = por %p46, %p47
    %p49 = scmp.ne.s32.totalorder %s35, %s36
    %p50 = scmp.eq.s32.totalorder %s14, 1
    %p51 = por %p49, %p50
    %p53 = scmp.ne.s32.totalorder %s36, %s52
    %p54 = scmp.eq.s32.totalorder %s14, 0
    %p55 = por %p53, %p54
    %s57 = sadd.s32 %s56, 1
    %p60 = scmp.eq.s32.totalorder %s8, 1
    %p61 = scmp.ne.s32.totalorder %s56, %s58
    %p62 = scmp.eq.s32.totalorder %s8, 0
    %p63 = por %p61, %p62
    %p64 = scmp.ne.s32.totalorder %s56, %s58
    %p65 = scmp.eq.s32.totalorder %s13, 1
    %p66 = por %p64, %p65
    %p67 = scmp.ne.s32.totalorder %s58, %s59
    %p68 = scmp.eq.s32.totalorder %s13, 0
    %p69 = por %p67, %p68
    %p70 = scmp.ne.s32.totalorder %s58, %s59
    %p71 = scmp.eq.s32.totalorder %s14, 1
    %p72 = por %p70, %p71
    %p74 = scmp.ne.s32.totalorder %s59, %s73
    %p75 = scmp.eq.s32.totalorder %s14, 0
    %p76 = por %p74, %p75
    %s77 = ssub.s32 %s15, %s27
    %s78 = ssub.s32 %s16, %s23
    %s79 = sor.u32 %s77, %s78
    %p80 = scmp.eq.s32.totalorder %s79, 0
    %s82 = sadd.s32 %s81, 1
    %s83 = scalar_select %p80, %s81, %s82
    %p86 = pneg %p80
    %p87 = scmp.eq.s32.totalorder %s8, 1
    %p88 = por %p86, %p87
    %p89 = scmp.ne.s32.totalorder %s81, %s84
    %p90 = scmp.eq.s32.totalorder %s8, 0
    %p91 = por %p89, %p90
    %p92 = scmp.ne.s32.totalorder %s81, %s84
    %p93 = scmp.eq.s32.totalorder %s13, 1
    %p94 = por %p92, %p93
    %p95 = scmp.ne.s32.totalorder %s84, %s85
    %p96 = scmp.eq.s32.totalorder %s13, 0
    %p97 = por %p95, %p96
    %p98 = scmp.ne.s32.totalorder %s84, %s85
    %p99 = scmp.eq.s32.totalorder %s14, 1
    %p100 = por %p98, %p99
    %p102 = scmp.ne.s32.totalorder %s85, %s101
    %p103 = scmp.eq.s32.totalorder %s14, 0
    %p104 = por %p102, %p103
    %p105 = scmp.le.s32.totalorder 1, %s8
    %p106 = scmp.lt.s32.totalorder %s8, 3
    %p107 = pnand %p105, %p106
    %p108 = pneg %p107
    // Predicated region
    $region9: #{vgg_forward.2} parent=5 // pred_check
      _
    $region10: #{vgg_forward.2} parent=5 // pred_check_branch
      %110 = sbr.rel (%p107) target = $region12
    $region11: #{vgg_forward.2} parent=5 // pred_region
      %s111 = ssub.s32 %s8, 1
      // Predicated region
      $region13: #{vgg_forward.2} parent=11 // pred_check
        %p112 = pneg %p69
      $region14: #{vgg_forward.2} parent=11 // pred_check_branch
        %114 = sbr.rel (%p112) target = $region16
      $region15: #{vgg_forward.2} parent=11 // pred_region
        _
      $region16: #{vgg_forward.2} parent=11 // pred_fallthru
        _
    $region12: #{vgg_forward.2} parent=5 // pred_fallthru
      _
    %p115 = scmp.lt.s32.totalorder %s8, 2
    // Predicated region
    $region17: #{vgg_forward.2} parent=5 // pred_check
      %p116 = pneg %p115
    $region18: #{vgg_forward.2} parent=5 // pred_check_branch
      %118 = sbr.rel (%p116) target = $region20
    $region19: #{vgg_forward.2} parent=5 // pred_region
      // Predicated region
      $region21: #{vgg_forward.2} parent=19 // pred_check
        %p119 = pneg %p42
      $region22: #{vgg_forward.2} parent=19 // pred_check_branch
        %121 = sbr.rel (%p119) target = $region24
      $region23: #{vgg_forward.2} parent=19 // pred_region
        %p122 = scmp.lt.s32.totalorder %s15, 1
        %s123 = scalar_select %p122, %s15, 1
        %p124 = scmp.lt.s32.totalorder %s16, 0
        %s125 = scalar_select %p124, %s16, 0
        %s126 = smul.addr %s125, 8
        %s127 = smul.addr %s123, 8
        %s128 = sadd.s32 %s126, %s127
        %s129 = smul.addr %s128, 8
        %s130 = scalar_lea.vmem %s0, %s129
      $region24: #{vgg_forward.2} parent=19 // pred_fallthru
        _
    $region20: #{vgg_forward.2} parent=5 // pred_fallthru
      _
    %p131 = scmp.le.s32.totalorder 1, %s8
    %p132 = scmp.lt.s32.totalorder %s8, 3
    %p133 = pnand %p131, %p132
    %p134 = pneg %p133
    // Predicated region
    $region25: #{vgg_forward.2} parent=5 // pred_check
      _
    $region26: #{vgg_forward.2} parent=5 // pred_check_branch
      %136 = sbr.rel (%p133) target = $region28
    $region27: #{vgg_forward.2} parent=5 // pred_region
      %s137 = ssub.s32 %s8, 1
      %p138 = scmp.lt.s32.totalorder %s17, 1
      %s139 = scalar_select %p138, %s17, 1
      %p140 = scmp.lt.s32.totalorder %s18, 0
      %s141 = scalar_select %p140, %s18, 0
      %s142 = smul.addr %s141, 8
      %s143 = smul.addr %s139, 8
      %s144 = sadd.s32 %s142, %s143
      %s145 = smul.addr %s144, 8
      %s146 = scalar_lea.vmem %s0, %s145
      %p147 = pneg %p48
      %p148 = pneg %p45
      %p149 = pneg %p69
      %p150 = pneg %p66
      %p151 = pneg %p97
      %p152 = pneg %p94
      %p153 = scmp.lt.s32.totalorder %s17, 1
      %s154 = scalar_select %p153, %s17, 1
      %p155 = scmp.lt.s32.totalorder %s18, 0
      %s156 = scalar_select %p155, %s18, 0
      %s157 = smul.addr %s154, 32
      %s158 = sadd.s32 %s156, %s157
      %s159 = smul.addr %s158, 4
      %s160 = scalar_lea.vmem %s2, %s159
      %p161 = scmp.lt.s32.totalorder %s17, 1
      %s162 = scalar_select %p161, %s17, 1
      %p163 = scmp.lt.s32.totalorder %s18, 0
      %s164 = scalar_select %p163, %s18, 0
      %s165 = smul.addr %s164, 8
      %s166 = smul.addr %s162, 8
      %s167 = sadd.s32 %s165, %s166
      %s168 = smul.addr %s167, 8
      %s169 = scalar_lea.vmem %s0, %s168
      %p170 = scmp.lt.s32.totalorder %s17, 1
      %s171 = scalar_select %p170, %s17, 1
      %p172 = scmp.lt.s32.totalorder %s18, 0
      %s173 = scalar_select %p172, %s18, 0
      %s174 = smul.addr %s171, 32
      %s175 = sadd.s32 %s173, %s174
      %s176 = smul.addr %s175, 4
      %s177 = scalar_lea.vmem %s2, %s176
      %v178 = vld [vmem:[%s1] sm:$0xff]
      %v179 = vld [vmem:[%s1 + $0x8] sm:$0xff]
      %v180 = vld [vmem:[%s1 + $0x10] sm:$0xff]
      %v181 = vld [vmem:[%s1 + $0x18] sm:$0xff]
      %v182 = vld [vmem:[%s169] sm:$0xff]
      %v183 = vld [vmem:[%s169 + $0x8] sm:$0x1]
      %s184 = scalar_lea.vmem %s169, 16
      %v185 = vld [vmem:[%s184] sm:$0xff]
      %v186 = vld [vmem:[%s184 + $0x8] sm:$0x1]
      %s187 = scalar_lea.vmem %s169, 32
      %v188 = vld [vmem:[%s187] sm:$0xff]
      %v189 = vld [vmem:[%s187 + $0x8] sm:$0x1]
      %s190 = scalar_lea.vmem %s169, 48
      %v191 = vld [vmem:[%s190] sm:$0xff]
      %v192 = vld [vmem:[%s190 + $0x8] sm:$0x1]
      %v197 = vrot.slane %v178, 1
      %v198 = vrot.slane %v178, 2
      %v199 = vrot.slane %v178, 3
      %v200 = vrot.slane %v178, 4
      %v201 = vrot.slane %v178, 5
      %v202 = vrot.slane %v178, 6
      %v203 = vrot.slane %v178, 7
      %v204 = vrot.slane %v179, 1
      %v205 = vrot.slane %v179, 2
      %v206 = vrot.slane %v179, 3
      %v207 = vrot.slane %v179, 4
      %v208 = vrot.slane %v179, 5
      %v209 = vrot.slane %v179, 6
      %v210 = vrot.slane %v179, 7
      %v211 = vrot.slane %v180, 1
      %v212 = vrot.slane %v180, 2
      %v213 = vrot.slane %v180, 3
      %v214 = vrot.slane %v180, 4
      %v215 = vrot.slane %v180, 5
      %v216 = vrot.slane %v180, 6
      %v217 = vrot.slane %v180, 7
      %v218 = vrot.slane %v181, 1
      %v219 = vrot.slane %v181, 2
      %v220 = vrot.slane %v181, 3
      %v221 = vrot.slane %v181, 4
      %v222 = vrot.slane %v181, 5
      %v223 = vrot.slane %v181, 6
      %v224 = vrot.slane %v181, 7
      %v225 = vperm.slane %v178, 0
      %v226 = vperm.slane %v197, 0
      %v227 = vperm.slane %v198, 0
      %v228 = vperm.slane %v199, 0
      %v229 = vperm.slane %v200, 0
      %v230 = vperm.slane %v201, 0
      %v231 = vperm.slane %v202, 0
      %v232 = vperm.slane %v203, 0
      %v233 = vperm.slane %v179, 0
      %v234 = vperm.slane %v204, 0
      %v235 = vperm.slane %v205, 0
      %v236 = vperm.slane %v206, 0
      %v237 = vperm.slane %v207, 0
      %v238 = vperm.slane %v208, 0
      %v239 = vperm.slane %v209, 0
      %v240 = vperm.slane %v210, 0
      %v241 = vperm.slane %v180, 0
      %v242 = vperm.slane %v211, 0
      %v243 = vperm.slane %v212, 0
      %v244 = vperm.slane %v213, 0
      %v245 = vperm.slane %v214, 0
      %v246 = vperm.slane %v215, 0
      %v247 = vperm.slane %v216, 0
      %v248 = vperm.slane %v217, 0
      %v249 = vperm.slane %v181, 0
      %v250 = vperm.slane %v218, 0
      %v251 = vperm.slane %v219, 0
      %v252 = vperm.slane %v220, 0
      %v253 = vperm.slane %v221, 0
      %v254 = vperm.slane %v222, 0
      %v255 = vperm.slane %v223, 0
      %v256 = vperm.slane %v224, 0
      %257 = vset.pattern.permute.xlu0 0
      %258 = vperm.xlu0 %257, %v225
      %v259 = vpop.permute.xlu0 %258
      %261 = vset.pattern.permute.xlu0 0
      %262 = vperm.xlu0 %261, %v226
      %v263 = vpop.permute.xlu0 %262
      %265 = vset.pattern.permute.xlu0 0
      %266 = vperm.xlu0 %265, %v227
      %v267 = vpop.permute.xlu0 %266
      %269 = vset.pattern.permute.xlu0 0
      %270 = vperm.xlu0 %269, %v228
      %v271 = vpop.permute.xlu0 %270
      %273 = vset.pattern.permute.xlu0 0
      %274 = vperm.xlu0 %273, %v229
      %v275 = vpop.permute.xlu0 %274
      %277 = vset.pattern.permute.xlu0 0
      %278 = vperm.xlu0 %277, %v230
      %v279 = vpop.permute.xlu0 %278
      %281 = vset.pattern.permute.xlu0 0
      %282 = vperm.xlu0 %281, %v231
      %v283 = vpop.permute.xlu0 %282
      %285 = vset.pattern.permute.xlu0 0
      %286 = vperm.xlu0 %285, %v232
      %v287 = vpop.permute.xlu0 %286
      %289 = vset.pattern.permute.xlu0 0
      %290 = vperm.xlu0 %289, %v233
      %v291 = vpop.permute.xlu0 %290
      %293 = vset.pattern.permute.xlu0 0
      %294 = vperm.xlu0 %293, %v234
      %v295 = vpop.permute.xlu0 %294
      %297 = vset.pattern.permute.xlu0 0
      %298 = vperm.xlu0 %297, %v235
      %v299 = vpop.permute.xlu0 %298
      %301 = vset.pattern.permute.xlu0 0
      %302 = vperm.xlu0 %301, %v236
      %v303 = vpop.permute.xlu0 %302
      %305 = vset.pattern.permute.xlu0 0
      %306 = vperm.xlu0 %305, %v237
      %v307 = vpop.permute.xlu0 %306
      %309 = vset.pattern.permute.xlu0 0
      %310 = vperm.xlu0 %309, %v238
      %v311 = vpop.permute.xlu0 %310
      %313 = vset.pattern.permute.xlu0 0
      %314 = vperm.xlu0 %313, %v239
      %v315 = vpop.permute.xlu0 %314
      %317 = vset.pattern.permute.xlu0 0
      %318 = vperm.xlu0 %317, %v240
      %v319 = vpop.permute.xlu0 %318
      %321 = vset.pattern.permute.xlu0 0
      %322 = vperm.xlu0 %321, %v241
      %v323 = vpop.permute.xlu0 %322
      %325 = vset.pattern.permute.xlu0 0
      %326 = vperm.xlu0 %325, %v242
      %v327 = vpop.permute.xlu0 %326
      %329 = vset.pattern.permute.xlu0 0
      %330 = vperm.xlu0 %329, %v243
      %v331 = vpop.permute.xlu0 %330
      %333 = vset.pattern.permute.xlu0 0
      %334 = vperm.xlu0 %333, %v244
      %v335 = vpop.permute.xlu0 %334
      %337 = vset.pattern.permute.xlu0 0
      %338 = vperm.xlu0 %337, %v245
      %v339 = vpop.permute.xlu0 %338
      %341 = vset.pattern.permute.xlu0 0
      %342 = vperm.xlu0 %341, %v246
      %v343 = vpop.permute.xlu0 %342
      %345 = vset.pattern.permute.xlu0 0
      %346 = vperm.xlu0 %345, %v247
      %v347 = vpop.permute.xlu0 %346
      %349 = vset.pattern.permute.xlu0 0
      %350 = vperm.xlu0 %349, %v248
      %v351 = vpop.permute.xlu0 %350
      %353 = vset.pattern.permute.xlu0 0
      %354 = vperm.xlu0 %353, %v249
      %v355 = vpop.permute.xlu0 %354
      %357 = vset.pattern.permute.xlu0 0
      %358 = vperm.xlu0 %357, %v250
      %v359 = vpop.permute.xlu0 %358
      %361 = vset.pattern.permute.xlu0 0
      %362 = vperm.xlu0 %361, %v251
      %v363 = vpop.permute.xlu0 %362
      %365 = vset.pattern.permute.xlu0 0
      %366 = vperm.xlu0 %365, %v252
      %v367 = vpop.permute.xlu0 %366
      %369 = vset.pattern.permute.xlu0 0
      %370 = vperm.xlu0 %369, %v253
      %v371 = vpop.permute.xlu0 %370
      %373 = vset.pattern.permute.xlu0 0
      %374 = vperm.xlu0 %373, %v254
      %v375 = vpop.permute.xlu0 %374
      %377 = vset.pattern.permute.xlu0 0
      %378 = vperm.xlu0 %377, %v255
      %v379 = vpop.permute.xlu0 %378
      %381 = vset.pattern.permute.xlu0 0
      %382 = vperm.xlu0 %381, %v256
      %v383 = vpop.permute.xlu0 %382
      %v385 = vmul.f32 %v259, %v182
      %v386 = vmul.f32 %v263, %v182
      %v387 = vmul.f32 %v267, %v182
      %v388 = vmul.f32 %v271, %v182
      %v389 = vmul.f32 %v275, %v182
      %v390 = vmul.f32 %v279, %v182
      %v391 = vmul.f32 %v283, %v182
      %v392 = vmul.f32 %v287, %v182
      %v393 = vmul.f32 %v291, %v182
      %v394 = vmul.f32 %v295, %v182
      %v395 = vmul.f32 %v299, %v182
      %v396 = vmul.f32 %v303, %v182
      %v397 = vmul.f32 %v307, %v182
      %v398 = vmul.f32 %v311, %v182
      %v399 = vmul.f32 %v315, %v182
      %v400 = vmul.f32 %v319, %v182
      %v401 = vmul.f32 %v323, %v182
      %v402 = vmul.f32 %v327, %v182
      %v403 = vmul.f32 %v331, %v182
      %v404 = vmul.f32 %v335, %v182
      %v405 = vmul.f32 %v339, %v182
      %v406 = vmul.f32 %v343, %v182
      %v407 = vmul.f32 %v347, %v182
      %v408 = vmul.f32 %v351, %v182
      %v409 = vmul.f32 %v355, %v182
      %v410 = vmul.f32 %v359, %v182
      %v411 = vmul.f32 %v363, %v182
      %v412 = vmul.f32 %v367, %v182
      %v413 = vmul.f32 %v371, %v182
      %v414 = vmul.f32 %v375, %v182
      %v415 = vmul.f32 %v379, %v182
      %v416 = vmul.f32 %v383, %v182
      %417 = vset.pattern.permute.xlu0 1
      %418 = vperm.xlu0 %417, %v225
      %v419 = vpop.permute.xlu0 %418
      %421 = vset.pattern.permute.xlu0 1
      %422 = vperm.xlu0 %421, %v226
      %v423 = vpop.permute.xlu0 %422
      %425 = vset.pattern.permute.xlu0 1
      %426 = vperm.xlu0 %425, %v227
      %v427 = vpop.permute.xlu0 %426
      %429 = vset.pattern.permute.xlu0 1
      %430 = vperm.xlu0 %429, %v228
      %v431 = vpop.permute.xlu0 %430
      %433 = vset.pattern.permute.xlu0 1
      %434 = vperm.xlu0 %433, %v229
      %v435 = vpop.permute.xlu0 %434
      %437 = vset.pattern.permute.xlu0 1
      %438 = vperm.xlu0 %437, %v230
      %v439 = vpop.permute.xlu0 %438
      %441 = vset.pattern.permute.xlu0 1
      %442 = vperm.xlu0 %441, %v231
      %v443 = vpop.permute.xlu0 %442
      %445 = vset.pattern.permute.xlu0 1
      %446 = vperm.xlu0 %445, %v232
      %v447 = vpop.permute.xlu0 %446
      %449 = vset.pattern.permute.xlu0 1
      %450 = vperm.xlu0 %449, %v233
      %v451 = vpop.permute.xlu0 %450
      %453 = vset.pattern.permute.xlu0 1
      %454 = vperm.xlu0 %453, %v234
      %v455 = vpop.permute.xlu0 %454
      %457 = vset.pattern.permute.xlu0 1
      %458 = vperm.xlu0 %457, %v235
      %v459 = vpop.permute.xlu0 %458
      %461 = vset.pattern.permute.xlu0 1
      %462 = vperm.xlu0 %461, %v236
      %v463 = vpop.permute.xlu0 %462
      %465 = vset.pattern.permute.xlu0 1
      %466 = vperm.xlu0 %465, %v237
      %v467 = vpop.permute.xlu0 %466
      %469 = vset.pattern.permute.xlu0 1
      %470 = vperm.xlu0 %469, %v238
      %v471 = vpop.permute.xlu0 %470
      %473 = vset.pattern.permute.xlu0 1
      %474 = vperm.xlu0 %473, %v239
      %v475 = vpop.permute.xlu0 %474
      %477 = vset.pattern.permute.xlu0 1
      %478 = vperm.xlu0 %477, %v240
      %v479 = vpop.permute.xlu0 %478
      %481 = vset.pattern.permute.xlu0 1
      %482 = vperm.xlu0 %481, %v241
      %v483 = vpop.permute.xlu0 %482
      %485 = vset.pattern.permute.xlu0 1
      %486 = vperm.xlu0 %485, %v242
      %v487 = vpop.permute.xlu0 %486
      %489 = vset.pattern.permute.xlu0 1
      %490 = vperm.xlu0 %489, %v243
      %v491 = vpop.permute.xlu0 %490
      %493 = vset.pattern.permute.xlu0 1
      %494 = vperm.xlu0 %493, %v244
      %v495 = vpop.permute.xlu0 %494
      %497 = vset.pattern.permute.xlu0 1
      %498 = vperm.xlu0 %497, %v245
      %v499 = vpop.permute.xlu0 %498
      %501 = vset.pattern.permute.xlu0 1
      %502 = vperm.xlu0 %501, %v246
      %v503 = vpop.permute.xlu0 %502
      %505 = vset.pattern.permute.xlu0 1
      %506 = vperm.xlu0 %505, %v247
      %v507 = vpop.permute.xlu0 %506
      %509 = vset.pattern.permute.xlu0 1
      %510 = vperm.xlu0 %509, %v248
      %v511 = vpop.permute.xlu0 %510
      %513 = vset.pattern.permute.xlu0 1
      %514 = vperm.xlu0 %513, %v249
      %v515 = vpop.permute.xlu0 %514
      %517 = vset.pattern.permute.xlu0 1
      %518 = vperm.xlu0 %517, %v250
      %v519 = vpop.permute.xlu0 %518
      %521 = vset.pattern.permute.xlu0 1
      %522 = vperm.xlu0 %521, %v251
      %v523 = vpop.permute.xlu0 %522
      %525 = vset.pattern.permute.xlu0 1
      %526 = vperm.xlu0 %525, %v252
      %v527 = vpop.permute.xlu0 %526
      %529 = vset.pattern.permute.xlu0 1
      %530 = vperm.xlu0 %529, %v253
      %v531 = vpop.permute.xlu0 %530
      %533 = vset.pattern.permute.xlu0 1
      %534 = vperm.xlu0 %533, %v254
      %v535 = vpop.permute.xlu0 %534
      %537 = vset.pattern.permute.xlu0 1
      %538 = vperm.xlu0 %537, %v255
      %v539 = vpop.permute.xlu0 %538
      %541 = vset.pattern.permute.xlu0 1
      %542 = vperm.xlu0 %541, %v256
      %v543 = vpop.permute.xlu0 %542
      %v545 = vmul.f32 %v419, %v185
      %v546 = vmul.f32 %v423, %v185
      %v547 = vmul.f32 %v427, %v185
      %v548 = vmul.f32 %v431, %v185
      %v549 = vmul.f32 %v435, %v185
      %v550 = vmul.f32 %v439, %v185
      %v551 = vmul.f32 %v443, %v185
      %v552 = vmul.f32 %v447, %v185
      %v553 = vmul.f32 %v451, %v185
      %v554 = vmul.f32 %v455, %v185
      %v555 = vmul.f32 %v459, %v185
      %v556 = vmul.f32 %v463, %v185
      %v557 = vmul.f32 %v467, %v185
      %v558 = vmul.f32 %v471, %v185
      %v559 = vmul.f32 %v475, %v185
      %v560 = vmul.f32 %v479, %v185
      %v561 = vmul.f32 %v483, %v185
      %v562 = vmul.f32 %v487, %v185
      %v563 = vmul.f32 %v491, %v185
      %v564 = vmul.f32 %v495, %v185
      %v565 = vmul.f32 %v499, %v185
      %v566 = vmul.f32 %v503, %v185
      %v567 = vmul.f32 %v507, %v185
      %v568 = vmul.f32 %v511, %v185
      %v569 = vmul.f32 %v515, %v185
      %v570 = vmul.f32 %v519, %v185
      %v571 = vmul.f32 %v523, %v185
      %v572 = vmul.f32 %v527, %v185
      %v573 = vmul.f32 %v531, %v185
      %v574 = vmul.f32 %v535, %v185
      %v575 = vmul.f32 %v539, %v185
      %v576 = vmul.f32 %v543, %v185
      %v577 = vadd.f32 %v385, %v545
      %v578 = vadd.f32 %v386, %v546
      %v579 = vadd.f32 %v387, %v547
      %v580 = vadd.f32 %v388, %v548
      %v581 = vadd.f32 %v389, %v549
      %v582 = vadd.f32 %v390, %v550
      %v583 = vadd.f32 %v391, %v551
      %v584 = vadd.f32 %v392, %v552
      %v585 = vadd.f32 %v393, %v553
      %v586 = vadd.f32 %v394, %v554
      %v587 = vadd.f32 %v395, %v555
      %v588 = vadd.f32 %v396, %v556
      %v589 = vadd.f32 %v397, %v557
      %v590 = vadd.f32 %v398, %v558
      %v591 = vadd.f32 %v399, %v559
      %v592 = vadd.f32 %v400, %v560
      %v593 = vadd.f32 %v401, %v561
      %v594 = vadd.f32 %v402, %v562
      %v595 = vadd.f32 %v403, %v563
      %v596 = vadd.f32 %v404, %v564
      %v597 = vadd.f32 %v405, %v565
      %v598 = vadd.f32 %v406, %v566
      %v599 = vadd.f32 %v407, %v567
      %v600 = vadd.f32 %v408, %v568
      %v601 = vadd.f32 %v409, %v569
      %v602 = vadd.f32 %v410, %v570
      %v603 = vadd.f32 %v411, %v571
      %v604 = vadd.f32 %v412, %v572
      %v605 = vadd.f32 %v413, %v573
      %v606 = vadd.f32 %v414, %v574
      %v607 = vadd.f32 %v415, %v575
      %v608 = vadd.f32 %v416, %v576
      %609 = vset.pattern.permute.xlu0 2
      %610 = vperm.xlu0 %609, %v225
      %v611 = vpop.permute.xlu0 %610
      %613 = vset.pattern.permute.xlu0 2
      %614 = vperm.xlu0 %613, %v226
      %v615 = vpop.permute.xlu0 %614
      %617 = vset.pattern.permute.xlu0 2
      %618 = vperm.xlu0 %617, %v227
      %v619 = vpop.permute.xlu0 %618
      %621 = vset.pattern.permute.xlu0 2
      %622 = vperm.xlu0 %621, %v228
      %v623 = vpop.permute.xlu0 %622
      %625 = vset.pattern.permute.xlu0 2
      %626 = vperm.xlu0 %625, %v229
      %v627 = vpop.permute.xlu0 %626
      %629 = vset.pattern.permute.xlu0 2
      %630 = vperm.xlu0 %629, %v230
      %v631 = vpop.permute.xlu0 %630
      %633 = vset.pattern.permute.xlu0 2
      %634 = vperm.xlu0 %633, %v231
      %v635 = vpop.permute.xlu0 %634
      %637 = vset.pattern.permute.xlu0 2
      %638 = vperm.xlu0 %637, %v232
      %v639 = vpop.permute.xlu0 %638
      %641 = vset.pattern.permute.xlu0 2
      %642 = vperm.xlu0 %641, %v233
      %v643 = vpop.permute.xlu0 %642
      %645 = vset.pattern.permute.xlu0 2
      %646 = vperm.xlu0 %645, %v234
      %v647 = vpop.permute.xlu0 %646
      %649 = vset.pattern.permute.xlu0 2
      %650 = vperm.xlu0 %649, %v235
      %v651 = vpop.permute.xlu0 %650
      %653 = vset.pattern.permute.xlu0 2
      %654 = vperm.xlu0 %653, %v236
      %v655 = vpop.permute.xlu0 %654
      %657 = vset.pattern.permute.xlu0 2
      %658 = vperm.xlu0 %657, %v237
      %v659 = vpop.permute.xlu0 %658
      %661 = vset.pattern.permute.xlu0 2
      %662 = vperm.xlu0 %661, %v238
      %v663 = vpop.permute.xlu0 %662
      %665 = vset.pattern.permute.xlu0 2
      %666 = vperm.xlu0 %665, %v239
      %v667 = vpop.permute.xlu0 %666
      %669 = vset.pattern.permute.xlu0 2
      %670 = vperm.xlu0 %669, %v240
      %v671 = vpop.permute.xlu0 %670
      %673 = vset.pattern.permute.xlu0 2
      %674 = vperm.xlu0 %673, %v241
      %v675 = vpop.permute.xlu0 %674
      %677 = vset.pattern.permute.xlu0 2
      %678 = vperm.xlu0 %677, %v242
      %v679 = vpop.permute.xlu0 %678
      %681 = vset.pattern.permute.xlu0 2
      %682 = vperm.xlu0 %681, %v243
      %v683 = vpop.permute.xlu0 %682
      %685 = vset.pattern.permute.xlu0 2
      %686 = vperm.xlu0 %685, %v244
      %v687 = vpop.permute.xlu0 %686
      %689 = vset.pattern.permute.xlu0 2
      %690 = vperm.xlu0 %689, %v245
      %v691 = vpop.permute.xlu0 %690
      %693 = vset.pattern.permute.xlu0 2
      %694 = vperm.xlu0 %693, %v246
      %v695 = vpop.permute.xlu0 %694
      %697 = vset.pattern.permute.xlu0 2
      %698 = vperm.xlu0 %697, %v247
      %v699 = vpop.permute.xlu0 %698
      %701 = vset.pattern.permute.xlu0 2
      %702 = vperm.xlu0 %701, %v248
      %v703 = vpop.permute.xlu0 %702
      %705 = vset.pattern.permute.xlu0 2
      %706 = vperm.xlu0 %705, %v249
      %v707 = vpop.permute.xlu0 %706
      %709 = vset.pattern.permute.xlu0 2
      %710 = vperm.xlu0 %709, %v250
      %v711 = vpop.permute.xlu0 %710
      %713 = vset.pattern.permute.xlu0 2
      %714 = vperm.xlu0 %713, %v251
      %v715 = vpop.permute.xlu0 %714
      %717 = vset.pattern.permute.xlu0 2
      %718 = vperm.xlu0 %717, %v252
      %v719 = vpop.permute.xlu0 %718
      %721 = vset.pattern.permute.xlu0 2
      %722 = vperm.xlu0 %721, %v253
      %v723 = vpop.permute.xlu0 %722
      %725 = vset.pattern.permute.xlu0 2
      %726 = vperm.xlu0 %725, %v254
      %v727 = vpop.permute.xlu0 %726
      %729 = vset.pattern.permute.xlu0 2
      %730 = vperm.xlu0 %729, %v255
      %v731 = vpop.permute.xlu0 %730
      %733 = vset.pattern.permute.xlu0 2
      %734 = vperm.xlu0 %733, %v256
      %v735 = vpop.permute.xlu0 %734
      %v737 = vmul.f32 %v611, %v182
      %v738 = vmul.f32 %v615, %v182
      %v739 = vmul.f32 %v619, %v182
      %v740 = vmul.f32 %v623, %v182
      %v741 = vmul.f32 %v627, %v182
      %v742 = vmul.f32 %v631, %v182
      %v743 = vmul.f32 %v635, %v182
      %v744 = vmul.f32 %v639, %v182
      %v745 = vmul.f32 %v643, %v182
      %v746 = vmul.f32 %v647, %v182
      %v747 = vmul.f32 %v651, %v182
      %v748 = vmul.f32 %v655, %v182
      %v749 = vmul.f32 %v659, %v182
      %v750 = vmul.f32 %v663, %v182
      %v751 = vmul.f32 %v667, %v182
      %v752 = vmul.f32 %v671, %v182
      %v753 = vmul.f32 %v675, %v182
      %v754 = vmul.f32 %v679, %v182
      %v755 = vmul.f32 %v683, %v182
      %v756 = vmul.f32 %v687, %v182
      %v757 = vmul.f32 %v691, %v182
      %v758 = vmul.f32 %v695, %v182
      %v759 = vmul.f32 %v699, %v182
      %v760 = vmul.f32 %v703, %v182
      %v761 = vmul.f32 %v707, %v182
      %v762 = vmul.f32 %v711, %v182
      %v763 = vmul.f32 %v715, %v182
      %v764 = vmul.f32 %v719, %v182
      %v765 = vmul.f32 %v723, %v182
      %v766 = vmul.f32 %v727, %v182
      %v767 = vmul.f32 %v731, %v182
      %v768 = vmul.f32 %v735, %v182
      %801 = vrot.lane.b32.xlu0 %v737, 127
      %v802 = vpop.permute.xlu0 %801
      %803 = vrot.lane.b32.xlu0 %v738, 127
      %v804 = vpop.permute.xlu0 %803
      %805 = vrot.lane.b32.xlu0 %v739, 127
      %v806 = vpop.permute.xlu0 %805
      %807 = vrot.lane.b32.xlu0 %v740, 127
      %v808 = vpop.permute.xlu0 %807
      %809 = vrot.lane.b32.xlu0 %v741, 127
      %v810 = vpop.permute.xlu0 %809
      %811 = vrot.lane.b32.xlu0 %v742, 127
      %v812 = vpop.permute.xlu0 %811
      %813 = vrot.lane.b32.xlu0 %v743, 127
      %v814 = vpop.permute.xlu0 %813
      %815 = vrot.lane.b32.xlu0 %v744, 127
      %v816 = vpop.permute.xlu0 %815
      %817 = vrot.lane.b32.xlu0 %v745, 127
      %v818 = vpop.permute.xlu0 %817
      %819 = vrot.lane.b32.xlu0 %v746, 127
      %v820 = vpop.permute.xlu0 %819
      %821 = vrot.lane.b32.xlu0 %v747, 127
      %v822 = vpop.permute.xlu0 %821
      %823 = vrot.lane.b32.xlu0 %v748, 127
      %v824 = vpop.permute.xlu0 %823
      %825 = vrot.lane.b32.xlu0 %v749, 127
      %v826 = vpop.permute.xlu0 %825
      %827 = vrot.lane.b32.xlu0 %v750, 127
      %v828 = vpop.permute.xlu0 %827
      %829 = vrot.lane.b32.xlu0 %v751, 127
      %v830 = vpop.permute.xlu0 %829
      %831 = vrot.lane.b32.xlu0 %v752, 127
      %v832 = vpop.permute.xlu0 %831
      %833 = vrot.lane.b32.xlu0 %v753, 127
      %v834 = vpop.permute.xlu0 %833
      %835 = vrot.lane.b32.xlu0 %v754, 127
      %v836 = vpop.permute.xlu0 %835
      %837 = vrot.lane.b32.xlu0 %v755, 127
      %v838 = vpop.permute.xlu0 %837
      %839 = vrot.lane.b32.xlu0 %v756, 127
      %v840 = vpop.permute.xlu0 %839
      %841 = vrot.lane.b32.xlu0 %v757, 127
      %v842 = vpop.permute.xlu0 %841
      %843 = vrot.lane.b32.xlu0 %v758, 127
      %v844 = vpop.permute.xlu0 %843
      %845 = vrot.lane.b32.xlu0 %v759, 127
      %v846 = vpop.permute.xlu0 %845
      %847 = vrot.lane.b32.xlu0 %v760, 127
      %v848 = vpop.permute.xlu0 %847
      %849 = vrot.lane.b32.xlu0 %v761, 127
      %v850 = vpop.permute.xlu0 %849
      %851 = vrot.lane.b32.xlu0 %v762, 127
      %v852 = vpop.permute.xlu0 %851
      %853 = vrot.lane.b32.xlu0 %v763, 127
      %v854 = vpop.permute.xlu0 %853
      %855 = vrot.lane.b32.xlu0 %v764, 127
      %v856 = vpop.permute.xlu0 %855
      %857 = vrot.lane.b32.xlu0 %v765, 127
      %v858 = vpop.permute.xlu0 %857
      %859 = vrot.lane.b32.xlu0 %v766, 127
      %v860 = vpop.permute.xlu0 %859
      %861 = vrot.lane.b32.xlu0 %v767, 127
      %v862 = vpop.permute.xlu0 %861
      %863 = vrot.lane.b32.xlu0 %v768, 127
      %v864 = vpop.permute.xlu0 %863
      %v897 = vadd.f32 %v577, %v802
      %v898 = vadd.f32 %v578, %v804
      %v899 = vadd.f32 %v579, %v806
      %v900 = vadd.f32 %v580, %v808
      %v901 = vadd.f32 %v581, %v810
      %v902 = vadd.f32 %v582, %v812
      %v903 = vadd.f32 %v583, %v814
      %v904 = vadd.f32 %v584, %v816
      %v905 = vadd.f32 %v585, %v818
      %v906 = vadd.f32 %v586, %v820
      %v907 = vadd.f32 %v587, %v822
      %v908 = vadd.f32 %v588, %v824
      %v909 = vadd.f32 %v589, %v826
      %v910 = vadd.f32 %v590, %v828
      %v911 = vadd.f32 %v591, %v830
      %v912 = vadd.f32 %v592, %v832
      %v913 = vadd.f32 %v593, %v834
      %v914 = vadd.f32 %v594, %v836
      %v915 = vadd.f32 %v595, %v838
      %v916 = vadd.f32 %v596, %v840
      %v917 = vadd.f32 %v597, %v842
      %v918 = vadd.f32 %v598, %v844
      %v919 = vadd.f32 %v599, %v846
      %v920 = vadd.f32 %v600, %v848
      %v921 = vadd.f32 %v601, %v850
      %v922 = vadd.f32 %v602, %v852
      %v923 = vadd.f32 %v603, %v854
      %v924 = vadd.f32 %v604, %v856
      %v925 = vadd.f32 %v605, %v858
      %v926 = vadd.f32 %v606, %v860
      %v927 = vadd.f32 %v607, %v862
      %v928 = vadd.f32 %v608, %v864
      %929 = vset.pattern.permute.xlu0 3
      %930 = vperm.xlu0 %929, %v225
      %v931 = vpop.permute.xlu0 %930
      %933 = vset.pattern.permute.xlu0 3
      %934 = vperm.xlu0 %933, %v226
      %v935 = vpop.permute.xlu0 %934
      %937 = vset.pattern.permute.xlu0 3
      %938 = vperm.xlu0 %937, %v227
      %v939 = vpop.permute.xlu0 %938
      %941 = vset.pattern.permute.xlu0 3
      %942 = vperm.xlu0 %941, %v228
      %v943 = vpop.permute.xlu0 %942
      %945 = vset.pattern.permute.xlu0 3
      %946 = vperm.xlu0 %945, %v229
      %v947 = vpop.permute.xlu0 %946
      %949 = vset.pattern.permute.xlu0 3
      %950 = vperm.xlu0 %949, %v230
      %v951 = vpop.permute.xlu0 %950
      %953 = vset.pattern.permute.xlu0 3
      %954 = vperm.xlu0 %953, %v231
      %v955 = vpop.permute.xlu0 %954
      %957 = vset.pattern.permute.xlu0 3
      %958 = vperm.xlu0 %957, %v232
      %v959 = vpop.permute.xlu0 %958
      %961 = vset.pattern.permute.xlu0 3
      %962 = vperm.xlu0 %961, %v233
      %v963 = vpop.permute.xlu0 %962
      %965 = vset.pattern.permute.xlu0 3
      %966 = vperm.xlu0 %965, %v234
      %v967 = vpop.permute.xlu0 %966
      %969 = vset.pattern.permute.xlu0 3
      %970 = vperm.xlu0 %969, %v235
      %v971 = vpop.permute.xlu0 %970
      %973 = vset.pattern.permute.xlu0 3
      %974 = vperm.xlu0 %973, %v236
      %v975 = vpop.permute.xlu0 %974
      %977 = vset.pattern.permute.xlu0 3
      %978 = vperm.xlu0 %977, %v237
      %v979 = vpop.permute.xlu0 %978
      %981 = vset.pattern.permute.xlu0 3
      %982 = vperm.xlu0 %981, %v238
      %v983 = vpop.permute.xlu0 %982
      %985 = vset.pattern.permute.xlu0 3
      %986 = vperm.xlu0 %985, %v239
      %v987 = vpop.permute.xlu0 %986
      %989 = vset.pattern.permute.xlu0 3
      %990 = vperm.xlu0 %989, %v240
      %v991 = vpop.permute.xlu0 %990
      %993 = vset.pattern.permute.xlu0 3
      %994 = vperm.xlu0 %993, %v241
      %v995 = vpop.permute.xlu0 %994
      %997 = vset.pattern.permute.xlu0 3
      %998 = vperm.xlu0 %997, %v242
      %v999 = vpop.permute.xlu0 %998
      %1001 = vset.pattern.permute.xlu0 3
      %1002 = vperm.xlu0 %1001, %v243
      %v1003 = vpop.permute.xlu0 %1002
      %1005 = vset.pattern.permute.xlu0 3
      %1006 = vperm.xlu0 %1005, %v244
      %v1007 = vpop.permute.xlu0 %1006
      %1009 = vset.pattern.permute.xlu0 3
      %1010 = vperm.xlu0 %1009, %v245
      %v1011 = vpop.permute.xlu0 %1010
      %1013 = vset.pattern.permute.xlu0 3
      %1014 = vperm.xlu0 %1013, %v246
      %v1015 = vpop.permute.xlu0 %1014
      %1017 = vset.pattern.permute.xlu0 3
      %1018 = vperm.xlu0 %1017, %v247
      %v1019 = vpop.permute.xlu0 %1018
      %1021 = vset.pattern.permute.xlu0 3
      %1022 = vperm.xlu0 %1021, %v248
      %v1023 = vpop.permute.xlu0 %1022
      %1025 = vset.pattern.permute.xlu0 3
      %1026 = vperm.xlu0 %1025, %v249
      %v1027 = vpop.permute.xlu0 %1026
      %1029 = vset.pattern.permute.xlu0 3
      %1030 = vperm.xlu0 %1029, %v250
      %v1031 = vpop.permute.xlu0 %1030
      %1033 = vset.pattern.permute.xlu0 3
      %1034 = vperm.xlu0 %1033, %v251
      %v1035 = vpop.permute.xlu0 %1034
      %1037 = vset.pattern.permute.xlu0 3
      %1038 = vperm.xlu0 %1037, %v252
      %v1039 = vpop.permute.xlu0 %1038
      %1041 = vset.pattern.permute.xlu0 3
      %1042 = vperm.xlu0 %1041, %v253
      %v1043 = vpop.permute.xlu0 %1042
      %1045 = vset.pattern.permute.xlu0 3
      %1046 = vperm.xlu0 %1045, %v254
      %v1047 = vpop.permute.xlu0 %1046
      %1049 = vset.pattern.permute.xlu0 3
      %1050 = vperm.xlu0 %1049, %v255
      %v1051 = vpop.permute.xlu0 %1050
      %1053 = vset.pattern.permute.xlu0 3
      %1054 = vperm.xlu0 %1053, %v256
      %v1055 = vpop.permute.xlu0 %1054
      %v1057 = vmul.f32 %v931, %v188
      %v1058 = vmul.f32 %v935, %v188
      %v1059 = vmul.f32 %v939, %v188
      %v1060 = vmul.f32 %v943, %v188
      %v1061 = vmul.f32 %v947, %v188
      %v1062 = vmul.f32 %v951, %v188
      %v1063 = vmul.f32 %v955, %v188
      %v1064 = vmul.f32 %v959, %v188
      %v1065 = vmul.f32 %v963, %v188
      %v1066 = vmul.f32 %v967, %v188
      %v1067 = vmul.f32 %v971, %v188
      %v1068 = vmul.f32 %v975, %v188
      %v1069 = vmul.f32 %v979, %v188
      %v1070 = vmul.f32 %v983, %v188
      %v1071 = vmul.f32 %v987, %v188
      %v1072 = vmul.f32 %v991, %v188
      %v1073 = vmul.f32 %v995, %v188
      %v1074 = vmul.f32 %v999, %v188
      %v1075 = vmul.f32 %v1003, %v188
      %v1076 = vmul.f32 %v1007, %v188
      %v1077 = vmul.f32 %v1011, %v188
      %v1078 = vmul.f32 %v1015, %v188
      %v1079 = vmul.f32 %v1019, %v188
      %v1080 = vmul.f32 %v1023, %v188
      %v1081 = vmul.f32 %v1027, %v188
      %v1082 = vmul.f32 %v1031, %v188
      %v1083 = vmul.f32 %v1035, %v188
      %v1084 = vmul.f32 %v1039, %v188
      %v1085 = vmul.f32 %v1043, %v188
      %v1086 = vmul.f32 %v1047, %v188
      %v1087 = vmul.f32 %v1051, %v188
      %v1088 = vmul.f32 %v1055, %v188
      %v1089 = vadd.f32 %v897, %v1057
      %v1090 = vadd.f32 %v898, %v1058
      %v1091 = vadd.f32 %v899, %v1059
      %v1092 = vadd.f32 %v900, %v1060
      %v1093 = vadd.f32 %v901, %v1061
      %v1094 = vadd.f32 %v902, %v1062
      %v1095 = vadd.f32 %v903, %v1063
      %v1096 = vadd.f32 %v904, %v1064
      %v1097 = vadd.f32 %v905, %v1065
      %v1098 = vadd.f32 %v906, %v1066
      %v1099 = vadd.f32 %v907, %v1067
      %v1100 = vadd.f32 %v908, %v1068
      %v1101 = vadd.f32 %v909, %v1069
      %v1102 = vadd.f32 %v910, %v1070
      %v1103 = vadd.f32 %v911, %v1071
      %v1104 = vadd.f32 %v912, %v1072
      %v1105 = vadd.f32 %v913, %v1073
      %v1106 = vadd.f32 %v914, %v1074
      %v1107 = vadd.f32 %v915, %v1075
      %v1108 = vadd.f32 %v916, %v1076
      %v1109 = vadd.f32 %v917, %v1077
      %v1110 = vadd.f32 %v918, %v1078
      %v1111 = vadd.f32 %v919, %v1079
      %v1112 = vadd.f32 %v920, %v1080
      %v1113 = vadd.f32 %v921, %v1081
      %v1114 = vadd.f32 %v922, %v1082
      %v1115 = vadd.f32 %v923, %v1083
      %v1116 = vadd.f32 %v924, %v1084
      %v1117 = vadd.f32 %v925, %v1085
      %v1118 = vadd.f32 %v926, %v1086
      %v1119 = vadd.f32 %v927, %v1087
      %v1120 = vadd.f32 %v928, %v1088
      %1121 = vset.pattern.permute.xlu0 4
      %1122 = vperm.xlu0 %1121, %v225
      %v1123 = vpop.permute.xlu0 %1122
      %1125 = vset.pattern.permute.xlu0 4
      %1126 = vperm.xlu0 %1125, %v226
      %v1127 = vpop.permute.xlu0 %1126
      %1129 = vset.pattern.permute.xlu0 4
      %1130 = vperm.xlu0 %1129, %v227
      %v1131 = vpop.permute.xlu0 %1130
      %1133 = vset.pattern.permute.xlu0 4
      %1134 = vperm.xlu0 %1133, %v228
      %v1135 = vpop.permute.xlu0 %1134
      %1137 = vset.pattern.permute.xlu0 4
      %1138 = vperm.xlu0 %1137, %v229
      %v1139 = vpop.permute.xlu0 %1138
      %1141 = vset.pattern.permute.xlu0 4
      %1142 = vperm.xlu0 %1141, %v230
      %v1143 = vpop.permute.xlu0 %1142
      %1145 = vset.pattern.permute.xlu0 4
      %1146 = vperm.xlu0 %1145, %v231
      %v1147 = vpop.permute.xlu0 %1146
      %1149 = vset.pattern.permute.xlu0 4
      %1150 = vperm.xlu0 %1149, %v232
      %v1151 = vpop.permute.xlu0 %1150
      %1153 = vset.pattern.permute.xlu0 4
      %1154 = vperm.xlu0 %1153, %v233
      %v1155 = vpop.permute.xlu0 %1154
      %1157 = vset.pattern.permute.xlu0 4
      %1158 = vperm.xlu0 %1157, %v234
      %v1159 = vpop.permute.xlu0 %1158
      %1161 = vset.pattern.permute.xlu0 4
      %1162 = vperm.xlu0 %1161, %v235
      %v1163 = vpop.permute.xlu0 %1162
      %1165 = vset.pattern.permute.xlu0 4
      %1166 = vperm.xlu0 %1165, %v236
      %v1167 = vpop.permute.xlu0 %1166
      %1169 = vset.pattern.permute.xlu0 4
      %1170 = vperm.xlu0 %1169, %v237
      %v1171 = vpop.permute.xlu0 %1170
      %1173 = vset.pattern.permute.xlu0 4
      %1174 = vperm.xlu0 %1173, %v238
      %v1175 = vpop.permute.xlu0 %1174
      %1177 = vset.pattern.permute.xlu0 4
      %1178 = vperm.xlu0 %1177, %v239
      %v1179 = vpop.permute.xlu0 %1178
      %1181 = vset.pattern.permute.xlu0 4
      %1182 = vperm.xlu0 %1181, %v240
      %v1183 = vpop.permute.xlu0 %1182
      %1185 = vset.pattern.permute.xlu0 4
      %1186 = vperm.xlu0 %1185, %v241
      %v1187 = vpop.permute.xlu0 %1186
      %1189 = vset.pattern.permute.xlu0 4
      %1190 = vperm.xlu0 %1189, %v242
      %v1191 = vpop.permute.xlu0 %1190
      %1193 = vset.pattern.permute.xlu0 4
      %1194 = vperm.xlu0 %1193, %v243
      %v1195 = vpop.permute.xlu0 %1194
      %1197 = vset.pattern.permute.xlu0 4
      %1198 = vperm.xlu0 %1197, %v244
      %v1199 = vpop.permute.xlu0 %1198
      %1201 = vset.pattern.permute.xlu0 4
      %1202 = vperm.xlu0 %1201, %v245
      %v1203 = vpop.permute.xlu0 %1202
      %1205 = vset.pattern.permute.xlu0 4
      %1206 = vperm.xlu0 %1205, %v246
      %v1207 = vpop.permute.xlu0 %1206
      %1209 = vset.pattern.permute.xlu0 4
      %1210 = vperm.xlu0 %1209, %v247
      %v1211 = vpop.permute.xlu0 %1210
      %1213 = vset.pattern.permute.xlu0 4
      %1214 = vperm.xlu0 %1213, %v248
      %v1215 = vpop.permute.xlu0 %1214
      %1217 = vset.pattern.permute.xlu0 4
      %1218 = vperm.xlu0 %1217, %v249
      %v1219 = vpop.permute.xlu0 %1218
      %1221 = vset.pattern.permute.xlu0 4
      %1222 = vperm.xlu0 %1221, %v250
      %v1223 = vpop.permute.xlu0 %1222
      %1225 = vset.pattern.permute.xlu0 4
      %1226 = vperm.xlu0 %1225, %v251
      %v1227 = vpop.permute.xlu0 %1226
      %1229 = vset.pattern.permute.xlu0 4
      %1230 = vperm.xlu0 %1229, %v252
      %v1231 = vpop.permute.xlu0 %1230
      %1233 = vset.pattern.permute.xlu0 4
      %1234 = vperm.xlu0 %1233, %v253
      %v1235 = vpop.permute.xlu0 %1234
      %1237 = vset.pattern.permute.xlu0 4
      %1238 = vperm.xlu0 %1237, %v254
      %v1239 = vpop.permute.xlu0 %1238
      %1241 = vset.pattern.permute.xlu0 4
      %1242 = vperm.xlu0 %1241, %v255
      %v1243 = vpop.permute.xlu0 %1242
      %1245 = vset.pattern.permute.xlu0 4
      %1246 = vperm.xlu0 %1245, %v256
      %v1247 = vpop.permute.xlu0 %1246
      %v1249 = vmul.f32 %v1123, %v191
      %v1250 = vmul.f32 %v1127, %v191
      %v1251 = vmul.f32 %v1131, %v191
      %v1252 = vmul.f32 %v1135, %v191
      %v1253 = vmul.f32 %v1139, %v191
      %v1254 = vmul.f32 %v1143, %v191
      %v1255 = vmul.f32 %v1147, %v191
      %v1256 = vmul.f32 %v1151, %v191
      %v1257 = vmul.f32 %v1155, %v191
      %v1258 = vmul.f32 %v1159, %v191
      %v1259 = vmul.f32 %v1163, %v191
      %v1260 = vmul.f32 %v1167, %v191
      %v1261 = vmul.f32 %v1171, %v191
      %v1262 = vmul.f32 %v1175, %v191
      %v1263 = vmul.f32 %v1179, %v191
      %v1264 = vmul.f32 %v1183, %v191
      %v1265 = vmul.f32 %v1187, %v191
      %v1266 = vmul.f32 %v1191, %v191
      %v1267 = vmul.f32 %v1195, %v191
      %v1268 = vmul.f32 %v1199, %v191
      %v1269 = vmul.f32 %v1203, %v191
      %v1270 = vmul.f32 %v1207, %v191
      %v1271 = vmul.f32 %v1211, %v191
      %v1272 = vmul.f32 %v1215, %v191
      %v1273 = vmul.f32 %v1219, %v191
      %v1274 = vmul.f32 %v1223, %v191
      %v1275 = vmul.f32 %v1227, %v191
      %v1276 = vmul.f32 %v1231, %v191
      %v1277 = vmul.f32 %v1235, %v191
      %v1278 = vmul.f32 %v1239, %v191
      %v1279 = vmul.f32 %v1243, %v191
      %v1280 = vmul.f32 %v1247, %v191
      %v1281 = vadd.f32 %v1089, %v1249
      %v1282 = vadd.f32 %v1090, %v1250
      %v1283 = vadd.f32 %v1091, %v1251
      %v1284 = vadd.f32 %v1092, %v1252
      %v1285 = vadd.f32 %v1093, %v1253
      %v1286 = vadd.f32 %v1094, %v1254
      %v1287 = vadd.f32 %v1095, %v1255
      %v1288 = vadd.f32 %v1096, %v1256
      %v1289 = vadd.f32 %v1097, %v1257
      %v1290 = vadd.f32 %v1098, %v1258
      %v1291 = vadd.f32 %v1099, %v1259
      %v1292 = vadd.f32 %v1100, %v1260
      %v1293 = vadd.f32 %v1101, %v1261
      %v1294 = vadd.f32 %v1102, %v1262
      %v1295 = vadd.f32 %v1103, %v1263
      %v1296 = vadd.f32 %v1104, %v1264
      %v1297 = vadd.f32 %v1105, %v1265
      %v1298 = vadd.f32 %v1106, %v1266
      %v1299 = vadd.f32 %v1107, %v1267
      %v1300 = vadd.f32 %v1108, %v1268
      %v1301 = vadd.f32 %v1109, %v1269
      %v1302 = vadd.f32 %v1110, %v1270
      %v1303 = vadd.f32 %v1111, %v1271
      %v1304 = vadd.f32 %v1112, %v1272
      %v1305 = vadd.f32 %v1113, %v1273
      %v1306 = vadd.f32 %v1114, %v1274
      %v1307 = vadd.f32 %v1115, %v1275
      %v1308 = vadd.f32 %v1116, %v1276
      %v1309 = vadd.f32 %v1117, %v1277
      %v1310 = vadd.f32 %v1118, %v1278
      %v1311 = vadd.f32 %v1119, %v1279
      %v1312 = vadd.f32 %v1120, %v1280
      %1313 = vset.pattern.permute.xlu0 5
      %1314 = vperm.xlu0 %1313, %v225
      %v1315 = vpop.permute.xlu0 %1314
      %1317 = vset.pattern.permute.xlu0 5
      %1318 = vperm.xlu0 %1317, %v226
      %v1319 = vpop.permute.xlu0 %1318
      %1321 = vset.pattern.permute.xlu0 5
      %1322 = vperm.xlu0 %1321, %v227
      %v1323 = vpop.permute.xlu0 %1322
      %1325 = vset.pattern.permute.xlu0 5
      %1326 = vperm.xlu0 %1325, %v228
      %v1327 = vpop.permute.xlu0 %1326
      %1329 = vset.pattern.permute.xlu0 5
      %1330 = vperm.xlu0 %1329, %v229
      %v1331 = vpop.permute.xlu0 %1330
      %1333 = vset.pattern.permute.xlu0 5
      %1334 = vperm.xlu0 %1333, %v230
      %v1335 = vpop.permute.xlu0 %1334
      %1337 = vset.pattern.permute.xlu0 5
      %1338 = vperm.xlu0 %1337, %v231
      %v1339 = vpop.permute.xlu0 %1338
      %1341 = vset.pattern.permute.xlu0 5
      %1342 = vperm.xlu0 %1341, %v232
      %v1343 = vpop.permute.xlu0 %1342
      %1345 = vset.pattern.permute.xlu0 5
      %1346 = vperm.xlu0 %1345, %v233
      %v1347 = vpop.permute.xlu0 %1346
      %1349 = vset.pattern.permute.xlu0 5
      %1350 = vperm.xlu0 %1349, %v234
      %v1351 = vpop.permute.xlu0 %1350
      %1353 = vset.pattern.permute.xlu0 5
      %1354 = vperm.xlu0 %1353, %v235
      %v1355 = vpop.permute.xlu0 %1354
      %1357 = vset.pattern.permute.xlu0 5
      %1358 = vperm.xlu0 %1357, %v236
      %v1359 = vpop.permute.xlu0 %1358
      %1361 = vset.pattern.permute.xlu0 5
      %1362 = vperm.xlu0 %1361, %v237
      %v1363 = vpop.permute.xlu0 %1362
      %1365 = vset.pattern.permute.xlu0 5
      %1366 = vperm.xlu0 %1365, %v238
      %v1367 = vpop.permute.xlu0 %1366
      %1369 = vset.pattern.permute.xlu0 5
      %1370 = vperm.xlu0 %1369, %v239
      %v1371 = vpop.permute.xlu0 %1370
      %1373 = vset.pattern.permute.xlu0 5
      %1374 = vperm.xlu0 %1373, %v240
      %v1375 = vpop.permute.xlu0 %1374
      %1377 = vset.pattern.permute.xlu0 5
      %1378 = vperm.xlu0 %1377, %v241
      %v1379 = vpop.permute.xlu0 %1378
      %1381 = vset.pattern.permute.xlu0 5
      %1382 = vperm.xlu0 %1381, %v242
      %v1383 = vpop.permute.xlu0 %1382
      %1385 = vset.pattern.permute.xlu0 5
      %1386 = vperm.xlu0 %1385, %v243
      %v1387 = vpop.permute.xlu0 %1386
      %1389 = vset.pattern.permute.xlu0 5
      %1390 = vperm.xlu0 %1389, %v244
      %v1391 = vpop.permute.xlu0 %1390
      %1393 = vset.pattern.permute.xlu0 5
      %1394 = vperm.xlu0 %1393, %v245
      %v1395 = vpop.permute.xlu0 %1394
      %1397 = vset.pattern.permute.xlu0 5
      %1398 = vperm.xlu0 %1397, %v246
      %v1399 = vpop.permute.xlu0 %1398
      %1401 = vset.pattern.permute.xlu0 5
      %1402 = vperm.xlu0 %1401, %v247
      %v1403 = vpop.permute.xlu0 %1402
      %1405 = vset.pattern.permute.xlu0 5
      %1406 = vperm.xlu0 %1405, %v248
      %v1407 = vpop.permute.xlu0 %1406
      %1409 = vset.pattern.permute.xlu0 5
      %1410 = vperm.xlu0 %1409, %v249
      %v1411 = vpop.permute.xlu0 %1410
      %1413 = vset.pattern.permute.xlu0 5
      %1414 = vperm.xlu0 %1413, %v250
      %v1415 = vpop.permute.xlu0 %1414
      %1417 = vset.pattern.permute.xlu0 5
      %1418 = vperm.xlu0 %1417, %v251
      %v1419 = vpop.permute.xlu0 %1418
      %1421 = vset.pattern.permute.xlu0 5
      %1422 = vperm.xlu0 %1421, %v252
      %v1423 = vpop.permute.xlu0 %1422
      %1425 = vset.pattern.permute.xlu0 5
      %1426 = vperm.xlu0 %1425, %v253
      %v1427 = vpop.permute.xlu0 %1426
      %1429 = vset.pattern.permute.xlu0 5
      %1430 = vperm.xlu0 %1429, %v254
      %v1431 = vpop.permute.xlu0 %1430
      %1433 = vset.pattern.permute.xlu0 5
      %1434 = vperm.xlu0 %1433, %v255
      %v1435 = vpop.permute.xlu0 %1434
      %1437 = vset.pattern.permute.xlu0 5
      %1438 = vperm.xlu0 %1437, %v256
      %v1439 = vpop.permute.xlu0 %1438
      %v1441 = vmul.f32 %v1315, %v188
      %v1442 = vmul.f32 %v1319, %v188
      %v1443 = vmul.f32 %v1323, %v188
      %v1444 = vmul.f32 %v1327, %v188
      %v1445 = vmul.f32 %v1331, %v188
      %v1446 = vmul.f32 %v1335, %v188
      %v1447 = vmul.f32 %v1339, %v188
      %v1448 = vmul.f32 %v1343, %v188
      %v1449 = vmul.f32 %v1347, %v188
      %v1450 = vmul.f32 %v1351, %v188
      %v1451 = vmul.f32 %v1355, %v188
      %v1452 = vmul.f32 %v1359, %v188
      %v1453 = vmul.f32 %v1363, %v188
      %v1454 = vmul.f32 %v1367, %v188
      %v1455 = vmul.f32 %v1371, %v188
      %v1456 = vmul.f32 %v1375, %v188
      %v1457 = vmul.f32 %v1379, %v188
      %v1458 = vmul.f32 %v1383, %v188
      %v1459 = vmul.f32 %v1387, %v188
      %v1460 = vmul.f32 %v1391, %v188
      %v1461 = vmul.f32 %v1395, %v188
      %v1462 = vmul.f32 %v1399, %v188
      %v1463 = vmul.f32 %v1403, %v188
      %v1464 = vmul.f32 %v1407, %v188
      %v1465 = vmul.f32 %v1411, %v188
      %v1466 = vmul.f32 %v1415, %v188
      %v1467 = vmul.f32 %v1419, %v188
      %v1468 = vmul.f32 %v1423, %v188
      %v1469 = vmul.f32 %v1427, %v188
      %v1470 = vmul.f32 %v1431, %v188
      %v1471 = vmul.f32 %v1435, %v188
      %v1472 = vmul.f32 %v1439, %v188
      %1505 = vrot.lane.b32.xlu0 %v1441, 127
      %v1506 = vpop.permute.xlu0 %1505
      %1507 = vrot.lane.b32.xlu0 %v1442, 127
      %v1508 = vpop.permute.xlu0 %1507
      %1509 = vrot.lane.b32.xlu0 %v1443, 127
      %v1510 = vpop.permute.xlu0 %1509
      %1511 = vrot.lane.b32.xlu0 %v1444, 127
      %v1512 = vpop.permute.xlu0 %1511
      %1513 = vrot.lane.b32.xlu0 %v1445, 127
      %v1514 = vpop.permute.xlu0 %1513
      %1515 = vrot.lane.b32.xlu0 %v1446, 127
      %v1516 = vpop.permute.xlu0 %1515
      %1517 = vrot.lane.b32.xlu0 %v1447, 127
      %v1518 = vpop.permute.xlu0 %1517
      %1519 = vrot.lane.b32.xlu0 %v1448, 127
      %v1520 = vpop.permute.xlu0 %1519
      %1521 = vrot.lane.b32.xlu0 %v1449, 127
      %v1522 = vpop.permute.xlu0 %1521
      %1523 = vrot.lane.b32.xlu0 %v1450, 127
      %v1524 = vpop.permute.xlu0 %1523
      %1525 = vrot.lane.b32.xlu0 %v1451, 127
      %v1526 = vpop.permute.xlu0 %1525
      %1527 = vrot.lane.b32.xlu0 %v1452, 127
      %v1528 = vpop.permute.xlu0 %1527
      %1529 = vrot.lane.b32.xlu0 %v1453, 127
      %v1530 = vpop.permute.xlu0 %1529
      %1531 = vrot.lane.b32.xlu0 %v1454, 127
      %v1532 = vpop.permute.xlu0 %1531
      %1533 = vrot.lane.b32.xlu0 %v1455, 127
      %v1534 = vpop.permute.xlu0 %1533
      %1535 = vrot.lane.b32.xlu0 %v1456, 127
      %v1536 = vpop.permute.xlu0 %1535
      %1537 = vrot.lane.b32.xlu0 %v1457, 127
      %v1538 = vpop.permute.xlu0 %1537
      %1539 = vrot.lane.b32.xlu0 %v1458, 127
      %v1540 = vpop.permute.xlu0 %1539
      %1541 = vrot.lane.b32.xlu0 %v1459, 127
      %v1542 = vpop.permute.xlu0 %1541
      %1543 = vrot.lane.b32.xlu0 %v1460, 127
      %v1544 = vpop.permute.xlu0 %1543
      %1545 = vrot.lane.b32.xlu0 %v1461, 127
      %v1546 = vpop.permute.xlu0 %1545
      %1547 = vrot.lane.b32.xlu0 %v1462, 127
      %v1548 = vpop.permute.xlu0 %1547
      %1549 = vrot.lane.b32.xlu0 %v1463, 127
      %v1550 = vpop.permute.xlu0 %1549
      %1551 = vrot.lane.b32.xlu0 %v1464, 127
      %v1552 = vpop.permute.xlu0 %1551
      %1553 = vrot.lane.b32.xlu0 %v1465, 127
      %v1554 = vpop.permute.xlu0 %1553
      %1555 = vrot.lane.b32.xlu0 %v1466, 127
      %v1556 = vpop.permute.xlu0 %1555
      %1557 = vrot.lane.b32.xlu0 %v1467, 127
      %v1558 = vpop.permute.xlu0 %1557
      %1559 = vrot.lane.b32.xlu0 %v1468, 127
      %v1560 = vpop.permute.xlu0 %1559
      %1561 = vrot.lane.b32.xlu0 %v1469, 127
      %v1562 = vpop.permute.xlu0 %1561
      %1563 = vrot.lane.b32.xlu0 %v1470, 127
      %v1564 = vpop.permute.xlu0 %1563
      %1565 = vrot.lane.b32.xlu0 %v1471, 127
      %v1566 = vpop.permute.xlu0 %1565
      %1567 = vrot.lane.b32.xlu0 %v1472, 127
      %v1568 = vpop.permute.xlu0 %1567
      %v1601 = vadd.f32 %v1281, %v1506
      %v1602 = vadd.f32 %v1282, %v1508
      %v1603 = vadd.f32 %v1283, %v1510
      %v1604 = vadd.f32 %v1284, %v1512
      %v1605 = vadd.f32 %v1285, %v1514
      %v1606 = vadd.f32 %v1286, %v1516
      %v1607 = vadd.f32 %v1287, %v1518
      %v1608 = vadd.f32 %v1288, %v1520
      %v1609 = vadd.f32 %v1289, %v1522
      %v1610 = vadd.f32 %v1290, %v1524
      %v1611 = vadd.f32 %v1291, %v1526
      %v1612 = vadd.f32 %v1292, %v1528
      %v1613 = vadd.f32 %v1293, %v1530
      %v1614 = vadd.f32 %v1294, %v1532
      %v1615 = vadd.f32 %v1295, %v1534
      %v1616 = vadd.f32 %v1296, %v1536
      %v1617 = vadd.f32 %v1297, %v1538
      %v1618 = vadd.f32 %v1298, %v1540
      %v1619 = vadd.f32 %v1299, %v1542
      %v1620 = vadd.f32 %v1300, %v1544
      %v1621 = vadd.f32 %v1301, %v1546
      %v1622 = vadd.f32 %v1302, %v1548
      %v1623 = vadd.f32 %v1303, %v1550
      %v1624 = vadd.f32 %v1304, %v1552
      %v1625 = vadd.f32 %v1305, %v1554
      %v1626 = vadd.f32 %v1306, %v1556
      %v1627 = vadd.f32 %v1307, %v1558
      %v1628 = vadd.f32 %v1308, %v1560
      %v1629 = vadd.f32 %v1309, %v1562
      %v1630 = vadd.f32 %v1310, %v1564
      %v1631 = vadd.f32 %v1311, %v1566
      %v1632 = vadd.f32 %v1312, %v1568
      %1633 = vset.pattern.permute.xlu0 6
      %1634 = vperm.xlu0 %1633, %v225
      %v1635 = vpop.permute.xlu0 %1634
      %1637 = vset.pattern.permute.xlu0 6
      %1638 = vperm.xlu0 %1637, %v226
      %v1639 = vpop.permute.xlu0 %1638
      %1641 = vset.pattern.permute.xlu0 6
      %1642 = vperm.xlu0 %1641, %v227
      %v1643 = vpop.permute.xlu0 %1642
      %1645 = vset.pattern.permute.xlu0 6
      %1646 = vperm.xlu0 %1645, %v228
      %v1647 = vpop.permute.xlu0 %1646
      %1649 = vset.pattern.permute.xlu0 6
      %1650 = vperm.xlu0 %1649, %v229
      %v1651 = vpop.permute.xlu0 %1650
      %1653 = vset.pattern.permute.xlu0 6
      %1654 = vperm.xlu0 %1653, %v230
      %v1655 = vpop.permute.xlu0 %1654
      %1657 = vset.pattern.permute.xlu0 6
      %1658 = vperm.xlu0 %1657, %v231
      %v1659 = vpop.permute.xlu0 %1658
      %1661 = vset.pattern.permute.xlu0 6
      %1662 = vperm.xlu0 %1661, %v232
      %v1663 = vpop.permute.xlu0 %1662
      %1665 = vset.pattern.permute.xlu0 6
      %1666 = vperm.xlu0 %1665, %v233
      %v1667 = vpop.permute.xlu0 %1666
      %1669 = vset.pattern.permute.xlu0 6
      %1670 = vperm.xlu0 %1669, %v234
      %v1671 = vpop.permute.xlu0 %1670
      %1673 = vset.pattern.permute.xlu0 6
      %1674 = vperm.xlu0 %1673, %v235
      %v1675 = vpop.permute.xlu0 %1674
      %1677 = vset.pattern.permute.xlu0 6
      %1678 = vperm.xlu0 %1677, %v236
      %v1679 = vpop.permute.xlu0 %1678
      %1681 = vset.pattern.permute.xlu0 6
      %1682 = vperm.xlu0 %1681, %v237
      %v1683 = vpop.permute.xlu0 %1682
      %1685 = vset.pattern.permute.xlu0 6
      %1686 = vperm.xlu0 %1685, %v238
      %v1687 = vpop.permute.xlu0 %1686
      %1689 = vset.pattern.permute.xlu0 6
      %1690 = vperm.xlu0 %1689, %v239
      %v1691 = vpop.permute.xlu0 %1690
      %1693 = vset.pattern.permute.xlu0 6
      %1694 = vperm.xlu0 %1693, %v240
      %v1695 = vpop.permute.xlu0 %1694
      %1697 = vset.pattern.permute.xlu0 6
      %1698 = vperm.xlu0 %1697, %v241
      %v1699 = vpop.permute.xlu0 %1698
      %1701 = vset.pattern.permute.xlu0 6
      %1702 = vperm.xlu0 %1701, %v242
      %v1703 = vpop.permute.xlu0 %1702
      %1705 = vset.pattern.permute.xlu0 6
      %1706 = vperm.xlu0 %1705, %v243
      %v1707 = vpop.permute.xlu0 %1706
      %1709 = vset.pattern.permute.xlu0 6
      %1710 = vperm.xlu0 %1709, %v244
      %v1711 = vpop.permute.xlu0 %1710
      %1713 = vset.pattern.permute.xlu0 6
      %1714 = vperm.xlu0 %1713, %v245
      %v1715 = vpop.permute.xlu0 %1714
      %1717 = vset.pattern.permute.xlu0 6
      %1718 = vperm.xlu0 %1717, %v246
      %v1719 = vpop.permute.xlu0 %1718
      %1721 = vset.pattern.permute.xlu0 6
      %1722 = vperm.xlu0 %1721, %v247
      %v1723 = vpop.permute.xlu0 %1722
      %1725 = vset.pattern.permute.xlu0 6
      %1726 = vperm.xlu0 %1725, %v248
      %v1727 = vpop.permute.xlu0 %1726
      %1729 = vset.pattern.permute.xlu0 6
      %1730 = vperm.xlu0 %1729, %v249
      %v1731 = vpop.permute.xlu0 %1730
      %1733 = vset.pattern.permute.xlu0 6
      %1734 = vperm.xlu0 %1733, %v250
      %v1735 = vpop.permute.xlu0 %1734
      %1737 = vset.pattern.permute.xlu0 6
      %1738 = vperm.xlu0 %1737, %v251
      %v1739 = vpop.permute.xlu0 %1738
      %1741 = vset.pattern.permute.xlu0 6
      %1742 = vperm.xlu0 %1741, %v252
      %v1743 = vpop.permute.xlu0 %1742
      %1745 = vset.pattern.permute.xlu0 6
      %1746 = vperm.xlu0 %1745, %v253
      %v1747 = vpop.permute.xlu0 %1746
      %1749 = vset.pattern.permute.xlu0 6
      %1750 = vperm.xlu0 %1749, %v254
      %v1751 = vpop.permute.xlu0 %1750
      %1753 = vset.pattern.permute.xlu0 6
      %1754 = vperm.xlu0 %1753, %v255
      %v1755 = vpop.permute.xlu0 %1754
      %1757 = vset.pattern.permute.xlu0 6
      %1758 = vperm.xlu0 %1757, %v256
      %v1759 = vpop.permute.xlu0 %1758
      %v1761 = vmul.f32 %v1635, %v182
      %v1762 = vmul.f32 %v1635, %v183
      %v1763 = vmul.f32 %v1639, %v182
      %v1764 = vmul.f32 %v1639, %v183
      %v1765 = vmul.f32 %v1643, %v182
      %v1766 = vmul.f32 %v1643, %v183
      %v1767 = vmul.f32 %v1647, %v182
      %v1768 = vmul.f32 %v1647, %v183
      %v1769 = vmul.f32 %v1651, %v182
      %v1770 = vmul.f32 %v1651, %v183
      %v1771 = vmul.f32 %v1655, %v182
      %v1772 = vmul.f32 %v1655, %v183
      %v1773 = vmul.f32 %v1659, %v182
      %v1774 = vmul.f32 %v1659, %v183
      %v1775 = vmul.f32 %v1663, %v182
      %v1776 = vmul.f32 %v1663, %v183
      %v1777 = vmul.f32 %v1667, %v182
      %v1778 = vmul.f32 %v1667, %v183
      %v1779 = vmul.f32 %v1671, %v182
      %v1780 = vmul.f32 %v1671, %v183
      %v1781 = vmul.f32 %v1675, %v182
      %v1782 = vmul.f32 %v1675, %v183
      %v1783 = vmul.f32 %v1679, %v182
      %v1784 = vmul.f32 %v1679, %v183
      %v1785 = vmul.f32 %v1683, %v182
      %v1786 = vmul.f32 %v1683, %v183
      %v1787 = vmul.f32 %v1687, %v182
      %v1788 = vmul.f32 %v1687, %v183
      %v1789 = vmul.f32 %v1691, %v182
      %v1790 = vmul.f32 %v1691, %v183
      %v1791 = vmul.f32 %v1695, %v182
      %v1792 = vmul.f32 %v1695, %v183
      %v1793 = vmul.f32 %v1699, %v182
      %v1794 = vmul.f32 %v1699, %v183
      %v1795 = vmul.f32 %v1703, %v182
      %v1796 = vmul.f32 %v1703, %v183
      %v1797 = vmul.f32 %v1707, %v182
      %v1798 = vmul.f32 %v1707, %v183
      %v1799 = vmul.f32 %v1711, %v182
      %v1800 = vmul.f32 %v1711, %v183
      %v1801 = vmul.f32 %v1715, %v182
      %v1802 = vmul.f32 %v1715, %v183
      %v1803 = vmul.f32 %v1719, %v182
      %v1804 = vmul.f32 %v1719, %v183
      %v1805 = vmul.f32 %v1723, %v182
      %v1806 = vmul.f32 %v1723, %v183
      %v1807 = vmul.f32 %v1727, %v182
      %v1808 = vmul.f32 %v1727, %v183
      %v1809 = vmul.f32 %v1731, %v182
      %v1810 = vmul.f32 %v1731, %v183
      %v1811 = vmul.f32 %v1735, %v182
      %v1812 = vmul.f32 %v1735, %v183
      %v1813 = vmul.f32 %v1739, %v182
      %v1814 = vmul.f32 %v1739, %v183
      %v1815 = vmul.f32 %v1743, %v182
      %v1816 = vmul.f32 %v1743, %v183
      %v1817 = vmul.f32 %v1747, %v182
      %v1818 = vmul.f32 %v1747, %v183
      %v1819 = vmul.f32 %v1751, %v182
      %v1820 = vmul.f32 %v1751, %v183
      %v1821 = vmul.f32 %v1755, %v182
      %v1822 = vmul.f32 %v1755, %v183
      %v1823 = vmul.f32 %v1759, %v182
      %v1824 = vmul.f32 %v1759, %v183
      %vm1889 = vcmask 1046528
      %v1890 = vrot.slane %v1761, 1
      %v1891 = vrot.slane %v1762, 1
      %v1892 = vsel %vm1889, %v1890, %v1891
      %v1893 = vrot.slane %v1763, 1
      %v1894 = vrot.slane %v1764, 1
      %v1895 = vsel %vm1889, %v1893, %v1894
      %v1896 = vrot.slane %v1765, 1
      %v1897 = vrot.slane %v1766, 1
      %v1898 = vsel %vm1889, %v1896, %v1897
      %v1899 = vrot.slane %v1767, 1
      %v1900 = vrot.slane %v1768, 1
      %v1901 = vsel %vm1889, %v1899, %v1900
      %v1902 = vrot.slane %v1769, 1
      %v1903 = vrot.slane %v1770, 1
      %v1904 = vsel %vm1889, %v1902, %v1903
      %v1905 = vrot.slane %v1771, 1
      %v1906 = vrot.slane %v1772, 1
      %v1907 = vsel %vm1889, %v1905, %v1906
      %v1908 = vrot.slane %v1773, 1
      %v1909 = vrot.slane %v1774, 1
      %v1910 = vsel %vm1889, %v1908, %v1909
      %v1911 = vrot.slane %v1775, 1
      %v1912 = vrot.slane %v1776, 1
      %v1913 = vsel %vm1889, %v1911, %v1912
      %v1914 = vrot.slane %v1777, 1
      %v1915 = vrot.slane %v1778, 1
      %v1916 = vsel %vm1889, %v1914, %v1915
      %v1917 = vrot.slane %v1779, 1
      %v1918 = vrot.slane %v1780, 1
      %v1919 = vsel %vm1889, %v1917, %v1918
      %v1920 = vrot.slane %v1781, 1
      %v1921 = vrot.slane %v1782, 1
      %v1922 = vsel %vm1889, %v1920, %v1921
      %v1923 = vrot.slane %v1783, 1
      %v1924 = vrot.slane %v1784, 1
      %v1925 = vsel %vm1889, %v1923, %v1924
      %v1926 = vrot.slane %v1785, 1
      %v1927 = vrot.slane %v1786, 1
      %v1928 = vsel %vm1889, %v1926, %v1927
      %v1929 = vrot.slane %v1787, 1
      %v1930 = vrot.slane %v1788, 1
      %v1931 = vsel %vm1889, %v1929, %v1930
      %v1932 = vrot.slane %v1789, 1
      %v1933 = vrot.slane %v1790, 1
      %v1934 = vsel %vm1889, %v1932, %v1933
      %v1935 = vrot.slane %v1791, 1
      %v1936 = vrot.slane %v1792, 1
      %v1937 = vsel %vm1889, %v1935, %v1936
      %v1938 = vrot.slane %v1793, 1
      %v1939 = vrot.slane %v1794, 1
      %v1940 = vsel %vm1889, %v1938, %v1939
      %v1941 = vrot.slane %v1795, 1
      %v1942 = vrot.slane %v1796, 1
      %v1943 = vsel %vm1889, %v1941, %v1942
      %v1944 = vrot.slane %v1797, 1
      %v1945 = vrot.slane %v1798, 1
      %v1946 = vsel %vm1889, %v1944, %v1945
      %v1947 = vrot.slane %v1799, 1
      %v1948 = vrot.slane %v1800, 1
      %v1949 = vsel %vm1889, %v1947, %v1948
      %v1950 = vrot.slane %v1801, 1
      %v1951 = vrot.slane %v1802, 1
      %v1952 = vsel %vm1889, %v1950, %v1951
      %v1953 = vrot.slane %v1803, 1
      %v1954 = vrot.slane %v1804, 1
      %v1955 = vsel %vm1889, %v1953, %v1954
      %v1956 = vrot.slane %v1805, 1
      %v1957 = vrot.slane %v1806, 1
      %v1958 = vsel %vm1889, %v1956, %v1957
      %v1959 = vrot.slane %v1807, 1
      %v1960 = vrot.slane %v1808, 1
      %v1961 = vsel %vm1889, %v1959, %v1960
      %v1962 = vrot.slane %v1809, 1
      %v1963 = vrot.slane %v1810, 1
      %v1964 = vsel %vm1889, %v1962, %v1963
      %v1965 = vrot.slane %v1811, 1
      %v1966 = vrot.slane %v1812, 1
      %v1967 = vsel %vm1889, %v1965, %v1966
      %v1968 = vrot.slane %v1813, 1
      %v1969 = vrot.slane %v1814, 1
      %v1970 = vsel %vm1889, %v1968, %v1969
      %v1971 = vrot.slane %v1815, 1
      %v1972 = vrot.slane %v1816, 1
      %v1973 = vsel %vm1889, %v1971, %v1972
      %v1974 = vrot.slane %v1817, 1
      %v1975 = vrot.slane %v1818, 1
      %v1976 = vsel %vm1889, %v1974, %v1975
      %v1977 = vrot.slane %v1819, 1
      %v1978 = vrot.slane %v1820, 1
      %v1979 = vsel %vm1889, %v1977, %v1978
      %v1980 = vrot.slane %v1821, 1
      %v1981 = vrot.slane %v1822, 1
      %v1982 = vsel %vm1889, %v1980, %v1981
      %v1983 = vrot.slane %v1823, 1
      %v1984 = vrot.slane %v1824, 1
      %v1985 = vsel %vm1889, %v1983, %v1984
      %v2018 = vadd.f32 %v1601, %v1892
      %v2019 = vadd.f32 %v1602, %v1895
      %v2020 = vadd.f32 %v1603, %v1898
      %v2021 = vadd.f32 %v1604, %v1901
      %v2022 = vadd.f32 %v1605, %v1904
      %v2023 = vadd.f32 %v1606, %v1907
      %v2024 = vadd.f32 %v1607, %v1910
      %v2025 = vadd.f32 %v1608, %v1913
      %v2026 = vadd.f32 %v1609, %v1916
      %v2027 = vadd.f32 %v1610, %v1919
      %v2028 = vadd.f32 %v1611, %v1922
      %v2029 = vadd.f32 %v1612, %v1925
      %v2030 = vadd.f32 %v1613, %v1928
      %v2031 = vadd.f32 %v1614, %v1931
      %v2032 = vadd.f32 %v1615, %v1934
      %v2033 = vadd.f32 %v1616, %v1937
      %v2034 = vadd.f32 %v1617, %v1940
      %v2035 = vadd.f32 %v1618, %v1943
      %v2036 = vadd.f32 %v1619, %v1946
      %v2037 = vadd.f32 %v1620, %v1949
      %v2038 = vadd.f32 %v1621, %v1952
      %v2039 = vadd.f32 %v1622, %v1955
      %v2040 = vadd.f32 %v1623, %v1958
      %v2041 = vadd.f32 %v1624, %v1961
      %v2042 = vadd.f32 %v1625, %v1964
      %v2043 = vadd.f32 %v1626, %v1967
      %v2044 = vadd.f32 %v1627, %v1970
      %v2045 = vadd.f32 %v1628, %v1973
      %v2046 = vadd.f32 %v1629, %v1976
      %v2047 = vadd.f32 %v1630, %v1979
      %v2048 = vadd.f32 %v1631, %v1982
      %v2049 = vadd.f32 %v1632, %v1985
      %2050 = vset.pattern.permute.xlu0 7
      %2051 = vperm.xlu0 %2050, %v225
      %v2052 = vpop.permute.xlu0 %2051
      %2054 = vset.pattern.permute.xlu0 7
      %2055 = vperm.xlu0 %2054, %v226
      %v2056 = vpop.permute.xlu0 %2055
      %2058 = vset.pattern.permute.xlu0 7
      %2059 = vperm.xlu0 %2058, %v227
      %v2060 = vpop.permute.xlu0 %2059
      %2062 = vset.pattern.permute.xlu0 7
      %2063 = vperm.xlu0 %2062, %v228
      %v2064 = vpop.permute.xlu0 %2063
      %2066 = vset.pattern.permute.xlu0 7
      %2067 = vperm.xlu0 %2066, %v229
      %v2068 = vpop.permute.xlu0 %2067
      %2070 = vset.pattern.permute.xlu0 7
      %2071 = vperm.xlu0 %2070, %v230
      %v2072 = vpop.permute.xlu0 %2071
      %2074 = vset.pattern.permute.xlu0 7
      %2075 = vperm.xlu0 %2074, %v231
      %v2076 = vpop.permute.xlu0 %2075
      %2078 = vset.pattern.permute.xlu0 7
      %2079 = vperm.xlu0 %2078, %v232
      %v2080 = vpop.permute.xlu0 %2079
      %2082 = vset.pattern.permute.xlu0 7
      %2083 = vperm.xlu0 %2082, %v233
      %v2084 = vpop.permute.xlu0 %2083
      %2086 = vset.pattern.permute.xlu0 7
      %2087 = vperm.xlu0 %2086, %v234
      %v2088 = vpop.permute.xlu0 %2087
      %2090 = vset.pattern.permute.xlu0 7
      %2091 = vperm.xlu0 %2090, %v235
      %v2092 = vpop.permute.xlu0 %2091
      %2094 = vset.pattern.permute.xlu0 7
      %2095 = vperm.xlu0 %2094, %v236
      %v2096 = vpop.permute.xlu0 %2095
      %2098 = vset.pattern.permute.xlu0 7
      %2099 = vperm.xlu0 %2098, %v237
      %v2100 = vpop.permute.xlu0 %2099
      %2102 = vset.pattern.permute.xlu0 7
      %2103 = vperm.xlu0 %2102, %v238
      %v2104 = vpop.permute.xlu0 %2103
      %2106 = vset.pattern.permute.xlu0 7
      %2107 = vperm.xlu0 %2106, %v239
      %v2108 = vpop.permute.xlu0 %2107
      %2110 = vset.pattern.permute.xlu0 7
      %2111 = vperm.xlu0 %2110, %v240
      %v2112 = vpop.permute.xlu0 %2111
      %2114 = vset.pattern.permute.xlu0 7
      %2115 = vperm.xlu0 %2114, %v241
      %v2116 = vpop.permute.xlu0 %2115
      %2118 = vset.pattern.permute.xlu0 7
      %2119 = vperm.xlu0 %2118, %v242
      %v2120 = vpop.permute.xlu0 %2119
      %2122 = vset.pattern.permute.xlu0 7
      %2123 = vperm.xlu0 %2122, %v243
      %v2124 = vpop.permute.xlu0 %2123
      %2126 = vset.pattern.permute.xlu0 7
      %2127 = vperm.xlu0 %2126, %v244
      %v2128 = vpop.permute.xlu0 %2127
      %2130 = vset.pattern.permute.xlu0 7
      %2131 = vperm.xlu0 %2130, %v245
      %v2132 = vpop.permute.xlu0 %2131
      %2134 = vset.pattern.permute.xlu0 7
      %2135 = vperm.xlu0 %2134, %v246
      %v2136 = vpop.permute.xlu0 %2135
      %2138 = vset.pattern.permute.xlu0 7
      %2139 = vperm.xlu0 %2138, %v247
      %v2140 = vpop.permute.xlu0 %2139
      %2142 = vset.pattern.permute.xlu0 7
      %2143 = vperm.xlu0 %2142, %v248
      %v2144 = vpop.permute.xlu0 %2143
      %2146 = vset.pattern.permute.xlu0 7
      %2147 = vperm.xlu0 %2146, %v249
      %v2148 = vpop.permute.xlu0 %2147
      %2150 = vset.pattern.permute.xlu0 7
      %2151 = vperm.xlu0 %2150, %v250
      %v2152 = vpop.permute.xlu0 %2151
      %2154 = vset.pattern.permute.xlu0 7
      %2155 = vperm.xlu0 %2154, %v251
      %v2156 = vpop.permute.xlu0 %2155
      %2158 = vset.pattern.permute.xlu0 7
      %2159 = vperm.xlu0 %2158, %v252
      %v2160 = vpop.permute.xlu0 %2159
      %2162 = vset.pattern.permute.xlu0 7
      %2163 = vperm.xlu0 %2162, %v253
      %v2164 = vpop.permute.xlu0 %2163
      %2166 = vset.pattern.permute.xlu0 7
      %2167 = vperm.xlu0 %2166, %v254
      %v2168 = vpop.permute.xlu0 %2167
      %2170 = vset.pattern.permute.xlu0 7
      %2171 = vperm.xlu0 %2170, %v255
      %v2172 = vpop.permute.xlu0 %2171
      %2174 = vset.pattern.permute.xlu0 7
      %2175 = vperm.xlu0 %2174, %v256
      %v2176 = vpop.permute.xlu0 %2175
      %v2178 = vmul.f32 %v2052, %v185
      %v2179 = vmul.f32 %v2052, %v186
      %v2180 = vmul.f32 %v2056, %v185
      %v2181 = vmul.f32 %v2056, %v186
      %v2182 = vmul.f32 %v2060, %v185
      %v2183 = vmul.f32 %v2060, %v186
      %v2184 = vmul.f32 %v2064, %v185
      %v2185 = vmul.f32 %v2064, %v186
      %v2186 = vmul.f32 %v2068, %v185
      %v2187 = vmul.f32 %v2068, %v186
      %v2188 = vmul.f32 %v2072, %v185
      %v2189 = vmul.f32 %v2072, %v186
      %v2190 = vmul.f32 %v2076, %v185
      %v2191 = vmul.f32 %v2076, %v186
      %v2192 = vmul.f32 %v2080, %v185
      %v2193 = vmul.f32 %v2080, %v186
      %v2194 = vmul.f32 %v2084, %v185
      %v2195 = vmul.f32 %v2084, %v186
      %v2196 = vmul.f32 %v2088, %v185
      %v2197 = vmul.f32 %v2088, %v186
      %v2198 = vmul.f32 %v2092, %v185
      %v2199 = vmul.f32 %v2092, %v186
      %v2200 = vmul.f32 %v2096, %v185
      %v2201 = vmul.f32 %v2096, %v186
      %v2202 = vmul.f32 %v2100, %v185
      %v2203 = vmul.f32 %v2100, %v186
      %v2204 = vmul.f32 %v2104, %v185
      %v2205 = vmul.f32 %v2104, %v186
      %v2206 = vmul.f32 %v2108, %v185
      %v2207 = vmul.f32 %v2108, %v186
      %v2208 = vmul.f32 %v2112, %v185
      %v2209 = vmul.f32 %v2112, %v186
      %v2210 = vmul.f32 %v2116, %v185
      %v2211 = vmul.f32 %v2116, %v186
      %v2212 = vmul.f32 %v2120, %v185
      %v2213 = vmul.f32 %v2120, %v186
      %v2214 = vmul.f32 %v2124, %v185
      %v2215 = vmul.f32 %v2124, %v186
      %v2216 = vmul.f32 %v2128, %v185
      %v2217 = vmul.f32 %v2128, %v186
      %v2218 = vmul.f32 %v2132, %v185
      %v2219 = vmul.f32 %v2132, %v186
      %v2220 = vmul.f32 %v2136, %v185
      %v2221 = vmul.f32 %v2136, %v186
      %v2222 = vmul.f32 %v2140, %v185
      %v2223 = vmul.f32 %v2140, %v186
      %v2224 = vmul.f32 %v2144, %v185
      %v2225 = vmul.f32 %v2144, %v186
      %v2226 = vmul.f32 %v2148, %v185
      %v2227 = vmul.f32 %v2148, %v186
      %v2228 = vmul.f32 %v2152, %v185
      %v2229 = vmul.f32 %v2152, %v186
      %v2230 = vmul.f32 %v2156, %v185
      %v2231 = vmul.f32 %v2156, %v186
      %v2232 = vmul.f32 %v2160, %v185
      %v2233 = vmul.f32 %v2160, %v186
      %v2234 = vmul.f32 %v2164, %v185
      %v2235 = vmul.f32 %v2164, %v186
      %v2236 = vmul.f32 %v2168, %v185
      %v2237 = vmul.f32 %v2168, %v186
      %v2238 = vmul.f32 %v2172, %v185
      %v2239 = vmul.f32 %v2172, %v186
      %v2240 = vmul.f32 %v2176, %v185
      %v2241 = vmul.f32 %v2176, %v186
      %v2306 = vrot.slane %v2178, 1
      %v2307 = vrot.slane %v2179, 1
      %v2308 = vsel %vm1889, %v2306, %v2307
      %v2309 = vrot.slane %v2180, 1
      %v2310 = vrot.slane %v2181, 1
      %v2311 = vsel %vm1889, %v2309, %v2310
      %v2312 = vrot.slane %v2182, 1
      %v2313 = vrot.slane %v2183, 1
      %v2314 = vsel %vm1889, %v2312, %v2313
      %v2315 = vrot.slane %v2184, 1
      %v2316 = vrot.slane %v2185, 1
      %v2317 = vsel %vm1889, %v2315, %v2316
      %v2318 = vrot.slane %v2186, 1
      %v2319 = vrot.slane %v2187, 1
      %v2320 = vsel %vm1889, %v2318, %v2319
      %v2321 = vrot.slane %v2188, 1
      %v2322 = vrot.slane %v2189, 1
      %v2323 = vsel %vm1889, %v2321, %v2322
      %v2324 = vrot.slane %v2190, 1
      %v2325 = vrot.slane %v2191, 1
      %v2326 = vsel %vm1889, %v2324, %v2325
      %v2327 = vrot.slane %v2192, 1
      %v2328 = vrot.slane %v2193, 1
      %v2329 = vsel %vm1889, %v2327, %v2328
      %v2330 = vrot.slane %v2194, 1
      %v2331 = vrot.slane %v2195, 1
      %v2332 = vsel %vm1889, %v2330, %v2331
      %v2333 = vrot.slane %v2196, 1
      %v2334 = vrot.slane %v2197, 1
      %v2335 = vsel %vm1889, %v2333, %v2334
      %v2336 = vrot.slane %v2198, 1
      %v2337 = vrot.slane %v2199, 1
      %v2338 = vsel %vm1889, %v2336, %v2337
      %v2339 = vrot.slane %v2200, 1
      %v2340 = vrot.slane %v2201, 1
      %v2341 = vsel %vm1889, %v2339, %v2340
      %v2342 = vrot.slane %v2202, 1
      %v2343 = vrot.slane %v2203, 1
      %v2344 = vsel %vm1889, %v2342, %v2343
      %v2345 = vrot.slane %v2204, 1
      %v2346 = vrot.slane %v2205, 1
      %v2347 = vsel %vm1889, %v2345, %v2346
      %v2348 = vrot.slane %v2206, 1
      %v2349 = vrot.slane %v2207, 1
      %v2350 = vsel %vm1889, %v2348, %v2349
      %v2351 = vrot.slane %v2208, 1
      %v2352 = vrot.slane %v2209, 1
      %v2353 = vsel %vm1889, %v2351, %v2352
      %v2354 = vrot.slane %v2210, 1
      %v2355 = vrot.slane %v2211, 1
      %v2356 = vsel %vm1889, %v2354, %v2355
      %v2357 = vrot.slane %v2212, 1
      %v2358 = vrot.slane %v2213, 1
      %v2359 = vsel %vm1889, %v2357, %v2358
      %v2360 = vrot.slane %v2214, 1
      %v2361 = vrot.slane %v2215, 1
      %v2362 = vsel %vm1889, %v2360, %v2361
      %v2363 = vrot.slane %v2216, 1
      %v2364 = vrot.slane %v2217, 1
      %v2365 = vsel %vm1889, %v2363, %v2364
      %v2366 = vrot.slane %v2218, 1
      %v2367 = vrot.slane %v2219, 1
      %v2368 = vsel %vm1889, %v2366, %v2367
      %v2369 = vrot.slane %v2220, 1
      %v2370 = vrot.slane %v2221, 1
      %v2371 = vsel %vm1889, %v2369, %v2370
      %v2372 = vrot.slane %v2222, 1
      %v2373 = vrot.slane %v2223, 1
      %v2374 = vsel %vm1889, %v2372, %v2373
      %v2375 = vrot.slane %v2224, 1
      %v2376 = vrot.slane %v2225, 1
      %v2377 = vsel %vm1889, %v2375, %v2376
      %v2378 = vrot.slane %v2226, 1
      %v2379 = vrot.slane %v2227, 1
      %v2380 = vsel %vm1889, %v2378, %v2379
      %v2381 = vrot.slane %v2228, 1
      %v2382 = vrot.slane %v2229, 1
      %v2383 = vsel %vm1889, %v2381, %v2382
      %v2384 = vrot.slane %v2230, 1
      %v2385 = vrot.slane %v2231, 1
      %v2386 = vsel %vm1889, %v2384, %v2385
      %v2387 = vrot.slane %v2232, 1
      %v2388 = vrot.slane %v2233, 1
      %v2389 = vsel %vm1889, %v2387, %v2388
      %v2390 = vrot.slane %v2234, 1
      %v2391 = vrot.slane %v2235, 1
      %v2392 = vsel %vm1889, %v2390, %v2391
      %v2393 = vrot.slane %v2236, 1
      %v2394 = vrot.slane %v2237, 1
      %v2395 = vsel %vm1889, %v2393, %v2394
      %v2396 = vrot.slane %v2238, 1
      %v2397 = vrot.slane %v2239, 1
      %v2398 = vsel %vm1889, %v2396, %v2397
      %v2399 = vrot.slane %v2240, 1
      %v2400 = vrot.slane %v2241, 1
      %v2401 = vsel %vm1889, %v2399, %v2400
      %v2434 = vadd.f32 %v2018, %v2308
      %v2435 = vadd.f32 %v2019, %v2311
      %v2436 = vadd.f32 %v2020, %v2314
      %v2437 = vadd.f32 %v2021, %v2317
      %v2438 = vadd.f32 %v2022, %v2320
      %v2439 = vadd.f32 %v2023, %v2323
      %v2440 = vadd.f32 %v2024, %v2326
      %v2441 = vadd.f32 %v2025, %v2329
      %v2442 = vadd.f32 %v2026, %v2332
      %v2443 = vadd.f32 %v2027, %v2335
      %v2444 = vadd.f32 %v2028, %v2338
      %v2445 = vadd.f32 %v2029, %v2341
      %v2446 = vadd.f32 %v2030, %v2344
      %v2447 = vadd.f32 %v2031, %v2347
      %v2448 = vadd.f32 %v2032, %v2350
      %v2449 = vadd.f32 %v2033, %v2353
      %v2450 = vadd.f32 %v2034, %v2356
      %v2451 = vadd.f32 %v2035, %v2359
      %v2452 = vadd.f32 %v2036, %v2362
      %v2453 = vadd.f32 %v2037, %v2365
      %v2454 = vadd.f32 %v2038, %v2368
      %v2455 = vadd.f32 %v2039, %v2371
      %v2456 = vadd.f32 %v2040, %v2374
      %v2457 = vadd.f32 %v2041, %v2377
      %v2458 = vadd.f32 %v2042, %v2380
      %v2459 = vadd.f32 %v2043, %v2383
      %v2460 = vadd.f32 %v2044, %v2386
      %v2461 = vadd.f32 %v2045, %v2389
      %v2462 = vadd.f32 %v2046, %v2392
      %v2463 = vadd.f32 %v2047, %v2395
      %v2464 = vadd.f32 %v2048, %v2398
      %v2465 = vadd.f32 %v2049, %v2401
      %2466 = vset.pattern.permute.xlu0 8
      %2467 = vperm.xlu0 %2466, %v225
      %v2468 = vpop.permute.xlu0 %2467
      %2470 = vset.pattern.permute.xlu0 8
      %2471 = vperm.xlu0 %2470, %v226
      %v2472 = vpop.permute.xlu0 %2471
      %2474 = vset.pattern.permute.xlu0 8
      %2475 = vperm.xlu0 %2474, %v227
      %v2476 = vpop.permute.xlu0 %2475
      %2478 = vset.pattern.permute.xlu0 8
      %2479 = vperm.xlu0 %2478, %v228
      %v2480 = vpop.permute.xlu0 %2479
      %2482 = vset.pattern.permute.xlu0 8
      %2483 = vperm.xlu0 %2482, %v229
      %v2484 = vpop.permute.xlu0 %2483
      %2486 = vset.pattern.permute.xlu0 8
      %2487 = vperm.xlu0 %2486, %v230
      %v2488 = vpop.permute.xlu0 %2487
      %2490 = vset.pattern.permute.xlu0 8
      %2491 = vperm.xlu0 %2490, %v231
      %v2492 = vpop.permute.xlu0 %2491
      %2494 = vset.pattern.permute.xlu0 8
      %2495 = vperm.xlu0 %2494, %v232
      %v2496 = vpop.permute.xlu0 %2495
      %2498 = vset.pattern.permute.xlu0 8
      %2499 = vperm.xlu0 %2498, %v233
      %v2500 = vpop.permute.xlu0 %2499
      %2502 = vset.pattern.permute.xlu0 8
      %2503 = vperm.xlu0 %2502, %v234
      %v2504 = vpop.permute.xlu0 %2503
      %2506 = vset.pattern.permute.xlu0 8
      %2507 = vperm.xlu0 %2506, %v235
      %v2508 = vpop.permute.xlu0 %2507
      %2510 = vset.pattern.permute.xlu0 8
      %2511 = vperm.xlu0 %2510, %v236
      %v2512 = vpop.permute.xlu0 %2511
      %2514 = vset.pattern.permute.xlu0 8
      %2515 = vperm.xlu0 %2514, %v237
      %v2516 = vpop.permute.xlu0 %2515
      %2518 = vset.pattern.permute.xlu0 8
      %2519 = vperm.xlu0 %2518, %v238
      %v2520 = vpop.permute.xlu0 %2519
      %2522 = vset.pattern.permute.xlu0 8
      %2523 = vperm.xlu0 %2522, %v239
      %v2524 = vpop.permute.xlu0 %2523
      %2526 = vset.pattern.permute.xlu0 8
      %2527 = vperm.xlu0 %2526, %v240
      %v2528 = vpop.permute.xlu0 %2527
      %2530 = vset.pattern.permute.xlu0 8
      %2531 = vperm.xlu0 %2530, %v241
      %v2532 = vpop.permute.xlu0 %2531
      %2534 = vset.pattern.permute.xlu0 8
      %2535 = vperm.xlu0 %2534, %v242
      %v2536 = vpop.permute.xlu0 %2535
      %2538 = vset.pattern.permute.xlu0 8
      %2539 = vperm.xlu0 %2538, %v243
      %v2540 = vpop.permute.xlu0 %2539
      %2542 = vset.pattern.permute.xlu0 8
      %2543 = vperm.xlu0 %2542, %v244
      %v2544 = vpop.permute.xlu0 %2543
      %2546 = vset.pattern.permute.xlu0 8
      %2547 = vperm.xlu0 %2546, %v245
      %v2548 = vpop.permute.xlu0 %2547
      %2550 = vset.pattern.permute.xlu0 8
      %2551 = vperm.xlu0 %2550, %v246
      %v2552 = vpop.permute.xlu0 %2551
      %2554 = vset.pattern.permute.xlu0 8
      %2555 = vperm.xlu0 %2554, %v247
      %v2556 = vpop.permute.xlu0 %2555
      %2558 = vset.pattern.permute.xlu0 8
      %2559 = vperm.xlu0 %2558, %v248
      %v2560 = vpop.permute.xlu0 %2559
      %2562 = vset.pattern.permute.xlu0 8
      %2563 = vperm.xlu0 %2562, %v249
      %v2564 = vpop.permute.xlu0 %2563
      %2566 = vset.pattern.permute.xlu0 8
      %2567 = vperm.xlu0 %2566, %v250
      %v2568 = vpop.permute.xlu0 %2567
      %2570 = vset.pattern.permute.xlu0 8
      %2571 = vperm.xlu0 %2570, %v251
      %v2572 = vpop.permute.xlu0 %2571
      %2574 = vset.pattern.permute.xlu0 8
      %2575 = vperm.xlu0 %2574, %v252
      %v2576 = vpop.permute.xlu0 %2575
      %2578 = vset.pattern.permute.xlu0 8
      %2579 = vperm.xlu0 %2578, %v253
      %v2580 = vpop.permute.xlu0 %2579
      %2582 = vset.pattern.permute.xlu0 8
      %2583 = vperm.xlu0 %2582, %v254
      %v2584 = vpop.permute.xlu0 %2583
      %2586 = vset.pattern.permute.xlu0 8
      %2587 = vperm.xlu0 %2586, %v255
      %v2588 = vpop.permute.xlu0 %2587
      %2590 = vset.pattern.permute.xlu0 8
      %2591 = vperm.xlu0 %2590, %v256
      %v2592 = vpop.permute.xlu0 %2591
      %v2594 = vmul.f32 %v2468, %v182
      %v2595 = vmul.f32 %v2468, %v183
      %v2596 = vmul.f32 %v2472, %v182
      %v2597 = vmul.f32 %v2472, %v183
      %v2598 = vmul.f32 %v2476, %v182
      %v2599 = vmul.f32 %v2476, %v183
      %v2600 = vmul.f32 %v2480, %v182
      %v2601 = vmul.f32 %v2480, %v183
      %v2602 = vmul.f32 %v2484, %v182
      %v2603 = vmul.f32 %v2484, %v183
      %v2604 = vmul.f32 %v2488, %v182
      %v2605 = vmul.f32 %v2488, %v183
      %v2606 = vmul.f32 %v2492, %v182
      %v2607 = vmul.f32 %v2492, %v183
      %v2608 = vmul.f32 %v2496, %v182
      %v2609 = vmul.f32 %v2496, %v183
      %v2610 = vmul.f32 %v2500, %v182
      %v2611 = vmul.f32 %v2500, %v183
      %v2612 = vmul.f32 %v2504, %v182
      %v2613 = vmul.f32 %v2504, %v183
      %v2614 = vmul.f32 %v2508, %v182
      %v2615 = vmul.f32 %v2508, %v183
      %v2616 = vmul.f32 %v2512, %v182
      %v2617 = vmul.f32 %v2512, %v183
      %v2618 = vmul.f32 %v2516, %v182
      %v2619 = vmul.f32 %v2516, %v183
      %v2620 = vmul.f32 %v2520, %v182
      %v2621 = vmul.f32 %v2520, %v183
      %v2622 = vmul.f32 %v2524, %v182
      %v2623 = vmul.f32 %v2524, %v183
      %v2624 = vmul.f32 %v2528, %v182
      %v2625 = vmul.f32 %v2528, %v183
      %v2626 = vmul.f32 %v2532, %v182
      %v2627 = vmul.f32 %v2532, %v183
      %v2628 = vmul.f32 %v2536, %v182
      %v2629 = vmul.f32 %v2536, %v183
      %v2630 = vmul.f32 %v2540, %v182
      %v2631 = vmul.f32 %v2540, %v183
      %v2632 = vmul.f32 %v2544, %v182
      %v2633 = vmul.f32 %v2544, %v183
      %v2634 = vmul.f32 %v2548, %v182
      %v2635 = vmul.f32 %v2548, %v183
      %v2636 = vmul.f32 %v2552, %v182
      %v2637 = vmul.f32 %v2552, %v183
      %v2638 = vmul.f32 %v2556, %v182
      %v2639 = vmul.f32 %v2556, %v183
      %v2640 = vmul.f32 %v2560, %v182
      %v2641 = vmul.f32 %v2560, %v183
      %v2642 = vmul.f32 %v2564, %v182
      %v2643 = vmul.f32 %v2564, %v183
      %v2644 = vmul.f32 %v2568, %v182
      %v2645 = vmul.f32 %v2568, %v183
      %v2646 = vmul.f32 %v2572, %v182
      %v2647 = vmul.f32 %v2572, %v183
      %v2648 = vmul.f32 %v2576, %v182
      %v2649 = vmul.f32 %v2576, %v183
      %v2650 = vmul.f32 %v2580, %v182
      %v2651 = vmul.f32 %v2580, %v183
      %v2652 = vmul.f32 %v2584, %v182
      %v2653 = vmul.f32 %v2584, %v183
      %v2654 = vmul.f32 %v2588, %v182
      %v2655 = vmul.f32 %v2588, %v183
      %v2656 = vmul.f32 %v2592, %v182
      %v2657 = vmul.f32 %v2592, %v183
      %v2722 = vrot.slane %v2594, 1
      %v2723 = vrot.slane %v2595, 1
      %v2724 = vsel %vm1889, %v2722, %v2723
      %v2725 = vrot.slane %v2596, 1
      %v2726 = vrot.slane %v2597, 1
      %v2727 = vsel %vm1889, %v2725, %v2726
      %v2728 = vrot.slane %v2598, 1
      %v2729 = vrot.slane %v2599, 1
      %v2730 = vsel %vm1889, %v2728, %v2729
      %v2731 = vrot.slane %v2600, 1
      %v2732 = vrot.slane %v2601, 1
      %v2733 = vsel %vm1889, %v2731, %v2732
      %v2734 = vrot.slane %v2602, 1
      %v2735 = vrot.slane %v2603, 1
      %v2736 = vsel %vm1889, %v2734, %v2735
      %v2737 = vrot.slane %v2604, 1
      %v2738 = vrot.slane %v2605, 1
      %v2739 = vsel %vm1889, %v2737, %v2738
      %v2740 = vrot.slane %v2606, 1
      %v2741 = vrot.slane %v2607, 1
      %v2742 = vsel %vm1889, %v2740, %v2741
      %v2743 = vrot.slane %v2608, 1
      %v2744 = vrot.slane %v2609, 1
      %v2745 = vsel %vm1889, %v2743, %v2744
      %v2746 = vrot.slane %v2610, 1
      %v2747 = vrot.slane %v2611, 1
      %v2748 = vsel %vm1889, %v2746, %v2747
      %v2749 = vrot.slane %v2612, 1
      %v2750 = vrot.slane %v2613, 1
      %v2751 = vsel %vm1889, %v2749, %v2750
      %v2752 = vrot.slane %v2614, 1
      %v2753 = vrot.slane %v2615, 1
      %v2754 = vsel %vm1889, %v2752, %v2753
      %v2755 = vrot.slane %v2616, 1
      %v2756 = vrot.slane %v2617, 1
      %v2757 = vsel %vm1889, %v2755, %v2756
      %v2758 = vrot.slane %v2618, 1
      %v2759 = vrot.slane %v2619, 1
      %v2760 = vsel %vm1889, %v2758, %v2759
      %v2761 = vrot.slane %v2620, 1
      %v2762 = vrot.slane %v2621, 1
      %v2763 = vsel %vm1889, %v2761, %v2762
      %v2764 = vrot.slane %v2622, 1
      %v2765 = vrot.slane %v2623, 1
      %v2766 = vsel %vm1889, %v2764, %v2765
      %v2767 = vrot.slane %v2624, 1
      %v2768 = vrot.slane %v2625, 1
      %v2769 = vsel %vm1889, %v2767, %v2768
      %v2770 = vrot.slane %v2626, 1
      %v2771 = vrot.slane %v2627, 1
      %v2772 = vsel %vm1889, %v2770, %v2771
      %v2773 = vrot.slane %v2628, 1
      %v2774 = vrot.slane %v2629, 1
      %v2775 = vsel %vm1889, %v2773, %v2774
      %v2776 = vrot.slane %v2630, 1
      %v2777 = vrot.slane %v2631, 1
      %v2778 = vsel %vm1889, %v2776, %v2777
      %v2779 = vrot.slane %v2632, 1
      %v2780 = vrot.slane %v2633, 1
      %v2781 = vsel %vm1889, %v2779, %v2780
      %v2782 = vrot.slane %v2634, 1
      %v2783 = vrot.slane %v2635, 1
      %v2784 = vsel %vm1889, %v2782, %v2783
      %v2785 = vrot.slane %v2636, 1
      %v2786 = vrot.slane %v2637, 1
      %v2787 = vsel %vm1889, %v2785, %v2786
      %v2788 = vrot.slane %v2638, 1
      %v2789 = vrot.slane %v2639, 1
      %v2790 = vsel %vm1889, %v2788, %v2789
      %v2791 = vrot.slane %v2640, 1
      %v2792 = vrot.slane %v2641, 1
      %v2793 = vsel %vm1889, %v2791, %v2792
      %v2794 = vrot.slane %v2642, 1
      %v2795 = vrot.slane %v2643, 1
      %v2796 = vsel %vm1889, %v2794, %v2795
      %v2797 = vrot.slane %v2644, 1
      %v2798 = vrot.slane %v2645, 1
      %v2799 = vsel %vm1889, %v2797, %v2798
      %v2800 = vrot.slane %v2646, 1
      %v2801 = vrot.slane %v2647, 1
      %v2802 = vsel %vm1889, %v2800, %v2801
      %v2803 = vrot.slane %v2648, 1
      %v2804 = vrot.slane %v2649, 1
      %v2805 = vsel %vm1889, %v2803, %v2804
      %v2806 = vrot.slane %v2650, 1
      %v2807 = vrot.slane %v2651, 1
      %v2808 = vsel %vm1889, %v2806, %v2807
      %v2809 = vrot.slane %v2652, 1
      %v2810 = vrot.slane %v2653, 1
      %v2811 = vsel %vm1889, %v2809, %v2810
      %v2812 = vrot.slane %v2654, 1
      %v2813 = vrot.slane %v2655, 1
      %v2814 = vsel %vm1889, %v2812, %v2813
      %v2815 = vrot.slane %v2656, 1
      %v2816 = vrot.slane %v2657, 1
      %v2817 = vsel %vm1889, %v2815, %v2816
      %2818 = vrot.lane.b32.xlu0 %v2724, 127
      %v2819 = vpop.permute.xlu0 %2818
      %2820 = vrot.lane.b32.xlu0 %v2727, 127
      %v2821 = vpop.permute.xlu0 %2820
      %2822 = vrot.lane.b32.xlu0 %v2730, 127
      %v2823 = vpop.permute.xlu0 %2822
      %2824 = vrot.lane.b32.xlu0 %v2733, 127
      %v2825 = vpop.permute.xlu0 %2824
      %2826 = vrot.lane.b32.xlu0 %v2736, 127
      %v2827 = vpop.permute.xlu0 %2826
      %2828 = vrot.lane.b32.xlu0 %v2739, 127
      %v2829 = vpop.permute.xlu0 %2828
      %2830 = vrot.lane.b32.xlu0 %v2742, 127
      %v2831 = vpop.permute.xlu0 %2830
      %2832 = vrot.lane.b32.xlu0 %v2745, 127
      %v2833 = vpop.permute.xlu0 %2832
      %2834 = vrot.lane.b32.xlu0 %v2748, 127
      %v2835 = vpop.permute.xlu0 %2834
      %2836 = vrot.lane.b32.xlu0 %v2751, 127
      %v2837 = vpop.permute.xlu0 %2836
      %2838 = vrot.lane.b32.xlu0 %v2754, 127
      %v2839 = vpop.permute.xlu0 %2838
      %2840 = vrot.lane.b32.xlu0 %v2757, 127
      %v2841 = vpop.permute.xlu0 %2840
      %2842 = vrot.lane.b32.xlu0 %v2760, 127
      %v2843 = vpop.permute.xlu0 %2842
      %2844 = vrot.lane.b32.xlu0 %v2763, 127
      %v2845 = vpop.permute.xlu0 %2844
      %2846 = vrot.lane.b32.xlu0 %v2766, 127
      %v2847 = vpop.permute.xlu0 %2846
      %2848 = vrot.lane.b32.xlu0 %v2769, 127
      %v2849 = vpop.permute.xlu0 %2848
      %2850 = vrot.lane.b32.xlu0 %v2772, 127
      %v2851 = vpop.permute.xlu0 %2850
      %2852 = vrot.lane.b32.xlu0 %v2775, 127
      %v2853 = vpop.permute.xlu0 %2852
      %2854 = vrot.lane.b32.xlu0 %v2778, 127
      %v2855 = vpop.permute.xlu0 %2854
      %2856 = vrot.lane.b32.xlu0 %v2781, 127
      %v2857 = vpop.permute.xlu0 %2856
      %2858 = vrot.lane.b32.xlu0 %v2784, 127
      %v2859 = vpop.permute.xlu0 %2858
      %2860 = vrot.lane.b32.xlu0 %v2787, 127
      %v2861 = vpop.permute.xlu0 %2860
      %2862 = vrot.lane.b32.xlu0 %v2790, 127
      %v2863 = vpop.permute.xlu0 %2862
      %2864 = vrot.lane.b32.xlu0 %v2793, 127
      %v2865 = vpop.permute.xlu0 %2864
      %2866 = vrot.lane.b32.xlu0 %v2796, 127
      %v2867 = vpop.permute.xlu0 %2866
      %2868 = vrot.lane.b32.xlu0 %v2799, 127
      %v2869 = vpop.permute.xlu0 %2868
      %2870 = vrot.lane.b32.xlu0 %v2802, 127
      %v2871 = vpop.permute.xlu0 %2870
      %2872 = vrot.lane.b32.xlu0 %v2805, 127
      %v2873 = vpop.permute.xlu0 %2872
      %2874 = vrot.lane.b32.xlu0 %v2808, 127
      %v2875 = vpop.permute.xlu0 %2874
      %2876 = vrot.lane.b32.xlu0 %v2811, 127
      %v2877 = vpop.permute.xlu0 %2876
      %2878 = vrot.lane.b32.xlu0 %v2814, 127
      %v2879 = vpop.permute.xlu0 %2878
      %2880 = vrot.lane.b32.xlu0 %v2817, 127
      %v2881 = vpop.permute.xlu0 %2880
      %v2914 = vadd.f32 %v2434, %v2819
      %v2915 = vadd.f32 %v2435, %v2821
      %v2916 = vadd.f32 %v2436, %v2823
      %v2917 = vadd.f32 %v2437, %v2825
      %v2918 = vadd.f32 %v2438, %v2827
      %v2919 = vadd.f32 %v2439, %v2829
      %v2920 = vadd.f32 %v2440, %v2831
      %v2921 = vadd.f32 %v2441, %v2833
      %v2922 = vadd.f32 %v2442, %v2835
      %v2923 = vadd.f32 %v2443, %v2837
      %v2924 = vadd.f32 %v2444, %v2839
      %v2925 = vadd.f32 %v2445, %v2841
      %v2926 = vadd.f32 %v2446, %v2843
      %v2927 = vadd.f32 %v2447, %v2845
      %v2928 = vadd.f32 %v2448, %v2847
      %v2929 = vadd.f32 %v2449, %v2849
      %v2930 = vadd.f32 %v2450, %v2851
      %v2931 = vadd.f32 %v2451, %v2853
      %v2932 = vadd.f32 %v2452, %v2855
      %v2933 = vadd.f32 %v2453, %v2857
      %v2934 = vadd.f32 %v2454, %v2859
      %v2935 = vadd.f32 %v2455, %v2861
      %v2936 = vadd.f32 %v2456, %v2863
      %v2937 = vadd.f32 %v2457, %v2865
      %v2938 = vadd.f32 %v2458, %v2867
      %v2939 = vadd.f32 %v2459, %v2869
      %v2940 = vadd.f32 %v2460, %v2871
      %v2941 = vadd.f32 %v2461, %v2873
      %v2942 = vadd.f32 %v2462, %v2875
      %v2943 = vadd.f32 %v2463, %v2877
      %v2944 = vadd.f32 %v2464, %v2879
      %v2945 = vadd.f32 %v2465, %v2881
      %v2946 = vmax.f32 %v2914, 0.0
      %v2947 = vmax.f32 %v2915, 0.0
      %v2948 = vmax.f32 %v2916, 0.0
      %v2949 = vmax.f32 %v2917, 0.0
      %v2950 = vmax.f32 %v2918, 0.0
      %v2951 = vmax.f32 %v2919, 0.0
      %v2952 = vmax.f32 %v2920, 0.0
      %v2953 = vmax.f32 %v2921, 0.0
      %v2954 = vmax.f32 %v2922, 0.0
      %v2955 = vmax.f32 %v2923, 0.0
      %v2956 = vmax.f32 %v2924, 0.0
      %v2957 = vmax.f32 %v2925, 0.0
      %v2958 = vmax.f32 %v2926, 0.0
      %v2959 = vmax.f32 %v2927, 0.0
      %v2960 = vmax.f32 %v2928, 0.0
      %v2961 = vmax.f32 %v2929, 0.0
      %v2962 = vmax.f32 %v2930, 0.0
      %v2963 = vmax.f32 %v2931, 0.0
      %v2964 = vmax.f32 %v2932, 0.0
      %v2965 = vmax.f32 %v2933, 0.0
      %v2966 = vmax.f32 %v2934, 0.0
      %v2967 = vmax.f32 %v2935, 0.0
      %v2968 = vmax.f32 %v2936, 0.0
      %v2969 = vmax.f32 %v2937, 0.0
      %v2970 = vmax.f32 %v2938, 0.0
      %v2971 = vmax.f32 %v2939, 0.0
      %v2972 = vmax.f32 %v2940, 0.0
      %v2973 = vmax.f32 %v2941, 0.0
      %v2974 = vmax.f32 %v2942, 0.0
      %v2975 = vmax.f32 %v2943, 0.0
      %v2976 = vmax.f32 %v2944, 0.0
      %v2977 = vmax.f32 %v2945, 0.0
      %v2978 = vmul.f32 %v259, %v185
      %v2979 = vmul.f32 %v263, %v185
      %v2980 = vmul.f32 %v267, %v185
      %v2981 = vmul.f32 %v271, %v185
      %v2982 = vmul.f32 %v275, %v185
      %v2983 = vmul.f32 %v279, %v185
      %v2984 = vmul.f32 %v283, %v185
      %v2985 = vmul.f32 %v287, %v185
      %v2986 = vmul.f32 %v291, %v185
      %v2987 = vmul.f32 %v295, %v185
      %v2988 = vmul.f32 %v299, %v185
      %v2989 = vmul.f32 %v303, %v185
      %v2990 = vmul.f32 %v307, %v185
      %v2991 = vmul.f32 %v311, %v185
      %v2992 = vmul.f32 %v315, %v185
      %v2993 = vmul.f32 %v319, %v185
      %v2994 = vmul.f32 %v323, %v185
      %v2995 = vmul.f32 %v327, %v185
      %v2996 = vmul.f32 %v331, %v185
      %v2997 = vmul.f32 %v335, %v185
      %v2998 = vmul.f32 %v339, %v185
      %v2999 = vmul.f32 %v343, %v185
      %v3000 = vmul.f32 %v347, %v185
      %v3001 = vmul.f32 %v351, %v185
      %v3002 = vmul.f32 %v355, %v185
      %v3003 = vmul.f32 %v359, %v185
      %v3004 = vmul.f32 %v363, %v185
      %v3005 = vmul.f32 %v367, %v185
      %v3006 = vmul.f32 %v371, %v185
      %v3007 = vmul.f32 %v375, %v185
      %v3008 = vmul.f32 %v379, %v185
      %v3009 = vmul.f32 %v383, %v185
      %v3010 = vmul.f32 %v419, %v182
      %v3011 = vmul.f32 %v423, %v182
      %v3012 = vmul.f32 %v427, %v182
      %v3013 = vmul.f32 %v431, %v182
      %v3014 = vmul.f32 %v435, %v182
      %v3015 = vmul.f32 %v439, %v182
      %v3016 = vmul.f32 %v443, %v182
      %v3017 = vmul.f32 %v447, %v182
      %v3018 = vmul.f32 %v451, %v182
      %v3019 = vmul.f32 %v455, %v182
      %v3020 = vmul.f32 %v459, %v182
      %v3021 = vmul.f32 %v463, %v182
      %v3022 = vmul.f32 %v467, %v182
      %v3023 = vmul.f32 %v471, %v182
      %v3024 = vmul.f32 %v475, %v182
      %v3025 = vmul.f32 %v479, %v182
      %v3026 = vmul.f32 %v483, %v182
      %v3027 = vmul.f32 %v487, %v182
      %v3028 = vmul.f32 %v491, %v182
      %v3029 = vmul.f32 %v495, %v182
      %v3030 = vmul.f32 %v499, %v182
      %v3031 = vmul.f32 %v503, %v182
      %v3032 = vmul.f32 %v507, %v182
      %v3033 = vmul.f32 %v511, %v182
      %v3034 = vmul.f32 %v515, %v182
      %v3035 = vmul.f32 %v519, %v182
      %v3036 = vmul.f32 %v523, %v182
      %v3037 = vmul.f32 %v527, %v182
      %v3038 = vmul.f32 %v531, %v182
      %v3039 = vmul.f32 %v535, %v182
      %v3040 = vmul.f32 %v539, %v182
      %v3041 = vmul.f32 %v543, %v182
      %3074 = vrot.lane.b32.xlu0 %v3010, 127
      %v3075 = vpop.permute.xlu0 %3074
      %3076 = vrot.lane.b32.xlu0 %v3011, 127
      %v3077 = vpop.permute.xlu0 %3076
      %3078 = vrot.lane.b32.xlu0 %v3012, 127
      %v3079 = vpop.permute.xlu0 %3078
      %3080 = vrot.lane.b32.xlu0 %v3013, 127
      %v3081 = vpop.permute.xlu0 %3080
      %3082 = vrot.lane.b32.xlu0 %v3014, 127
      %v3083 = vpop.permute.xlu0 %3082
      %3084 = vrot.lane.b32.xlu0 %v3015, 127
      %v3085 = vpop.permute.xlu0 %3084
      %3086 = vrot.lane.b32.xlu0 %v3016, 127
      %v3087 = vpop.permute.xlu0 %3086
      %3088 = vrot.lane.b32.xlu0 %v3017, 127
      %v3089 = vpop.permute.xlu0 %3088
      %3090 = vrot.lane.b32.xlu0 %v3018, 127
      %v3091 = vpop.permute.xlu0 %3090
      %3092 = vrot.lane.b32.xlu0 %v3019, 127
      %v3093 = vpop.permute.xlu0 %3092
      %3094 = vrot.lane.b32.xlu0 %v3020, 127
      %v3095 = vpop.permute.xlu0 %3094
      %3096 = vrot.lane.b32.xlu0 %v3021, 127
      %v3097 = vpop.permute.xlu0 %3096
      %3098 = vrot.lane.b32.xlu0 %v3022, 127
      %v3099 = vpop.permute.xlu0 %3098
      %3100 = vrot.lane.b32.xlu0 %v3023, 127
      %v3101 = vpop.permute.xlu0 %3100
      %3102 = vrot.lane.b32.xlu0 %v3024, 127
      %v3103 = vpop.permute.xlu0 %3102
      %3104 = vrot.lane.b32.xlu0 %v3025, 127
      %v3105 = vpop.permute.xlu0 %3104
      %3106 = vrot.lane.b32.xlu0 %v3026, 127
      %v3107 = vpop.permute.xlu0 %3106
      %3108 = vrot.lane.b32.xlu0 %v3027, 127
      %v3109 = vpop.permute.xlu0 %3108
      %3110 = vrot.lane.b32.xlu0 %v3028, 127
      %v3111 = vpop.permute.xlu0 %3110
      %3112 = vrot.lane.b32.xlu0 %v3029, 127
      %v3113 = vpop.permute.xlu0 %3112
      %3114 = vrot.lane.b32.xlu0 %v3030, 127
      %v3115 = vpop.permute.xlu0 %3114
      %3116 = vrot.lane.b32.xlu0 %v3031, 127
      %v3117 = vpop.permute.xlu0 %3116
      %3118 = vrot.lane.b32.xlu0 %v3032, 127
      %v3119 = vpop.permute.xlu0 %3118
      %3120 = vrot.lane.b32.xlu0 %v3033, 127
      %v3121 = vpop.permute.xlu0 %3120
      %3122 = vrot.lane.b32.xlu0 %v3034, 127
      %v3123 = vpop.permute.xlu0 %3122
      %3124 = vrot.lane.b32.xlu0 %v3035, 127
      %v3125 = vpop.permute.xlu0 %3124
      %3126 = vrot.lane.b32.xlu0 %v3036, 127
      %v3127 = vpop.permute.xlu0 %3126
      %3128 = vrot.lane.b32.xlu0 %v3037, 127
      %v3129 = vpop.permute.xlu0 %3128
      %3130 = vrot.lane.b32.xlu0 %v3038, 127
      %v3131 = vpop.permute.xlu0 %3130
      %3132 = vrot.lane.b32.xlu0 %v3039, 127
      %v3133 = vpop.permute.xlu0 %3132
      %3134 = vrot.lane.b32.xlu0 %v3040, 127
      %v3135 = vpop.permute.xlu0 %3134
      %3136 = vrot.lane.b32.xlu0 %v3041, 127
      %v3137 = vpop.permute.xlu0 %3136
      %v3170 = vadd.f32 %v2978, %v3075
      %v3171 = vadd.f32 %v2979, %v3077
      %v3172 = vadd.f32 %v2980, %v3079
      %v3173 = vadd.f32 %v2981, %v3081
      %v3174 = vadd.f32 %v2982, %v3083
      %v3175 = vadd.f32 %v2983, %v3085
      %v3176 = vadd.f32 %v2984, %v3087
      %v3177 = vadd.f32 %v2985, %v3089
      %v3178 = vadd.f32 %v2986, %v3091
      %v3179 = vadd.f32 %v2987, %v3093
      %v3180 = vadd.f32 %v2988, %v3095
      %v3181 = vadd.f32 %v2989, %v3097
      %v3182 = vadd.f32 %v2990, %v3099
      %v3183 = vadd.f32 %v2991, %v3101
      %v3184 = vadd.f32 %v2992, %v3103
      %v3185 = vadd.f32 %v2993, %v3105
      %v3186 = vadd.f32 %v2994, %v3107
      %v3187 = vadd.f32 %v2995, %v3109
      %v3188 = vadd.f32 %v2996, %v3111
      %v3189 = vadd.f32 %v2997, %v3113
      %v3190 = vadd.f32 %v2998, %v3115
      %v3191 = vadd.f32 %v2999, %v3117
      %v3192 = vadd.f32 %v3000, %v3119
      %v3193 = vadd.f32 %v3001, %v3121
      %v3194 = vadd.f32 %v3002, %v3123
      %v3195 = vadd.f32 %v3003, %v3125
      %v3196 = vadd.f32 %v3004, %v3127
      %v3197 = vadd.f32 %v3005, %v3129
      %v3198 = vadd.f32 %v3006, %v3131
      %v3199 = vadd.f32 %v3007, %v3133
      %v3200 = vadd.f32 %v3008, %v3135
      %v3201 = vadd.f32 %v3009, %v3137
      %v3202 = vmul.f32 %v611, %v185
      %v3203 = vmul.f32 %v615, %v185
      %v3204 = vmul.f32 %v619, %v185
      %v3205 = vmul.f32 %v623, %v185
      %v3206 = vmul.f32 %v627, %v185
      %v3207 = vmul.f32 %v631, %v185
      %v3208 = vmul.f32 %v635, %v185
      %v3209 = vmul.f32 %v639, %v185
      %v3210 = vmul.f32 %v643, %v185
      %v3211 = vmul.f32 %v647, %v185
      %v3212 = vmul.f32 %v651, %v185
      %v3213 = vmul.f32 %v655, %v185
      %v3214 = vmul.f32 %v659, %v185
      %v3215 = vmul.f32 %v663, %v185
      %v3216 = vmul.f32 %v667, %v185
      %v3217 = vmul.f32 %v671, %v185
      %v3218 = vmul.f32 %v675, %v185
      %v3219 = vmul.f32 %v679, %v185
      %v3220 = vmul.f32 %v683, %v185
      %v3221 = vmul.f32 %v687, %v185
      %v3222 = vmul.f32 %v691, %v185
      %v3223 = vmul.f32 %v695, %v185
      %v3224 = vmul.f32 %v699, %v185
      %v3225 = vmul.f32 %v703, %v185
      %v3226 = vmul.f32 %v707, %v185
      %v3227 = vmul.f32 %v711, %v185
      %v3228 = vmul.f32 %v715, %v185
      %v3229 = vmul.f32 %v719, %v185
      %v3230 = vmul.f32 %v723, %v185
      %v3231 = vmul.f32 %v727, %v185
      %v3232 = vmul.f32 %v731, %v185
      %v3233 = vmul.f32 %v735, %v185
      %3266 = vrot.lane.b32.xlu0 %v3202, 127
      %v3267 = vpop.permute.xlu0 %3266
      %3268 = vrot.lane.b32.xlu0 %v3203, 127
      %v3269 = vpop.permute.xlu0 %3268
      %3270 = vrot.lane.b32.xlu0 %v3204, 127
      %v3271 = vpop.permute.xlu0 %3270
      %3272 = vrot.lane.b32.xlu0 %v3205, 127
      %v3273 = vpop.permute.xlu0 %3272
      %3274 = vrot.lane.b32.xlu0 %v3206, 127
      %v3275 = vpop.permute.xlu0 %3274
      %3276 = vrot.lane.b32.xlu0 %v3207, 127
      %v3277 = vpop.permute.xlu0 %3276
      %3278 = vrot.lane.b32.xlu0 %v3208, 127
      %v3279 = vpop.permute.xlu0 %3278
      %3280 = vrot.lane.b32.xlu0 %v3209, 127
      %v3281 = vpop.permute.xlu0 %3280
      %3282 = vrot.lane.b32.xlu0 %v3210, 127
      %v3283 = vpop.permute.xlu0 %3282
      %3284 = vrot.lane.b32.xlu0 %v3211, 127
      %v3285 = vpop.permute.xlu0 %3284
      %3286 = vrot.lane.b32.xlu0 %v3212, 127
      %v3287 = vpop.permute.xlu0 %3286
      %3288 = vrot.lane.b32.xlu0 %v3213, 127
      %v3289 = vpop.permute.xlu0 %3288
      %3290 = vrot.lane.b32.xlu0 %v3214, 127
      %v3291 = vpop.permute.xlu0 %3290
      %3292 = vrot.lane.b32.xlu0 %v3215, 127
      %v3293 = vpop.permute.xlu0 %3292
      %3294 = vrot.lane.b32.xlu0 %v3216, 127
      %v3295 = vpop.permute.xlu0 %3294
      %3296 = vrot.lane.b32.xlu0 %v3217, 127
      %v3297 = vpop.permute.xlu0 %3296
      %3298 = vrot.lane.b32.xlu0 %v3218, 127
      %v3299 = vpop.permute.xlu0 %3298
      %3300 = vrot.lane.b32.xlu0 %v3219, 127
      %v3301 = vpop.permute.xlu0 %3300
      %3302 = vrot.lane.b32.xlu0 %v3220, 127
      %v3303 = vpop.permute.xlu0 %3302
      %3304 = vrot.lane.b32.xlu0 %v3221, 127
      %v3305 = vpop.permute.xlu0 %3304
      %3306 = vrot.lane.b32.xlu0 %v3222, 127
      %v3307 = vpop.permute.xlu0 %3306
      %3308 = vrot.lane.b32.xlu0 %v3223, 127
      %v3309 = vpop.permute.xlu0 %3308
      %3310 = vrot.lane.b32.xlu0 %v3224, 127
      %v3311 = vpop.permute.xlu0 %3310
      %3312 = vrot.lane.b32.xlu0 %v3225, 127
      %v3313 = vpop.permute.xlu0 %3312
      %3314 = vrot.lane.b32.xlu0 %v3226, 127
      %v3315 = vpop.permute.xlu0 %3314
      %3316 = vrot.lane.b32.xlu0 %v3227, 127
      %v3317 = vpop.permute.xlu0 %3316
      %3318 = vrot.lane.b32.xlu0 %v3228, 127
      %v3319 = vpop.permute.xlu0 %3318
      %3320 = vrot.lane.b32.xlu0 %v3229, 127
      %v3321 = vpop.permute.xlu0 %3320
      %3322 = vrot.lane.b32.xlu0 %v3230, 127
      %v3323 = vpop.permute.xlu0 %3322
      %3324 = vrot.lane.b32.xlu0 %v3231, 127
      %v3325 = vpop.permute.xlu0 %3324
      %3326 = vrot.lane.b32.xlu0 %v3232, 127
      %v3327 = vpop.permute.xlu0 %3326
      %3328 = vrot.lane.b32.xlu0 %v3233, 127
      %v3329 = vpop.permute.xlu0 %3328
      %v3362 = vadd.f32 %v3170, %v3267
      %v3363 = vadd.f32 %v3171, %v3269
      %v3364 = vadd.f32 %v3172, %v3271
      %v3365 = vadd.f32 %v3173, %v3273
      %v3366 = vadd.f32 %v3174, %v3275
      %v3367 = vadd.f32 %v3175, %v3277
      %v3368 = vadd.f32 %v3176, %v3279
      %v3369 = vadd.f32 %v3177, %v3281
      %v3370 = vadd.f32 %v3178, %v3283
      %v3371 = vadd.f32 %v3179, %v3285
      %v3372 = vadd.f32 %v3180, %v3287
      %v3373 = vadd.f32 %v3181, %v3289
      %v3374 = vadd.f32 %v3182, %v3291
      %v3375 = vadd.f32 %v3183, %v3293
      %v3376 = vadd.f32 %v3184, %v3295
      %v3377 = vadd.f32 %v3185, %v3297
      %v3378 = vadd.f32 %v3186, %v3299
      %v3379 = vadd.f32 %v3187, %v3301
      %v3380 = vadd.f32 %v3188, %v3303
      %v3381 = vadd.f32 %v3189, %v3305
      %v3382 = vadd.f32 %v3190, %v3307
      %v3383 = vadd.f32 %v3191, %v3309
      %v3384 = vadd.f32 %v3192, %v3311
      %v3385 = vadd.f32 %v3193, %v3313
      %v3386 = vadd.f32 %v3194, %v3315
      %v3387 = vadd.f32 %v3195, %v3317
      %v3388 = vadd.f32 %v3196, %v3319
      %v3389 = vadd.f32 %v3197, %v3321
      %v3390 = vadd.f32 %v3198, %v3323
      %v3391 = vadd.f32 %v3199, %v3325
      %v3392 = vadd.f32 %v3200, %v3327
      %v3393 = vadd.f32 %v3201, %v3329
      %v3394 = vmul.f32 %v931, %v191
      %v3395 = vmul.f32 %v935, %v191
      %v3396 = vmul.f32 %v939, %v191
      %v3397 = vmul.f32 %v943, %v191
      %v3398 = vmul.f32 %v947, %v191
      %v3399 = vmul.f32 %v951, %v191
      %v3400 = vmul.f32 %v955, %v191
      %v3401 = vmul.f32 %v959, %v191
      %v3402 = vmul.f32 %v963, %v191
      %v3403 = vmul.f32 %v967, %v191
      %v3404 = vmul.f32 %v971, %v191
      %v3405 = vmul.f32 %v975, %v191
      %v3406 = vmul.f32 %v979, %v191
      %v3407 = vmul.f32 %v983, %v191
      %v3408 = vmul.f32 %v987, %v191
      %v3409 = vmul.f32 %v991, %v191
      %v3410 = vmul.f32 %v995, %v191
      %v3411 = vmul.f32 %v999, %v191
      %v3412 = vmul.f32 %v1003, %v191
      %v3413 = vmul.f32 %v1007, %v191
      %v3414 = vmul.f32 %v1011, %v191
      %v3415 = vmul.f32 %v1015, %v191
      %v3416 = vmul.f32 %v1019, %v191
      %v3417 = vmul.f32 %v1023, %v191
      %v3418 = vmul.f32 %v1027, %v191
      %v3419 = vmul.f32 %v1031, %v191
      %v3420 = vmul.f32 %v1035, %v191
      %v3421 = vmul.f32 %v1039, %v191
      %v3422 = vmul.f32 %v1043, %v191
      %v3423 = vmul.f32 %v1047, %v191
      %v3424 = vmul.f32 %v1051, %v191
      %v3425 = vmul.f32 %v1055, %v191
      %v3426 = vadd.f32 %v3362, %v3394
      %v3427 = vadd.f32 %v3363, %v3395
      %v3428 = vadd.f32 %v3364, %v3396
      %v3429 = vadd.f32 %v3365, %v3397
      %v3430 = vadd.f32 %v3366, %v3398
      %v3431 = vadd.f32 %v3367, %v3399
      %v3432 = vadd.f32 %v3368, %v3400
      %v3433 = vadd.f32 %v3369, %v3401
      %v3434 = vadd.f32 %v3370, %v3402
      %v3435 = vadd.f32 %v3371, %v3403
      %v3436 = vadd.f32 %v3372, %v3404
      %v3437 = vadd.f32 %v3373, %v3405
      %v3438 = vadd.f32 %v3374, %v3406
      %v3439 = vadd.f32 %v3375, %v3407
      %v3440 = vadd.f32 %v3376, %v3408
      %v3441 = vadd.f32 %v3377, %v3409
      %v3442 = vadd.f32 %v3378, %v3410
      %v3443 = vadd.f32 %v3379, %v3411
      %v3444 = vadd.f32 %v3380, %v3412
      %v3445 = vadd.f32 %v3381, %v3413
      %v3446 = vadd.f32 %v3382, %v3414
      %v3447 = vadd.f32 %v3383, %v3415
      %v3448 = vadd.f32 %v3384, %v3416
      %v3449 = vadd.f32 %v3385, %v3417
      %v3450 = vadd.f32 %v3386, %v3418
      %v3451 = vadd.f32 %v3387, %v3419
      %v3452 = vadd.f32 %v3388, %v3420
      %v3453 = vadd.f32 %v3389, %v3421
      %v3454 = vadd.f32 %v3390, %v3422
      %v3455 = vadd.f32 %v3391, %v3423
      %v3456 = vadd.f32 %v3392, %v3424
      %v3457 = vadd.f32 %v3393, %v3425
      %v3458 = vmul.f32 %v1123, %v188
      %v3459 = vmul.f32 %v1127, %v188
      %v3460 = vmul.f32 %v1131, %v188
      %v3461 = vmul.f32 %v1135, %v188
      %v3462 = vmul.f32 %v1139, %v188
      %v3463 = vmul.f32 %v1143, %v188
      %v3464 = vmul.f32 %v1147, %v188
      %v3465 = vmul.f32 %v1151, %v188
      %v3466 = vmul.f32 %v1155, %v188
      %v3467 = vmul.f32 %v1159, %v188
      %v3468 = vmul.f32 %v1163, %v188
      %v3469 = vmul.f32 %v1167, %v188
      %v3470 = vmul.f32 %v1171, %v188
      %v3471 = vmul.f32 %v1175, %v188
      %v3472 = vmul.f32 %v1179, %v188
      %v3473 = vmul.f32 %v1183, %v188
      %v3474 = vmul.f32 %v1187, %v188
      %v3475 = vmul.f32 %v1191, %v188
      %v3476 = vmul.f32 %v1195, %v188
      %v3477 = vmul.f32 %v1199, %v188
      %v3478 = vmul.f32 %v1203, %v188
      %v3479 = vmul.f32 %v1207, %v188
      %v3480 = vmul.f32 %v1211, %v188
      %v3481 = vmul.f32 %v1215, %v188
      %v3482 = vmul.f32 %v1219, %v188
      %v3483 = vmul.f32 %v1223, %v188
      %v3484 = vmul.f32 %v1227, %v188
      %v3485 = vmul.f32 %v1231, %v188
      %v3486 = vmul.f32 %v1235, %v188
      %v3487 = vmul.f32 %v1239, %v188
      %v3488 = vmul.f32 %v1243, %v188
      %v3489 = vmul.f32 %v1247, %v188
      %3522 = vrot.lane.b32.xlu0 %v3458, 127
      %v3523 = vpop.permute.xlu0 %3522
      %3524 = vrot.lane.b32.xlu0 %v3459, 127
      %v3525 = vpop.permute.xlu0 %3524
      %3526 = vrot.lane.b32.xlu0 %v3460, 127
      %v3527 = vpop.permute.xlu0 %3526
      %3528 = vrot.lane.b32.xlu0 %v3461, 127
      %v3529 = vpop.permute.xlu0 %3528
      %3530 = vrot.lane.b32.xlu0 %v3462, 127
      %v3531 = vpop.permute.xlu0 %3530
      %3532 = vrot.lane.b32.xlu0 %v3463, 127
      %v3533 = vpop.permute.xlu0 %3532
      %3534 = vrot.lane.b32.xlu0 %v3464, 127
      %v3535 = vpop.permute.xlu0 %3534
      %3536 = vrot.lane.b32.xlu0 %v3465, 127
      %v3537 = vpop.permute.xlu0 %3536
      %3538 = vrot.lane.b32.xlu0 %v3466, 127
      %v3539 = vpop.permute.xlu0 %3538
      %3540 = vrot.lane.b32.xlu0 %v3467, 127
      %v3541 = vpop.permute.xlu0 %3540
      %3542 = vrot.lane.b32.xlu0 %v3468, 127
      %v3543 = vpop.permute.xlu0 %3542
      %3544 = vrot.lane.b32.xlu0 %v3469, 127
      %v3545 = vpop.permute.xlu0 %3544
      %3546 = vrot.lane.b32.xlu0 %v3470, 127
      %v3547 = vpop.permute.xlu0 %3546
      %3548 = vrot.lane.b32.xlu0 %v3471, 127
      %v3549 = vpop.permute.xlu0 %3548
      %3550 = vrot.lane.b32.xlu0 %v3472, 127
      %v3551 = vpop.permute.xlu0 %3550
      %3552 = vrot.lane.b32.xlu0 %v3473, 127
      %v3553 = vpop.permute.xlu0 %3552
      %3554 = vrot.lane.b32.xlu0 %v3474, 127
      %v3555 = vpop.permute.xlu0 %3554
      %3556 = vrot.lane.b32.xlu0 %v3475, 127
      %v3557 = vpop.permute.xlu0 %3556
      %3558 = vrot.lane.b32.xlu0 %v3476, 127
      %v3559 = vpop.permute.xlu0 %3558
      %3560 = vrot.lane.b32.xlu0 %v3477, 127
      %v3561 = vpop.permute.xlu0 %3560
      %3562 = vrot.lane.b32.xlu0 %v3478, 127
      %v3563 = vpop.permute.xlu0 %3562
      %3564 = vrot.lane.b32.xlu0 %v3479, 127
      %v3565 = vpop.permute.xlu0 %3564
      %3566 = vrot.lane.b32.xlu0 %v3480, 127
      %v3567 = vpop.permute.xlu0 %3566
      %3568 = vrot.lane.b32.xlu0 %v3481, 127
      %v3569 = vpop.permute.xlu0 %3568
      %3570 = vrot.lane.b32.xlu0 %v3482, 127
      %v3571 = vpop.permute.xlu0 %3570
      %3572 = vrot.lane.b32.xlu0 %v3483, 127
      %v3573 = vpop.permute.xlu0 %3572
      %3574 = vrot.lane.b32.xlu0 %v3484, 127
      %v3575 = vpop.permute.xlu0 %3574
      %3576 = vrot.lane.b32.xlu0 %v3485, 127
      %v3577 = vpop.permute.xlu0 %3576
      %3578 = vrot.lane.b32.xlu0 %v3486, 127
      %v3579 = vpop.permute.xlu0 %3578
      %3580 = vrot.lane.b32.xlu0 %v3487, 127
      %v3581 = vpop.permute.xlu0 %3580
      %3582 = vrot.lane.b32.xlu0 %v3488, 127
      %v3583 = vpop.permute.xlu0 %3582
      %3584 = vrot.lane.b32.xlu0 %v3489, 127
      %v3585 = vpop.permute.xlu0 %3584
      %v3618 = vadd.f32 %v3426, %v3523
      %v3619 = vadd.f32 %v3427, %v3525
      %v3620 = vadd.f32 %v3428, %v3527
      %v3621 = vadd.f32 %v3429, %v3529
      %v3622 = vadd.f32 %v3430, %v3531
      %v3623 = vadd.f32 %v3431, %v3533
      %v3624 = vadd.f32 %v3432, %v3535
      %v3625 = vadd.f32 %v3433, %v3537
      %v3626 = vadd.f32 %v3434, %v3539
      %v3627 = vadd.f32 %v3435, %v3541
      %v3628 = vadd.f32 %v3436, %v3543
      %v3629 = vadd.f32 %v3437, %v3545
      %v3630 = vadd.f32 %v3438, %v3547
      %v3631 = vadd.f32 %v3439, %v3549
      %v3632 = vadd.f32 %v3440, %v3551
      %v3633 = vadd.f32 %v3441, %v3553
      %v3634 = vadd.f32 %v3442, %v3555
      %v3635 = vadd.f32 %v3443, %v3557
      %v3636 = vadd.f32 %v3444, %v3559
      %v3637 = vadd.f32 %v3445, %v3561
      %v3638 = vadd.f32 %v3446, %v3563
      %v3639 = vadd.f32 %v3447, %v3565
      %v3640 = vadd.f32 %v3448, %v3567
      %v3641 = vadd.f32 %v3449, %v3569
      %v3642 = vadd.f32 %v3450, %v3571
      %v3643 = vadd.f32 %v3451, %v3573
      %v3644 = vadd.f32 %v3452, %v3575
      %v3645 = vadd.f32 %v3453, %v3577
      %v3646 = vadd.f32 %v3454, %v3579
      %v3647 = vadd.f32 %v3455, %v3581
      %v3648 = vadd.f32 %v3456, %v3583
      %v3649 = vadd.f32 %v3457, %v3585
      %v3650 = vmul.f32 %v1315, %v191
      %v3651 = vmul.f32 %v1319, %v191
      %v3652 = vmul.f32 %v1323, %v191
      %v3653 = vmul.f32 %v1327, %v191
      %v3654 = vmul.f32 %v1331, %v191
      %v3655 = vmul.f32 %v1335, %v191
      %v3656 = vmul.f32 %v1339, %v191
      %v3657 = vmul.f32 %v1343, %v191
      %v3658 = vmul.f32 %v1347, %v191
      %v3659 = vmul.f32 %v1351, %v191
      %v3660 = vmul.f32 %v1355, %v191
      %v3661 = vmul.f32 %v1359, %v191
      %v3662 = vmul.f32 %v1363, %v191
      %v3663 = vmul.f32 %v1367, %v191
      %v3664 = vmul.f32 %v1371, %v191
      %v3665 = vmul.f32 %v1375, %v191
      %v3666 = vmul.f32 %v1379, %v191
      %v3667 = vmul.f32 %v1383, %v191
      %v3668 = vmul.f32 %v1387, %v191
      %v3669 = vmul.f32 %v1391, %v191
      %v3670 = vmul.f32 %v1395, %v191
      %v3671 = vmul.f32 %v1399, %v191
      %v3672 = vmul.f32 %v1403, %v191
      %v3673 = vmul.f32 %v1407, %v191
      %v3674 = vmul.f32 %v1411, %v191
      %v3675 = vmul.f32 %v1415, %v191
      %v3676 = vmul.f32 %v1419, %v191
      %v3677 = vmul.f32 %v1423, %v191
      %v3678 = vmul.f32 %v1427, %v191
      %v3679 = vmul.f32 %v1431, %v191
      %v3680 = vmul.f32 %v1435, %v191
      %v3681 = vmul.f32 %v1439, %v191
      %3714 = vrot.lane.b32.xlu0 %v3650, 127
      %v3715 = vpop.permute.xlu0 %3714
      %3716 = vrot.lane.b32.xlu0 %v3651, 127
      %v3717 = vpop.permute.xlu0 %3716
      %3718 = vrot.lane.b32.xlu0 %v3652, 127
      %v3719 = vpop.permute.xlu0 %3718
      %3720 = vrot.lane.b32.xlu0 %v3653, 127
      %v3721 = vpop.permute.xlu0 %3720
      %3722 = vrot.lane.b32.xlu0 %v3654, 127
      %v3723 = vpop.permute.xlu0 %3722
      %3724 = vrot.lane.b32.xlu0 %v3655, 127
      %v3725 = vpop.permute.xlu0 %3724
      %3726 = vrot.lane.b32.xlu0 %v3656, 127
      %v3727 = vpop.permute.xlu0 %3726
      %3728 = vrot.lane.b32.xlu0 %v3657, 127
      %v3729 = vpop.permute.xlu0 %3728
      %3730 = vrot.lane.b32.xlu0 %v3658, 127
      %v3731 = vpop.permute.xlu0 %3730
      %3732 = vrot.lane.b32.xlu0 %v3659, 127
      %v3733 = vpop.permute.xlu0 %3732
      %3734 = vrot.lane.b32.xlu0 %v3660, 127
      %v3735 = vpop.permute.xlu0 %3734
      %3736 = vrot.lane.b32.xlu0 %v3661, 127
      %v3737 = vpop.permute.xlu0 %3736
      %3738 = vrot.lane.b32.xlu0 %v3662, 127
      %v3739 = vpop.permute.xlu0 %3738
      %3740 = vrot.lane.b32.xlu0 %v3663, 127
      %v3741 = vpop.permute.xlu0 %3740
      %3742 = vrot.lane.b32.xlu0 %v3664, 127
      %v3743 = vpop.permute.xlu0 %3742
      %3744 = vrot.lane.b32.xlu0 %v3665, 127
      %v3745 = vpop.permute.xlu0 %3744
      %3746 = vrot.lane.b32.xlu0 %v3666, 127
      %v3747 = vpop.permute.xlu0 %3746
      %3748 = vrot.lane.b32.xlu0 %v3667, 127
      %v3749 = vpop.permute.xlu0 %3748
      %3750 = vrot.lane.b32.xlu0 %v3668, 127
      %v3751 = vpop.permute.xlu0 %3750
      %3752 = vrot.lane.b32.xlu0 %v3669, 127
      %v3753 = vpop.permute.xlu0 %3752
      %3754 = vrot.lane.b32.xlu0 %v3670, 127
      %v3755 = vpop.permute.xlu0 %3754
      %3756 = vrot.lane.b32.xlu0 %v3671, 127
      %v3757 = vpop.permute.xlu0 %3756
      %3758 = vrot.lane.b32.xlu0 %v3672, 127
      %v3759 = vpop.permute.xlu0 %3758
      %3760 = vrot.lane.b32.xlu0 %v3673, 127
      %v3761 = vpop.permute.xlu0 %3760
      %3762 = vrot.lane.b32.xlu0 %v3674, 127
      %v3763 = vpop.permute.xlu0 %3762
      %3764 = vrot.lane.b32.xlu0 %v3675, 127
      %v3765 = vpop.permute.xlu0 %3764
      %3766 = vrot.lane.b32.xlu0 %v3676, 127
      %v3767 = vpop.permute.xlu0 %3766
      %3768 = vrot.lane.b32.xlu0 %v3677, 127
      %v3769 = vpop.permute.xlu0 %3768
      %3770 = vrot.lane.b32.xlu0 %v3678, 127
      %v3771 = vpop.permute.xlu0 %3770
      %3772 = vrot.lane.b32.xlu0 %v3679, 127
      %v3773 = vpop.permute.xlu0 %3772
      %3774 = vrot.lane.b32.xlu0 %v3680, 127
      %v3775 = vpop.permute.xlu0 %3774
      %3776 = vrot.lane.b32.xlu0 %v3681, 127
      %v3777 = vpop.permute.xlu0 %3776
      %v3810 = vadd.f32 %v3618, %v3715
      %v3811 = vadd.f32 %v3619, %v3717
      %v3812 = vadd.f32 %v3620, %v3719
      %v3813 = vadd.f32 %v3621, %v3721
      %v3814 = vadd.f32 %v3622, %v3723
      %v3815 = vadd.f32 %v3623, %v3725
      %v3816 = vadd.f32 %v3624, %v3727
      %v3817 = vadd.f32 %v3625, %v3729
      %v3818 = vadd.f32 %v3626, %v3731
      %v3819 = vadd.f32 %v3627, %v3733
      %v3820 = vadd.f32 %v3628, %v3735
      %v3821 = vadd.f32 %v3629, %v3737
      %v3822 = vadd.f32 %v3630, %v3739
      %v3823 = vadd.f32 %v3631, %v3741
      %v3824 = vadd.f32 %v3632, %v3743
      %v3825 = vadd.f32 %v3633, %v3745
      %v3826 = vadd.f32 %v3634, %v3747
      %v3827 = vadd.f32 %v3635, %v3749
      %v3828 = vadd.f32 %v3636, %v3751
      %v3829 = vadd.f32 %v3637, %v3753
      %v3830 = vadd.f32 %v3638, %v3755
      %v3831 = vadd.f32 %v3639, %v3757
      %v3832 = vadd.f32 %v3640, %v3759
      %v3833 = vadd.f32 %v3641, %v3761
      %v3834 = vadd.f32 %v3642, %v3763
      %v3835 = vadd.f32 %v3643, %v3765
      %v3836 = vadd.f32 %v3644, %v3767
      %v3837 = vadd.f32 %v3645, %v3769
      %v3838 = vadd.f32 %v3646, %v3771
      %v3839 = vadd.f32 %v3647, %v3773
      %v3840 = vadd.f32 %v3648, %v3775
      %v3841 = vadd.f32 %v3649, %v3777
      %v3842 = vmul.f32 %v1635, %v185
      %v3843 = vmul.f32 %v1635, %v186
      %v3844 = vmul.f32 %v1639, %v185
      %v3845 = vmul.f32 %v1639, %v186
      %v3846 = vmul.f32 %v1643, %v185
      %v3847 = vmul.f32 %v1643, %v186
      %v3848 = vmul.f32 %v1647, %v185
      %v3849 = vmul.f32 %v1647, %v186
      %v3850 = vmul.f32 %v1651, %v185
      %v3851 = vmul.f32 %v1651, %v186
      %v3852 = vmul.f32 %v1655, %v185
      %v3853 = vmul.f32 %v1655, %v186
      %v3854 = vmul.f32 %v1659, %v185
      %v3855 = vmul.f32 %v1659, %v186
      %v3856 = vmul.f32 %v1663, %v185
      %v3857 = vmul.f32 %v1663, %v186
      %v3858 = vmul.f32 %v1667, %v185
      %v3859 = vmul.f32 %v1667, %v186
      %v3860 = vmul.f32 %v1671, %v185
      %v3861 = vmul.f32 %v1671, %v186
      %v3862 = vmul.f32 %v1675, %v185
      %v3863 = vmul.f32 %v1675, %v186
      %v3864 = vmul.f32 %v1679, %v185
      %v3865 = vmul.f32 %v1679, %v186
      %v3866 = vmul.f32 %v1683, %v185
      %v3867 = vmul.f32 %v1683, %v186
      %v3868 = vmul.f32 %v1687, %v185
      %v3869 = vmul.f32 %v1687, %v186
      %v3870 = vmul.f32 %v1691, %v185
      %v3871 = vmul.f32 %v1691, %v186
      %v3872 = vmul.f32 %v1695, %v185
      %v3873 = vmul.f32 %v1695, %v186
      %v3874 = vmul.f32 %v1699, %v185
      %v3875 = vmul.f32 %v1699, %v186
      %v3876 = vmul.f32 %v1703, %v185
      %v3877 = vmul.f32 %v1703, %v186
      %v3878 = vmul.f32 %v1707, %v185
      %v3879 = vmul.f32 %v1707, %v186
      %v3880 = vmul.f32 %v1711, %v185
      %v3881 = vmul.f32 %v1711, %v186
      %v3882 = vmul.f32 %v1715, %v185
      %v3883 = vmul.f32 %v1715, %v186
      %v3884 = vmul.f32 %v1719, %v185
      %v3885 = vmul.f32 %v1719, %v186
      %v3886 = vmul.f32 %v1723, %v185
      %v3887 = vmul.f32 %v1723, %v186
      %v3888 = vmul.f32 %v1727, %v185
      %v3889 = vmul.f32 %v1727, %v186
      %v3890 = vmul.f32 %v1731, %v185
      %v3891 = vmul.f32 %v1731, %v186
      %v3892 = vmul.f32 %v1735, %v185
      %v3893 = vmul.f32 %v1735, %v186
      %v3894 = vmul.f32 %v1739, %v185
      %v3895 = vmul.f32 %v1739, %v186
      %v3896 = vmul.f32 %v1743, %v185
      %v3897 = vmul.f32 %v1743, %v186
      %v3898 = vmul.f32 %v1747, %v185
      %v3899 = vmul.f32 %v1747, %v186
      %v3900 = vmul.f32 %v1751, %v185
      %v3901 = vmul.f32 %v1751, %v186
      %v3902 = vmul.f32 %v1755, %v185
      %v3903 = vmul.f32 %v1755, %v186
      %v3904 = vmul.f32 %v1759, %v185
      %v3905 = vmul.f32 %v1759, %v186
      %v3970 = vrot.slane %v3842, 1
      %v3971 = vrot.slane %v3843, 1
      %v3972 = vsel %vm1889, %v3970, %v3971
      %v3973 = vrot.slane %v3844, 1
      %v3974 = vrot.slane %v3845, 1
      %v3975 = vsel %vm1889, %v3973, %v3974
      %v3976 = vrot.slane %v3846, 1
      %v3977 = vrot.slane %v3847, 1
      %v3978 = vsel %vm1889, %v3976, %v3977
      %v3979 = vrot.slane %v3848, 1
      %v3980 = vrot.slane %v3849, 1
      %v3981 = vsel %vm1889, %v3979, %v3980
      %v3982 = vrot.slane %v3850, 1
      %v3983 = vrot.slane %v3851, 1
      %v3984 = vsel %vm1889, %v3982, %v3983
      %v3985 = vrot.slane %v3852, 1
      %v3986 = vrot.slane %v3853, 1
      %v3987 = vsel %vm1889, %v3985, %v3986
      %v3988 = vrot.slane %v3854, 1
      %v3989 = vrot.slane %v3855, 1
      %v3990 = vsel %vm1889, %v3988, %v3989
      %v3991 = vrot.slane %v3856, 1
      %v3992 = vrot.slane %v3857, 1
      %v3993 = vsel %vm1889, %v3991, %v3992
      %v3994 = vrot.slane %v3858, 1
      %v3995 = vrot.slane %v3859, 1
      %v3996 = vsel %vm1889, %v3994, %v3995
      %v3997 = vrot.slane %v3860, 1
      %v3998 = vrot.slane %v3861, 1
      %v3999 = vsel %vm1889, %v3997, %v3998
      %v4000 = vrot.slane %v3862, 1
      %v4001 = vrot.slane %v3863, 1
      %v4002 = vsel %vm1889, %v4000, %v4001
      %v4003 = vrot.slane %v3864, 1
      %v4004 = vrot.slane %v3865, 1
      %v4005 = vsel %vm1889, %v4003, %v4004
      %v4006 = vrot.slane %v3866, 1
      %v4007 = vrot.slane %v3867, 1
      %v4008 = vsel %vm1889, %v4006, %v4007
      %v4009 = vrot.slane %v3868, 1
      %v4010 = vrot.slane %v3869, 1
      %v4011 = vsel %vm1889, %v4009, %v4010
      %v4012 = vrot.slane %v3870, 1
      %v4013 = vrot.slane %v3871, 1
      %v4014 = vsel %vm1889, %v4012, %v4013
      %v4015 = vrot.slane %v3872, 1
      %v4016 = vrot.slane %v3873, 1
      %v4017 = vsel %vm1889, %v4015, %v4016
      %v4018 = vrot.slane %v3874, 1
      %v4019 = vrot.slane %v3875, 1
      %v4020 = vsel %vm1889, %v4018, %v4019
      %v4021 = vrot.slane %v3876, 1
      %v4022 = vrot.slane %v3877, 1
      %v4023 = vsel %vm1889, %v4021, %v4022
      %v4024 = vrot.slane %v3878, 1
      %v4025 = vrot.slane %v3879, 1
      %v4026 = vsel %vm1889, %v4024, %v4025
      %v4027 = vrot.slane %v3880, 1
      %v4028 = vrot.slane %v3881, 1
      %v4029 = vsel %vm1889, %v4027, %v4028
      %v4030 = vrot.slane %v3882, 1
      %v4031 = vrot.slane %v3883, 1
      %v4032 = vsel %vm1889, %v4030, %v4031
      %v4033 = vrot.slane %v3884, 1
      %v4034 = vrot.slane %v3885, 1
      %v4035 = vsel %vm1889, %v4033, %v4034
      %v4036 = vrot.slane %v3886, 1
      %v4037 = vrot.slane %v3887, 1
      %v4038 = vsel %vm1889, %v4036, %v4037
      %v4039 = vrot.slane %v3888, 1
      %v4040 = vrot.slane %v3889, 1
      %v4041 = vsel %vm1889, %v4039, %v4040
      %v4042 = vrot.slane %v3890, 1
      %v4043 = vrot.slane %v3891, 1
      %v4044 = vsel %vm1889, %v4042, %v4043
      %v4045 = vrot.slane %v3892, 1
      %v4046 = vrot.slane %v3893, 1
      %v4047 = vsel %vm1889, %v4045, %v4046
      %v4048 = vrot.slane %v3894, 1
      %v4049 = vrot.slane %v3895, 1
      %v4050 = vsel %vm1889, %v4048, %v4049
      %v4051 = vrot.slane %v3896, 1
      %v4052 = vrot.slane %v3897, 1
      %v4053 = vsel %vm1889, %v4051, %v4052
      %v4054 = vrot.slane %v3898, 1
      %v4055 = vrot.slane %v3899, 1
      %v4056 = vsel %vm1889, %v4054, %v4055
      %v4057 = vrot.slane %v3900, 1
      %v4058 = vrot.slane %v3901, 1
      %v4059 = vsel %vm1889, %v4057, %v4058
      %v4060 = vrot.slane %v3902, 1
      %v4061 = vrot.slane %v3903, 1
      %v4062 = vsel %vm1889, %v4060, %v4061
      %v4063 = vrot.slane %v3904, 1
      %v4064 = vrot.slane %v3905, 1
      %v4065 = vsel %vm1889, %v4063, %v4064
      %v4098 = vadd.f32 %v3810, %v3972
      %v4099 = vadd.f32 %v3811, %v3975
      %v4100 = vadd.f32 %v3812, %v3978
      %v4101 = vadd.f32 %v3813, %v3981
      %v4102 = vadd.f32 %v3814, %v3984
      %v4103 = vadd.f32 %v3815, %v3987
      %v4104 = vadd.f32 %v3816, %v3990
      %v4105 = vadd.f32 %v3817, %v3993
      %v4106 = vadd.f32 %v3818, %v3996
      %v4107 = vadd.f32 %v3819, %v3999
      %v4108 = vadd.f32 %v3820, %v4002
      %v4109 = vadd.f32 %v3821, %v4005
      %v4110 = vadd.f32 %v3822, %v4008
      %v4111 = vadd.f32 %v3823, %v4011
      %v4112 = vadd.f32 %v3824, %v4014
      %v4113 = vadd.f32 %v3825, %v4017
      %v4114 = vadd.f32 %v3826, %v4020
      %v4115 = vadd.f32 %v3827, %v4023
      %v4116 = vadd.f32 %v3828, %v4026
      %v4117 = vadd.f32 %v3829, %v4029
      %v4118 = vadd.f32 %v3830, %v4032
      %v4119 = vadd.f32 %v3831, %v4035
      %v4120 = vadd.f32 %v3832, %v4038
      %v4121 = vadd.f32 %v3833, %v4041
      %v4122 = vadd.f32 %v3834, %v4044
      %v4123 = vadd.f32 %v3835, %v4047
      %v4124 = vadd.f32 %v3836, %v4050
      %v4125 = vadd.f32 %v3837, %v4053
      %v4126 = vadd.f32 %v3838, %v4056
      %v4127 = vadd.f32 %v3839, %v4059
      %v4128 = vadd.f32 %v3840, %v4062
      %v4129 = vadd.f32 %v3841, %v4065
      %v4130 = vmul.f32 %v2052, %v182
      %v4131 = vmul.f32 %v2052, %v183
      %v4132 = vmul.f32 %v2056, %v182
      %v4133 = vmul.f32 %v2056, %v183
      %v4134 = vmul.f32 %v2060, %v182
      %v4135 = vmul.f32 %v2060, %v183
      %v4136 = vmul.f32 %v2064, %v182
      %v4137 = vmul.f32 %v2064, %v183
      %v4138 = vmul.f32 %v2068, %v182
      %v4139 = vmul.f32 %v2068, %v183
      %v4140 = vmul.f32 %v2072, %v182
      %v4141 = vmul.f32 %v2072, %v183
      %v4142 = vmul.f32 %v2076, %v182
      %v4143 = vmul.f32 %v2076, %v183
      %v4144 = vmul.f32 %v2080, %v182
      %v4145 = vmul.f32 %v2080, %v183
      %v4146 = vmul.f32 %v2084, %v182
      %v4147 = vmul.f32 %v2084, %v183
      %v4148 = vmul.f32 %v2088, %v182
      %v4149 = vmul.f32 %v2088, %v183
      %v4150 = vmul.f32 %v2092, %v182
      %v4151 = vmul.f32 %v2092, %v183
      %v4152 = vmul.f32 %v2096, %v182
      %v4153 = vmul.f32 %v2096, %v183
      %v4154 = vmul.f32 %v2100, %v182
      %v4155 = vmul.f32 %v2100, %v183
      %v4156 = vmul.f32 %v2104, %v182
      %v4157 = vmul.f32 %v2104, %v183
      %v4158 = vmul.f32 %v2108, %v182
      %v4159 = vmul.f32 %v2108, %v183
      %v4160 = vmul.f32 %v2112, %v182
      %v4161 = vmul.f32 %v2112, %v183
      %v4162 = vmul.f32 %v2116, %v182
      %v4163 = vmul.f32 %v2116, %v183
      %v4164 = vmul.f32 %v2120, %v182
      %v4165 = vmul.f32 %v2120, %v183
      %v4166 = vmul.f32 %v2124, %v182
      %v4167 = vmul.f32 %v2124, %v183
      %v4168 = vmul.f32 %v2128, %v182
      %v4169 = vmul.f32 %v2128, %v183
      %v4170 = vmul.f32 %v2132, %v182
      %v4171 = vmul.f32 %v2132, %v183
      %v4172 = vmul.f32 %v2136, %v182
      %v4173 = vmul.f32 %v2136, %v183
      %v4174 = vmul.f32 %v2140, %v182
      %v4175 = vmul.f32 %v2140, %v183
      %v4176 = vmul.f32 %v2144, %v182
      %v4177 = vmul.f32 %v2144, %v183
      %v4178 = vmul.f32 %v2148, %v182
      %v4179 = vmul.f32 %v2148, %v183
      %v4180 = vmul.f32 %v2152, %v182
      %v4181 = vmul.f32 %v2152, %v183
      %v4182 = vmul.f32 %v2156, %v182
      %v4183 = vmul.f32 %v2156, %v183
      %v4184 = vmul.f32 %v2160, %v182
      %v4185 = vmul.f32 %v2160, %v183
      %v4186 = vmul.f32 %v2164, %v182
      %v4187 = vmul.f32 %v2164, %v183
      %v4188 = vmul.f32 %v2168, %v182
      %v4189 = vmul.f32 %v2168, %v183
      %v4190 = vmul.f32 %v2172, %v182
      %v4191 = vmul.f32 %v2172, %v183
      %v4192 = vmul.f32 %v2176, %v182
      %v4193 = vmul.f32 %v2176, %v183
      %v4258 = vrot.slane %v4130, 1
      %v4259 = vrot.slane %v4131, 1
      %v4260 = vsel %vm1889, %v4258, %v4259
      %v4261 = vrot.slane %v4132, 1
      %v4262 = vrot.slane %v4133, 1
      %v4263 = vsel %vm1889, %v4261, %v4262
      %v4264 = vrot.slane %v4134, 1
      %v4265 = vrot.slane %v4135, 1
      %v4266 = vsel %vm1889, %v4264, %v4265
      %v4267 = vrot.slane %v4136, 1
      %v4268 = vrot.slane %v4137, 1
      %v4269 = vsel %vm1889, %v4267, %v4268
      %v4270 = vrot.slane %v4138, 1
      %v4271 = vrot.slane %v4139, 1
      %v4272 = vsel %vm1889, %v4270, %v4271
      %v4273 = vrot.slane %v4140, 1
      %v4274 = vrot.slane %v4141, 1
      %v4275 = vsel %vm1889, %v4273, %v4274
      %v4276 = vrot.slane %v4142, 1
      %v4277 = vrot.slane %v4143, 1
      %v4278 = vsel %vm1889, %v4276, %v4277
      %v4279 = vrot.slane %v4144, 1
      %v4280 = vrot.slane %v4145, 1
      %v4281 = vsel %vm1889, %v4279, %v4280
      %v4282 = vrot.slane %v4146, 1
      %v4283 = vrot.slane %v4147, 1
      %v4284 = vsel %vm1889, %v4282, %v4283
      %v4285 = vrot.slane %v4148, 1
      %v4286 = vrot.slane %v4149, 1
      %v4287 = vsel %vm1889, %v4285, %v4286
      %v4288 = vrot.slane %v4150, 1
      %v4289 = vrot.slane %v4151, 1
      %v4290 = vsel %vm1889, %v4288, %v4289
      %v4291 = vrot.slane %v4152, 1
      %v4292 = vrot.slane %v4153, 1
      %v4293 = vsel %vm1889, %v4291, %v4292
      %v4294 = vrot.slane %v4154, 1
      %v4295 = vrot.slane %v4155, 1
      %v4296 = vsel %vm1889, %v4294, %v4295
      %v4297 = vrot.slane %v4156, 1
      %v4298 = vrot.slane %v4157, 1
      %v4299 = vsel %vm1889, %v4297, %v4298
      %v4300 = vrot.slane %v4158, 1
      %v4301 = vrot.slane %v4159, 1
      %v4302 = vsel %vm1889, %v4300, %v4301
      %v4303 = vrot.slane %v4160, 1
      %v4304 = vrot.slane %v4161, 1
      %v4305 = vsel %vm1889, %v4303, %v4304
      %v4306 = vrot.slane %v4162, 1
      %v4307 = vrot.slane %v4163, 1
      %v4308 = vsel %vm1889, %v4306, %v4307
      %v4309 = vrot.slane %v4164, 1
      %v4310 = vrot.slane %v4165, 1
      %v4311 = vsel %vm1889, %v4309, %v4310
      %v4312 = vrot.slane %v4166, 1
      %v4313 = vrot.slane %v4167, 1
      %v4314 = vsel %vm1889, %v4312, %v4313
      %v4315 = vrot.slane %v4168, 1
      %v4316 = vrot.slane %v4169, 1
      %v4317 = vsel %vm1889, %v4315, %v4316
      %v4318 = vrot.slane %v4170, 1
      %v4319 = vrot.slane %v4171, 1
      %v4320 = vsel %vm1889, %v4318, %v4319
      %v4321 = vrot.slane %v4172, 1
      %v4322 = vrot.slane %v4173, 1
      %v4323 = vsel %vm1889, %v4321, %v4322
      %v4324 = vrot.slane %v4174, 1
      %v4325 = vrot.slane %v4175, 1
      %v4326 = vsel %vm1889, %v4324, %v4325
      %v4327 = vrot.slane %v4176, 1
      %v4328 = vrot.slane %v4177, 1
      %v4329 = vsel %vm1889, %v4327, %v4328
      %v4330 = vrot.slane %v4178, 1
      %v4331 = vrot.slane %v4179, 1
      %v4332 = vsel %vm1889, %v4330, %v4331
      %v4333 = vrot.slane %v4180, 1
      %v4334 = vrot.slane %v4181, 1
      %v4335 = vsel %vm1889, %v4333, %v4334
      %v4336 = vrot.slane %v4182, 1
      %v4337 = vrot.slane %v4183, 1
      %v4338 = vsel %vm1889, %v4336, %v4337
      %v4339 = vrot.slane %v4184, 1
      %v4340 = vrot.slane %v4185, 1
      %v4341 = vsel %vm1889, %v4339, %v4340
      %v4342 = vrot.slane %v4186, 1
      %v4343 = vrot.slane %v4187, 1
      %v4344 = vsel %vm1889, %v4342, %v4343
      %v4345 = vrot.slane %v4188, 1
      %v4346 = vrot.slane %v4189, 1
      %v4347 = vsel %vm1889, %v4345, %v4346
      %v4348 = vrot.slane %v4190, 1
      %v4349 = vrot.slane %v4191, 1
      %v4350 = vsel %vm1889, %v4348, %v4349
      %v4351 = vrot.slane %v4192, 1
      %v4352 = vrot.slane %v4193, 1
      %v4353 = vsel %vm1889, %v4351, %v4352
      %4354 = vrot.lane.b32.xlu0 %v4260, 127
      %v4355 = vpop.permute.xlu0 %4354
      %4356 = vrot.lane.b32.xlu0 %v4263, 127
      %v4357 = vpop.permute.xlu0 %4356
      %4358 = vrot.lane.b32.xlu0 %v4266, 127
      %v4359 = vpop.permute.xlu0 %4358
      %4360 = vrot.lane.b32.xlu0 %v4269, 127
      %v4361 = vpop.permute.xlu0 %4360
      %4362 = vrot.lane.b32.xlu0 %v4272, 127
      %v4363 = vpop.permute.xlu0 %4362
      %4364 = vrot.lane.b32.xlu0 %v4275, 127
      %v4365 = vpop.permute.xlu0 %4364
      %4366 = vrot.lane.b32.xlu0 %v4278, 127
      %v4367 = vpop.permute.xlu0 %4366
      %4368 = vrot.lane.b32.xlu0 %v4281, 127
      %v4369 = vpop.permute.xlu0 %4368
      %4370 = vrot.lane.b32.xlu0 %v4284, 127
      %v4371 = vpop.permute.xlu0 %4370
      %4372 = vrot.lane.b32.xlu0 %v4287, 127
      %v4373 = vpop.permute.xlu0 %4372
      %4374 = vrot.lane.b32.xlu0 %v4290, 127
      %v4375 = vpop.permute.xlu0 %4374
      %4376 = vrot.lane.b32.xlu0 %v4293, 127
      %v4377 = vpop.permute.xlu0 %4376
      %4378 = vrot.lane.b32.xlu0 %v4296, 127
      %v4379 = vpop.permute.xlu0 %4378
      %4380 = vrot.lane.b32.xlu0 %v4299, 127
      %v4381 = vpop.permute.xlu0 %4380
      %4382 = vrot.lane.b32.xlu0 %v4302, 127
      %v4383 = vpop.permute.xlu0 %4382
      %4384 = vrot.lane.b32.xlu0 %v4305, 127
      %v4385 = vpop.permute.xlu0 %4384
      %4386 = vrot.lane.b32.xlu0 %v4308, 127
      %v4387 = vpop.permute.xlu0 %4386
      %4388 = vrot.lane.b32.xlu0 %v4311, 127
      %v4389 = vpop.permute.xlu0 %4388
      %4390 = vrot.lane.b32.xlu0 %v4314, 127
      %v4391 = vpop.permute.xlu0 %4390
      %4392 = vrot.lane.b32.xlu0 %v4317, 127
      %v4393 = vpop.permute.xlu0 %4392
      %4394 = vrot.lane.b32.xlu0 %v4320, 127
      %v4395 = vpop.permute.xlu0 %4394
      %4396 = vrot.lane.b32.xlu0 %v4323, 127
      %v4397 = vpop.permute.xlu0 %4396
      %4398 = vrot.lane.b32.xlu0 %v4326, 127
      %v4399 = vpop.permute.xlu0 %4398
      %4400 = vrot.lane.b32.xlu0 %v4329, 127
      %v4401 = vpop.permute.xlu0 %4400
      %4402 = vrot.lane.b32.xlu0 %v4332, 127
      %v4403 = vpop.permute.xlu0 %4402
      %4404 = vrot.lane.b32.xlu0 %v4335, 127
      %v4405 = vpop.permute.xlu0 %4404
      %4406 = vrot.lane.b32.xlu0 %v4338, 127
      %v4407 = vpop.permute.xlu0 %4406
      %4408 = vrot.lane.b32.xlu0 %v4341, 127
      %v4409 = vpop.permute.xlu0 %4408
      %4410 = vrot.lane.b32.xlu0 %v4344, 127
      %v4411 = vpop.permute.xlu0 %4410
      %4412 = vrot.lane.b32.xlu0 %v4347, 127
      %v4413 = vpop.permute.xlu0 %4412
      %4414 = vrot.lane.b32.xlu0 %v4350, 127
      %v4415 = vpop.permute.xlu0 %4414
      %4416 = vrot.lane.b32.xlu0 %v4353, 127
      %v4417 = vpop.permute.xlu0 %4416
      %v4450 = vadd.f32 %v4098, %v4355
      %v4451 = vadd.f32 %v4099, %v4357
      %v4452 = vadd.f32 %v4100, %v4359
      %v4453 = vadd.f32 %v4101, %v4361
      %v4454 = vadd.f32 %v4102, %v4363
      %v4455 = vadd.f32 %v4103, %v4365
      %v4456 = vadd.f32 %v4104, %v4367
      %v4457 = vadd.f32 %v4105, %v4369
      %v4458 = vadd.f32 %v4106, %v4371
      %v4459 = vadd.f32 %v4107, %v4373
      %v4460 = vadd.f32 %v4108, %v4375
      %v4461 = vadd.f32 %v4109, %v4377
      %v4462 = vadd.f32 %v4110, %v4379
      %v4463 = vadd.f32 %v4111, %v4381
      %v4464 = vadd.f32 %v4112, %v4383
      %v4465 = vadd.f32 %v4113, %v4385
      %v4466 = vadd.f32 %v4114, %v4387
      %v4467 = vadd.f32 %v4115, %v4389
      %v4468 = vadd.f32 %v4116, %v4391
      %v4469 = vadd.f32 %v4117, %v4393
      %v4470 = vadd.f32 %v4118, %v4395
      %v4471 = vadd.f32 %v4119, %v4397
      %v4472 = vadd.f32 %v4120, %v4399
      %v4473 = vadd.f32 %v4121, %v4401
      %v4474 = vadd.f32 %v4122, %v4403
      %v4475 = vadd.f32 %v4123, %v4405
      %v4476 = vadd.f32 %v4124, %v4407
      %v4477 = vadd.f32 %v4125, %v4409
      %v4478 = vadd.f32 %v4126, %v4411
      %v4479 = vadd.f32 %v4127, %v4413
      %v4480 = vadd.f32 %v4128, %v4415
      %v4481 = vadd.f32 %v4129, %v4417
      %v4482 = vmul.f32 %v2468, %v185
      %v4483 = vmul.f32 %v2468, %v186
      %v4484 = vmul.f32 %v2472, %v185
      %v4485 = vmul.f32 %v2472, %v186
      %v4486 = vmul.f32 %v2476, %v185
      %v4487 = vmul.f32 %v2476, %v186
      %v4488 = vmul.f32 %v2480, %v185
      %v4489 = vmul.f32 %v2480, %v186
      %v4490 = vmul.f32 %v2484, %v185
      %v4491 = vmul.f32 %v2484, %v186
      %v4492 = vmul.f32 %v2488, %v185
      %v4493 = vmul.f32 %v2488, %v186
      %v4494 = vmul.f32 %v2492, %v185
      %v4495 = vmul.f32 %v2492, %v186
      %v4496 = vmul.f32 %v2496, %v185
      %v4497 = vmul.f32 %v2496, %v186
      %v4498 = vmul.f32 %v2500, %v185
      %v4499 = vmul.f32 %v2500, %v186
      %v4500 = vmul.f32 %v2504, %v185
      %v4501 = vmul.f32 %v2504, %v186
      %v4502 = vmul.f32 %v2508, %v185
      %v4503 = vmul.f32 %v2508, %v186
      %v4504 = vmul.f32 %v2512, %v185
      %v4505 = vmul.f32 %v2512, %v186
      %v4506 = vmul.f32 %v2516, %v185
      %v4507 = vmul.f32 %v2516, %v186
      %v4508 = vmul.f32 %v2520, %v185
      %v4509 = vmul.f32 %v2520, %v186
      %v4510 = vmul.f32 %v2524, %v185
      %v4511 = vmul.f32 %v2524, %v186
      %v4512 = vmul.f32 %v2528, %v185
      %v4513 = vmul.f32 %v2528, %v186
      %v4514 = vmul.f32 %v2532, %v185
      %v4515 = vmul.f32 %v2532, %v186
      %v4516 = vmul.f32 %v2536, %v185
      %v4517 = vmul.f32 %v2536, %v186
      %v4518 = vmul.f32 %v2540, %v185
      %v4519 = vmul.f32 %v2540, %v186
      %v4520 = vmul.f32 %v2544, %v185
      %v4521 = vmul.f32 %v2544, %v186
      %v4522 = vmul.f32 %v2548, %v185
      %v4523 = vmul.f32 %v2548, %v186
      %v4524 = vmul.f32 %v2552, %v185
      %v4525 = vmul.f32 %v2552, %v186
      %v4526 = vmul.f32 %v2556, %v185
      %v4527 = vmul.f32 %v2556, %v186
      %v4528 = vmul.f32 %v2560, %v185
      %v4529 = vmul.f32 %v2560, %v186
      %v4530 = vmul.f32 %v2564, %v185
      %v4531 = vmul.f32 %v2564, %v186
      %v4532 = vmul.f32 %v2568, %v185
      %v4533 = vmul.f32 %v2568, %v186
      %v4534 = vmul.f32 %v2572, %v185
      %v4535 = vmul.f32 %v2572, %v186
      %v4536 = vmul.f32 %v2576, %v185
      %v4537 = vmul.f32 %v2576, %v186
      %v4538 = vmul.f32 %v2580, %v185
      %v4539 = vmul.f32 %v2580, %v186
      %v4540 = vmul.f32 %v2584, %v185
      %v4541 = vmul.f32 %v2584, %v186
      %v4542 = vmul.f32 %v2588, %v185
      %v4543 = vmul.f32 %v2588, %v186
      %v4544 = vmul.f32 %v2592, %v185
      %v4545 = vmul.f32 %v2592, %v186
      %v4610 = vrot.slane %v4482, 1
      %v4611 = vrot.slane %v4483, 1
      %v4612 = vsel %vm1889, %v4610, %v4611
      %v4613 = vrot.slane %v4484, 1
      %v4614 = vrot.slane %v4485, 1
      %v4615 = vsel %vm1889, %v4613, %v4614
      %v4616 = vrot.slane %v4486, 1
      %v4617 = vrot.slane %v4487, 1
      %v4618 = vsel %vm1889, %v4616, %v4617
      %v4619 = vrot.slane %v4488, 1
      %v4620 = vrot.slane %v4489, 1
      %v4621 = vsel %vm1889, %v4619, %v4620
      %v4622 = vrot.slane %v4490, 1
      %v4623 = vrot.slane %v4491, 1
      %v4624 = vsel %vm1889, %v4622, %v4623
      %v4625 = vrot.slane %v4492, 1
      %v4626 = vrot.slane %v4493, 1
      %v4627 = vsel %vm1889, %v4625, %v4626
      %v4628 = vrot.slane %v4494, 1
      %v4629 = vrot.slane %v4495, 1
      %v4630 = vsel %vm1889, %v4628, %v4629
      %v4631 = vrot.slane %v4496, 1
      %v4632 = vrot.slane %v4497, 1
      %v4633 = vsel %vm1889, %v4631, %v4632
      %v4634 = vrot.slane %v4498, 1
      %v4635 = vrot.slane %v4499, 1
      %v4636 = vsel %vm1889, %v4634, %v4635
      %v4637 = vrot.slane %v4500, 1
      %v4638 = vrot.slane %v4501, 1
      %v4639 = vsel %vm1889, %v4637, %v4638
      %v4640 = vrot.slane %v4502, 1
      %v4641 = vrot.slane %v4503, 1
      %v4642 = vsel %vm1889, %v4640, %v4641
      %v4643 = vrot.slane %v4504, 1
      %v4644 = vrot.slane %v4505, 1
      %v4645 = vsel %vm1889, %v4643, %v4644
      %v4646 = vrot.slane %v4506, 1
      %v4647 = vrot.slane %v4507, 1
      %v4648 = vsel %vm1889, %v4646, %v4647
      %v4649 = vrot.slane %v4508, 1
      %v4650 = vrot.slane %v4509, 1
      %v4651 = vsel %vm1889, %v4649, %v4650
      %v4652 = vrot.slane %v4510, 1
      %v4653 = vrot.slane %v4511, 1
      %v4654 = vsel %vm1889, %v4652, %v4653
      %v4655 = vrot.slane %v4512, 1
      %v4656 = vrot.slane %v4513, 1
      %v4657 = vsel %vm1889, %v4655, %v4656
      %v4658 = vrot.slane %v4514, 1
      %v4659 = vrot.slane %v4515, 1
      %v4660 = vsel %vm1889, %v4658, %v4659
      %v4661 = vrot.slane %v4516, 1
      %v4662 = vrot.slane %v4517, 1
      %v4663 = vsel %vm1889, %v4661, %v4662
      %v4664 = vrot.slane %v4518, 1
      %v4665 = vrot.slane %v4519, 1
      %v4666 = vsel %vm1889, %v4664, %v4665
      %v4667 = vrot.slane %v4520, 1
      %v4668 = vrot.slane %v4521, 1
      %v4669 = vsel %vm1889, %v4667, %v4668
      %v4670 = vrot.slane %v4522, 1
      %v4671 = vrot.slane %v4523, 1
      %v4672 = vsel %vm1889, %v4670, %v4671
      %v4673 = vrot.slane %v4524, 1
      %v4674 = vrot.slane %v4525, 1
      %v4675 = vsel %vm1889, %v4673, %v4674
      %v4676 = vrot.slane %v4526, 1
      %v4677 = vrot.slane %v4527, 1
      %v4678 = vsel %vm1889, %v4676, %v4677
      %v4679 = vrot.slane %v4528, 1
      %v4680 = vrot.slane %v4529, 1
      %v4681 = vsel %vm1889, %v4679, %v4680
      %v4682 = vrot.slane %v4530, 1
      %v4683 = vrot.slane %v4531, 1
      %v4684 = vsel %vm1889, %v4682, %v4683
      %v4685 = vrot.slane %v4532, 1
      %v4686 = vrot.slane %v4533, 1
      %v4687 = vsel %vm1889, %v4685, %v4686
      %v4688 = vrot.slane %v4534, 1
      %v4689 = vrot.slane %v4535, 1
      %v4690 = vsel %vm1889, %v4688, %v4689
      %v4691 = vrot.slane %v4536, 1
      %v4692 = vrot.slane %v4537, 1
      %v4693 = vsel %vm1889, %v4691, %v4692
      %v4694 = vrot.slane %v4538, 1
      %v4695 = vrot.slane %v4539, 1
      %v4696 = vsel %vm1889, %v4694, %v4695
      %v4697 = vrot.slane %v4540, 1
      %v4698 = vrot.slane %v4541, 1
      %v4699 = vsel %vm1889, %v4697, %v4698
      %v4700 = vrot.slane %v4542, 1
      %v4701 = vrot.slane %v4543, 1
      %v4702 = vsel %vm1889, %v4700, %v4701
      %v4703 = vrot.slane %v4544, 1
      %v4704 = vrot.slane %v4545, 1
      %v4705 = vsel %vm1889, %v4703, %v4704
      %4706 = vrot.lane.b32.xlu0 %v4612, 127
      %v4707 = vpop.permute.xlu0 %4706
      %4708 = vrot.lane.b32.xlu0 %v4615, 127
      %v4709 = vpop.permute.xlu0 %4708
      %4710 = vrot.lane.b32.xlu0 %v4618, 127
      %v4711 = vpop.permute.xlu0 %4710
      %4712 = vrot.lane.b32.xlu0 %v4621, 127
      %v4713 = vpop.permute.xlu0 %4712
      %4714 = vrot.lane.b32.xlu0 %v4624, 127
      %v4715 = vpop.permute.xlu0 %4714
      %4716 = vrot.lane.b32.xlu0 %v4627, 127
      %v4717 = vpop.permute.xlu0 %4716
      %4718 = vrot.lane.b32.xlu0 %v4630, 127
      %v4719 = vpop.permute.xlu0 %4718
      %4720 = vrot.lane.b32.xlu0 %v4633, 127
      %v4721 = vpop.permute.xlu0 %4720
      %4722 = vrot.lane.b32.xlu0 %v4636, 127
      %v4723 = vpop.permute.xlu0 %4722
      %4724 = vrot.lane.b32.xlu0 %v4639, 127
      %v4725 = vpop.permute.xlu0 %4724
      %4726 = vrot.lane.b32.xlu0 %v4642, 127
      %v4727 = vpop.permute.xlu0 %4726
      %4728 = vrot.lane.b32.xlu0 %v4645, 127
      %v4729 = vpop.permute.xlu0 %4728
      %4730 = vrot.lane.b32.xlu0 %v4648, 127
      %v4731 = vpop.permute.xlu0 %4730
      %4732 = vrot.lane.b32.xlu0 %v4651, 127
      %v4733 = vpop.permute.xlu0 %4732
      %4734 = vrot.lane.b32.xlu0 %v4654, 127
      %v4735 = vpop.permute.xlu0 %4734
      %4736 = vrot.lane.b32.xlu0 %v4657, 127
      %v4737 = vpop.permute.xlu0 %4736
      %4738 = vrot.lane.b32.xlu0 %v4660, 127
      %v4739 = vpop.permute.xlu0 %4738
      %4740 = vrot.lane.b32.xlu0 %v4663, 127
      %v4741 = vpop.permute.xlu0 %4740
      %4742 = vrot.lane.b32.xlu0 %v4666, 127
      %v4743 = vpop.permute.xlu0 %4742
      %4744 = vrot.lane.b32.xlu0 %v4669, 127
      %v4745 = vpop.permute.xlu0 %4744
      %4746 = vrot.lane.b32.xlu0 %v4672, 127
      %v4747 = vpop.permute.xlu0 %4746
      %4748 = vrot.lane.b32.xlu0 %v4675, 127
      %v4749 = vpop.permute.xlu0 %4748
      %4750 = vrot.lane.b32.xlu0 %v4678, 127
      %v4751 = vpop.permute.xlu0 %4750
      %4752 = vrot.lane.b32.xlu0 %v4681, 127
      %v4753 = vpop.permute.xlu0 %4752
      %4754 = vrot.lane.b32.xlu0 %v4684, 127
      %v4755 = vpop.permute.xlu0 %4754
      %4756 = vrot.lane.b32.xlu0 %v4687, 127
      %v4757 = vpop.permute.xlu0 %4756
      %4758 = vrot.lane.b32.xlu0 %v4690, 127
      %v4759 = vpop.permute.xlu0 %4758
      %4760 = vrot.lane.b32.xlu0 %v4693, 127
      %v4761 = vpop.permute.xlu0 %4760
      %4762 = vrot.lane.b32.xlu0 %v4696, 127
      %v4763 = vpop.permute.xlu0 %4762
      %4764 = vrot.lane.b32.xlu0 %v4699, 127
      %v4765 = vpop.permute.xlu0 %4764
      %4766 = vrot.lane.b32.xlu0 %v4702, 127
      %v4767 = vpop.permute.xlu0 %4766
      %4768 = vrot.lane.b32.xlu0 %v4705, 127
      %v4769 = vpop.permute.xlu0 %4768
      %v4802 = vadd.f32 %v4450, %v4707
      %v4803 = vadd.f32 %v4451, %v4709
      %v4804 = vadd.f32 %v4452, %v4711
      %v4805 = vadd.f32 %v4453, %v4713
      %v4806 = vadd.f32 %v4454, %v4715
      %v4807 = vadd.f32 %v4455, %v4717
      %v4808 = vadd.f32 %v4456, %v4719
      %v4809 = vadd.f32 %v4457, %v4721
      %v4810 = vadd.f32 %v4458, %v4723
      %v4811 = vadd.f32 %v4459, %v4725
      %v4812 = vadd.f32 %v4460, %v4727
      %v4813 = vadd.f32 %v4461, %v4729
      %v4814 = vadd.f32 %v4462, %v4731
      %v4815 = vadd.f32 %v4463, %v4733
      %v4816 = vadd.f32 %v4464, %v4735
      %v4817 = vadd.f32 %v4465, %v4737
      %v4818 = vadd.f32 %v4466, %v4739
      %v4819 = vadd.f32 %v4467, %v4741
      %v4820 = vadd.f32 %v4468, %v4743
      %v4821 = vadd.f32 %v4469, %v4745
      %v4822 = vadd.f32 %v4470, %v4747
      %v4823 = vadd.f32 %v4471, %v4749
      %v4824 = vadd.f32 %v4472, %v4751
      %v4825 = vadd.f32 %v4473, %v4753
      %v4826 = vadd.f32 %v4474, %v4755
      %v4827 = vadd.f32 %v4475, %v4757
      %v4828 = vadd.f32 %v4476, %v4759
      %v4829 = vadd.f32 %v4477, %v4761
      %v4830 = vadd.f32 %v4478, %v4763
      %v4831 = vadd.f32 %v4479, %v4765
      %v4832 = vadd.f32 %v4480, %v4767
      %v4833 = vadd.f32 %v4481, %v4769
      %v4834 = vmax.f32 %v4802, 0.0
      %v4835 = vmax.f32 %v4803, 0.0
      %v4836 = vmax.f32 %v4804, 0.0
      %v4837 = vmax.f32 %v4805, 0.0
      %v4838 = vmax.f32 %v4806, 0.0
      %v4839 = vmax.f32 %v4807, 0.0
      %v4840 = vmax.f32 %v4808, 0.0
      %v4841 = vmax.f32 %v4809, 0.0
      %v4842 = vmax.f32 %v4810, 0.0
      %v4843 = vmax.f32 %v4811, 0.0
      %v4844 = vmax.f32 %v4812, 0.0
      %v4845 = vmax.f32 %v4813, 0.0
      %v4846 = vmax.f32 %v4814, 0.0
      %v4847 = vmax.f32 %v4815, 0.0
      %v4848 = vmax.f32 %v4816, 0.0
      %v4849 = vmax.f32 %v4817, 0.0
      %v4850 = vmax.f32 %v4818, 0.0
      %v4851 = vmax.f32 %v4819, 0.0
      %v4852 = vmax.f32 %v4820, 0.0
      %v4853 = vmax.f32 %v4821, 0.0
      %v4854 = vmax.f32 %v4822, 0.0
      %v4855 = vmax.f32 %v4823, 0.0
      %v4856 = vmax.f32 %v4824, 0.0
      %v4857 = vmax.f32 %v4825, 0.0
      %v4858 = vmax.f32 %v4826, 0.0
      %v4859 = vmax.f32 %v4827, 0.0
      %v4860 = vmax.f32 %v4828, 0.0
      %v4861 = vmax.f32 %v4829, 0.0
      %v4862 = vmax.f32 %v4830, 0.0
      %v4863 = vmax.f32 %v4831, 0.0
      %v4864 = vmax.f32 %v4832, 0.0
      %v4865 = vmax.f32 %v4833, 0.0
      %v4866 = vmax.f32 %v2946, %v4834
      %v4867 = vmax.f32 %v2947, %v4835
      %v4868 = vmax.f32 %v2948, %v4836
      %v4869 = vmax.f32 %v2949, %v4837
      %v4870 = vmax.f32 %v2950, %v4838
      %v4871 = vmax.f32 %v2951, %v4839
      %v4872 = vmax.f32 %v2952, %v4840
      %v4873 = vmax.f32 %v2953, %v4841
      %v4874 = vmax.f32 %v2954, %v4842
      %v4875 = vmax.f32 %v2955, %v4843
      %v4876 = vmax.f32 %v2956, %v4844
      %v4877 = vmax.f32 %v2957, %v4845
      %v4878 = vmax.f32 %v2958, %v4846
      %v4879 = vmax.f32 %v2959, %v4847
      %v4880 = vmax.f32 %v2960, %v4848
      %v4881 = vmax.f32 %v2961, %v4849
      %v4882 = vmax.f32 %v2962, %v4850
      %v4883 = vmax.f32 %v2963, %v4851
      %v4884 = vmax.f32 %v2964, %v4852
      %v4885 = vmax.f32 %v2965, %v4853
      %v4886 = vmax.f32 %v2966, %v4854
      %v4887 = vmax.f32 %v2967, %v4855
      %v4888 = vmax.f32 %v2968, %v4856
      %v4889 = vmax.f32 %v2969, %v4857
      %v4890 = vmax.f32 %v2970, %v4858
      %v4891 = vmax.f32 %v2971, %v4859
      %v4892 = vmax.f32 %v2972, %v4860
      %v4893 = vmax.f32 %v2973, %v4861
      %v4894 = vmax.f32 %v2974, %v4862
      %v4895 = vmax.f32 %v2975, %v4863
      %v4896 = vmax.f32 %v2976, %v4864
      %v4897 = vmax.f32 %v2977, %v4865
      %v4898 = vmul.f32 %v259, %v188
      %v4899 = vmul.f32 %v263, %v188
      %v4900 = vmul.f32 %v267, %v188
      %v4901 = vmul.f32 %v271, %v188
      %v4902 = vmul.f32 %v275, %v188
      %v4903 = vmul.f32 %v279, %v188
      %v4904 = vmul.f32 %v283, %v188
      %v4905 = vmul.f32 %v287, %v188
      %v4906 = vmul.f32 %v291, %v188
      %v4907 = vmul.f32 %v295, %v188
      %v4908 = vmul.f32 %v299, %v188
      %v4909 = vmul.f32 %v303, %v188
      %v4910 = vmul.f32 %v307, %v188
      %v4911 = vmul.f32 %v311, %v188
      %v4912 = vmul.f32 %v315, %v188
      %v4913 = vmul.f32 %v319, %v188
      %v4914 = vmul.f32 %v323, %v188
      %v4915 = vmul.f32 %v327, %v188
      %v4916 = vmul.f32 %v331, %v188
      %v4917 = vmul.f32 %v335, %v188
      %v4918 = vmul.f32 %v339, %v188
      %v4919 = vmul.f32 %v343, %v188
      %v4920 = vmul.f32 %v347, %v188
      %v4921 = vmul.f32 %v351, %v188
      %v4922 = vmul.f32 %v355, %v188
      %v4923 = vmul.f32 %v359, %v188
      %v4924 = vmul.f32 %v363, %v188
      %v4925 = vmul.f32 %v367, %v188
      %v4926 = vmul.f32 %v371, %v188
      %v4927 = vmul.f32 %v375, %v188
      %v4928 = vmul.f32 %v379, %v188
      %v4929 = vmul.f32 %v383, %v188
      %v4930 = vmul.f32 %v419, %v191
      %v4931 = vmul.f32 %v423, %v191
      %v4932 = vmul.f32 %v427, %v191
      %v4933 = vmul.f32 %v431, %v191
      %v4934 = vmul.f32 %v435, %v191
      %v4935 = vmul.f32 %v439, %v191
      %v4936 = vmul.f32 %v443, %v191
      %v4937 = vmul.f32 %v447, %v191
      %v4938 = vmul.f32 %v451, %v191
      %v4939 = vmul.f32 %v455, %v191
      %v4940 = vmul.f32 %v459, %v191
      %v4941 = vmul.f32 %v463, %v191
      %v4942 = vmul.f32 %v467, %v191
      %v4943 = vmul.f32 %v471, %v191
      %v4944 = vmul.f32 %v475, %v191
      %v4945 = vmul.f32 %v479, %v191
      %v4946 = vmul.f32 %v483, %v191
      %v4947 = vmul.f32 %v487, %v191
      %v4948 = vmul.f32 %v491, %v191
      %v4949 = vmul.f32 %v495, %v191
      %v4950 = vmul.f32 %v499, %v191
      %v4951 = vmul.f32 %v503, %v191
      %v4952 = vmul.f32 %v507, %v191
      %v4953 = vmul.f32 %v511, %v191
      %v4954 = vmul.f32 %v515, %v191
      %v4955 = vmul.f32 %v519, %v191
      %v4956 = vmul.f32 %v523, %v191
      %v4957 = vmul.f32 %v527, %v191
      %v4958 = vmul.f32 %v531, %v191
      %v4959 = vmul.f32 %v535, %v191
      %v4960 = vmul.f32 %v539, %v191
      %v4961 = vmul.f32 %v543, %v191
      %v4962 = vadd.f32 %v4898, %v4930
      %v4963 = vadd.f32 %v4899, %v4931
      %v4964 = vadd.f32 %v4900, %v4932
      %v4965 = vadd.f32 %v4901, %v4933
      %v4966 = vadd.f32 %v4902, %v4934
      %v4967 = vadd.f32 %v4903, %v4935
      %v4968 = vadd.f32 %v4904, %v4936
      %v4969 = vadd.f32 %v4905, %v4937
      %v4970 = vadd.f32 %v4906, %v4938
      %v4971 = vadd.f32 %v4907, %v4939
      %v4972 = vadd.f32 %v4908, %v4940
      %v4973 = vadd.f32 %v4909, %v4941
      %v4974 = vadd.f32 %v4910, %v4942
      %v4975 = vadd.f32 %v4911, %v4943
      %v4976 = vadd.f32 %v4912, %v4944
      %v4977 = vadd.f32 %v4913, %v4945
      %v4978 = vadd.f32 %v4914, %v4946
      %v4979 = vadd.f32 %v4915, %v4947
      %v4980 = vadd.f32 %v4916, %v4948
      %v4981 = vadd.f32 %v4917, %v4949
      %v4982 = vadd.f32 %v4918, %v4950
      %v4983 = vadd.f32 %v4919, %v4951
      %v4984 = vadd.f32 %v4920, %v4952
      %v4985 = vadd.f32 %v4921, %v4953
      %v4986 = vadd.f32 %v4922, %v4954
      %v4987 = vadd.f32 %v4923, %v4955
      %v4988 = vadd.f32 %v4924, %v4956
      %v4989 = vadd.f32 %v4925, %v4957
      %v4990 = vadd.f32 %v4926, %v4958
      %v4991 = vadd.f32 %v4927, %v4959
      %v4992 = vadd.f32 %v4928, %v4960
      %v4993 = vadd.f32 %v4929, %v4961
      %v4994 = vmul.f32 %v611, %v188
      %v4995 = vmul.f32 %v615, %v188
      %v4996 = vmul.f32 %v619, %v188
      %v4997 = vmul.f32 %v623, %v188
      %v4998 = vmul.f32 %v627, %v188
      %v4999 = vmul.f32 %v631, %v188
      %v5000 = vmul.f32 %v635, %v188
      %v5001 = vmul.f32 %v639, %v188
      %v5002 = vmul.f32 %v643, %v188
      %v5003 = vmul.f32 %v647, %v188
      %v5004 = vmul.f32 %v651, %v188
      %v5005 = vmul.f32 %v655, %v188
      %v5006 = vmul.f32 %v659, %v188
      %v5007 = vmul.f32 %v663, %v188
      %v5008 = vmul.f32 %v667, %v188
      %v5009 = vmul.f32 %v671, %v188
      %v5010 = vmul.f32 %v675, %v188
      %v5011 = vmul.f32 %v679, %v188
      %v5012 = vmul.f32 %v683, %v188
      %v5013 = vmul.f32 %v687, %v188
      %v5014 = vmul.f32 %v691, %v188
      %v5015 = vmul.f32 %v695, %v188
      %v5016 = vmul.f32 %v699, %v188
      %v5017 = vmul.f32 %v703, %v188
      %v5018 = vmul.f32 %v707, %v188
      %v5019 = vmul.f32 %v711, %v188
      %v5020 = vmul.f32 %v715, %v188
      %v5021 = vmul.f32 %v719, %v188
      %v5022 = vmul.f32 %v723, %v188
      %v5023 = vmul.f32 %v727, %v188
      %v5024 = vmul.f32 %v731, %v188
      %v5025 = vmul.f32 %v735, %v188
      %5058 = vrot.lane.b32.xlu0 %v4994, 127
      %v5059 = vpop.permute.xlu0 %5058
      %5060 = vrot.lane.b32.xlu0 %v4995, 127
      %v5061 = vpop.permute.xlu0 %5060
      %5062 = vrot.lane.b32.xlu0 %v4996, 127
      %v5063 = vpop.permute.xlu0 %5062
      %5064 = vrot.lane.b32.xlu0 %v4997, 127
      %v5065 = vpop.permute.xlu0 %5064
      %5066 = vrot.lane.b32.xlu0 %v4998, 127
      %v5067 = vpop.permute.xlu0 %5066
      %5068 = vrot.lane.b32.xlu0 %v4999, 127
      %v5069 = vpop.permute.xlu0 %5068
      %5070 = vrot.lane.b32.xlu0 %v5000, 127
      %v5071 = vpop.permute.xlu0 %5070
      %5072 = vrot.lane.b32.xlu0 %v5001, 127
      %v5073 = vpop.permute.xlu0 %5072
      %5074 = vrot.lane.b32.xlu0 %v5002, 127
      %v5075 = vpop.permute.xlu0 %5074
      %5076 = vrot.lane.b32.xlu0 %v5003, 127
      %v5077 = vpop.permute.xlu0 %5076
      %5078 = vrot.lane.b32.xlu0 %v5004, 127
      %v5079 = vpop.permute.xlu0 %5078
      %5080 = vrot.lane.b32.xlu0 %v5005, 127
      %v5081 = vpop.permute.xlu0 %5080
      %5082 = vrot.lane.b32.xlu0 %v5006, 127
      %v5083 = vpop.permute.xlu0 %5082
      %5084 = vrot.lane.b32.xlu0 %v5007, 127
      %v5085 = vpop.permute.xlu0 %5084
      %5086 = vrot.lane.b32.xlu0 %v5008, 127
      %v5087 = vpop.permute.xlu0 %5086
      %5088 = vrot.lane.b32.xlu0 %v5009, 127
      %v5089 = vpop.permute.xlu0 %5088
      %5090 = vrot.lane.b32.xlu0 %v5010, 127
      %v5091 = vpop.permute.xlu0 %5090
      %5092 = vrot.lane.b32.xlu0 %v5011, 127
      %v5093 = vpop.permute.xlu0 %5092
      %5094 = vrot.lane.b32.xlu0 %v5012, 127
      %v5095 = vpop.permute.xlu0 %5094
      %5096 = vrot.lane.b32.xlu0 %v5013, 127
      %v5097 = vpop.permute.xlu0 %5096
      %5098 = vrot.lane.b32.xlu0 %v5014, 127
      %v5099 = vpop.permute.xlu0 %5098
      %5100 = vrot.lane.b32.xlu0 %v5015, 127
      %v5101 = vpop.permute.xlu0 %5100
      %5102 = vrot.lane.b32.xlu0 %v5016, 127
      %v5103 = vpop.permute.xlu0 %5102
      %5104 = vrot.lane.b32.xlu0 %v5017, 127
      %v5105 = vpop.permute.xlu0 %5104
      %5106 = vrot.lane.b32.xlu0 %v5018, 127
      %v5107 = vpop.permute.xlu0 %5106
      %5108 = vrot.lane.b32.xlu0 %v5019, 127
      %v5109 = vpop.permute.xlu0 %5108
      %5110 = vrot.lane.b32.xlu0 %v5020, 127
      %v5111 = vpop.permute.xlu0 %5110
      %5112 = vrot.lane.b32.xlu0 %v5021, 127
      %v5113 = vpop.permute.xlu0 %5112
      %5114 = vrot.lane.b32.xlu0 %v5022, 127
      %v5115 = vpop.permute.xlu0 %5114
      %5116 = vrot.lane.b32.xlu0 %v5023, 127
      %v5117 = vpop.permute.xlu0 %5116
      %5118 = vrot.lane.b32.xlu0 %v5024, 127
      %v5119 = vpop.permute.xlu0 %5118
      %5120 = vrot.lane.b32.xlu0 %v5025, 127
      %v5121 = vpop.permute.xlu0 %5120
      %v5154 = vadd.f32 %v4962, %v5059
      %v5155 = vadd.f32 %v4963, %v5061
      %v5156 = vadd.f32 %v4964, %v5063
      %v5157 = vadd.f32 %v4965, %v5065
      %v5158 = vadd.f32 %v4966, %v5067
      %v5159 = vadd.f32 %v4967, %v5069
      %v5160 = vadd.f32 %v4968, %v5071
      %v5161 = vadd.f32 %v4969, %v5073
      %v5162 = vadd.f32 %v4970, %v5075
      %v5163 = vadd.f32 %v4971, %v5077
      %v5164 = vadd.f32 %v4972, %v5079
      %v5165 = vadd.f32 %v4973, %v5081
      %v5166 = vadd.f32 %v4974, %v5083
      %v5167 = vadd.f32 %v4975, %v5085
      %v5168 = vadd.f32 %v4976, %v5087
      %v5169 = vadd.f32 %v4977, %v5089
      %v5170 = vadd.f32 %v4978, %v5091
      %v5171 = vadd.f32 %v4979, %v5093
      %v5172 = vadd.f32 %v4980, %v5095
      %v5173 = vadd.f32 %v4981, %v5097
      %v5174 = vadd.f32 %v4982, %v5099
      %v5175 = vadd.f32 %v4983, %v5101
      %v5176 = vadd.f32 %v4984, %v5103
      %v5177 = vadd.f32 %v4985, %v5105
      %v5178 = vadd.f32 %v4986, %v5107
      %v5179 = vadd.f32 %v4987, %v5109
      %v5180 = vadd.f32 %v4988, %v5111
      %v5181 = vadd.f32 %v4989, %v5113
      %v5182 = vadd.f32 %v4990, %v5115
      %v5183 = vadd.f32 %v4991, %v5117
      %v5184 = vadd.f32 %v4992, %v5119
      %v5185 = vadd.f32 %v4993, %v5121
      %v5186 = vmul.f32 %v931, %v182
      %v5187 = vmul.f32 %v931, %v183
      %v5188 = vmul.f32 %v935, %v182
      %v5189 = vmul.f32 %v935, %v183
      %v5190 = vmul.f32 %v939, %v182
      %v5191 = vmul.f32 %v939, %v183
      %v5192 = vmul.f32 %v943, %v182
      %v5193 = vmul.f32 %v943, %v183
      %v5194 = vmul.f32 %v947, %v182
      %v5195 = vmul.f32 %v947, %v183
      %v5196 = vmul.f32 %v951, %v182
      %v5197 = vmul.f32 %v951, %v183
      %v5198 = vmul.f32 %v955, %v182
      %v5199 = vmul.f32 %v955, %v183
      %v5200 = vmul.f32 %v959, %v182
      %v5201 = vmul.f32 %v959, %v183
      %v5202 = vmul.f32 %v963, %v182
      %v5203 = vmul.f32 %v963, %v183
      %v5204 = vmul.f32 %v967, %v182
      %v5205 = vmul.f32 %v967, %v183
      %v5206 = vmul.f32 %v971, %v182
      %v5207 = vmul.f32 %v971, %v183
      %v5208 = vmul.f32 %v975, %v182
      %v5209 = vmul.f32 %v975, %v183
      %v5210 = vmul.f32 %v979, %v182
      %v5211 = vmul.f32 %v979, %v183
      %v5212 = vmul.f32 %v983, %v182
      %v5213 = vmul.f32 %v983, %v183
      %v5214 = vmul.f32 %v987, %v182
      %v5215 = vmul.f32 %v987, %v183
      %v5216 = vmul.f32 %v991, %v182
      %v5217 = vmul.f32 %v991, %v183
      %v5218 = vmul.f32 %v995, %v182
      %v5219 = vmul.f32 %v995, %v183
      %v5220 = vmul.f32 %v999, %v182
      %v5221 = vmul.f32 %v999, %v183
      %v5222 = vmul.f32 %v1003, %v182
      %v5223 = vmul.f32 %v1003, %v183
      %v5224 = vmul.f32 %v1007, %v182
      %v5225 = vmul.f32 %v1007, %v183
      %v5226 = vmul.f32 %v1011, %v182
      %v5227 = vmul.f32 %v1011, %v183
      %v5228 = vmul.f32 %v1015, %v182
      %v5229 = vmul.f32 %v1015, %v183
      %v5230 = vmul.f32 %v1019, %v182
      %v5231 = vmul.f32 %v1019, %v183
      %v5232 = vmul.f32 %v1023, %v182
      %v5233 = vmul.f32 %v1023, %v183
      %v5234 = vmul.f32 %v1027, %v182
      %v5235 = vmul.f32 %v1027, %v183
      %v5236 = vmul.f32 %v1031, %v182
      %v5237 = vmul.f32 %v1031, %v183
      %v5238 = vmul.f32 %v1035, %v182
      %v5239 = vmul.f32 %v1035, %v183
      %v5240 = vmul.f32 %v1039, %v182
      %v5241 = vmul.f32 %v1039, %v183
      %v5242 = vmul.f32 %v1043, %v182
      %v5243 = vmul.f32 %v1043, %v183
      %v5244 = vmul.f32 %v1047, %v182
      %v5245 = vmul.f32 %v1047, %v183
      %v5246 = vmul.f32 %v1051, %v182
      %v5247 = vmul.f32 %v1051, %v183
      %v5248 = vmul.f32 %v1055, %v182
      %v5249 = vmul.f32 %v1055, %v183
      %v5314 = vrot.slane %v5186, 1
      %v5315 = vrot.slane %v5187, 1
      %v5316 = vsel %vm1889, %v5314, %v5315
      %v5317 = vrot.slane %v5188, 1
      %v5318 = vrot.slane %v5189, 1
      %v5319 = vsel %vm1889, %v5317, %v5318
      %v5320 = vrot.slane %v5190, 1
      %v5321 = vrot.slane %v5191, 1
      %v5322 = vsel %vm1889, %v5320, %v5321
      %v5323 = vrot.slane %v5192, 1
      %v5324 = vrot.slane %v5193, 1
      %v5325 = vsel %vm1889, %v5323, %v5324
      %v5326 = vrot.slane %v5194, 1
      %v5327 = vrot.slane %v5195, 1
      %v5328 = vsel %vm1889, %v5326, %v5327
      %v5329 = vrot.slane %v5196, 1
      %v5330 = vrot.slane %v5197, 1
      %v5331 = vsel %vm1889, %v5329, %v5330
      %v5332 = vrot.slane %v5198, 1
      %v5333 = vrot.slane %v5199, 1
      %v5334 = vsel %vm1889, %v5332, %v5333
      %v5335 = vrot.slane %v5200, 1
      %v5336 = vrot.slane %v5201, 1
      %v5337 = vsel %vm1889, %v5335, %v5336
      %v5338 = vrot.slane %v5202, 1
      %v5339 = vrot.slane %v5203, 1
      %v5340 = vsel %vm1889, %v5338, %v5339
      %v5341 = vrot.slane %v5204, 1
      %v5342 = vrot.slane %v5205, 1
      %v5343 = vsel %vm1889, %v5341, %v5342
      %v5344 = vrot.slane %v5206, 1
      %v5345 = vrot.slane %v5207, 1
      %v5346 = vsel %vm1889, %v5344, %v5345
      %v5347 = vrot.slane %v5208, 1
      %v5348 = vrot.slane %v5209, 1
      %v5349 = vsel %vm1889, %v5347, %v5348
      %v5350 = vrot.slane %v5210, 1
      %v5351 = vrot.slane %v5211, 1
      %v5352 = vsel %vm1889, %v5350, %v5351
      %v5353 = vrot.slane %v5212, 1
      %v5354 = vrot.slane %v5213, 1
      %v5355 = vsel %vm1889, %v5353, %v5354
      %v5356 = vrot.slane %v5214, 1
      %v5357 = vrot.slane %v5215, 1
      %v5358 = vsel %vm1889, %v5356, %v5357
      %v5359 = vrot.slane %v5216, 1
      %v5360 = vrot.slane %v5217, 1
      %v5361 = vsel %vm1889, %v5359, %v5360
      %v5362 = vrot.slane %v5218, 1
      %v5363 = vrot.slane %v5219, 1
      %v5364 = vsel %vm1889, %v5362, %v5363
      %v5365 = vrot.slane %v5220, 1
      %v5366 = vrot.slane %v5221, 1
      %v5367 = vsel %vm1889, %v5365, %v5366
      %v5368 = vrot.slane %v5222, 1
      %v5369 = vrot.slane %v5223, 1
      %v5370 = vsel %vm1889, %v5368, %v5369
      %v5371 = vrot.slane %v5224, 1
      %v5372 = vrot.slane %v5225, 1
      %v5373 = vsel %vm1889, %v5371, %v5372
      %v5374 = vrot.slane %v5226, 1
      %v5375 = vrot.slane %v5227, 1
      %v5376 = vsel %vm1889, %v5374, %v5375
      %v5377 = vrot.slane %v5228, 1
      %v5378 = vrot.slane %v5229, 1
      %v5379 = vsel %vm1889, %v5377, %v5378
      %v5380 = vrot.slane %v5230, 1
      %v5381 = vrot.slane %v5231, 1
      %v5382 = vsel %vm1889, %v5380, %v5381
      %v5383 = vrot.slane %v5232, 1
      %v5384 = vrot.slane %v5233, 1
      %v5385 = vsel %vm1889, %v5383, %v5384
      %v5386 = vrot.slane %v5234, 1
      %v5387 = vrot.slane %v5235, 1
      %v5388 = vsel %vm1889, %v5386, %v5387
      %v5389 = vrot.slane %v5236, 1
      %v5390 = vrot.slane %v5237, 1
      %v5391 = vsel %vm1889, %v5389, %v5390
      %v5392 = vrot.slane %v5238, 1
      %v5393 = vrot.slane %v5239, 1
      %v5394 = vsel %vm1889, %v5392, %v5393
      %v5395 = vrot.slane %v5240, 1
      %v5396 = vrot.slane %v5241, 1
      %v5397 = vsel %vm1889, %v5395, %v5396
      %v5398 = vrot.slane %v5242, 1
      %v5399 = vrot.slane %v5243, 1
      %v5400 = vsel %vm1889, %v5398, %v5399
      %v5401 = vrot.slane %v5244, 1
      %v5402 = vrot.slane %v5245, 1
      %v5403 = vsel %vm1889, %v5401, %v5402
      %v5404 = vrot.slane %v5246, 1
      %v5405 = vrot.slane %v5247, 1
      %v5406 = vsel %vm1889, %v5404, %v5405
      %v5407 = vrot.slane %v5248, 1
      %v5408 = vrot.slane %v5249, 1
      %v5409 = vsel %vm1889, %v5407, %v5408
      %v5442 = vadd.f32 %v5154, %v5316
      %v5443 = vadd.f32 %v5155, %v5319
      %v5444 = vadd.f32 %v5156, %v5322
      %v5445 = vadd.f32 %v5157, %v5325
      %v5446 = vadd.f32 %v5158, %v5328
      %v5447 = vadd.f32 %v5159, %v5331
      %v5448 = vadd.f32 %v5160, %v5334
      %v5449 = vadd.f32 %v5161, %v5337
      %v5450 = vadd.f32 %v5162, %v5340
      %v5451 = vadd.f32 %v5163, %v5343
      %v5452 = vadd.f32 %v5164, %v5346
      %v5453 = vadd.f32 %v5165, %v5349
      %v5454 = vadd.f32 %v5166, %v5352
      %v5455 = vadd.f32 %v5167, %v5355
      %v5456 = vadd.f32 %v5168, %v5358
      %v5457 = vadd.f32 %v5169, %v5361
      %v5458 = vadd.f32 %v5170, %v5364
      %v5459 = vadd.f32 %v5171, %v5367
      %v5460 = vadd.f32 %v5172, %v5370
      %v5461 = vadd.f32 %v5173, %v5373
      %v5462 = vadd.f32 %v5174, %v5376
      %v5463 = vadd.f32 %v5175, %v5379
      %v5464 = vadd.f32 %v5176, %v5382
      %v5465 = vadd.f32 %v5177, %v5385
      %v5466 = vadd.f32 %v5178, %v5388
      %v5467 = vadd.f32 %v5179, %v5391
      %v5468 = vadd.f32 %v5180, %v5394
      %v5469 = vadd.f32 %v5181, %v5397
      %v5470 = vadd.f32 %v5182, %v5400
      %v5471 = vadd.f32 %v5183, %v5403
      %v5472 = vadd.f32 %v5184, %v5406
      %v5473 = vadd.f32 %v5185, %v5409
      %v5474 = vmul.f32 %v1123, %v185
      %v5475 = vmul.f32 %v1123, %v186
      %v5476 = vmul.f32 %v1127, %v185
      %v5477 = vmul.f32 %v1127, %v186
      %v5478 = vmul.f32 %v1131, %v185
      %v5479 = vmul.f32 %v1131, %v186
      %v5480 = vmul.f32 %v1135, %v185
      %v5481 = vmul.f32 %v1135, %v186
      %v5482 = vmul.f32 %v1139, %v185
      %v5483 = vmul.f32 %v1139, %v186
      %v5484 = vmul.f32 %v1143, %v185
      %v5485 = vmul.f32 %v1143, %v186
      %v5486 = vmul.f32 %v1147, %v185
      %v5487 = vmul.f32 %v1147, %v186
      %v5488 = vmul.f32 %v1151, %v185
      %v5489 = vmul.f32 %v1151, %v186
      %v5490 = vmul.f32 %v1155, %v185
      %v5491 = vmul.f32 %v1155, %v186
      %v5492 = vmul.f32 %v1159, %v185
      %v5493 = vmul.f32 %v1159, %v186
      %v5494 = vmul.f32 %v1163, %v185
      %v5495 = vmul.f32 %v1163, %v186
      %v5496 = vmul.f32 %v1167, %v185
      %v5497 = vmul.f32 %v1167, %v186
      %v5498 = vmul.f32 %v1171, %v185
      %v5499 = vmul.f32 %v1171, %v186
      %v5500 = vmul.f32 %v1175, %v185
      %v5501 = vmul.f32 %v1175, %v186
      %v5502 = vmul.f32 %v1179, %v185
      %v5503 = vmul.f32 %v1179, %v186
      %v5504 = vmul.f32 %v1183, %v185
      %v5505 = vmul.f32 %v1183, %v186
      %v5506 = vmul.f32 %v1187, %v185
      %v5507 = vmul.f32 %v1187, %v186
      %v5508 = vmul.f32 %v1191, %v185
      %v5509 = vmul.f32 %v1191, %v186
      %v5510 = vmul.f32 %v1195, %v185
      %v5511 = vmul.f32 %v1195, %v186
      %v5512 = vmul.f32 %v1199, %v185
      %v5513 = vmul.f32 %v1199, %v186
      %v5514 = vmul.f32 %v1203, %v185
      %v5515 = vmul.f32 %v1203, %v186
      %v5516 = vmul.f32 %v1207, %v185
      %v5517 = vmul.f32 %v1207, %v186
      %v5518 = vmul.f32 %v1211, %v185
      %v5519 = vmul.f32 %v1211, %v186
      %v5520 = vmul.f32 %v1215, %v185
      %v5521 = vmul.f32 %v1215, %v186
      %v5522 = vmul.f32 %v1219, %v185
      %v5523 = vmul.f32 %v1219, %v186
      %v5524 = vmul.f32 %v1223, %v185
      %v5525 = vmul.f32 %v1223, %v186
      %v5526 = vmul.f32 %v1227, %v185
      %v5527 = vmul.f32 %v1227, %v186
      %v5528 = vmul.f32 %v1231, %v185
      %v5529 = vmul.f32 %v1231, %v186
      %v5530 = vmul.f32 %v1235, %v185
      %v5531 = vmul.f32 %v1235, %v186
      %v5532 = vmul.f32 %v1239, %v185
      %v5533 = vmul.f32 %v1239, %v186
      %v5534 = vmul.f32 %v1243, %v185
      %v5535 = vmul.f32 %v1243, %v186
      %v5536 = vmul.f32 %v1247, %v185
      %v5537 = vmul.f32 %v1247, %v186
      %v5602 = vrot.slane %v5474, 1
      %v5603 = vrot.slane %v5475, 1
      %v5604 = vsel %vm1889, %v5602, %v5603
      %v5605 = vrot.slane %v5476, 1
      %v5606 = vrot.slane %v5477, 1
      %v5607 = vsel %vm1889, %v5605, %v5606
      %v5608 = vrot.slane %v5478, 1
      %v5609 = vrot.slane %v5479, 1
      %v5610 = vsel %vm1889, %v5608, %v5609
      %v5611 = vrot.slane %v5480, 1
      %v5612 = vrot.slane %v5481, 1
      %v5613 = vsel %vm1889, %v5611, %v5612
      %v5614 = vrot.slane %v5482, 1
      %v5615 = vrot.slane %v5483, 1
      %v5616 = vsel %vm1889, %v5614, %v5615
      %v5617 = vrot.slane %v5484, 1
      %v5618 = vrot.slane %v5485, 1
      %v5619 = vsel %vm1889, %v5617, %v5618
      %v5620 = vrot.slane %v5486, 1
      %v5621 = vrot.slane %v5487, 1
      %v5622 = vsel %vm1889, %v5620, %v5621
      %v5623 = vrot.slane %v5488, 1
      %v5624 = vrot.slane %v5489, 1
      %v5625 = vsel %vm1889, %v5623, %v5624
      %v5626 = vrot.slane %v5490, 1
      %v5627 = vrot.slane %v5491, 1
      %v5628 = vsel %vm1889, %v5626, %v5627
      %v5629 = vrot.slane %v5492, 1
      %v5630 = vrot.slane %v5493, 1
      %v5631 = vsel %vm1889, %v5629, %v5630
      %v5632 = vrot.slane %v5494, 1
      %v5633 = vrot.slane %v5495, 1
      %v5634 = vsel %vm1889, %v5632, %v5633
      %v5635 = vrot.slane %v5496, 1
      %v5636 = vrot.slane %v5497, 1
      %v5637 = vsel %vm1889, %v5635, %v5636
      %v5638 = vrot.slane %v5498, 1
      %v5639 = vrot.slane %v5499, 1
      %v5640 = vsel %vm1889, %v5638, %v5639
      %v5641 = vrot.slane %v5500, 1
      %v5642 = vrot.slane %v5501, 1
      %v5643 = vsel %vm1889, %v5641, %v5642
      %v5644 = vrot.slane %v5502, 1
      %v5645 = vrot.slane %v5503, 1
      %v5646 = vsel %vm1889, %v5644, %v5645
      %v5647 = vrot.slane %v5504, 1
      %v5648 = vrot.slane %v5505, 1
      %v5649 = vsel %vm1889, %v5647, %v5648
      %v5650 = vrot.slane %v5506, 1
      %v5651 = vrot.slane %v5507, 1
      %v5652 = vsel %vm1889, %v5650, %v5651
      %v5653 = vrot.slane %v5508, 1
      %v5654 = vrot.slane %v5509, 1
      %v5655 = vsel %vm1889, %v5653, %v5654
      %v5656 = vrot.slane %v5510, 1
      %v5657 = vrot.slane %v5511, 1
      %v5658 = vsel %vm1889, %v5656, %v5657
      %v5659 = vrot.slane %v5512, 1
      %v5660 = vrot.slane %v5513, 1
      %v5661 = vsel %vm1889, %v5659, %v5660
      %v5662 = vrot.slane %v5514, 1
      %v5663 = vrot.slane %v5515, 1
      %v5664 = vsel %vm1889, %v5662, %v5663
      %v5665 = vrot.slane %v5516, 1
      %v5666 = vrot.slane %v5517, 1
      %v5667 = vsel %vm1889, %v5665, %v5666
      %v5668 = vrot.slane %v5518, 1
      %v5669 = vrot.slane %v5519, 1
      %v5670 = vsel %vm1889, %v5668, %v5669
      %v5671 = vrot.slane %v5520, 1
      %v5672 = vrot.slane %v5521, 1
      %v5673 = vsel %vm1889, %v5671, %v5672
      %v5674 = vrot.slane %v5522, 1
      %v5675 = vrot.slane %v5523, 1
      %v5676 = vsel %vm1889, %v5674, %v5675
      %v5677 = vrot.slane %v5524, 1
      %v5678 = vrot.slane %v5525, 1
      %v5679 = vsel %vm1889, %v5677, %v5678
      %v5680 = vrot.slane %v5526, 1
      %v5681 = vrot.slane %v5527, 1
      %v5682 = vsel %vm1889, %v5680, %v5681
      %v5683 = vrot.slane %v5528, 1
      %v5684 = vrot.slane %v5529, 1
      %v5685 = vsel %vm1889, %v5683, %v5684
      %v5686 = vrot.slane %v5530, 1
      %v5687 = vrot.slane %v5531, 1
      %v5688 = vsel %vm1889, %v5686, %v5687
      %v5689 = vrot.slane %v5532, 1
      %v5690 = vrot.slane %v5533, 1
      %v5691 = vsel %vm1889, %v5689, %v5690
      %v5692 = vrot.slane %v5534, 1
      %v5693 = vrot.slane %v5535, 1
      %v5694 = vsel %vm1889, %v5692, %v5693
      %v5695 = vrot.slane %v5536, 1
      %v5696 = vrot.slane %v5537, 1
      %v5697 = vsel %vm1889, %v5695, %v5696
      %v5730 = vadd.f32 %v5442, %v5604
      %v5731 = vadd.f32 %v5443, %v5607
      %v5732 = vadd.f32 %v5444, %v5610
      %v5733 = vadd.f32 %v5445, %v5613
      %v5734 = vadd.f32 %v5446, %v5616
      %v5735 = vadd.f32 %v5447, %v5619
      %v5736 = vadd.f32 %v5448, %v5622
      %v5737 = vadd.f32 %v5449, %v5625
      %v5738 = vadd.f32 %v5450, %v5628
      %v5739 = vadd.f32 %v5451, %v5631
      %v5740 = vadd.f32 %v5452, %v5634
      %v5741 = vadd.f32 %v5453, %v5637
      %v5742 = vadd.f32 %v5454, %v5640
      %v5743 = vadd.f32 %v5455, %v5643
      %v5744 = vadd.f32 %v5456, %v5646
      %v5745 = vadd.f32 %v5457, %v5649
      %v5746 = vadd.f32 %v5458, %v5652
      %v5747 = vadd.f32 %v5459, %v5655
      %v5748 = vadd.f32 %v5460, %v5658
      %v5749 = vadd.f32 %v5461, %v5661
      %v5750 = vadd.f32 %v5462, %v5664
      %v5751 = vadd.f32 %v5463, %v5667
      %v5752 = vadd.f32 %v5464, %v5670
      %v5753 = vadd.f32 %v5465, %v5673
      %v5754 = vadd.f32 %v5466, %v5676
      %v5755 = vadd.f32 %v5467, %v5679
      %v5756 = vadd.f32 %v5468, %v5682
      %v5757 = vadd.f32 %v5469, %v5685
      %v5758 = vadd.f32 %v5470, %v5688
      %v5759 = vadd.f32 %v5471, %v5691
      %v5760 = vadd.f32 %v5472, %v5694
      %v5761 = vadd.f32 %v5473, %v5697
      %v5762 = vmul.f32 %v1315, %v182
      %v5763 = vmul.f32 %v1315, %v183
      %v5764 = vmul.f32 %v1319, %v182
      %v5765 = vmul.f32 %v1319, %v183
      %v5766 = vmul.f32 %v1323, %v182
      %v5767 = vmul.f32 %v1323, %v183
      %v5768 = vmul.f32 %v1327, %v182
      %v5769 = vmul.f32 %v1327, %v183
      %v5770 = vmul.f32 %v1331, %v182
      %v5771 = vmul.f32 %v1331, %v183
      %v5772 = vmul.f32 %v1335, %v182
      %v5773 = vmul.f32 %v1335, %v183
      %v5774 = vmul.f32 %v1339, %v182
      %v5775 = vmul.f32 %v1339, %v183
      %v5776 = vmul.f32 %v1343, %v182
      %v5777 = vmul.f32 %v1343, %v183
      %v5778 = vmul.f32 %v1347, %v182
      %v5779 = vmul.f32 %v1347, %v183
      %v5780 = vmul.f32 %v1351, %v182
      %v5781 = vmul.f32 %v1351, %v183
      %v5782 = vmul.f32 %v1355, %v182
      %v5783 = vmul.f32 %v1355, %v183
      %v5784 = vmul.f32 %v1359, %v182
      %v5785 = vmul.f32 %v1359, %v183
      %v5786 = vmul.f32 %v1363, %v182
      %v5787 = vmul.f32 %v1363, %v183
      %v5788 = vmul.f32 %v1367, %v182
      %v5789 = vmul.f32 %v1367, %v183
      %v5790 = vmul.f32 %v1371, %v182
      %v5791 = vmul.f32 %v1371, %v183
      %v5792 = vmul.f32 %v1375, %v182
      %v5793 = vmul.f32 %v1375, %v183
      %v5794 = vmul.f32 %v1379, %v182
      %v5795 = vmul.f32 %v1379, %v183
      %v5796 = vmul.f32 %v1383, %v182
      %v5797 = vmul.f32 %v1383, %v183
      %v5798 = vmul.f32 %v1387, %v182
      %v5799 = vmul.f32 %v1387, %v183
      %v5800 = vmul.f32 %v1391, %v182
      %v5801 = vmul.f32 %v1391, %v183
      %v5802 = vmul.f32 %v1395, %v182
      %v5803 = vmul.f32 %v1395, %v183
      %v5804 = vmul.f32 %v1399, %v182
      %v5805 = vmul.f32 %v1399, %v183
      %v5806 = vmul.f32 %v1403, %v182
      %v5807 = vmul.f32 %v1403, %v183
      %v5808 = vmul.f32 %v1407, %v182
      %v5809 = vmul.f32 %v1407, %v183
      %v5810 = vmul.f32 %v1411, %v182
      %v5811 = vmul.f32 %v1411, %v183
      %v5812 = vmul.f32 %v1415, %v182
      %v5813 = vmul.f32 %v1415, %v183
      %v5814 = vmul.f32 %v1419, %v182
      %v5815 = vmul.f32 %v1419, %v183
      %v5816 = vmul.f32 %v1423, %v182
      %v5817 = vmul.f32 %v1423, %v183
      %v5818 = vmul.f32 %v1427, %v182
      %v5819 = vmul.f32 %v1427, %v183
      %v5820 = vmul.f32 %v1431, %v182
      %v5821 = vmul.f32 %v1431, %v183
      %v5822 = vmul.f32 %v1435, %v182
      %v5823 = vmul.f32 %v1435, %v183
      %v5824 = vmul.f32 %v1439, %v182
      %v5825 = vmul.f32 %v1439, %v183
      %v5890 = vrot.slane %v5762, 1
      %v5891 = vrot.slane %v5763, 1
      %v5892 = vsel %vm1889, %v5890, %v5891
      %v5893 = vrot.slane %v5764, 1
      %v5894 = vrot.slane %v5765, 1
      %v5895 = vsel %vm1889, %v5893, %v5894
      %v5896 = vrot.slane %v5766, 1
      %v5897 = vrot.slane %v5767, 1
      %v5898 = vsel %vm1889, %v5896, %v5897
      %v5899 = vrot.slane %v5768, 1
      %v5900 = vrot.slane %v5769, 1
      %v5901 = vsel %vm1889, %v5899, %v5900
      %v5902 = vrot.slane %v5770, 1
      %v5903 = vrot.slane %v5771, 1
      %v5904 = vsel %vm1889, %v5902, %v5903
      %v5905 = vrot.slane %v5772, 1
      %v5906 = vrot.slane %v5773, 1
      %v5907 = vsel %vm1889, %v5905, %v5906
      %v5908 = vrot.slane %v5774, 1
      %v5909 = vrot.slane %v5775, 1
      %v5910 = vsel %vm1889, %v5908, %v5909
      %v5911 = vrot.slane %v5776, 1
      %v5912 = vrot.slane %v5777, 1
      %v5913 = vsel %vm1889, %v5911, %v5912
      %v5914 = vrot.slane %v5778, 1
      %v5915 = vrot.slane %v5779, 1
      %v5916 = vsel %vm1889, %v5914, %v5915
      %v5917 = vrot.slane %v5780, 1
      %v5918 = vrot.slane %v5781, 1
      %v5919 = vsel %vm1889, %v5917, %v5918
      %v5920 = vrot.slane %v5782, 1
      %v5921 = vrot.slane %v5783, 1
      %v5922 = vsel %vm1889, %v5920, %v5921
      %v5923 = vrot.slane %v5784, 1
      %v5924 = vrot.slane %v5785, 1
      %v5925 = vsel %vm1889, %v5923, %v5924
      %v5926 = vrot.slane %v5786, 1
      %v5927 = vrot.slane %v5787, 1
      %v5928 = vsel %vm1889, %v5926, %v5927
      %v5929 = vrot.slane %v5788, 1
      %v5930 = vrot.slane %v5789, 1
      %v5931 = vsel %vm1889, %v5929, %v5930
      %v5932 = vrot.slane %v5790, 1
      %v5933 = vrot.slane %v5791, 1
      %v5934 = vsel %vm1889, %v5932, %v5933
      %v5935 = vrot.slane %v5792, 1
      %v5936 = vrot.slane %v5793, 1
      %v5937 = vsel %vm1889, %v5935, %v5936
      %v5938 = vrot.slane %v5794, 1
      %v5939 = vrot.slane %v5795, 1
      %v5940 = vsel %vm1889, %v5938, %v5939
      %v5941 = vrot.slane %v5796, 1
      %v5942 = vrot.slane %v5797, 1
      %v5943 = vsel %vm1889, %v5941, %v5942
      %v5944 = vrot.slane %v5798, 1
      %v5945 = vrot.slane %v5799, 1
      %v5946 = vsel %vm1889, %v5944, %v5945
      %v5947 = vrot.slane %v5800, 1
      %v5948 = vrot.slane %v5801, 1
      %v5949 = vsel %vm1889, %v5947, %v5948
      %v5950 = vrot.slane %v5802, 1
      %v5951 = vrot.slane %v5803, 1
      %v5952 = vsel %vm1889, %v5950, %v5951
      %v5953 = vrot.slane %v5804, 1
      %v5954 = vrot.slane %v5805, 1
      %v5955 = vsel %vm1889, %v5953, %v5954
      %v5956 = vrot.slane %v5806, 1
      %v5957 = vrot.slane %v5807, 1
      %v5958 = vsel %vm1889, %v5956, %v5957
      %v5959 = vrot.slane %v5808, 1
      %v5960 = vrot.slane %v5809, 1
      %v5961 = vsel %vm1889, %v5959, %v5960
      %v5962 = vrot.slane %v5810, 1
      %v5963 = vrot.slane %v5811, 1
      %v5964 = vsel %vm1889, %v5962, %v5963
      %v5965 = vrot.slane %v5812, 1
      %v5966 = vrot.slane %v5813, 1
      %v5967 = vsel %vm1889, %v5965, %v5966
      %v5968 = vrot.slane %v5814, 1
      %v5969 = vrot.slane %v5815, 1
      %v5970 = vsel %vm1889, %v5968, %v5969
      %v5971 = vrot.slane %v5816, 1
      %v5972 = vrot.slane %v5817, 1
      %v5973 = vsel %vm1889, %v5971, %v5972
      %v5974 = vrot.slane %v5818, 1
      %v5975 = vrot.slane %v5819, 1
      %v5976 = vsel %vm1889, %v5974, %v5975
      %v5977 = vrot.slane %v5820, 1
      %v5978 = vrot.slane %v5821, 1
      %v5979 = vsel %vm1889, %v5977, %v5978
      %v5980 = vrot.slane %v5822, 1
      %v5981 = vrot.slane %v5823, 1
      %v5982 = vsel %vm1889, %v5980, %v5981
      %v5983 = vrot.slane %v5824, 1
      %v5984 = vrot.slane %v5825, 1
      %v5985 = vsel %vm1889, %v5983, %v5984
      %5986 = vrot.lane.b32.xlu0 %v5892, 127
      %v5987 = vpop.permute.xlu0 %5986
      %5988 = vrot.lane.b32.xlu0 %v5895, 127
      %v5989 = vpop.permute.xlu0 %5988
      %5990 = vrot.lane.b32.xlu0 %v5898, 127
      %v5991 = vpop.permute.xlu0 %5990
      %5992 = vrot.lane.b32.xlu0 %v5901, 127
      %v5993 = vpop.permute.xlu0 %5992
      %5994 = vrot.lane.b32.xlu0 %v5904, 127
      %v5995 = vpop.permute.xlu0 %5994
      %5996 = vrot.lane.b32.xlu0 %v5907, 127
      %v5997 = vpop.permute.xlu0 %5996
      %5998 = vrot.lane.b32.xlu0 %v5910, 127
      %v5999 = vpop.permute.xlu0 %5998
      %6000 = vrot.lane.b32.xlu0 %v5913, 127
      %v6001 = vpop.permute.xlu0 %6000
      %6002 = vrot.lane.b32.xlu0 %v5916, 127
      %v6003 = vpop.permute.xlu0 %6002
      %6004 = vrot.lane.b32.xlu0 %v5919, 127
      %v6005 = vpop.permute.xlu0 %6004
      %6006 = vrot.lane.b32.xlu0 %v5922, 127
      %v6007 = vpop.permute.xlu0 %6006
      %6008 = vrot.lane.b32.xlu0 %v5925, 127
      %v6009 = vpop.permute.xlu0 %6008
      %6010 = vrot.lane.b32.xlu0 %v5928, 127
      %v6011 = vpop.permute.xlu0 %6010
      %6012 = vrot.lane.b32.xlu0 %v5931, 127
      %v6013 = vpop.permute.xlu0 %6012
      %6014 = vrot.lane.b32.xlu0 %v5934, 127
      %v6015 = vpop.permute.xlu0 %6014
      %6016 = vrot.lane.b32.xlu0 %v5937, 127
      %v6017 = vpop.permute.xlu0 %6016
      %6018 = vrot.lane.b32.xlu0 %v5940, 127
      %v6019 = vpop.permute.xlu0 %6018
      %6020 = vrot.lane.b32.xlu0 %v5943, 127
      %v6021 = vpop.permute.xlu0 %6020
      %6022 = vrot.lane.b32.xlu0 %v5946, 127
      %v6023 = vpop.permute.xlu0 %6022
      %6024 = vrot.lane.b32.xlu0 %v5949, 127
      %v6025 = vpop.permute.xlu0 %6024
      %6026 = vrot.lane.b32.xlu0 %v5952, 127
      %v6027 = vpop.permute.xlu0 %6026
      %6028 = vrot.lane.b32.xlu0 %v5955, 127
      %v6029 = vpop.permute.xlu0 %6028
      %6030 = vrot.lane.b32.xlu0 %v5958, 127
      %v6031 = vpop.permute.xlu0 %6030
      %6032 = vrot.lane.b32.xlu0 %v5961, 127
      %v6033 = vpop.permute.xlu0 %6032
      %6034 = vrot.lane.b32.xlu0 %v5964, 127
      %v6035 = vpop.permute.xlu0 %6034
      %6036 = vrot.lane.b32.xlu0 %v5967, 127
      %v6037 = vpop.permute.xlu0 %6036
      %6038 = vrot.lane.b32.xlu0 %v5970, 127
      %v6039 = vpop.permute.xlu0 %6038
      %6040 = vrot.lane.b32.xlu0 %v5973, 127
      %v6041 = vpop.permute.xlu0 %6040
      %6042 = vrot.lane.b32.xlu0 %v5976, 127
      %v6043 = vpop.permute.xlu0 %6042
      %6044 = vrot.lane.b32.xlu0 %v5979, 127
      %v6045 = vpop.permute.xlu0 %6044
      %6046 = vrot.lane.b32.xlu0 %v5982, 127
      %v6047 = vpop.permute.xlu0 %6046
      %6048 = vrot.lane.b32.xlu0 %v5985, 127
      %v6049 = vpop.permute.xlu0 %6048
      %v6082 = vadd.f32 %v5730, %v5987
      %v6083 = vadd.f32 %v5731, %v5989
      %v6084 = vadd.f32 %v5732, %v5991
      %v6085 = vadd.f32 %v5733, %v5993
      %v6086 = vadd.f32 %v5734, %v5995
      %v6087 = vadd.f32 %v5735, %v5997
      %v6088 = vadd.f32 %v5736, %v5999
      %v6089 = vadd.f32 %v5737, %v6001
      %v6090 = vadd.f32 %v5738, %v6003
      %v6091 = vadd.f32 %v5739, %v6005
      %v6092 = vadd.f32 %v5740, %v6007
      %v6093 = vadd.f32 %v5741, %v6009
      %v6094 = vadd.f32 %v5742, %v6011
      %v6095 = vadd.f32 %v5743, %v6013
      %v6096 = vadd.f32 %v5744, %v6015
      %v6097 = vadd.f32 %v5745, %v6017
      %v6098 = vadd.f32 %v5746, %v6019
      %v6099 = vadd.f32 %v5747, %v6021
      %v6100 = vadd.f32 %v5748, %v6023
      %v6101 = vadd.f32 %v5749, %v6025
      %v6102 = vadd.f32 %v5750, %v6027
      %v6103 = vadd.f32 %v5751, %v6029
      %v6104 = vadd.f32 %v5752, %v6031
      %v6105 = vadd.f32 %v5753, %v6033
      %v6106 = vadd.f32 %v5754, %v6035
      %v6107 = vadd.f32 %v5755, %v6037
      %v6108 = vadd.f32 %v5756, %v6039
      %v6109 = vadd.f32 %v5757, %v6041
      %v6110 = vadd.f32 %v5758, %v6043
      %v6111 = vadd.f32 %v5759, %v6045
      %v6112 = vadd.f32 %v5760, %v6047
      %v6113 = vadd.f32 %v5761, %v6049
      %v6114 = vmul.f32 %v1635, %v188
      %v6115 = vmul.f32 %v1635, %v189
      %v6116 = vmul.f32 %v1639, %v188
      %v6117 = vmul.f32 %v1639, %v189
      %v6118 = vmul.f32 %v1643, %v188
      %v6119 = vmul.f32 %v1643, %v189
      %v6120 = vmul.f32 %v1647, %v188
      %v6121 = vmul.f32 %v1647, %v189
      %v6122 = vmul.f32 %v1651, %v188
      %v6123 = vmul.f32 %v1651, %v189
      %v6124 = vmul.f32 %v1655, %v188
      %v6125 = vmul.f32 %v1655, %v189
      %v6126 = vmul.f32 %v1659, %v188
      %v6127 = vmul.f32 %v1659, %v189
      %v6128 = vmul.f32 %v1663, %v188
      %v6129 = vmul.f32 %v1663, %v189
      %v6130 = vmul.f32 %v1667, %v188
      %v6131 = vmul.f32 %v1667, %v189
      %v6132 = vmul.f32 %v1671, %v188
      %v6133 = vmul.f32 %v1671, %v189
      %v6134 = vmul.f32 %v1675, %v188
      %v6135 = vmul.f32 %v1675, %v189
      %v6136 = vmul.f32 %v1679, %v188
      %v6137 = vmul.f32 %v1679, %v189
      %v6138 = vmul.f32 %v1683, %v188
      %v6139 = vmul.f32 %v1683, %v189
      %v6140 = vmul.f32 %v1687, %v188
      %v6141 = vmul.f32 %v1687, %v189
      %v6142 = vmul.f32 %v1691, %v188
      %v6143 = vmul.f32 %v1691, %v189
      %v6144 = vmul.f32 %v1695, %v188
      %v6145 = vmul.f32 %v1695, %v189
      %v6146 = vmul.f32 %v1699, %v188
      %v6147 = vmul.f32 %v1699, %v189
      %v6148 = vmul.f32 %v1703, %v188
      %v6149 = vmul.f32 %v1703, %v189
      %v6150 = vmul.f32 %v1707, %v188
      %v6151 = vmul.f32 %v1707, %v189
      %v6152 = vmul.f32 %v1711, %v188
      %v6153 = vmul.f32 %v1711, %v189
      %v6154 = vmul.f32 %v1715, %v188
      %v6155 = vmul.f32 %v1715, %v189
      %v6156 = vmul.f32 %v1719, %v188
      %v6157 = vmul.f32 %v1719, %v189
      %v6158 = vmul.f32 %v1723, %v188
      %v6159 = vmul.f32 %v1723, %v189
      %v6160 = vmul.f32 %v1727, %v188
      %v6161 = vmul.f32 %v1727, %v189
      %v6162 = vmul.f32 %v1731, %v188
      %v6163 = vmul.f32 %v1731, %v189
      %v6164 = vmul.f32 %v1735, %v188
      %v6165 = vmul.f32 %v1735, %v189
      %v6166 = vmul.f32 %v1739, %v188
      %v6167 = vmul.f32 %v1739, %v189
      %v6168 = vmul.f32 %v1743, %v188
      %v6169 = vmul.f32 %v1743, %v189
      %v6170 = vmul.f32 %v1747, %v188
      %v6171 = vmul.f32 %v1747, %v189
      %v6172 = vmul.f32 %v1751, %v188
      %v6173 = vmul.f32 %v1751, %v189
      %v6174 = vmul.f32 %v1755, %v188
      %v6175 = vmul.f32 %v1755, %v189
      %v6176 = vmul.f32 %v1759, %v188
      %v6177 = vmul.f32 %v1759, %v189
      %v6242 = vrot.slane %v6114, 1
      %v6243 = vrot.slane %v6115, 1
      %v6244 = vsel %vm1889, %v6242, %v6243
      %v6245 = vrot.slane %v6116, 1
      %v6246 = vrot.slane %v6117, 1
      %v6247 = vsel %vm1889, %v6245, %v6246
      %v6248 = vrot.slane %v6118, 1
      %v6249 = vrot.slane %v6119, 1
      %v6250 = vsel %vm1889, %v6248, %v6249
      %v6251 = vrot.slane %v6120, 1
      %v6252 = vrot.slane %v6121, 1
      %v6253 = vsel %vm1889, %v6251, %v6252
      %v6254 = vrot.slane %v6122, 1
      %v6255 = vrot.slane %v6123, 1
      %v6256 = vsel %vm1889, %v6254, %v6255
      %v6257 = vrot.slane %v6124, 1
      %v6258 = vrot.slane %v6125, 1
      %v6259 = vsel %vm1889, %v6257, %v6258
      %v6260 = vrot.slane %v6126, 1
      %v6261 = vrot.slane %v6127, 1
      %v6262 = vsel %vm1889, %v6260, %v6261
      %v6263 = vrot.slane %v6128, 1
      %v6264 = vrot.slane %v6129, 1
      %v6265 = vsel %vm1889, %v6263, %v6264
      %v6266 = vrot.slane %v6130, 1
      %v6267 = vrot.slane %v6131, 1
      %v6268 = vsel %vm1889, %v6266, %v6267
      %v6269 = vrot.slane %v6132, 1
      %v6270 = vrot.slane %v6133, 1
      %v6271 = vsel %vm1889, %v6269, %v6270
      %v6272 = vrot.slane %v6134, 1
      %v6273 = vrot.slane %v6135, 1
      %v6274 = vsel %vm1889, %v6272, %v6273
      %v6275 = vrot.slane %v6136, 1
      %v6276 = vrot.slane %v6137, 1
      %v6277 = vsel %vm1889, %v6275, %v6276
      %v6278 = vrot.slane %v6138, 1
      %v6279 = vrot.slane %v6139, 1
      %v6280 = vsel %vm1889, %v6278, %v6279
      %v6281 = vrot.slane %v6140, 1
      %v6282 = vrot.slane %v6141, 1
      %v6283 = vsel %vm1889, %v6281, %v6282
      %v6284 = vrot.slane %v6142, 1
      %v6285 = vrot.slane %v6143, 1
      %v6286 = vsel %vm1889, %v6284, %v6285
      %v6287 = vrot.slane %v6144, 1
      %v6288 = vrot.slane %v6145, 1
      %v6289 = vsel %vm1889, %v6287, %v6288
      %v6290 = vrot.slane %v6146, 1
      %v6291 = vrot.slane %v6147, 1
      %v6292 = vsel %vm1889, %v6290, %v6291
      %v6293 = vrot.slane %v6148, 1
      %v6294 = vrot.slane %v6149, 1
      %v6295 = vsel %vm1889, %v6293, %v6294
      %v6296 = vrot.slane %v6150, 1
      %v6297 = vrot.slane %v6151, 1
      %v6298 = vsel %vm1889, %v6296, %v6297
      %v6299 = vrot.slane %v6152, 1
      %v6300 = vrot.slane %v6153, 1
      %v6301 = vsel %vm1889, %v6299, %v6300
      %v6302 = vrot.slane %v6154, 1
      %v6303 = vrot.slane %v6155, 1
      %v6304 = vsel %vm1889, %v6302, %v6303
      %v6305 = vrot.slane %v6156, 1
      %v6306 = vrot.slane %v6157, 1
      %v6307 = vsel %vm1889, %v6305, %v6306
      %v6308 = vrot.slane %v6158, 1
      %v6309 = vrot.slane %v6159, 1
      %v6310 = vsel %vm1889, %v6308, %v6309
      %v6311 = vrot.slane %v6160, 1
      %v6312 = vrot.slane %v6161, 1
      %v6313 = vsel %vm1889, %v6311, %v6312
      %v6314 = vrot.slane %v6162, 1
      %v6315 = vrot.slane %v6163, 1
      %v6316 = vsel %vm1889, %v6314, %v6315
      %v6317 = vrot.slane %v6164, 1
      %v6318 = vrot.slane %v6165, 1
      %v6319 = vsel %vm1889, %v6317, %v6318
      %v6320 = vrot.slane %v6166, 1
      %v6321 = vrot.slane %v6167, 1
      %v6322 = vsel %vm1889, %v6320, %v6321
      %v6323 = vrot.slane %v6168, 1
      %v6324 = vrot.slane %v6169, 1
      %v6325 = vsel %vm1889, %v6323, %v6324
      %v6326 = vrot.slane %v6170, 1
      %v6327 = vrot.slane %v6171, 1
      %v6328 = vsel %vm1889, %v6326, %v6327
      %v6329 = vrot.slane %v6172, 1
      %v6330 = vrot.slane %v6173, 1
      %v6331 = vsel %vm1889, %v6329, %v6330
      %v6332 = vrot.slane %v6174, 1
      %v6333 = vrot.slane %v6175, 1
      %v6334 = vsel %vm1889, %v6332, %v6333
      %v6335 = vrot.slane %v6176, 1
      %v6336 = vrot.slane %v6177, 1
      %v6337 = vsel %vm1889, %v6335, %v6336
      %v6370 = vadd.f32 %v6082, %v6244
      %v6371 = vadd.f32 %v6083, %v6247
      %v6372 = vadd.f32 %v6084, %v6250
      %v6373 = vadd.f32 %v6085, %v6253
      %v6374 = vadd.f32 %v6086, %v6256
      %v6375 = vadd.f32 %v6087, %v6259
      %v6376 = vadd.f32 %v6088, %v6262
      %v6377 = vadd.f32 %v6089, %v6265
      %v6378 = vadd.f32 %v6090, %v6268
      %v6379 = vadd.f32 %v6091, %v6271
      %v6380 = vadd.f32 %v6092, %v6274
      %v6381 = vadd.f32 %v6093, %v6277
      %v6382 = vadd.f32 %v6094, %v6280
      %v6383 = vadd.f32 %v6095, %v6283
      %v6384 = vadd.f32 %v6096, %v6286
      %v6385 = vadd.f32 %v6097, %v6289
      %v6386 = vadd.f32 %v6098, %v6292
      %v6387 = vadd.f32 %v6099, %v6295
      %v6388 = vadd.f32 %v6100, %v6298
      %v6389 = vadd.f32 %v6101, %v6301
      %v6390 = vadd.f32 %v6102, %v6304
      %v6391 = vadd.f32 %v6103, %v6307
      %v6392 = vadd.f32 %v6104, %v6310
      %v6393 = vadd.f32 %v6105, %v6313
      %v6394 = vadd.f32 %v6106, %v6316
      %v6395 = vadd.f32 %v6107, %v6319
      %v6396 = vadd.f32 %v6108, %v6322
      %v6397 = vadd.f32 %v6109, %v6325
      %v6398 = vadd.f32 %v6110, %v6328
      %v6399 = vadd.f32 %v6111, %v6331
      %v6400 = vadd.f32 %v6112, %v6334
      %v6401 = vadd.f32 %v6113, %v6337
      %v6402 = vmul.f32 %v2052, %v191
      %v6403 = vmul.f32 %v2052, %v192
      %v6404 = vmul.f32 %v2056, %v191
      %v6405 = vmul.f32 %v2056, %v192
      %v6406 = vmul.f32 %v2060, %v191
      %v6407 = vmul.f32 %v2060, %v192
      %v6408 = vmul.f32 %v2064, %v191
      %v6409 = vmul.f32 %v2064, %v192
      %v6410 = vmul.f32 %v2068, %v191
      %v6411 = vmul.f32 %v2068, %v192
      %v6412 = vmul.f32 %v2072, %v191
      %v6413 = vmul.f32 %v2072, %v192
      %v6414 = vmul.f32 %v2076, %v191
      %v6415 = vmul.f32 %v2076, %v192
      %v6416 = vmul.f32 %v2080, %v191
      %v6417 = vmul.f32 %v2080, %v192
      %v6418 = vmul.f32 %v2084, %v191
      %v6419 = vmul.f32 %v2084, %v192
      %v6420 = vmul.f32 %v2088, %v191
      %v6421 = vmul.f32 %v2088, %v192
      %v6422 = vmul.f32 %v2092, %v191
      %v6423 = vmul.f32 %v2092, %v192
      %v6424 = vmul.f32 %v2096, %v191
      %v6425 = vmul.f32 %v2096, %v192
      %v6426 = vmul.f32 %v2100, %v191
      %v6427 = vmul.f32 %v2100, %v192
      %v6428 = vmul.f32 %v2104, %v191
      %v6429 = vmul.f32 %v2104, %v192
      %v6430 = vmul.f32 %v2108, %v191
      %v6431 = vmul.f32 %v2108, %v192
      %v6432 = vmul.f32 %v2112, %v191
      %v6433 = vmul.f32 %v2112, %v192
      %v6434 = vmul.f32 %v2116, %v191
      %v6435 = vmul.f32 %v2116, %v192
      %v6436 = vmul.f32 %v2120, %v191
      %v6437 = vmul.f32 %v2120, %v192
      %v6438 = vmul.f32 %v2124, %v191
      %v6439 = vmul.f32 %v2124, %v192
      %v6440 = vmul.f32 %v2128, %v191
      %v6441 = vmul.f32 %v2128, %v192
      %v6442 = vmul.f32 %v2132, %v191
      %v6443 = vmul.f32 %v2132, %v192
      %v6444 = vmul.f32 %v2136, %v191
      %v6445 = vmul.f32 %v2136, %v192
      %v6446 = vmul.f32 %v2140, %v191
      %v6447 = vmul.f32 %v2140, %v192
      %v6448 = vmul.f32 %v2144, %v191
      %v6449 = vmul.f32 %v2144, %v192
      %v6450 = vmul.f32 %v2148, %v191
      %v6451 = vmul.f32 %v2148, %v192
      %v6452 = vmul.f32 %v2152, %v191
      %v6453 = vmul.f32 %v2152, %v192
      %v6454 = vmul.f32 %v2156, %v191
      %v6455 = vmul.f32 %v2156, %v192
      %v6456 = vmul.f32 %v2160, %v191
      %v6457 = vmul.f32 %v2160, %v192
      %v6458 = vmul.f32 %v2164, %v191
      %v6459 = vmul.f32 %v2164, %v192
      %v6460 = vmul.f32 %v2168, %v191
      %v6461 = vmul.f32 %v2168, %v192
      %v6462 = vmul.f32 %v2172, %v191
      %v6463 = vmul.f32 %v2172, %v192
      %v6464 = vmul.f32 %v2176, %v191
      %v6465 = vmul.f32 %v2176, %v192
      %v6530 = vrot.slane %v6402, 1
      %v6531 = vrot.slane %v6403, 1
      %v6532 = vsel %vm1889, %v6530, %v6531
      %v6533 = vrot.slane %v6404, 1
      %v6534 = vrot.slane %v6405, 1
      %v6535 = vsel %vm1889, %v6533, %v6534
      %v6536 = vrot.slane %v6406, 1
      %v6537 = vrot.slane %v6407, 1
      %v6538 = vsel %vm1889, %v6536, %v6537
      %v6539 = vrot.slane %v6408, 1
      %v6540 = vrot.slane %v6409, 1
      %v6541 = vsel %vm1889, %v6539, %v6540
      %v6542 = vrot.slane %v6410, 1
      %v6543 = vrot.slane %v6411, 1
      %v6544 = vsel %vm1889, %v6542, %v6543
      %v6545 = vrot.slane %v6412, 1
      %v6546 = vrot.slane %v6413, 1
      %v6547 = vsel %vm1889, %v6545, %v6546
      %v6548 = vrot.slane %v6414, 1
      %v6549 = vrot.slane %v6415, 1
      %v6550 = vsel %vm1889, %v6548, %v6549
      %v6551 = vrot.slane %v6416, 1
      %v6552 = vrot.slane %v6417, 1
      %v6553 = vsel %vm1889, %v6551, %v6552
      %v6554 = vrot.slane %v6418, 1
      %v6555 = vrot.slane %v6419, 1
      %v6556 = vsel %vm1889, %v6554, %v6555
      %v6557 = vrot.slane %v6420, 1
      %v6558 = vrot.slane %v6421, 1
      %v6559 = vsel %vm1889, %v6557, %v6558
      %v6560 = vrot.slane %v6422, 1
      %v6561 = vrot.slane %v6423, 1
      %v6562 = vsel %vm1889, %v6560, %v6561
      %v6563 = vrot.slane %v6424, 1
      %v6564 = vrot.slane %v6425, 1
      %v6565 = vsel %vm1889, %v6563, %v6564
      %v6566 = vrot.slane %v6426, 1
      %v6567 = vrot.slane %v6427, 1
      %v6568 = vsel %vm1889, %v6566, %v6567
      %v6569 = vrot.slane %v6428, 1
      %v6570 = vrot.slane %v6429, 1
      %v6571 = vsel %vm1889, %v6569, %v6570
      %v6572 = vrot.slane %v6430, 1
      %v6573 = vrot.slane %v6431, 1
      %v6574 = vsel %vm1889, %v6572, %v6573
      %v6575 = vrot.slane %v6432, 1
      %v6576 = vrot.slane %v6433, 1
      %v6577 = vsel %vm1889, %v6575, %v6576
      %v6578 = vrot.slane %v6434, 1
      %v6579 = vrot.slane %v6435, 1
      %v6580 = vsel %vm1889, %v6578, %v6579
      %v6581 = vrot.slane %v6436, 1
      %v6582 = vrot.slane %v6437, 1
      %v6583 = vsel %vm1889, %v6581, %v6582
      %v6584 = vrot.slane %v6438, 1
      %v6585 = vrot.slane %v6439, 1
      %v6586 = vsel %vm1889, %v6584, %v6585
      %v6587 = vrot.slane %v6440, 1
      %v6588 = vrot.slane %v6441, 1
      %v6589 = vsel %vm1889, %v6587, %v6588
      %v6590 = vrot.slane %v6442, 1
      %v6591 = vrot.slane %v6443, 1
      %v6592 = vsel %vm1889, %v6590, %v6591
      %v6593 = vrot.slane %v6444, 1
      %v6594 = vrot.slane %v6445, 1
      %v6595 = vsel %vm1889, %v6593, %v6594
      %v6596 = vrot.slane %v6446, 1
      %v6597 = vrot.slane %v6447, 1
      %v6598 = vsel %vm1889, %v6596, %v6597
      %v6599 = vrot.slane %v6448, 1
      %v6600 = vrot.slane %v6449, 1
      %v6601 = vsel %vm1889, %v6599, %v6600
      %v6602 = vrot.slane %v6450, 1
      %v6603 = vrot.slane %v6451, 1
      %v6604 = vsel %vm1889, %v6602, %v6603
      %v6605 = vrot.slane %v6452, 1
      %v6606 = vrot.slane %v6453, 1
      %v6607 = vsel %vm1889, %v6605, %v6606
      %v6608 = vrot.slane %v6454, 1
      %v6609 = vrot.slane %v6455, 1
      %v6610 = vsel %vm1889, %v6608, %v6609
      %v6611 = vrot.slane %v6456, 1
      %v6612 = vrot.slane %v6457, 1
      %v6613 = vsel %vm1889, %v6611, %v6612
      %v6614 = vrot.slane %v6458, 1
      %v6615 = vrot.slane %v6459, 1
      %v6616 = vsel %vm1889, %v6614, %v6615
      %v6617 = vrot.slane %v6460, 1
      %v6618 = vrot.slane %v6461, 1
      %v6619 = vsel %vm1889, %v6617, %v6618
      %v6620 = vrot.slane %v6462, 1
      %v6621 = vrot.slane %v6463, 1
      %v6622 = vsel %vm1889, %v6620, %v6621
      %v6623 = vrot.slane %v6464, 1
      %v6624 = vrot.slane %v6465, 1
      %v6625 = vsel %vm1889, %v6623, %v6624
      %v6658 = vadd.f32 %v6370, %v6532
      %v6659 = vadd.f32 %v6371, %v6535
      %v6660 = vadd.f32 %v6372, %v6538
      %v6661 = vadd.f32 %v6373, %v6541
      %v6662 = vadd.f32 %v6374, %v6544
      %v6663 = vadd.f32 %v6375, %v6547
      %v6664 = vadd.f32 %v6376, %v6550
      %v6665 = vadd.f32 %v6377, %v6553
      %v6666 = vadd.f32 %v6378, %v6556
      %v6667 = vadd.f32 %v6379, %v6559
      %v6668 = vadd.f32 %v6380, %v6562
      %v6669 = vadd.f32 %v6381, %v6565
      %v6670 = vadd.f32 %v6382, %v6568
      %v6671 = vadd.f32 %v6383, %v6571
      %v6672 = vadd.f32 %v6384, %v6574
      %v6673 = vadd.f32 %v6385, %v6577
      %v6674 = vadd.f32 %v6386, %v6580
      %v6675 = vadd.f32 %v6387, %v6583
      %v6676 = vadd.f32 %v6388, %v6586
      %v6677 = vadd.f32 %v6389, %v6589
      %v6678 = vadd.f32 %v6390, %v6592
      %v6679 = vadd.f32 %v6391, %v6595
      %v6680 = vadd.f32 %v6392, %v6598
      %v6681 = vadd.f32 %v6393, %v6601
      %v6682 = vadd.f32 %v6394, %v6604
      %v6683 = vadd.f32 %v6395, %v6607
      %v6684 = vadd.f32 %v6396, %v6610
      %v6685 = vadd.f32 %v6397, %v6613
      %v6686 = vadd.f32 %v6398, %v6616
      %v6687 = vadd.f32 %v6399, %v6619
      %v6688 = vadd.f32 %v6400, %v6622
      %v6689 = vadd.f32 %v6401, %v6625
      %v6690 = vmul.f32 %v2468, %v188
      %v6691 = vmul.f32 %v2468, %v189
      %v6692 = vmul.f32 %v2472, %v188
      %v6693 = vmul.f32 %v2472, %v189
      %v6694 = vmul.f32 %v2476, %v188
      %v6695 = vmul.f32 %v2476, %v189
      %v6696 = vmul.f32 %v2480, %v188
      %v6697 = vmul.f32 %v2480, %v189
      %v6698 = vmul.f32 %v2484, %v188
      %v6699 = vmul.f32 %v2484, %v189
      %v6700 = vmul.f32 %v2488, %v188
      %v6701 = vmul.f32 %v2488, %v189
      %v6702 = vmul.f32 %v2492, %v188
      %v6703 = vmul.f32 %v2492, %v189
      %v6704 = vmul.f32 %v2496, %v188
      %v6705 = vmul.f32 %v2496, %v189
      %v6706 = vmul.f32 %v2500, %v188
      %v6707 = vmul.f32 %v2500, %v189
      %v6708 = vmul.f32 %v2504, %v188
      %v6709 = vmul.f32 %v2504, %v189
      %v6710 = vmul.f32 %v2508, %v188
      %v6711 = vmul.f32 %v2508, %v189
      %v6712 = vmul.f32 %v2512, %v188
      %v6713 = vmul.f32 %v2512, %v189
      %v6714 = vmul.f32 %v2516, %v188
      %v6715 = vmul.f32 %v2516, %v189
      %v6716 = vmul.f32 %v2520, %v188
      %v6717 = vmul.f32 %v2520, %v189
      %v6718 = vmul.f32 %v2524, %v188
      %v6719 = vmul.f32 %v2524, %v189
      %v6720 = vmul.f32 %v2528, %v188
      %v6721 = vmul.f32 %v2528, %v189
      %v6722 = vmul.f32 %v2532, %v188
      %v6723 = vmul.f32 %v2532, %v189
      %v6724 = vmul.f32 %v2536, %v188
      %v6725 = vmul.f32 %v2536, %v189
      %v6726 = vmul.f32 %v2540, %v188
      %v6727 = vmul.f32 %v2540, %v189
      %v6728 = vmul.f32 %v2544, %v188
      %v6729 = vmul.f32 %v2544, %v189
      %v6730 = vmul.f32 %v2548, %v188
      %v6731 = vmul.f32 %v2548, %v189
      %v6732 = vmul.f32 %v2552, %v188
      %v6733 = vmul.f32 %v2552, %v189
      %v6734 = vmul.f32 %v2556, %v188
      %v6735 = vmul.f32 %v2556, %v189
      %v6736 = vmul.f32 %v2560, %v188
      %v6737 = vmul.f32 %v2560, %v189
      %v6738 = vmul.f32 %v2564, %v188
      %v6739 = vmul.f32 %v2564, %v189
      %v6740 = vmul.f32 %v2568, %v188
      %v6741 = vmul.f32 %v2568, %v189
      %v6742 = vmul.f32 %v2572, %v188
      %v6743 = vmul.f32 %v2572, %v189
      %v6744 = vmul.f32 %v2576, %v188
      %v6745 = vmul.f32 %v2576, %v189
      %v6746 = vmul.f32 %v2580, %v188
      %v6747 = vmul.f32 %v2580, %v189
      %v6748 = vmul.f32 %v2584, %v188
      %v6749 = vmul.f32 %v2584, %v189
      %v6750 = vmul.f32 %v2588, %v188
      %v6751 = vmul.f32 %v2588, %v189
      %v6752 = vmul.f32 %v2592, %v188
      %v6753 = vmul.f32 %v2592, %v189
      %v6818 = vrot.slane %v6690, 1
      %v6819 = vrot.slane %v6691, 1
      %v6820 = vsel %vm1889, %v6818, %v6819
      %v6821 = vrot.slane %v6692, 1
      %v6822 = vrot.slane %v6693, 1
      %v6823 = vsel %vm1889, %v6821, %v6822
      %v6824 = vrot.slane %v6694, 1
      %v6825 = vrot.slane %v6695, 1
      %v6826 = vsel %vm1889, %v6824, %v6825
      %v6827 = vrot.slane %v6696, 1
      %v6828 = vrot.slane %v6697, 1
      %v6829 = vsel %vm1889, %v6827, %v6828
      %v6830 = vrot.slane %v6698, 1
      %v6831 = vrot.slane %v6699, 1
      %v6832 = vsel %vm1889, %v6830, %v6831
      %v6833 = vrot.slane %v6700, 1
      %v6834 = vrot.slane %v6701, 1
      %v6835 = vsel %vm1889, %v6833, %v6834
      %v6836 = vrot.slane %v6702, 1
      %v6837 = vrot.slane %v6703, 1
      %v6838 = vsel %vm1889, %v6836, %v6837
      %v6839 = vrot.slane %v6704, 1
      %v6840 = vrot.slane %v6705, 1
      %v6841 = vsel %vm1889, %v6839, %v6840
      %v6842 = vrot.slane %v6706, 1
      %v6843 = vrot.slane %v6707, 1
      %v6844 = vsel %vm1889, %v6842, %v6843
      %v6845 = vrot.slane %v6708, 1
      %v6846 = vrot.slane %v6709, 1
      %v6847 = vsel %vm1889, %v6845, %v6846
      %v6848 = vrot.slane %v6710, 1
      %v6849 = vrot.slane %v6711, 1
      %v6850 = vsel %vm1889, %v6848, %v6849
      %v6851 = vrot.slane %v6712, 1
      %v6852 = vrot.slane %v6713, 1
      %v6853 = vsel %vm1889, %v6851, %v6852
      %v6854 = vrot.slane %v6714, 1
      %v6855 = vrot.slane %v6715, 1
      %v6856 = vsel %vm1889, %v6854, %v6855
      %v6857 = vrot.slane %v6716, 1
      %v6858 = vrot.slane %v6717, 1
      %v6859 = vsel %vm1889, %v6857, %v6858
      %v6860 = vrot.slane %v6718, 1
      %v6861 = vrot.slane %v6719, 1
      %v6862 = vsel %vm1889, %v6860, %v6861
      %v6863 = vrot.slane %v6720, 1
      %v6864 = vrot.slane %v6721, 1
      %v6865 = vsel %vm1889, %v6863, %v6864
      %v6866 = vrot.slane %v6722, 1
      %v6867 = vrot.slane %v6723, 1
      %v6868 = vsel %vm1889, %v6866, %v6867
      %v6869 = vrot.slane %v6724, 1
      %v6870 = vrot.slane %v6725, 1
      %v6871 = vsel %vm1889, %v6869, %v6870
      %v6872 = vrot.slane %v6726, 1
      %v6873 = vrot.slane %v6727, 1
      %v6874 = vsel %vm1889, %v6872, %v6873
      %v6875 = vrot.slane %v6728, 1
      %v6876 = vrot.slane %v6729, 1
      %v6877 = vsel %vm1889, %v6875, %v6876
      %v6878 = vrot.slane %v6730, 1
      %v6879 = vrot.slane %v6731, 1
      %v6880 = vsel %vm1889, %v6878, %v6879
      %v6881 = vrot.slane %v6732, 1
      %v6882 = vrot.slane %v6733, 1
      %v6883 = vsel %vm1889, %v6881, %v6882
      %v6884 = vrot.slane %v6734, 1
      %v6885 = vrot.slane %v6735, 1
      %v6886 = vsel %vm1889, %v6884, %v6885
      %v6887 = vrot.slane %v6736, 1
      %v6888 = vrot.slane %v6737, 1
      %v6889 = vsel %vm1889, %v6887, %v6888
      %v6890 = vrot.slane %v6738, 1
      %v6891 = vrot.slane %v6739, 1
      %v6892 = vsel %vm1889, %v6890, %v6891
      %v6893 = vrot.slane %v6740, 1
      %v6894 = vrot.slane %v6741, 1
      %v6895 = vsel %vm1889, %v6893, %v6894
      %v6896 = vrot.slane %v6742, 1
      %v6897 = vrot.slane %v6743, 1
      %v6898 = vsel %vm1889, %v6896, %v6897
      %v6899 = vrot.slane %v6744, 1
      %v6900 = vrot.slane %v6745, 1
      %v6901 = vsel %vm1889, %v6899, %v6900
      %v6902 = vrot.slane %v6746, 1
      %v6903 = vrot.slane %v6747, 1
      %v6904 = vsel %vm1889, %v6902, %v6903
      %v6905 = vrot.slane %v6748, 1
      %v6906 = vrot.slane %v6749, 1
      %v6907 = vsel %vm1889, %v6905, %v6906
      %v6908 = vrot.slane %v6750, 1
      %v6909 = vrot.slane %v6751, 1
      %v6910 = vsel %vm1889, %v6908, %v6909
      %v6911 = vrot.slane %v6752, 1
      %v6912 = vrot.slane %v6753, 1
      %v6913 = vsel %vm1889, %v6911, %v6912
      %6914 = vrot.lane.b32.xlu0 %v6820, 127
      %v6915 = vpop.permute.xlu0 %6914
      %6916 = vrot.lane.b32.xlu0 %v6823, 127
      %v6917 = vpop.permute.xlu0 %6916
      %6918 = vrot.lane.b32.xlu0 %v6826, 127
      %v6919 = vpop.permute.xlu0 %6918
      %6920 = vrot.lane.b32.xlu0 %v6829, 127
      %v6921 = vpop.permute.xlu0 %6920
      %6922 = vrot.lane.b32.xlu0 %v6832, 127
      %v6923 = vpop.permute.xlu0 %6922
      %6924 = vrot.lane.b32.xlu0 %v6835, 127
      %v6925 = vpop.permute.xlu0 %6924
      %6926 = vrot.lane.b32.xlu0 %v6838, 127
      %v6927 = vpop.permute.xlu0 %6926
      %6928 = vrot.lane.b32.xlu0 %v6841, 127
      %v6929 = vpop.permute.xlu0 %6928
      %6930 = vrot.lane.b32.xlu0 %v6844, 127
      %v6931 = vpop.permute.xlu0 %6930
      %6932 = vrot.lane.b32.xlu0 %v6847, 127
      %v6933 = vpop.permute.xlu0 %6932
      %6934 = vrot.lane.b32.xlu0 %v6850, 127
      %v6935 = vpop.permute.xlu0 %6934
      %6936 = vrot.lane.b32.xlu0 %v6853, 127
      %v6937 = vpop.permute.xlu0 %6936
      %6938 = vrot.lane.b32.xlu0 %v6856, 127
      %v6939 = vpop.permute.xlu0 %6938
      %6940 = vrot.lane.b32.xlu0 %v6859, 127
      %v6941 = vpop.permute.xlu0 %6940
      %6942 = vrot.lane.b32.xlu0 %v6862, 127
      %v6943 = vpop.permute.xlu0 %6942
      %6944 = vrot.lane.b32.xlu0 %v6865, 127
      %v6945 = vpop.permute.xlu0 %6944
      %6946 = vrot.lane.b32.xlu0 %v6868, 127
      %v6947 = vpop.permute.xlu0 %6946
      %6948 = vrot.lane.b32.xlu0 %v6871, 127
      %v6949 = vpop.permute.xlu0 %6948
      %6950 = vrot.lane.b32.xlu0 %v6874, 127
      %v6951 = vpop.permute.xlu0 %6950
      %6952 = vrot.lane.b32.xlu0 %v6877, 127
      %v6953 = vpop.permute.xlu0 %6952
      %6954 = vrot.lane.b32.xlu0 %v6880, 127
      %v6955 = vpop.permute.xlu0 %6954
      %6956 = vrot.lane.b32.xlu0 %v6883, 127
      %v6957 = vpop.permute.xlu0 %6956
      %6958 = vrot.lane.b32.xlu0 %v6886, 127
      %v6959 = vpop.permute.xlu0 %6958
      %6960 = vrot.lane.b32.xlu0 %v6889, 127
      %v6961 = vpop.permute.xlu0 %6960
      %6962 = vrot.lane.b32.xlu0 %v6892, 127
      %v6963 = vpop.permute.xlu0 %6962
      %6964 = vrot.lane.b32.xlu0 %v6895, 127
      %v6965 = vpop.permute.xlu0 %6964
      %6966 = vrot.lane.b32.xlu0 %v6898, 127
      %v6967 = vpop.permute.xlu0 %6966
      %6968 = vrot.lane.b32.xlu0 %v6901, 127
      %v6969 = vpop.permute.xlu0 %6968
      %6970 = vrot.lane.b32.xlu0 %v6904, 127
      %v6971 = vpop.permute.xlu0 %6970
      %6972 = vrot.lane.b32.xlu0 %v6907, 127
      %v6973 = vpop.permute.xlu0 %6972
      %6974 = vrot.lane.b32.xlu0 %v6910, 127
      %v6975 = vpop.permute.xlu0 %6974
      %6976 = vrot.lane.b32.xlu0 %v6913, 127
      %v6977 = vpop.permute.xlu0 %6976
      %v7010 = vadd.f32 %v6658, %v6915
      %v7011 = vadd.f32 %v6659, %v6917
      %v7012 = vadd.f32 %v6660, %v6919
      %v7013 = vadd.f32 %v6661, %v6921
      %v7014 = vadd.f32 %v6662, %v6923
      %v7015 = vadd.f32 %v6663, %v6925
      %v7016 = vadd.f32 %v6664, %v6927
      %v7017 = vadd.f32 %v6665, %v6929
      %v7018 = vadd.f32 %v6666, %v6931
      %v7019 = vadd.f32 %v6667, %v6933
      %v7020 = vadd.f32 %v6668, %v6935
      %v7021 = vadd.f32 %v6669, %v6937
      %v7022 = vadd.f32 %v6670, %v6939
      %v7023 = vadd.f32 %v6671, %v6941
      %v7024 = vadd.f32 %v6672, %v6943
      %v7025 = vadd.f32 %v6673, %v6945
      %v7026 = vadd.f32 %v6674, %v6947
      %v7027 = vadd.f32 %v6675, %v6949
      %v7028 = vadd.f32 %v6676, %v6951
      %v7029 = vadd.f32 %v6677, %v6953
      %v7030 = vadd.f32 %v6678, %v6955
      %v7031 = vadd.f32 %v6679, %v6957
      %v7032 = vadd.f32 %v6680, %v6959
      %v7033 = vadd.f32 %v6681, %v6961
      %v7034 = vadd.f32 %v6682, %v6963
      %v7035 = vadd.f32 %v6683, %v6965
      %v7036 = vadd.f32 %v6684, %v6967
      %v7037 = vadd.f32 %v6685, %v6969
      %v7038 = vadd.f32 %v6686, %v6971
      %v7039 = vadd.f32 %v6687, %v6973
      %v7040 = vadd.f32 %v6688, %v6975
      %v7041 = vadd.f32 %v6689, %v6977
      %v7042 = vmax.f32 %v7010, 0.0
      %v7043 = vmax.f32 %v7011, 0.0
      %v7044 = vmax.f32 %v7012, 0.0
      %v7045 = vmax.f32 %v7013, 0.0
      %v7046 = vmax.f32 %v7014, 0.0
      %v7047 = vmax.f32 %v7015, 0.0
      %v7048 = vmax.f32 %v7016, 0.0
      %v7049 = vmax.f32 %v7017, 0.0
      %v7050 = vmax.f32 %v7018, 0.0
      %v7051 = vmax.f32 %v7019, 0.0
      %v7052 = vmax.f32 %v7020, 0.0
      %v7053 = vmax.f32 %v7021, 0.0
      %v7054 = vmax.f32 %v7022, 0.0
      %v7055 = vmax.f32 %v7023, 0.0
      %v7056 = vmax.f32 %v7024, 0.0
      %v7057 = vmax.f32 %v7025, 0.0
      %v7058 = vmax.f32 %v7026, 0.0
      %v7059 = vmax.f32 %v7027, 0.0
      %v7060 = vmax.f32 %v7028, 0.0
      %v7061 = vmax.f32 %v7029, 0.0
      %v7062 = vmax.f32 %v7030, 0.0
      %v7063 = vmax.f32 %v7031, 0.0
      %v7064 = vmax.f32 %v7032, 0.0
      %v7065 = vmax.f32 %v7033, 0.0
      %v7066 = vmax.f32 %v7034, 0.0
      %v7067 = vmax.f32 %v7035, 0.0
      %v7068 = vmax.f32 %v7036, 0.0
      %v7069 = vmax.f32 %v7037, 0.0
      %v7070 = vmax.f32 %v7038, 0.0
      %v7071 = vmax.f32 %v7039, 0.0
      %v7072 = vmax.f32 %v7040, 0.0
      %v7073 = vmax.f32 %v7041, 0.0
      %v7074 = vmul.f32 %v259, %v191
      %v7075 = vmul.f32 %v263, %v191
      %v7076 = vmul.f32 %v267, %v191
      %v7077 = vmul.f32 %v271, %v191
      %v7078 = vmul.f32 %v275, %v191
      %v7079 = vmul.f32 %v279, %v191
      %v7080 = vmul.f32 %v283, %v191
      %v7081 = vmul.f32 %v287, %v191
      %v7082 = vmul.f32 %v291, %v191
      %v7083 = vmul.f32 %v295, %v191
      %v7084 = vmul.f32 %v299, %v191
      %v7085 = vmul.f32 %v303, %v191
      %v7086 = vmul.f32 %v307, %v191
      %v7087 = vmul.f32 %v311, %v191
      %v7088 = vmul.f32 %v315, %v191
      %v7089 = vmul.f32 %v319, %v191
      %v7090 = vmul.f32 %v323, %v191
      %v7091 = vmul.f32 %v327, %v191
      %v7092 = vmul.f32 %v331, %v191
      %v7093 = vmul.f32 %v335, %v191
      %v7094 = vmul.f32 %v339, %v191
      %v7095 = vmul.f32 %v343, %v191
      %v7096 = vmul.f32 %v347, %v191
      %v7097 = vmul.f32 %v351, %v191
      %v7098 = vmul.f32 %v355, %v191
      %v7099 = vmul.f32 %v359, %v191
      %v7100 = vmul.f32 %v363, %v191
      %v7101 = vmul.f32 %v367, %v191
      %v7102 = vmul.f32 %v371, %v191
      %v7103 = vmul.f32 %v375, %v191
      %v7104 = vmul.f32 %v379, %v191
      %v7105 = vmul.f32 %v383, %v191
      %v7106 = vmul.f32 %v419, %v188
      %v7107 = vmul.f32 %v423, %v188
      %v7108 = vmul.f32 %v427, %v188
      %v7109 = vmul.f32 %v431, %v188
      %v7110 = vmul.f32 %v435, %v188
      %v7111 = vmul.f32 %v439, %v188
      %v7112 = vmul.f32 %v443, %v188
      %v7113 = vmul.f32 %v447, %v188
      %v7114 = vmul.f32 %v451, %v188
      %v7115 = vmul.f32 %v455, %v188
      %v7116 = vmul.f32 %v459, %v188
      %v7117 = vmul.f32 %v463, %v188
      %v7118 = vmul.f32 %v467, %v188
      %v7119 = vmul.f32 %v471, %v188
      %v7120 = vmul.f32 %v475, %v188
      %v7121 = vmul.f32 %v479, %v188
      %v7122 = vmul.f32 %v483, %v188
      %v7123 = vmul.f32 %v487, %v188
      %v7124 = vmul.f32 %v491, %v188
      %v7125 = vmul.f32 %v495, %v188
      %v7126 = vmul.f32 %v499, %v188
      %v7127 = vmul.f32 %v503, %v188
      %v7128 = vmul.f32 %v507, %v188
      %v7129 = vmul.f32 %v511, %v188
      %v7130 = vmul.f32 %v515, %v188
      %v7131 = vmul.f32 %v519, %v188
      %v7132 = vmul.f32 %v523, %v188
      %v7133 = vmul.f32 %v527, %v188
      %v7134 = vmul.f32 %v531, %v188
      %v7135 = vmul.f32 %v535, %v188
      %v7136 = vmul.f32 %v539, %v188
      %v7137 = vmul.f32 %v543, %v188
      %7170 = vrot.lane.b32.xlu0 %v7106, 127
      %v7171 = vpop.permute.xlu0 %7170
      %7172 = vrot.lane.b32.xlu0 %v7107, 127
      %v7173 = vpop.permute.xlu0 %7172
      %7174 = vrot.lane.b32.xlu0 %v7108, 127
      %v7175 = vpop.permute.xlu0 %7174
      %7176 = vrot.lane.b32.xlu0 %v7109, 127
      %v7177 = vpop.permute.xlu0 %7176
      %7178 = vrot.lane.b32.xlu0 %v7110, 127
      %v7179 = vpop.permute.xlu0 %7178
      %7180 = vrot.lane.b32.xlu0 %v7111, 127
      %v7181 = vpop.permute.xlu0 %7180
      %7182 = vrot.lane.b32.xlu0 %v7112, 127
      %v7183 = vpop.permute.xlu0 %7182
      %7184 = vrot.lane.b32.xlu0 %v7113, 127
      %v7185 = vpop.permute.xlu0 %7184
      %7186 = vrot.lane.b32.xlu0 %v7114, 127
      %v7187 = vpop.permute.xlu0 %7186
      %7188 = vrot.lane.b32.xlu0 %v7115, 127
      %v7189 = vpop.permute.xlu0 %7188
      %7190 = vrot.lane.b32.xlu0 %v7116, 127
      %v7191 = vpop.permute.xlu0 %7190
      %7192 = vrot.lane.b32.xlu0 %v7117, 127
      %v7193 = vpop.permute.xlu0 %7192
      %7194 = vrot.lane.b32.xlu0 %v7118, 127
      %v7195 = vpop.permute.xlu0 %7194
      %7196 = vrot.lane.b32.xlu0 %v7119, 127
      %v7197 = vpop.permute.xlu0 %7196
      %7198 = vrot.lane.b32.xlu0 %v7120, 127
      %v7199 = vpop.permute.xlu0 %7198
      %7200 = vrot.lane.b32.xlu0 %v7121, 127
      %v7201 = vpop.permute.xlu0 %7200
      %7202 = vrot.lane.b32.xlu0 %v7122, 127
      %v7203 = vpop.permute.xlu0 %7202
      %7204 = vrot.lane.b32.xlu0 %v7123, 127
      %v7205 = vpop.permute.xlu0 %7204
      %7206 = vrot.lane.b32.xlu0 %v7124, 127
      %v7207 = vpop.permute.xlu0 %7206
      %7208 = vrot.lane.b32.xlu0 %v7125, 127
      %v7209 = vpop.permute.xlu0 %7208
      %7210 = vrot.lane.b32.xlu0 %v7126, 127
      %v7211 = vpop.permute.xlu0 %7210
      %7212 = vrot.lane.b32.xlu0 %v7127, 127
      %v7213 = vpop.permute.xlu0 %7212
      %7214 = vrot.lane.b32.xlu0 %v7128, 127
      %v7215 = vpop.permute.xlu0 %7214
      %7216 = vrot.lane.b32.xlu0 %v7129, 127
      %v7217 = vpop.permute.xlu0 %7216
      %7218 = vrot.lane.b32.xlu0 %v7130, 127
      %v7219 = vpop.permute.xlu0 %7218
      %7220 = vrot.lane.b32.xlu0 %v7131, 127
      %v7221 = vpop.permute.xlu0 %7220
      %7222 = vrot.lane.b32.xlu0 %v7132, 127
      %v7223 = vpop.permute.xlu0 %7222
      %7224 = vrot.lane.b32.xlu0 %v7133, 127
      %v7225 = vpop.permute.xlu0 %7224
      %7226 = vrot.lane.b32.xlu0 %v7134, 127
      %v7227 = vpop.permute.xlu0 %7226
      %7228 = vrot.lane.b32.xlu0 %v7135, 127
      %v7229 = vpop.permute.xlu0 %7228
      %7230 = vrot.lane.b32.xlu0 %v7136, 127
      %v7231 = vpop.permute.xlu0 %7230
      %7232 = vrot.lane.b32.xlu0 %v7137, 127
      %v7233 = vpop.permute.xlu0 %7232
      %v7266 = vadd.f32 %v7074, %v7171
      %v7267 = vadd.f32 %v7075, %v7173
      %v7268 = vadd.f32 %v7076, %v7175
      %v7269 = vadd.f32 %v7077, %v7177
      %v7270 = vadd.f32 %v7078, %v7179
      %v7271 = vadd.f32 %v7079, %v7181
      %v7272 = vadd.f32 %v7080, %v7183
      %v7273 = vadd.f32 %v7081, %v7185
      %v7274 = vadd.f32 %v7082, %v7187
      %v7275 = vadd.f32 %v7083, %v7189
      %v7276 = vadd.f32 %v7084, %v7191
      %v7277 = vadd.f32 %v7085, %v7193
      %v7278 = vadd.f32 %v7086, %v7195
      %v7279 = vadd.f32 %v7087, %v7197
      %v7280 = vadd.f32 %v7088, %v7199
      %v7281 = vadd.f32 %v7089, %v7201
      %v7282 = vadd.f32 %v7090, %v7203
      %v7283 = vadd.f32 %v7091, %v7205
      %v7284 = vadd.f32 %v7092, %v7207
      %v7285 = vadd.f32 %v7093, %v7209
      %v7286 = vadd.f32 %v7094, %v7211
      %v7287 = vadd.f32 %v7095, %v7213
      %v7288 = vadd.f32 %v7096, %v7215
      %v7289 = vadd.f32 %v7097, %v7217
      %v7290 = vadd.f32 %v7098, %v7219
      %v7291 = vadd.f32 %v7099, %v7221
      %v7292 = vadd.f32 %v7100, %v7223
      %v7293 = vadd.f32 %v7101, %v7225
      %v7294 = vadd.f32 %v7102, %v7227
      %v7295 = vadd.f32 %v7103, %v7229
      %v7296 = vadd.f32 %v7104, %v7231
      %v7297 = vadd.f32 %v7105, %v7233
      %v7298 = vmul.f32 %v611, %v191
      %v7299 = vmul.f32 %v615, %v191
      %v7300 = vmul.f32 %v619, %v191
      %v7301 = vmul.f32 %v623, %v191
      %v7302 = vmul.f32 %v627, %v191
      %v7303 = vmul.f32 %v631, %v191
      %v7304 = vmul.f32 %v635, %v191
      %v7305 = vmul.f32 %v639, %v191
      %v7306 = vmul.f32 %v643, %v191
      %v7307 = vmul.f32 %v647, %v191
      %v7308 = vmul.f32 %v651, %v191
      %v7309 = vmul.f32 %v655, %v191
      %v7310 = vmul.f32 %v659, %v191
      %v7311 = vmul.f32 %v663, %v191
      %v7312 = vmul.f32 %v667, %v191
      %v7313 = vmul.f32 %v671, %v191
      %v7314 = vmul.f32 %v675, %v191
      %v7315 = vmul.f32 %v679, %v191
      %v7316 = vmul.f32 %v683, %v191
      %v7317 = vmul.f32 %v687, %v191
      %v7318 = vmul.f32 %v691, %v191
      %v7319 = vmul.f32 %v695, %v191
      %v7320 = vmul.f32 %v699, %v191
      %v7321 = vmul.f32 %v703, %v191
      %v7322 = vmul.f32 %v707, %v191
      %v7323 = vmul.f32 %v711, %v191
      %v7324 = vmul.f32 %v715, %v191
      %v7325 = vmul.f32 %v719, %v191
      %v7326 = vmul.f32 %v723, %v191
      %v7327 = vmul.f32 %v727, %v191
      %v7328 = vmul.f32 %v731, %v191
      %v7329 = vmul.f32 %v735, %v191
      %7362 = vrot.lane.b32.xlu0 %v7298, 127
      %v7363 = vpop.permute.xlu0 %7362
      %7364 = vrot.lane.b32.xlu0 %v7299, 127
      %v7365 = vpop.permute.xlu0 %7364
      %7366 = vrot.lane.b32.xlu0 %v7300, 127
      %v7367 = vpop.permute.xlu0 %7366
      %7368 = vrot.lane.b32.xlu0 %v7301, 127
      %v7369 = vpop.permute.xlu0 %7368
      %7370 = vrot.lane.b32.xlu0 %v7302, 127
      %v7371 = vpop.permute.xlu0 %7370
      %7372 = vrot.lane.b32.xlu0 %v7303, 127
      %v7373 = vpop.permute.xlu0 %7372
      %7374 = vrot.lane.b32.xlu0 %v7304, 127
      %v7375 = vpop.permute.xlu0 %7374
      %7376 = vrot.lane.b32.xlu0 %v7305, 127
      %v7377 = vpop.permute.xlu0 %7376
      %7378 = vrot.lane.b32.xlu0 %v7306, 127
      %v7379 = vpop.permute.xlu0 %7378
      %7380 = vrot.lane.b32.xlu0 %v7307, 127
      %v7381 = vpop.permute.xlu0 %7380
      %7382 = vrot.lane.b32.xlu0 %v7308, 127
      %v7383 = vpop.permute.xlu0 %7382
      %7384 = vrot.lane.b32.xlu0 %v7309, 127
      %v7385 = vpop.permute.xlu0 %7384
      %7386 = vrot.lane.b32.xlu0 %v7310, 127
      %v7387 = vpop.permute.xlu0 %7386
      %7388 = vrot.lane.b32.xlu0 %v7311, 127
      %v7389 = vpop.permute.xlu0 %7388
      %7390 = vrot.lane.b32.xlu0 %v7312, 127
      %v7391 = vpop.permute.xlu0 %7390
      %7392 = vrot.lane.b32.xlu0 %v7313, 127
      %v7393 = vpop.permute.xlu0 %7392
      %7394 = vrot.lane.b32.xlu0 %v7314, 127
      %v7395 = vpop.permute.xlu0 %7394
      %7396 = vrot.lane.b32.xlu0 %v7315, 127
      %v7397 = vpop.permute.xlu0 %7396
      %7398 = vrot.lane.b32.xlu0 %v7316, 127
      %v7399 = vpop.permute.xlu0 %7398
      %7400 = vrot.lane.b32.xlu0 %v7317, 127
      %v7401 = vpop.permute.xlu0 %7400
      %7402 = vrot.lane.b32.xlu0 %v7318, 127
      %v7403 = vpop.permute.xlu0 %7402
      %7404 = vrot.lane.b32.xlu0 %v7319, 127
      %v7405 = vpop.permute.xlu0 %7404
      %7406 = vrot.lane.b32.xlu0 %v7320, 127
      %v7407 = vpop.permute.xlu0 %7406
      %7408 = vrot.lane.b32.xlu0 %v7321, 127
      %v7409 = vpop.permute.xlu0 %7408
      %7410 = vrot.lane.b32.xlu0 %v7322, 127
      %v7411 = vpop.permute.xlu0 %7410
      %7412 = vrot.lane.b32.xlu0 %v7323, 127
      %v7413 = vpop.permute.xlu0 %7412
      %7414 = vrot.lane.b32.xlu0 %v7324, 127
      %v7415 = vpop.permute.xlu0 %7414
      %7416 = vrot.lane.b32.xlu0 %v7325, 127
      %v7417 = vpop.permute.xlu0 %7416
      %7418 = vrot.lane.b32.xlu0 %v7326, 127
      %v7419 = vpop.permute.xlu0 %7418
      %7420 = vrot.lane.b32.xlu0 %v7327, 127
      %v7421 = vpop.permute.xlu0 %7420
      %7422 = vrot.lane.b32.xlu0 %v7328, 127
      %v7423 = vpop.permute.xlu0 %7422
      %7424 = vrot.lane.b32.xlu0 %v7329, 127
      %v7425 = vpop.permute.xlu0 %7424
      %v7458 = vadd.f32 %v7266, %v7363
      %v7459 = vadd.f32 %v7267, %v7365
      %v7460 = vadd.f32 %v7268, %v7367
      %v7461 = vadd.f32 %v7269, %v7369
      %v7462 = vadd.f32 %v7270, %v7371
      %v7463 = vadd.f32 %v7271, %v7373
      %v7464 = vadd.f32 %v7272, %v7375
      %v7465 = vadd.f32 %v7273, %v7377
      %v7466 = vadd.f32 %v7274, %v7379
      %v7467 = vadd.f32 %v7275, %v7381
      %v7468 = vadd.f32 %v7276, %v7383
      %v7469 = vadd.f32 %v7277, %v7385
      %v7470 = vadd.f32 %v7278, %v7387
      %v7471 = vadd.f32 %v7279, %v7389
      %v7472 = vadd.f32 %v7280, %v7391
      %v7473 = vadd.f32 %v7281, %v7393
      %v7474 = vadd.f32 %v7282, %v7395
      %v7475 = vadd.f32 %v7283, %v7397
      %v7476 = vadd.f32 %v7284, %v7399
      %v7477 = vadd.f32 %v7285, %v7401
      %v7478 = vadd.f32 %v7286, %v7403
      %v7479 = vadd.f32 %v7287, %v7405
      %v7480 = vadd.f32 %v7288, %v7407
      %v7481 = vadd.f32 %v7289, %v7409
      %v7482 = vadd.f32 %v7290, %v7411
      %v7483 = vadd.f32 %v7291, %v7413
      %v7484 = vadd.f32 %v7292, %v7415
      %v7485 = vadd.f32 %v7293, %v7417
      %v7486 = vadd.f32 %v7294, %v7419
      %v7487 = vadd.f32 %v7295, %v7421
      %v7488 = vadd.f32 %v7296, %v7423
      %v7489 = vadd.f32 %v7297, %v7425
      %v7490 = vmul.f32 %v931, %v185
      %v7491 = vmul.f32 %v931, %v186
      %v7492 = vmul.f32 %v935, %v185
      %v7493 = vmul.f32 %v935, %v186
      %v7494 = vmul.f32 %v939, %v185
      %v7495 = vmul.f32 %v939, %v186
      %v7496 = vmul.f32 %v943, %v185
      %v7497 = vmul.f32 %v943, %v186
      %v7498 = vmul.f32 %v947, %v185
      %v7499 = vmul.f32 %v947, %v186
      %v7500 = vmul.f32 %v951, %v185
      %v7501 = vmul.f32 %v951, %v186
      %v7502 = vmul.f32 %v955, %v185
      %v7503 = vmul.f32 %v955, %v186
      %v7504 = vmul.f32 %v959, %v185
      %v7505 = vmul.f32 %v959, %v186
      %v7506 = vmul.f32 %v963, %v185
      %v7507 = vmul.f32 %v963, %v186
      %v7508 = vmul.f32 %v967, %v185
      %v7509 = vmul.f32 %v967, %v186
      %v7510 = vmul.f32 %v971, %v185
      %v7511 = vmul.f32 %v971, %v186
      %v7512 = vmul.f32 %v975, %v185
      %v7513 = vmul.f32 %v975, %v186
      %v7514 = vmul.f32 %v979, %v185
      %v7515 = vmul.f32 %v979, %v186
      %v7516 = vmul.f32 %v983, %v185
      %v7517 = vmul.f32 %v983, %v186
      %v7518 = vmul.f32 %v987, %v185
      %v7519 = vmul.f32 %v987, %v186
      %v7520 = vmul.f32 %v991, %v185
      %v7521 = vmul.f32 %v991, %v186
      %v7522 = vmul.f32 %v995, %v185
      %v7523 = vmul.f32 %v995, %v186
      %v7524 = vmul.f32 %v999, %v185
      %v7525 = vmul.f32 %v999, %v186
      %v7526 = vmul.f32 %v1003, %v185
      %v7527 = vmul.f32 %v1003, %v186
      %v7528 = vmul.f32 %v1007, %v185
      %v7529 = vmul.f32 %v1007, %v186
      %v7530 = vmul.f32 %v1011, %v185
      %v7531 = vmul.f32 %v1011, %v186
      %v7532 = vmul.f32 %v1015, %v185
      %v7533 = vmul.f32 %v1015, %v186
      %v7534 = vmul.f32 %v1019, %v185
      %v7535 = vmul.f32 %v1019, %v186
      %v7536 = vmul.f32 %v1023, %v185
      %v7537 = vmul.f32 %v1023, %v186
      %v7538 = vmul.f32 %v1027, %v185
      %v7539 = vmul.f32 %v1027, %v186
      %v7540 = vmul.f32 %v1031, %v185
      %v7541 = vmul.f32 %v1031, %v186
      %v7542 = vmul.f32 %v1035, %v185
      %v7543 = vmul.f32 %v1035, %v186
      %v7544 = vmul.f32 %v1039, %v185
      %v7545 = vmul.f32 %v1039, %v186
      %v7546 = vmul.f32 %v1043, %v185
      %v7547 = vmul.f32 %v1043, %v186
      %v7548 = vmul.f32 %v1047, %v185
      %v7549 = vmul.f32 %v1047, %v186
      %v7550 = vmul.f32 %v1051, %v185
      %v7551 = vmul.f32 %v1051, %v186
      %v7552 = vmul.f32 %v1055, %v185
      %v7553 = vmul.f32 %v1055, %v186
      %v7618 = vrot.slane %v7490, 1
      %v7619 = vrot.slane %v7491, 1
      %v7620 = vsel %vm1889, %v7618, %v7619
      %v7621 = vrot.slane %v7492, 1
      %v7622 = vrot.slane %v7493, 1
      %v7623 = vsel %vm1889, %v7621, %v7622
      %v7624 = vrot.slane %v7494, 1
      %v7625 = vrot.slane %v7495, 1
      %v7626 = vsel %vm1889, %v7624, %v7625
      %v7627 = vrot.slane %v7496, 1
      %v7628 = vrot.slane %v7497, 1
      %v7629 = vsel %vm1889, %v7627, %v7628
      %v7630 = vrot.slane %v7498, 1
      %v7631 = vrot.slane %v7499, 1
      %v7632 = vsel %vm1889, %v7630, %v7631
      %v7633 = vrot.slane %v7500, 1
      %v7634 = vrot.slane %v7501, 1
      %v7635 = vsel %vm1889, %v7633, %v7634
      %v7636 = vrot.slane %v7502, 1
      %v7637 = vrot.slane %v7503, 1
      %v7638 = vsel %vm1889, %v7636, %v7637
      %v7639 = vrot.slane %v7504, 1
      %v7640 = vrot.slane %v7505, 1
      %v7641 = vsel %vm1889, %v7639, %v7640
      %v7642 = vrot.slane %v7506, 1
      %v7643 = vrot.slane %v7507, 1
      %v7644 = vsel %vm1889, %v7642, %v7643
      %v7645 = vrot.slane %v7508, 1
      %v7646 = vrot.slane %v7509, 1
      %v7647 = vsel %vm1889, %v7645, %v7646
      %v7648 = vrot.slane %v7510, 1
      %v7649 = vrot.slane %v7511, 1
      %v7650 = vsel %vm1889, %v7648, %v7649
      %v7651 = vrot.slane %v7512, 1
      %v7652 = vrot.slane %v7513, 1
      %v7653 = vsel %vm1889, %v7651, %v7652
      %v7654 = vrot.slane %v7514, 1
      %v7655 = vrot.slane %v7515, 1
      %v7656 = vsel %vm1889, %v7654, %v7655
      %v7657 = vrot.slane %v7516, 1
      %v7658 = vrot.slane %v7517, 1
      %v7659 = vsel %vm1889, %v7657, %v7658
      %v7660 = vrot.slane %v7518, 1
      %v7661 = vrot.slane %v7519, 1
      %v7662 = vsel %vm1889, %v7660, %v7661
      %v7663 = vrot.slane %v7520, 1
      %v7664 = vrot.slane %v7521, 1
      %v7665 = vsel %vm1889, %v7663, %v7664
      %v7666 = vrot.slane %v7522, 1
      %v7667 = vrot.slane %v7523, 1
      %v7668 = vsel %vm1889, %v7666, %v7667
      %v7669 = vrot.slane %v7524, 1
      %v7670 = vrot.slane %v7525, 1
      %v7671 = vsel %vm1889, %v7669, %v7670
      %v7672 = vrot.slane %v7526, 1
      %v7673 = vrot.slane %v7527, 1
      %v7674 = vsel %vm1889, %v7672, %v7673
      %v7675 = vrot.slane %v7528, 1
      %v7676 = vrot.slane %v7529, 1
      %v7677 = vsel %vm1889, %v7675, %v7676
      %v7678 = vrot.slane %v7530, 1
      %v7679 = vrot.slane %v7531, 1
      %v7680 = vsel %vm1889, %v7678, %v7679
      %v7681 = vrot.slane %v7532, 1
      %v7682 = vrot.slane %v7533, 1
      %v7683 = vsel %vm1889, %v7681, %v7682
      %v7684 = vrot.slane %v7534, 1
      %v7685 = vrot.slane %v7535, 1
      %v7686 = vsel %vm1889, %v7684, %v7685
      %v7687 = vrot.slane %v7536, 1
      %v7688 = vrot.slane %v7537, 1
      %v7689 = vsel %vm1889, %v7687, %v7688
      %v7690 = vrot.slane %v7538, 1
      %v7691 = vrot.slane %v7539, 1
      %v7692 = vsel %vm1889, %v7690, %v7691
      %v7693 = vrot.slane %v7540, 1
      %v7694 = vrot.slane %v7541, 1
      %v7695 = vsel %vm1889, %v7693, %v7694
      %v7696 = vrot.slane %v7542, 1
      %v7697 = vrot.slane %v7543, 1
      %v7698 = vsel %vm1889, %v7696, %v7697
      %v7699 = vrot.slane %v7544, 1
      %v7700 = vrot.slane %v7545, 1
      %v7701 = vsel %vm1889, %v7699, %v7700
      %v7702 = vrot.slane %v7546, 1
      %v7703 = vrot.slane %v7547, 1
      %v7704 = vsel %vm1889, %v7702, %v7703
      %v7705 = vrot.slane %v7548, 1
      %v7706 = vrot.slane %v7549, 1
      %v7707 = vsel %vm1889, %v7705, %v7706
      %v7708 = vrot.slane %v7550, 1
      %v7709 = vrot.slane %v7551, 1
      %v7710 = vsel %vm1889, %v7708, %v7709
      %v7711 = vrot.slane %v7552, 1
      %v7712 = vrot.slane %v7553, 1
      %v7713 = vsel %vm1889, %v7711, %v7712
      %v7746 = vadd.f32 %v7458, %v7620
      %v7747 = vadd.f32 %v7459, %v7623
      %v7748 = vadd.f32 %v7460, %v7626
      %v7749 = vadd.f32 %v7461, %v7629
      %v7750 = vadd.f32 %v7462, %v7632
      %v7751 = vadd.f32 %v7463, %v7635
      %v7752 = vadd.f32 %v7464, %v7638
      %v7753 = vadd.f32 %v7465, %v7641
      %v7754 = vadd.f32 %v7466, %v7644
      %v7755 = vadd.f32 %v7467, %v7647
      %v7756 = vadd.f32 %v7468, %v7650
      %v7757 = vadd.f32 %v7469, %v7653
      %v7758 = vadd.f32 %v7470, %v7656
      %v7759 = vadd.f32 %v7471, %v7659
      %v7760 = vadd.f32 %v7472, %v7662
      %v7761 = vadd.f32 %v7473, %v7665
      %v7762 = vadd.f32 %v7474, %v7668
      %v7763 = vadd.f32 %v7475, %v7671
      %v7764 = vadd.f32 %v7476, %v7674
      %v7765 = vadd.f32 %v7477, %v7677
      %v7766 = vadd.f32 %v7478, %v7680
      %v7767 = vadd.f32 %v7479, %v7683
      %v7768 = vadd.f32 %v7480, %v7686
      %v7769 = vadd.f32 %v7481, %v7689
      %v7770 = vadd.f32 %v7482, %v7692
      %v7771 = vadd.f32 %v7483, %v7695
      %v7772 = vadd.f32 %v7484, %v7698
      %v7773 = vadd.f32 %v7485, %v7701
      %v7774 = vadd.f32 %v7486, %v7704
      %v7775 = vadd.f32 %v7487, %v7707
      %v7776 = vadd.f32 %v7488, %v7710
      %v7777 = vadd.f32 %v7489, %v7713
      %v7778 = vmul.f32 %v1123, %v182
      %v7779 = vmul.f32 %v1123, %v183
      %v7780 = vmul.f32 %v1127, %v182
      %v7781 = vmul.f32 %v1127, %v183
      %v7782 = vmul.f32 %v1131, %v182
      %v7783 = vmul.f32 %v1131, %v183
      %v7784 = vmul.f32 %v1135, %v182
      %v7785 = vmul.f32 %v1135, %v183
      %v7786 = vmul.f32 %v1139, %v182
      %v7787 = vmul.f32 %v1139, %v183
      %v7788 = vmul.f32 %v1143, %v182
      %v7789 = vmul.f32 %v1143, %v183
      %v7790 = vmul.f32 %v1147, %v182
      %v7791 = vmul.f32 %v1147, %v183
      %v7792 = vmul.f32 %v1151, %v182
      %v7793 = vmul.f32 %v1151, %v183
      %v7794 = vmul.f32 %v1155, %v182
      %v7795 = vmul.f32 %v1155, %v183
      %v7796 = vmul.f32 %v1159, %v182
      %v7797 = vmul.f32 %v1159, %v183
      %v7798 = vmul.f32 %v1163, %v182
      %v7799 = vmul.f32 %v1163, %v183
      %v7800 = vmul.f32 %v1167, %v182
      %v7801 = vmul.f32 %v1167, %v183
      %v7802 = vmul.f32 %v1171, %v182
      %v7803 = vmul.f32 %v1171, %v183
      %v7804 = vmul.f32 %v1175, %v182
      %v7805 = vmul.f32 %v1175, %v183
      %v7806 = vmul.f32 %v1179, %v182
      %v7807 = vmul.f32 %v1179, %v183
      %v7808 = vmul.f32 %v1183, %v182
      %v7809 = vmul.f32 %v1183, %v183
      %v7810 = vmul.f32 %v1187, %v182
      %v7811 = vmul.f32 %v1187, %v183
      %v7812 = vmul.f32 %v1191, %v182
      %v7813 = vmul.f32 %v1191, %v183
      %v7814 = vmul.f32 %v1195, %v182
      %v7815 = vmul.f32 %v1195, %v183
      %v7816 = vmul.f32 %v1199, %v182
      %v7817 = vmul.f32 %v1199, %v183
      %v7818 = vmul.f32 %v1203, %v182
      %v7819 = vmul.f32 %v1203, %v183
      %v7820 = vmul.f32 %v1207, %v182
      %v7821 = vmul.f32 %v1207, %v183
      %v7822 = vmul.f32 %v1211, %v182
      %v7823 = vmul.f32 %v1211, %v183
      %v7824 = vmul.f32 %v1215, %v182
      %v7825 = vmul.f32 %v1215, %v183
      %v7826 = vmul.f32 %v1219, %v182
      %v7827 = vmul.f32 %v1219, %v183
      %v7828 = vmul.f32 %v1223, %v182
      %v7829 = vmul.f32 %v1223, %v183
      %v7830 = vmul.f32 %v1227, %v182
      %v7831 = vmul.f32 %v1227, %v183
      %v7832 = vmul.f32 %v1231, %v182
      %v7833 = vmul.f32 %v1231, %v183
      %v7834 = vmul.f32 %v1235, %v182
      %v7835 = vmul.f32 %v1235, %v183
      %v7836 = vmul.f32 %v1239, %v182
      %v7837 = vmul.f32 %v1239, %v183
      %v7838 = vmul.f32 %v1243, %v182
      %v7839 = vmul.f32 %v1243, %v183
      %v7840 = vmul.f32 %v1247, %v182
      %v7841 = vmul.f32 %v1247, %v183
      %v7906 = vrot.slane %v7778, 1
      %v7907 = vrot.slane %v7779, 1
      %v7908 = vsel %vm1889, %v7906, %v7907
      %v7909 = vrot.slane %v7780, 1
      %v7910 = vrot.slane %v7781, 1
      %v7911 = vsel %vm1889, %v7909, %v7910
      %v7912 = vrot.slane %v7782, 1
      %v7913 = vrot.slane %v7783, 1
      %v7914 = vsel %vm1889, %v7912, %v7913
      %v7915 = vrot.slane %v7784, 1
      %v7916 = vrot.slane %v7785, 1
      %v7917 = vsel %vm1889, %v7915, %v7916
      %v7918 = vrot.slane %v7786, 1
      %v7919 = vrot.slane %v7787, 1
      %v7920 = vsel %vm1889, %v7918, %v7919
      %v7921 = vrot.slane %v7788, 1
      %v7922 = vrot.slane %v7789, 1
      %v7923 = vsel %vm1889, %v7921, %v7922
      %v7924 = vrot.slane %v7790, 1
      %v7925 = vrot.slane %v7791, 1
      %v7926 = vsel %vm1889, %v7924, %v7925
      %v7927 = vrot.slane %v7792, 1
      %v7928 = vrot.slane %v7793, 1
      %v7929 = vsel %vm1889, %v7927, %v7928
      %v7930 = vrot.slane %v7794, 1
      %v7931 = vrot.slane %v7795, 1
      %v7932 = vsel %vm1889, %v7930, %v7931
      %v7933 = vrot.slane %v7796, 1
      %v7934 = vrot.slane %v7797, 1
      %v7935 = vsel %vm1889, %v7933, %v7934
      %v7936 = vrot.slane %v7798, 1
      %v7937 = vrot.slane %v7799, 1
      %v7938 = vsel %vm1889, %v7936, %v7937
      %v7939 = vrot.slane %v7800, 1
      %v7940 = vrot.slane %v7801, 1
      %v7941 = vsel %vm1889, %v7939, %v7940
      %v7942 = vrot.slane %v7802, 1
      %v7943 = vrot.slane %v7803, 1
      %v7944 = vsel %vm1889, %v7942, %v7943
      %v7945 = vrot.slane %v7804, 1
      %v7946 = vrot.slane %v7805, 1
      %v7947 = vsel %vm1889, %v7945, %v7946
      %v7948 = vrot.slane %v7806, 1
      %v7949 = vrot.slane %v7807, 1
      %v7950 = vsel %vm1889, %v7948, %v7949
      %v7951 = vrot.slane %v7808, 1
      %v7952 = vrot.slane %v7809, 1
      %v7953 = vsel %vm1889, %v7951, %v7952
      %v7954 = vrot.slane %v7810, 1
      %v7955 = vrot.slane %v7811, 1
      %v7956 = vsel %vm1889, %v7954, %v7955
      %v7957 = vrot.slane %v7812, 1
      %v7958 = vrot.slane %v7813, 1
      %v7959 = vsel %vm1889, %v7957, %v7958
      %v7960 = vrot.slane %v7814, 1
      %v7961 = vrot.slane %v7815, 1
      %v7962 = vsel %vm1889, %v7960, %v7961
      %v7963 = vrot.slane %v7816, 1
      %v7964 = vrot.slane %v7817, 1
      %v7965 = vsel %vm1889, %v7963, %v7964
      %v7966 = vrot.slane %v7818, 1
      %v7967 = vrot.slane %v7819, 1
      %v7968 = vsel %vm1889, %v7966, %v7967
      %v7969 = vrot.slane %v7820, 1
      %v7970 = vrot.slane %v7821, 1
      %v7971 = vsel %vm1889, %v7969, %v7970
      %v7972 = vrot.slane %v7822, 1
      %v7973 = vrot.slane %v7823, 1
      %v7974 = vsel %vm1889, %v7972, %v7973
      %v7975 = vrot.slane %v7824, 1
      %v7976 = vrot.slane %v7825, 1
      %v7977 = vsel %vm1889, %v7975, %v7976
      %v7978 = vrot.slane %v7826, 1
      %v7979 = vrot.slane %v7827, 1
      %v7980 = vsel %vm1889, %v7978, %v7979
      %v7981 = vrot.slane %v7828, 1
      %v7982 = vrot.slane %v7829, 1
      %v7983 = vsel %vm1889, %v7981, %v7982
      %v7984 = vrot.slane %v7830, 1
      %v7985 = vrot.slane %v7831, 1
      %v7986 = vsel %vm1889, %v7984, %v7985
      %v7987 = vrot.slane %v7832, 1
      %v7988 = vrot.slane %v7833, 1
      %v7989 = vsel %vm1889, %v7987, %v7988
      %v7990 = vrot.slane %v7834, 1
      %v7991 = vrot.slane %v7835, 1
      %v7992 = vsel %vm1889, %v7990, %v7991
      %v7993 = vrot.slane %v7836, 1
      %v7994 = vrot.slane %v7837, 1
      %v7995 = vsel %vm1889, %v7993, %v7994
      %v7996 = vrot.slane %v7838, 1
      %v7997 = vrot.slane %v7839, 1
      %v7998 = vsel %vm1889, %v7996, %v7997
      %v7999 = vrot.slane %v7840, 1
      %v8000 = vrot.slane %v7841, 1
      %v8001 = vsel %vm1889, %v7999, %v8000
      %8002 = vrot.lane.b32.xlu0 %v7908, 127
      %v8003 = vpop.permute.xlu0 %8002
      %8004 = vrot.lane.b32.xlu0 %v7911, 127
      %v8005 = vpop.permute.xlu0 %8004
      %8006 = vrot.lane.b32.xlu0 %v7914, 127
      %v8007 = vpop.permute.xlu0 %8006
      %8008 = vrot.lane.b32.xlu0 %v7917, 127
      %v8009 = vpop.permute.xlu0 %8008
      %8010 = vrot.lane.b32.xlu0 %v7920, 127
      %v8011 = vpop.permute.xlu0 %8010
      %8012 = vrot.lane.b32.xlu0 %v7923, 127
      %v8013 = vpop.permute.xlu0 %8012
      %8014 = vrot.lane.b32.xlu0 %v7926, 127
      %v8015 = vpop.permute.xlu0 %8014
      %8016 = vrot.lane.b32.xlu0 %v7929, 127
      %v8017 = vpop.permute.xlu0 %8016
      %8018 = vrot.lane.b32.xlu0 %v7932, 127
      %v8019 = vpop.permute.xlu0 %8018
      %8020 = vrot.lane.b32.xlu0 %v7935, 127
      %v8021 = vpop.permute.xlu0 %8020
      %8022 = vrot.lane.b32.xlu0 %v7938, 127
      %v8023 = vpop.permute.xlu0 %8022
      %8024 = vrot.lane.b32.xlu0 %v7941, 127
      %v8025 = vpop.permute.xlu0 %8024
      %8026 = vrot.lane.b32.xlu0 %v7944, 127
      %v8027 = vpop.permute.xlu0 %8026
      %8028 = vrot.lane.b32.xlu0 %v7947, 127
      %v8029 = vpop.permute.xlu0 %8028
      %8030 = vrot.lane.b32.xlu0 %v7950, 127
      %v8031 = vpop.permute.xlu0 %8030
      %8032 = vrot.lane.b32.xlu0 %v7953, 127
      %v8033 = vpop.permute.xlu0 %8032
      %8034 = vrot.lane.b32.xlu0 %v7956, 127
      %v8035 = vpop.permute.xlu0 %8034
      %8036 = vrot.lane.b32.xlu0 %v7959, 127
      %v8037 = vpop.permute.xlu0 %8036
      %8038 = vrot.lane.b32.xlu0 %v7962, 127
      %v8039 = vpop.permute.xlu0 %8038
      %8040 = vrot.lane.b32.xlu0 %v7965, 127
      %v8041 = vpop.permute.xlu0 %8040
      %8042 = vrot.lane.b32.xlu0 %v7968, 127
      %v8043 = vpop.permute.xlu0 %8042
      %8044 = vrot.lane.b32.xlu0 %v7971, 127
      %v8045 = vpop.permute.xlu0 %8044
      %8046 = vrot.lane.b32.xlu0 %v7974, 127
      %v8047 = vpop.permute.xlu0 %8046
      %8048 = vrot.lane.b32.xlu0 %v7977, 127
      %v8049 = vpop.permute.xlu0 %8048
      %8050 = vrot.lane.b32.xlu0 %v7980, 127
      %v8051 = vpop.permute.xlu0 %8050
      %8052 = vrot.lane.b32.xlu0 %v7983, 127
      %v8053 = vpop.permute.xlu0 %8052
      %8054 = vrot.lane.b32.xlu0 %v7986, 127
      %v8055 = vpop.permute.xlu0 %8054
      %8056 = vrot.lane.b32.xlu0 %v7989, 127
      %v8057 = vpop.permute.xlu0 %8056
      %8058 = vrot.lane.b32.xlu0 %v7992, 127
      %v8059 = vpop.permute.xlu0 %8058
      %8060 = vrot.lane.b32.xlu0 %v7995, 127
      %v8061 = vpop.permute.xlu0 %8060
      %8062 = vrot.lane.b32.xlu0 %v7998, 127
      %v8063 = vpop.permute.xlu0 %8062
      %8064 = vrot.lane.b32.xlu0 %v8001, 127
      %v8065 = vpop.permute.xlu0 %8064
      %v8098 = vadd.f32 %v7746, %v8003
      %v8099 = vadd.f32 %v7747, %v8005
      %v8100 = vadd.f32 %v7748, %v8007
      %v8101 = vadd.f32 %v7749, %v8009
      %v8102 = vadd.f32 %v7750, %v8011
      %v8103 = vadd.f32 %v7751, %v8013
      %v8104 = vadd.f32 %v7752, %v8015
      %v8105 = vadd.f32 %v7753, %v8017
      %v8106 = vadd.f32 %v7754, %v8019
      %v8107 = vadd.f32 %v7755, %v8021
      %v8108 = vadd.f32 %v7756, %v8023
      %v8109 = vadd.f32 %v7757, %v8025
      %v8110 = vadd.f32 %v7758, %v8027
      %v8111 = vadd.f32 %v7759, %v8029
      %v8112 = vadd.f32 %v7760, %v8031
      %v8113 = vadd.f32 %v7761, %v8033
      %v8114 = vadd.f32 %v7762, %v8035
      %v8115 = vadd.f32 %v7763, %v8037
      %v8116 = vadd.f32 %v7764, %v8039
      %v8117 = vadd.f32 %v7765, %v8041
      %v8118 = vadd.f32 %v7766, %v8043
      %v8119 = vadd.f32 %v7767, %v8045
      %v8120 = vadd.f32 %v7768, %v8047
      %v8121 = vadd.f32 %v7769, %v8049
      %v8122 = vadd.f32 %v7770, %v8051
      %v8123 = vadd.f32 %v7771, %v8053
      %v8124 = vadd.f32 %v7772, %v8055
      %v8125 = vadd.f32 %v7773, %v8057
      %v8126 = vadd.f32 %v7774, %v8059
      %v8127 = vadd.f32 %v7775, %v8061
      %v8128 = vadd.f32 %v7776, %v8063
      %v8129 = vadd.f32 %v7777, %v8065
      %v8130 = vmul.f32 %v1315, %v185
      %v8131 = vmul.f32 %v1315, %v186
      %v8132 = vmul.f32 %v1319, %v185
      %v8133 = vmul.f32 %v1319, %v186
      %v8134 = vmul.f32 %v1323, %v185
      %v8135 = vmul.f32 %v1323, %v186
      %v8136 = vmul.f32 %v1327, %v185
      %v8137 = vmul.f32 %v1327, %v186
      %v8138 = vmul.f32 %v1331, %v185
      %v8139 = vmul.f32 %v1331, %v186
      %v8140 = vmul.f32 %v1335, %v185
      %v8141 = vmul.f32 %v1335, %v186
      %v8142 = vmul.f32 %v1339, %v185
      %v8143 = vmul.f32 %v1339, %v186
      %v8144 = vmul.f32 %v1343, %v185
      %v8145 = vmul.f32 %v1343, %v186
      %v8146 = vmul.f32 %v1347, %v185
      %v8147 = vmul.f32 %v1347, %v186
      %v8148 = vmul.f32 %v1351, %v185
      %v8149 = vmul.f32 %v1351, %v186
      %v8150 = vmul.f32 %v1355, %v185
      %v8151 = vmul.f32 %v1355, %v186
      %v8152 = vmul.f32 %v1359, %v185
      %v8153 = vmul.f32 %v1359, %v186
      %v8154 = vmul.f32 %v1363, %v185
      %v8155 = vmul.f32 %v1363, %v186
      %v8156 = vmul.f32 %v1367, %v185
      %v8157 = vmul.f32 %v1367, %v186
      %v8158 = vmul.f32 %v1371, %v185
      %v8159 = vmul.f32 %v1371, %v186
      %v8160 = vmul.f32 %v1375, %v185
      %v8161 = vmul.f32 %v1375, %v186
      %v8162 = vmul.f32 %v1379, %v185
      %v8163 = vmul.f32 %v1379, %v186
      %v8164 = vmul.f32 %v1383, %v185
      %v8165 = vmul.f32 %v1383, %v186
      %v8166 = vmul.f32 %v1387, %v185
      %v8167 = vmul.f32 %v1387, %v186
      %v8168 = vmul.f32 %v1391, %v185
      %v8169 = vmul.f32 %v1391, %v186
      %v8170 = vmul.f32 %v1395, %v185
      %v8171 = vmul.f32 %v1395, %v186
      %v8172 = vmul.f32 %v1399, %v185
      %v8173 = vmul.f32 %v1399, %v186
      %v8174 = vmul.f32 %v1403, %v185
      %v8175 = vmul.f32 %v1403, %v186
      %v8176 = vmul.f32 %v1407, %v185
      %v8177 = vmul.f32 %v1407, %v186
      %v8178 = vmul.f32 %v1411, %v185
      %v8179 = vmul.f32 %v1411, %v186
      %v8180 = vmul.f32 %v1415, %v185
      %v8181 = vmul.f32 %v1415, %v186
      %v8182 = vmul.f32 %v1419, %v185
      %v8183 = vmul.f32 %v1419, %v186
      %v8184 = vmul.f32 %v1423, %v185
      %v8185 = vmul.f32 %v1423, %v186
      %v8186 = vmul.f32 %v1427, %v185
      %v8187 = vmul.f32 %v1427, %v186
      %v8188 = vmul.f32 %v1431, %v185
      %v8189 = vmul.f32 %v1431, %v186
      %v8190 = vmul.f32 %v1435, %v185
      %v8191 = vmul.f32 %v1435, %v186
      %v8192 = vmul.f32 %v1439, %v185
      %v8193 = vmul.f32 %v1439, %v186
      %v8258 = vrot.slane %v8130, 1
      %v8259 = vrot.slane %v8131, 1
      %v8260 = vsel %vm1889, %v8258, %v8259
      %v8261 = vrot.slane %v8132, 1
      %v8262 = vrot.slane %v8133, 1
      %v8263 = vsel %vm1889, %v8261, %v8262
      %v8264 = vrot.slane %v8134, 1
      %v8265 = vrot.slane %v8135, 1
      %v8266 = vsel %vm1889, %v8264, %v8265
      %v8267 = vrot.slane %v8136, 1
      %v8268 = vrot.slane %v8137, 1
      %v8269 = vsel %vm1889, %v8267, %v8268
      %v8270 = vrot.slane %v8138, 1
      %v8271 = vrot.slane %v8139, 1
      %v8272 = vsel %vm1889, %v8270, %v8271
      %v8273 = vrot.slane %v8140, 1
      %v8274 = vrot.slane %v8141, 1
      %v8275 = vsel %vm1889, %v8273, %v8274
      %v8276 = vrot.slane %v8142, 1
      %v8277 = vrot.slane %v8143, 1
      %v8278 = vsel %vm1889, %v8276, %v8277
      %v8279 = vrot.slane %v8144, 1
      %v8280 = vrot.slane %v8145, 1
      %v8281 = vsel %vm1889, %v8279, %v8280
      %v8282 = vrot.slane %v8146, 1
      %v8283 = vrot.slane %v8147, 1
      %v8284 = vsel %vm1889, %v8282, %v8283
      %v8285 = vrot.slane %v8148, 1
      %v8286 = vrot.slane %v8149, 1
      %v8287 = vsel %vm1889, %v8285, %v8286
      %v8288 = vrot.slane %v8150, 1
      %v8289 = vrot.slane %v8151, 1
      %v8290 = vsel %vm1889, %v8288, %v8289
      %v8291 = vrot.slane %v8152, 1
      %v8292 = vrot.slane %v8153, 1
      %v8293 = vsel %vm1889, %v8291, %v8292
      %v8294 = vrot.slane %v8154, 1
      %v8295 = vrot.slane %v8155, 1
      %v8296 = vsel %vm1889, %v8294, %v8295
      %v8297 = vrot.slane %v8156, 1
      %v8298 = vrot.slane %v8157, 1
      %v8299 = vsel %vm1889, %v8297, %v8298
      %v8300 = vrot.slane %v8158, 1
      %v8301 = vrot.slane %v8159, 1
      %v8302 = vsel %vm1889, %v8300, %v8301
      %v8303 = vrot.slane %v8160, 1
      %v8304 = vrot.slane %v8161, 1
      %v8305 = vsel %vm1889, %v8303, %v8304
      %v8306 = vrot.slane %v8162, 1
      %v8307 = vrot.slane %v8163, 1
      %v8308 = vsel %vm1889, %v8306, %v8307
      %v8309 = vrot.slane %v8164, 1
      %v8310 = vrot.slane %v8165, 1
      %v8311 = vsel %vm1889, %v8309, %v8310
      %v8312 = vrot.slane %v8166, 1
      %v8313 = vrot.slane %v8167, 1
      %v8314 = vsel %vm1889, %v8312, %v8313
      %v8315 = vrot.slane %v8168, 1
      %v8316 = vrot.slane %v8169, 1
      %v8317 = vsel %vm1889, %v8315, %v8316
      %v8318 = vrot.slane %v8170, 1
      %v8319 = vrot.slane %v8171, 1
      %v8320 = vsel %vm1889, %v8318, %v8319
      %v8321 = vrot.slane %v8172, 1
      %v8322 = vrot.slane %v8173, 1
      %v8323 = vsel %vm1889, %v8321, %v8322
      %v8324 = vrot.slane %v8174, 1
      %v8325 = vrot.slane %v8175, 1
      %v8326 = vsel %vm1889, %v8324, %v8325
      %v8327 = vrot.slane %v8176, 1
      %v8328 = vrot.slane %v8177, 1
      %v8329 = vsel %vm1889, %v8327, %v8328
      %v8330 = vrot.slane %v8178, 1
      %v8331 = vrot.slane %v8179, 1
      %v8332 = vsel %vm1889, %v8330, %v8331
      %v8333 = vrot.slane %v8180, 1
      %v8334 = vrot.slane %v8181, 1
      %v8335 = vsel %vm1889, %v8333, %v8334
      %v8336 = vrot.slane %v8182, 1
      %v8337 = vrot.slane %v8183, 1
      %v8338 = vsel %vm1889, %v8336, %v8337
      %v8339 = vrot.slane %v8184, 1
      %v8340 = vrot.slane %v8185, 1
      %v8341 = vsel %vm1889, %v8339, %v8340
      %v8342 = vrot.slane %v8186, 1
      %v8343 = vrot.slane %v8187, 1
      %v8344 = vsel %vm1889, %v8342, %v8343
      %v8345 = vrot.slane %v8188, 1
      %v8346 = vrot.slane %v8189, 1
      %v8347 = vsel %vm1889, %v8345, %v8346
      %v8348 = vrot.slane %v8190, 1
      %v8349 = vrot.slane %v8191, 1
      %v8350 = vsel %vm1889, %v8348, %v8349
      %v8351 = vrot.slane %v8192, 1
      %v8352 = vrot.slane %v8193, 1
      %v8353 = vsel %vm1889, %v8351, %v8352
      %8354 = vrot.lane.b32.xlu0 %v8260, 127
      %v8355 = vpop.permute.xlu0 %8354
      %8356 = vrot.lane.b32.xlu0 %v8263, 127
      %v8357 = vpop.permute.xlu0 %8356
      %8358 = vrot.lane.b32.xlu0 %v8266, 127
      %v8359 = vpop.permute.xlu0 %8358
      %8360 = vrot.lane.b32.xlu0 %v8269, 127
      %v8361 = vpop.permute.xlu0 %8360
      %8362 = vrot.lane.b32.xlu0 %v8272, 127
      %v8363 = vpop.permute.xlu0 %8362
      %8364 = vrot.lane.b32.xlu0 %v8275, 127
      %v8365 = vpop.permute.xlu0 %8364
      %8366 = vrot.lane.b32.xlu0 %v8278, 127
      %v8367 = vpop.permute.xlu0 %8366
      %8368 = vrot.lane.b32.xlu0 %v8281, 127
      %v8369 = vpop.permute.xlu0 %8368
      %8370 = vrot.lane.b32.xlu0 %v8284, 127
      %v8371 = vpop.permute.xlu0 %8370
      %8372 = vrot.lane.b32.xlu0 %v8287, 127
      %v8373 = vpop.permute.xlu0 %8372
      %8374 = vrot.lane.b32.xlu0 %v8290, 127
      %v8375 = vpop.permute.xlu0 %8374
      %8376 = vrot.lane.b32.xlu0 %v8293, 127
      %v8377 = vpop.permute.xlu0 %8376
      %8378 = vrot.lane.b32.xlu0 %v8296, 127
      %v8379 = vpop.permute.xlu0 %8378
      %8380 = vrot.lane.b32.xlu0 %v8299, 127
      %v8381 = vpop.permute.xlu0 %8380
      %8382 = vrot.lane.b32.xlu0 %v8302, 127
      %v8383 = vpop.permute.xlu0 %8382
      %8384 = vrot.lane.b32.xlu0 %v8305, 127
      %v8385 = vpop.permute.xlu0 %8384
      %8386 = vrot.lane.b32.xlu0 %v8308, 127
      %v8387 = vpop.permute.xlu0 %8386
      %8388 = vrot.lane.b32.xlu0 %v8311, 127
      %v8389 = vpop.permute.xlu0 %8388
      %8390 = vrot.lane.b32.xlu0 %v8314, 127
      %v8391 = vpop.permute.xlu0 %8390
      %8392 = vrot.lane.b32.xlu0 %v8317, 127
      %v8393 = vpop.permute.xlu0 %8392
      %8394 = vrot.lane.b32.xlu0 %v8320, 127
      %v8395 = vpop.permute.xlu0 %8394
      %8396 = vrot.lane.b32.xlu0 %v8323, 127
      %v8397 = vpop.permute.xlu0 %8396
      %8398 = vrot.lane.b32.xlu0 %v8326, 127
      %v8399 = vpop.permute.xlu0 %8398
      %8400 = vrot.lane.b32.xlu0 %v8329, 127
      %v8401 = vpop.permute.xlu0 %8400
      %8402 = vrot.lane.b32.xlu0 %v8332, 127
      %v8403 = vpop.permute.xlu0 %8402
      %8404 = vrot.lane.b32.xlu0 %v8335, 127
      %v8405 = vpop.permute.xlu0 %8404
      %8406 = vrot.lane.b32.xlu0 %v8338, 127
      %v8407 = vpop.permute.xlu0 %8406
      %8408 = vrot.lane.b32.xlu0 %v8341, 127
      %v8409 = vpop.permute.xlu0 %8408
      %8410 = vrot.lane.b32.xlu0 %v8344, 127
      %v8411 = vpop.permute.xlu0 %8410
      %8412 = vrot.lane.b32.xlu0 %v8347, 127
      %v8413 = vpop.permute.xlu0 %8412
      %8414 = vrot.lane.b32.xlu0 %v8350, 127
      %v8415 = vpop.permute.xlu0 %8414
      %8416 = vrot.lane.b32.xlu0 %v8353, 127
      %v8417 = vpop.permute.xlu0 %8416
      %v8450 = vadd.f32 %v8098, %v8355
      %v8451 = vadd.f32 %v8099, %v8357
      %v8452 = vadd.f32 %v8100, %v8359
      %v8453 = vadd.f32 %v8101, %v8361
      %v8454 = vadd.f32 %v8102, %v8363
      %v8455 = vadd.f32 %v8103, %v8365
      %v8456 = vadd.f32 %v8104, %v8367
      %v8457 = vadd.f32 %v8105, %v8369
      %v8458 = vadd.f32 %v8106, %v8371
      %v8459 = vadd.f32 %v8107, %v8373
      %v8460 = vadd.f32 %v8108, %v8375
      %v8461 = vadd.f32 %v8109, %v8377
      %v8462 = vadd.f32 %v8110, %v8379
      %v8463 = vadd.f32 %v8111, %v8381
      %v8464 = vadd.f32 %v8112, %v8383
      %v8465 = vadd.f32 %v8113, %v8385
      %v8466 = vadd.f32 %v8114, %v8387
      %v8467 = vadd.f32 %v8115, %v8389
      %v8468 = vadd.f32 %v8116, %v8391
      %v8469 = vadd.f32 %v8117, %v8393
      %v8470 = vadd.f32 %v8118, %v8395
      %v8471 = vadd.f32 %v8119, %v8397
      %v8472 = vadd.f32 %v8120, %v8399
      %v8473 = vadd.f32 %v8121, %v8401
      %v8474 = vadd.f32 %v8122, %v8403
      %v8475 = vadd.f32 %v8123, %v8405
      %v8476 = vadd.f32 %v8124, %v8407
      %v8477 = vadd.f32 %v8125, %v8409
      %v8478 = vadd.f32 %v8126, %v8411
      %v8479 = vadd.f32 %v8127, %v8413
      %v8480 = vadd.f32 %v8128, %v8415
      %v8481 = vadd.f32 %v8129, %v8417
      %v8482 = vmul.f32 %v1635, %v191
      %v8483 = vmul.f32 %v1635, %v192
      %v8484 = vmul.f32 %v1639, %v191
      %v8485 = vmul.f32 %v1639, %v192
      %v8486 = vmul.f32 %v1643, %v191
      %v8487 = vmul.f32 %v1643, %v192
      %v8488 = vmul.f32 %v1647, %v191
      %v8489 = vmul.f32 %v1647, %v192
      %v8490 = vmul.f32 %v1651, %v191
      %v8491 = vmul.f32 %v1651, %v192
      %v8492 = vmul.f32 %v1655, %v191
      %v8493 = vmul.f32 %v1655, %v192
      %v8494 = vmul.f32 %v1659, %v191
      %v8495 = vmul.f32 %v1659, %v192
      %v8496 = vmul.f32 %v1663, %v191
      %v8497 = vmul.f32 %v1663, %v192
      %v8498 = vmul.f32 %v1667, %v191
      %v8499 = vmul.f32 %v1667, %v192
      %v8500 = vmul.f32 %v1671, %v191
      %v8501 = vmul.f32 %v1671, %v192
      %v8502 = vmul.f32 %v1675, %v191
      %v8503 = vmul.f32 %v1675, %v192
      %v8504 = vmul.f32 %v1679, %v191
      %v8505 = vmul.f32 %v1679, %v192
      %v8506 = vmul.f32 %v1683, %v191
      %v8507 = vmul.f32 %v1683, %v192
      %v8508 = vmul.f32 %v1687, %v191
      %v8509 = vmul.f32 %v1687, %v192
      %v8510 = vmul.f32 %v1691, %v191
      %v8511 = vmul.f32 %v1691, %v192
      %v8512 = vmul.f32 %v1695, %v191
      %v8513 = vmul.f32 %v1695, %v192
      %v8514 = vmul.f32 %v1699, %v191
      %v8515 = vmul.f32 %v1699, %v192
      %v8516 = vmul.f32 %v1703, %v191
      %v8517 = vmul.f32 %v1703, %v192
      %v8518 = vmul.f32 %v1707, %v191
      %v8519 = vmul.f32 %v1707, %v192
      %v8520 = vmul.f32 %v1711, %v191
      %v8521 = vmul.f32 %v1711, %v192
      %v8522 = vmul.f32 %v1715, %v191
      %v8523 = vmul.f32 %v1715, %v192
      %v8524 = vmul.f32 %v1719, %v191
      %v8525 = vmul.f32 %v1719, %v192
      %v8526 = vmul.f32 %v1723, %v191
      %v8527 = vmul.f32 %v1723, %v192
      %v8528 = vmul.f32 %v1727, %v191
      %v8529 = vmul.f32 %v1727, %v192
      %v8530 = vmul.f32 %v1731, %v191
      %v8531 = vmul.f32 %v1731, %v192
      %v8532 = vmul.f32 %v1735, %v191
      %v8533 = vmul.f32 %v1735, %v192
      %v8534 = vmul.f32 %v1739, %v191
      %v8535 = vmul.f32 %v1739, %v192
      %v8536 = vmul.f32 %v1743, %v191
      %v8537 = vmul.f32 %v1743, %v192
      %v8538 = vmul.f32 %v1747, %v191
      %v8539 = vmul.f32 %v1747, %v192
      %v8540 = vmul.f32 %v1751, %v191
      %v8541 = vmul.f32 %v1751, %v192
      %v8542 = vmul.f32 %v1755, %v191
      %v8543 = vmul.f32 %v1755, %v192
      %v8544 = vmul.f32 %v1759, %v191
      %v8545 = vmul.f32 %v1759, %v192
      %v8610 = vrot.slane %v8482, 1
      %v8611 = vrot.slane %v8483, 1
      %v8612 = vsel %vm1889, %v8610, %v8611
      %v8613 = vrot.slane %v8484, 1
      %v8614 = vrot.slane %v8485, 1
      %v8615 = vsel %vm1889, %v8613, %v8614
      %v8616 = vrot.slane %v8486, 1
      %v8617 = vrot.slane %v8487, 1
      %v8618 = vsel %vm1889, %v8616, %v8617
      %v8619 = vrot.slane %v8488, 1
      %v8620 = vrot.slane %v8489, 1
      %v8621 = vsel %vm1889, %v8619, %v8620
      %v8622 = vrot.slane %v8490, 1
      %v8623 = vrot.slane %v8491, 1
      %v8624 = vsel %vm1889, %v8622, %v8623
      %v8625 = vrot.slane %v8492, 1
      %v8626 = vrot.slane %v8493, 1
      %v8627 = vsel %vm1889, %v8625, %v8626
      %v8628 = vrot.slane %v8494, 1
      %v8629 = vrot.slane %v8495, 1
      %v8630 = vsel %vm1889, %v8628, %v8629
      %v8631 = vrot.slane %v8496, 1
      %v8632 = vrot.slane %v8497, 1
      %v8633 = vsel %vm1889, %v8631, %v8632
      %v8634 = vrot.slane %v8498, 1
      %v8635 = vrot.slane %v8499, 1
      %v8636 = vsel %vm1889, %v8634, %v8635
      %v8637 = vrot.slane %v8500, 1
      %v8638 = vrot.slane %v8501, 1
      %v8639 = vsel %vm1889, %v8637, %v8638
      %v8640 = vrot.slane %v8502, 1
      %v8641 = vrot.slane %v8503, 1
      %v8642 = vsel %vm1889, %v8640, %v8641
      %v8643 = vrot.slane %v8504, 1
      %v8644 = vrot.slane %v8505, 1
      %v8645 = vsel %vm1889, %v8643, %v8644
      %v8646 = vrot.slane %v8506, 1
      %v8647 = vrot.slane %v8507, 1
      %v8648 = vsel %vm1889, %v8646, %v8647
      %v8649 = vrot.slane %v8508, 1
      %v8650 = vrot.slane %v8509, 1
      %v8651 = vsel %vm1889, %v8649, %v8650
      %v8652 = vrot.slane %v8510, 1
      %v8653 = vrot.slane %v8511, 1
      %v8654 = vsel %vm1889, %v8652, %v8653
      %v8655 = vrot.slane %v8512, 1
      %v8656 = vrot.slane %v8513, 1
      %v8657 = vsel %vm1889, %v8655, %v8656
      %v8658 = vrot.slane %v8514, 1
      %v8659 = vrot.slane %v8515, 1
      %v8660 = vsel %vm1889, %v8658, %v8659
      %v8661 = vrot.slane %v8516, 1
      %v8662 = vrot.slane %v8517, 1
      %v8663 = vsel %vm1889, %v8661, %v8662
      %v8664 = vrot.slane %v8518, 1
      %v8665 = vrot.slane %v8519, 1
      %v8666 = vsel %vm1889, %v8664, %v8665
      %v8667 = vrot.slane %v8520, 1
      %v8668 = vrot.slane %v8521, 1
      %v8669 = vsel %vm1889, %v8667, %v8668
      %v8670 = vrot.slane %v8522, 1
      %v8671 = vrot.slane %v8523, 1
      %v8672 = vsel %vm1889, %v8670, %v8671
      %v8673 = vrot.slane %v8524, 1
      %v8674 = vrot.slane %v8525, 1
      %v8675 = vsel %vm1889, %v8673, %v8674
      %v8676 = vrot.slane %v8526, 1
      %v8677 = vrot.slane %v8527, 1
      %v8678 = vsel %vm1889, %v8676, %v8677
      %v8679 = vrot.slane %v8528, 1
      %v8680 = vrot.slane %v8529, 1
      %v8681 = vsel %vm1889, %v8679, %v8680
      %v8682 = vrot.slane %v8530, 1
      %v8683 = vrot.slane %v8531, 1
      %v8684 = vsel %vm1889, %v8682, %v8683
      %v8685 = vrot.slane %v8532, 1
      %v8686 = vrot.slane %v8533, 1
      %v8687 = vsel %vm1889, %v8685, %v8686
      %v8688 = vrot.slane %v8534, 1
      %v8689 = vrot.slane %v8535, 1
      %v8690 = vsel %vm1889, %v8688, %v8689
      %v8691 = vrot.slane %v8536, 1
      %v8692 = vrot.slane %v8537, 1
      %v8693 = vsel %vm1889, %v8691, %v8692
      %v8694 = vrot.slane %v8538, 1
      %v8695 = vrot.slane %v8539, 1
      %v8696 = vsel %vm1889, %v8694, %v8695
      %v8697 = vrot.slane %v8540, 1
      %v8698 = vrot.slane %v8541, 1
      %v8699 = vsel %vm1889, %v8697, %v8698
      %v8700 = vrot.slane %v8542, 1
      %v8701 = vrot.slane %v8543, 1
      %v8702 = vsel %vm1889, %v8700, %v8701
      %v8703 = vrot.slane %v8544, 1
      %v8704 = vrot.slane %v8545, 1
      %v8705 = vsel %vm1889, %v8703, %v8704
      %v8738 = vadd.f32 %v8450, %v8612
      %v8739 = vadd.f32 %v8451, %v8615
      %v8740 = vadd.f32 %v8452, %v8618
      %v8741 = vadd.f32 %v8453, %v8621
      %v8742 = vadd.f32 %v8454, %v8624
      %v8743 = vadd.f32 %v8455, %v8627
      %v8744 = vadd.f32 %v8456, %v8630
      %v8745 = vadd.f32 %v8457, %v8633
      %v8746 = vadd.f32 %v8458, %v8636
      %v8747 = vadd.f32 %v8459, %v8639
      %v8748 = vadd.f32 %v8460, %v8642
      %v8749 = vadd.f32 %v8461, %v8645
      %v8750 = vadd.f32 %v8462, %v8648
      %v8751 = vadd.f32 %v8463, %v8651
      %v8752 = vadd.f32 %v8464, %v8654
      %v8753 = vadd.f32 %v8465, %v8657
      %v8754 = vadd.f32 %v8466, %v8660
      %v8755 = vadd.f32 %v8467, %v8663
      %v8756 = vadd.f32 %v8468, %v8666
      %v8757 = vadd.f32 %v8469, %v8669
      %v8758 = vadd.f32 %v8470, %v8672
      %v8759 = vadd.f32 %v8471, %v8675
      %v8760 = vadd.f32 %v8472, %v8678
      %v8761 = vadd.f32 %v8473, %v8681
      %v8762 = vadd.f32 %v8474, %v8684
      %v8763 = vadd.f32 %v8475, %v8687
      %v8764 = vadd.f32 %v8476, %v8690
      %v8765 = vadd.f32 %v8477, %v8693
      %v8766 = vadd.f32 %v8478, %v8696
      %v8767 = vadd.f32 %v8479, %v8699
      %v8768 = vadd.f32 %v8480, %v8702
      %v8769 = vadd.f32 %v8481, %v8705
      %v8770 = vmul.f32 %v2052, %v188
      %v8771 = vmul.f32 %v2052, %v189
      %v8772 = vmul.f32 %v2056, %v188
      %v8773 = vmul.f32 %v2056, %v189
      %v8774 = vmul.f32 %v2060, %v188
      %v8775 = vmul.f32 %v2060, %v189
      %v8776 = vmul.f32 %v2064, %v188
      %v8777 = vmul.f32 %v2064, %v189
      %v8778 = vmul.f32 %v2068, %v188
      %v8779 = vmul.f32 %v2068, %v189
      %v8780 = vmul.f32 %v2072, %v188
      %v8781 = vmul.f32 %v2072, %v189
      %v8782 = vmul.f32 %v2076, %v188
      %v8783 = vmul.f32 %v2076, %v189
      %v8784 = vmul.f32 %v2080, %v188
      %v8785 = vmul.f32 %v2080, %v189
      %v8786 = vmul.f32 %v2084, %v188
      %v8787 = vmul.f32 %v2084, %v189
      %v8788 = vmul.f32 %v2088, %v188
      %v8789 = vmul.f32 %v2088, %v189
      %v8790 = vmul.f32 %v2092, %v188
      %v8791 = vmul.f32 %v2092, %v189
      %v8792 = vmul.f32 %v2096, %v188
      %v8793 = vmul.f32 %v2096, %v189
      %v8794 = vmul.f32 %v2100, %v188
      %v8795 = vmul.f32 %v2100, %v189
      %v8796 = vmul.f32 %v2104, %v188
      %v8797 = vmul.f32 %v2104, %v189
      %v8798 = vmul.f32 %v2108, %v188
      %v8799 = vmul.f32 %v2108, %v189
      %v8800 = vmul.f32 %v2112, %v188
      %v8801 = vmul.f32 %v2112, %v189
      %v8802 = vmul.f32 %v2116, %v188
      %v8803 = vmul.f32 %v2116, %v189
      %v8804 = vmul.f32 %v2120, %v188
      %v8805 = vmul.f32 %v2120, %v189
      %v8806 = vmul.f32 %v2124, %v188
      %v8807 = vmul.f32 %v2124, %v189
      %v8808 = vmul.f32 %v2128, %v188
      %v8809 = vmul.f32 %v2128, %v189
      %v8810 = vmul.f32 %v2132, %v188
      %v8811 = vmul.f32 %v2132, %v189
      %v8812 = vmul.f32 %v2136, %v188
      %v8813 = vmul.f32 %v2136, %v189
      %v8814 = vmul.f32 %v2140, %v188
      %v8815 = vmul.f32 %v2140, %v189
      %v8816 = vmul.f32 %v2144, %v188
      %v8817 = vmul.f32 %v2144, %v189
      %v8818 = vmul.f32 %v2148, %v188
      %v8819 = vmul.f32 %v2148, %v189
      %v8820 = vmul.f32 %v2152, %v188
      %v8821 = vmul.f32 %v2152, %v189
      %v8822 = vmul.f32 %v2156, %v188
      %v8823 = vmul.f32 %v2156, %v189
      %v8824 = vmul.f32 %v2160, %v188
      %v8825 = vmul.f32 %v2160, %v189
      %v8826 = vmul.f32 %v2164, %v188
      %v8827 = vmul.f32 %v2164, %v189
      %v8828 = vmul.f32 %v2168, %v188
      %v8829 = vmul.f32 %v2168, %v189
      %v8830 = vmul.f32 %v2172, %v188
      %v8831 = vmul.f32 %v2172, %v189
      %v8832 = vmul.f32 %v2176, %v188
      %v8833 = vmul.f32 %v2176, %v189
      %v8898 = vrot.slane %v8770, 1
      %v8899 = vrot.slane %v8771, 1
      %v8900 = vsel %vm1889, %v8898, %v8899
      %v8901 = vrot.slane %v8772, 1
      %v8902 = vrot.slane %v8773, 1
      %v8903 = vsel %vm1889, %v8901, %v8902
      %v8904 = vrot.slane %v8774, 1
      %v8905 = vrot.slane %v8775, 1
      %v8906 = vsel %vm1889, %v8904, %v8905
      %v8907 = vrot.slane %v8776, 1
      %v8908 = vrot.slane %v8777, 1
      %v8909 = vsel %vm1889, %v8907, %v8908
      %v8910 = vrot.slane %v8778, 1
      %v8911 = vrot.slane %v8779, 1
      %v8912 = vsel %vm1889, %v8910, %v8911
      %v8913 = vrot.slane %v8780, 1
      %v8914 = vrot.slane %v8781, 1
      %v8915 = vsel %vm1889, %v8913, %v8914
      %v8916 = vrot.slane %v8782, 1
      %v8917 = vrot.slane %v8783, 1
      %v8918 = vsel %vm1889, %v8916, %v8917
      %v8919 = vrot.slane %v8784, 1
      %v8920 = vrot.slane %v8785, 1
      %v8921 = vsel %vm1889, %v8919, %v8920
      %v8922 = vrot.slane %v8786, 1
      %v8923 = vrot.slane %v8787, 1
      %v8924 = vsel %vm1889, %v8922, %v8923
      %v8925 = vrot.slane %v8788, 1
      %v8926 = vrot.slane %v8789, 1
      %v8927 = vsel %vm1889, %v8925, %v8926
      %v8928 = vrot.slane %v8790, 1
      %v8929 = vrot.slane %v8791, 1
      %v8930 = vsel %vm1889, %v8928, %v8929
      %v8931 = vrot.slane %v8792, 1
      %v8932 = vrot.slane %v8793, 1
      %v8933 = vsel %vm1889, %v8931, %v8932
      %v8934 = vrot.slane %v8794, 1
      %v8935 = vrot.slane %v8795, 1
      %v8936 = vsel %vm1889, %v8934, %v8935
      %v8937 = vrot.slane %v8796, 1
      %v8938 = vrot.slane %v8797, 1
      %v8939 = vsel %vm1889, %v8937, %v8938
      %v8940 = vrot.slane %v8798, 1
      %v8941 = vrot.slane %v8799, 1
      %v8942 = vsel %vm1889, %v8940, %v8941
      %v8943 = vrot.slane %v8800, 1
      %v8944 = vrot.slane %v8801, 1
      %v8945 = vsel %vm1889, %v8943, %v8944
      %v8946 = vrot.slane %v8802, 1
      %v8947 = vrot.slane %v8803, 1
      %v8948 = vsel %vm1889, %v8946, %v8947
      %v8949 = vrot.slane %v8804, 1
      %v8950 = vrot.slane %v8805, 1
      %v8951 = vsel %vm1889, %v8949, %v8950
      %v8952 = vrot.slane %v8806, 1
      %v8953 = vrot.slane %v8807, 1
      %v8954 = vsel %vm1889, %v8952, %v8953
      %v8955 = vrot.slane %v8808, 1
      %v8956 = vrot.slane %v8809, 1
      %v8957 = vsel %vm1889, %v8955, %v8956
      %v8958 = vrot.slane %v8810, 1
      %v8959 = vrot.slane %v8811, 1
      %v8960 = vsel %vm1889, %v8958, %v8959
      %v8961 = vrot.slane %v8812, 1
      %v8962 = vrot.slane %v8813, 1
      %v8963 = vsel %vm1889, %v8961, %v8962
      %v8964 = vrot.slane %v8814, 1
      %v8965 = vrot.slane %v8815, 1
      %v8966 = vsel %vm1889, %v8964, %v8965
      %v8967 = vrot.slane %v8816, 1
      %v8968 = vrot.slane %v8817, 1
      %v8969 = vsel %vm1889, %v8967, %v8968
      %v8970 = vrot.slane %v8818, 1
      %v8971 = vrot.slane %v8819, 1
      %v8972 = vsel %vm1889, %v8970, %v8971
      %v8973 = vrot.slane %v8820, 1
      %v8974 = vrot.slane %v8821, 1
      %v8975 = vsel %vm1889, %v8973, %v8974
      %v8976 = vrot.slane %v8822, 1
      %v8977 = vrot.slane %v8823, 1
      %v8978 = vsel %vm1889, %v8976, %v8977
      %v8979 = vrot.slane %v8824, 1
      %v8980 = vrot.slane %v8825, 1
      %v8981 = vsel %vm1889, %v8979, %v8980
      %v8982 = vrot.slane %v8826, 1
      %v8983 = vrot.slane %v8827, 1
      %v8984 = vsel %vm1889, %v8982, %v8983
      %v8985 = vrot.slane %v8828, 1
      %v8986 = vrot.slane %v8829, 1
      %v8987 = vsel %vm1889, %v8985, %v8986
      %v8988 = vrot.slane %v8830, 1
      %v8989 = vrot.slane %v8831, 1
      %v8990 = vsel %vm1889, %v8988, %v8989
      %v8991 = vrot.slane %v8832, 1
      %v8992 = vrot.slane %v8833, 1
      %v8993 = vsel %vm1889, %v8991, %v8992
      %8994 = vrot.lane.b32.xlu0 %v8900, 127
      %v8995 = vpop.permute.xlu0 %8994
      %8996 = vrot.lane.b32.xlu0 %v8903, 127
      %v8997 = vpop.permute.xlu0 %8996
      %8998 = vrot.lane.b32.xlu0 %v8906, 127
      %v8999 = vpop.permute.xlu0 %8998
      %9000 = vrot.lane.b32.xlu0 %v8909, 127
      %v9001 = vpop.permute.xlu0 %9000
      %9002 = vrot.lane.b32.xlu0 %v8912, 127
      %v9003 = vpop.permute.xlu0 %9002
      %9004 = vrot.lane.b32.xlu0 %v8915, 127
      %v9005 = vpop.permute.xlu0 %9004
      %9006 = vrot.lane.b32.xlu0 %v8918, 127
      %v9007 = vpop.permute.xlu0 %9006
      %9008 = vrot.lane.b32.xlu0 %v8921, 127
      %v9009 = vpop.permute.xlu0 %9008
      %9010 = vrot.lane.b32.xlu0 %v8924, 127
      %v9011 = vpop.permute.xlu0 %9010
      %9012 = vrot.lane.b32.xlu0 %v8927, 127
      %v9013 = vpop.permute.xlu0 %9012
      %9014 = vrot.lane.b32.xlu0 %v8930, 127
      %v9015 = vpop.permute.xlu0 %9014
      %9016 = vrot.lane.b32.xlu0 %v8933, 127
      %v9017 = vpop.permute.xlu0 %9016
      %9018 = vrot.lane.b32.xlu0 %v8936, 127
      %v9019 = vpop.permute.xlu0 %9018
      %9020 = vrot.lane.b32.xlu0 %v8939, 127
      %v9021 = vpop.permute.xlu0 %9020
      %9022 = vrot.lane.b32.xlu0 %v8942, 127
      %v9023 = vpop.permute.xlu0 %9022
      %9024 = vrot.lane.b32.xlu0 %v8945, 127
      %v9025 = vpop.permute.xlu0 %9024
      %9026 = vrot.lane.b32.xlu0 %v8948, 127
      %v9027 = vpop.permute.xlu0 %9026
      %9028 = vrot.lane.b32.xlu0 %v8951, 127
      %v9029 = vpop.permute.xlu0 %9028
      %9030 = vrot.lane.b32.xlu0 %v8954, 127
      %v9031 = vpop.permute.xlu0 %9030
      %9032 = vrot.lane.b32.xlu0 %v8957, 127
      %v9033 = vpop.permute.xlu0 %9032
      %9034 = vrot.lane.b32.xlu0 %v8960, 127
      %v9035 = vpop.permute.xlu0 %9034
      %9036 = vrot.lane.b32.xlu0 %v8963, 127
      %v9037 = vpop.permute.xlu0 %9036
      %9038 = vrot.lane.b32.xlu0 %v8966, 127
      %v9039 = vpop.permute.xlu0 %9038
      %9040 = vrot.lane.b32.xlu0 %v8969, 127
      %v9041 = vpop.permute.xlu0 %9040
      %9042 = vrot.lane.b32.xlu0 %v8972, 127
      %v9043 = vpop.permute.xlu0 %9042
      %9044 = vrot.lane.b32.xlu0 %v8975, 127
      %v9045 = vpop.permute.xlu0 %9044
      %9046 = vrot.lane.b32.xlu0 %v8978, 127
      %v9047 = vpop.permute.xlu0 %9046
      %9048 = vrot.lane.b32.xlu0 %v8981, 127
      %v9049 = vpop.permute.xlu0 %9048
      %9050 = vrot.lane.b32.xlu0 %v8984, 127
      %v9051 = vpop.permute.xlu0 %9050
      %9052 = vrot.lane.b32.xlu0 %v8987, 127
      %v9053 = vpop.permute.xlu0 %9052
      %9054 = vrot.lane.b32.xlu0 %v8990, 127
      %v9055 = vpop.permute.xlu0 %9054
      %9056 = vrot.lane.b32.xlu0 %v8993, 127
      %v9057 = vpop.permute.xlu0 %9056
      %v9090 = vadd.f32 %v8738, %v8995
      %v9091 = vadd.f32 %v8739, %v8997
      %v9092 = vadd.f32 %v8740, %v8999
      %v9093 = vadd.f32 %v8741, %v9001
      %v9094 = vadd.f32 %v8742, %v9003
      %v9095 = vadd.f32 %v8743, %v9005
      %v9096 = vadd.f32 %v8744, %v9007
      %v9097 = vadd.f32 %v8745, %v9009
      %v9098 = vadd.f32 %v8746, %v9011
      %v9099 = vadd.f32 %v8747, %v9013
      %v9100 = vadd.f32 %v8748, %v9015
      %v9101 = vadd.f32 %v8749, %v9017
      %v9102 = vadd.f32 %v8750, %v9019
      %v9103 = vadd.f32 %v8751, %v9021
      %v9104 = vadd.f32 %v8752, %v9023
      %v9105 = vadd.f32 %v8753, %v9025
      %v9106 = vadd.f32 %v8754, %v9027
      %v9107 = vadd.f32 %v8755, %v9029
      %v9108 = vadd.f32 %v8756, %v9031
      %v9109 = vadd.f32 %v8757, %v9033
      %v9110 = vadd.f32 %v8758, %v9035
      %v9111 = vadd.f32 %v8759, %v9037
      %v9112 = vadd.f32 %v8760, %v9039
      %v9113 = vadd.f32 %v8761, %v9041
      %v9114 = vadd.f32 %v8762, %v9043
      %v9115 = vadd.f32 %v8763, %v9045
      %v9116 = vadd.f32 %v8764, %v9047
      %v9117 = vadd.f32 %v8765, %v9049
      %v9118 = vadd.f32 %v8766, %v9051
      %v9119 = vadd.f32 %v8767, %v9053
      %v9120 = vadd.f32 %v8768, %v9055
      %v9121 = vadd.f32 %v8769, %v9057
      %v9122 = vmul.f32 %v2468, %v191
      %v9123 = vmul.f32 %v2468, %v192
      %v9124 = vmul.f32 %v2472, %v191
      %v9125 = vmul.f32 %v2472, %v192
      %v9126 = vmul.f32 %v2476, %v191
      %v9127 = vmul.f32 %v2476, %v192
      %v9128 = vmul.f32 %v2480, %v191
      %v9129 = vmul.f32 %v2480, %v192
      %v9130 = vmul.f32 %v2484, %v191
      %v9131 = vmul.f32 %v2484, %v192
      %v9132 = vmul.f32 %v2488, %v191
      %v9133 = vmul.f32 %v2488, %v192
      %v9134 = vmul.f32 %v2492, %v191
      %v9135 = vmul.f32 %v2492, %v192
      %v9136 = vmul.f32 %v2496, %v191
      %v9137 = vmul.f32 %v2496, %v192
      %v9138 = vmul.f32 %v2500, %v191
      %v9139 = vmul.f32 %v2500, %v192
      %v9140 = vmul.f32 %v2504, %v191
      %v9141 = vmul.f32 %v2504, %v192
      %v9142 = vmul.f32 %v2508, %v191
      %v9143 = vmul.f32 %v2508, %v192
      %v9144 = vmul.f32 %v2512, %v191
      %v9145 = vmul.f32 %v2512, %v192
      %v9146 = vmul.f32 %v2516, %v191
      %v9147 = vmul.f32 %v2516, %v192
      %v9148 = vmul.f32 %v2520, %v191
      %v9149 = vmul.f32 %v2520, %v192
      %v9150 = vmul.f32 %v2524, %v191
      %v9151 = vmul.f32 %v2524, %v192
      %v9152 = vmul.f32 %v2528, %v191
      %v9153 = vmul.f32 %v2528, %v192
      %v9154 = vmul.f32 %v2532, %v191
      %v9155 = vmul.f32 %v2532, %v192
      %v9156 = vmul.f32 %v2536, %v191
      %v9157 = vmul.f32 %v2536, %v192
      %v9158 = vmul.f32 %v2540, %v191
      %v9159 = vmul.f32 %v2540, %v192
      %v9160 = vmul.f32 %v2544, %v191
      %v9161 = vmul.f32 %v2544, %v192
      %v9162 = vmul.f32 %v2548, %v191
      %v9163 = vmul.f32 %v2548, %v192
      %v9164 = vmul.f32 %v2552, %v191
      %v9165 = vmul.f32 %v2552, %v192
      %v9166 = vmul.f32 %v2556, %v191
      %v9167 = vmul.f32 %v2556, %v192
      %v9168 = vmul.f32 %v2560, %v191
      %v9169 = vmul.f32 %v2560, %v192
      %v9170 = vmul.f32 %v2564, %v191
      %v9171 = vmul.f32 %v2564, %v192
      %v9172 = vmul.f32 %v2568, %v191
      %v9173 = vmul.f32 %v2568, %v192
      %v9174 = vmul.f32 %v2572, %v191
      %v9175 = vmul.f32 %v2572, %v192
      %v9176 = vmul.f32 %v2576, %v191
      %v9177 = vmul.f32 %v2576, %v192
      %v9178 = vmul.f32 %v2580, %v191
      %v9179 = vmul.f32 %v2580, %v192
      %v9180 = vmul.f32 %v2584, %v191
      %v9181 = vmul.f32 %v2584, %v192
      %v9182 = vmul.f32 %v2588, %v191
      %v9183 = vmul.f32 %v2588, %v192
      %v9184 = vmul.f32 %v2592, %v191
      %v9185 = vmul.f32 %v2592, %v192
      %v9250 = vrot.slane %v9122, 1
      %v9251 = vrot.slane %v9123, 1
      %v9252 = vsel %vm1889, %v9250, %v9251
      %v9253 = vrot.slane %v9124, 1
      %v9254 = vrot.slane %v9125, 1
      %v9255 = vsel %vm1889, %v9253, %v9254
      %v9256 = vrot.slane %v9126, 1
      %v9257 = vrot.slane %v9127, 1
      %v9258 = vsel %vm1889, %v9256, %v9257
      %v9259 = vrot.slane %v9128, 1
      %v9260 = vrot.slane %v9129, 1
      %v9261 = vsel %vm1889, %v9259, %v9260
      %v9262 = vrot.slane %v9130, 1
      %v9263 = vrot.slane %v9131, 1
      %v9264 = vsel %vm1889, %v9262, %v9263
      %v9265 = vrot.slane %v9132, 1
      %v9266 = vrot.slane %v9133, 1
      %v9267 = vsel %vm1889, %v9265, %v9266
      %v9268 = vrot.slane %v9134, 1
      %v9269 = vrot.slane %v9135, 1
      %v9270 = vsel %vm1889, %v9268, %v9269
      %v9271 = vrot.slane %v9136, 1
      %v9272 = vrot.slane %v9137, 1
      %v9273 = vsel %vm1889, %v9271, %v9272
      %v9274 = vrot.slane %v9138, 1
      %v9275 = vrot.slane %v9139, 1
      %v9276 = vsel %vm1889, %v9274, %v9275
      %v9277 = vrot.slane %v9140, 1
      %v9278 = vrot.slane %v9141, 1
      %v9279 = vsel %vm1889, %v9277, %v9278
      %v9280 = vrot.slane %v9142, 1
      %v9281 = vrot.slane %v9143, 1
      %v9282 = vsel %vm1889, %v9280, %v9281
      %v9283 = vrot.slane %v9144, 1
      %v9284 = vrot.slane %v9145, 1
      %v9285 = vsel %vm1889, %v9283, %v9284
      %v9286 = vrot.slane %v9146, 1
      %v9287 = vrot.slane %v9147, 1
      %v9288 = vsel %vm1889, %v9286, %v9287
      %v9289 = vrot.slane %v9148, 1
      %v9290 = vrot.slane %v9149, 1
      %v9291 = vsel %vm1889, %v9289, %v9290
      %v9292 = vrot.slane %v9150, 1
      %v9293 = vrot.slane %v9151, 1
      %v9294 = vsel %vm1889, %v9292, %v9293
      %v9295 = vrot.slane %v9152, 1
      %v9296 = vrot.slane %v9153, 1
      %v9297 = vsel %vm1889, %v9295, %v9296
      %v9298 = vrot.slane %v9154, 1
      %v9299 = vrot.slane %v9155, 1
      %v9300 = vsel %vm1889, %v9298, %v9299
      %v9301 = vrot.slane %v9156, 1
      %v9302 = vrot.slane %v9157, 1
      %v9303 = vsel %vm1889, %v9301, %v9302
      %v9304 = vrot.slane %v9158, 1
      %v9305 = vrot.slane %v9159, 1
      %v9306 = vsel %vm1889, %v9304, %v9305
      %v9307 = vrot.slane %v9160, 1
      %v9308 = vrot.slane %v9161, 1
      %v9309 = vsel %vm1889, %v9307, %v9308
      %v9310 = vrot.slane %v9162, 1
      %v9311 = vrot.slane %v9163, 1
      %v9312 = vsel %vm1889, %v9310, %v9311
      %v9313 = vrot.slane %v9164, 1
      %v9314 = vrot.slane %v9165, 1
      %v9315 = vsel %vm1889, %v9313, %v9314
      %v9316 = vrot.slane %v9166, 1
      %v9317 = vrot.slane %v9167, 1
      %v9318 = vsel %vm1889, %v9316, %v9317
      %v9319 = vrot.slane %v9168, 1
      %v9320 = vrot.slane %v9169, 1
      %v9321 = vsel %vm1889, %v9319, %v9320
      %v9322 = vrot.slane %v9170, 1
      %v9323 = vrot.slane %v9171, 1
      %v9324 = vsel %vm1889, %v9322, %v9323
      %v9325 = vrot.slane %v9172, 1
      %v9326 = vrot.slane %v9173, 1
      %v9327 = vsel %vm1889, %v9325, %v9326
      %v9328 = vrot.slane %v9174, 1
      %v9329 = vrot.slane %v9175, 1
      %v9330 = vsel %vm1889, %v9328, %v9329
      %v9331 = vrot.slane %v9176, 1
      %v9332 = vrot.slane %v9177, 1
      %v9333 = vsel %vm1889, %v9331, %v9332
      %v9334 = vrot.slane %v9178, 1
      %v9335 = vrot.slane %v9179, 1
      %v9336 = vsel %vm1889, %v9334, %v9335
      %v9337 = vrot.slane %v9180, 1
      %v9338 = vrot.slane %v9181, 1
      %v9339 = vsel %vm1889, %v9337, %v9338
      %v9340 = vrot.slane %v9182, 1
      %v9341 = vrot.slane %v9183, 1
      %v9342 = vsel %vm1889, %v9340, %v9341
      %v9343 = vrot.slane %v9184, 1
      %v9344 = vrot.slane %v9185, 1
      %v9345 = vsel %vm1889, %v9343, %v9344
      %9346 = vrot.lane.b32.xlu0 %v9252, 127
      %v9347 = vpop.permute.xlu0 %9346
      %9348 = vrot.lane.b32.xlu0 %v9255, 127
      %v9349 = vpop.permute.xlu0 %9348
      %9350 = vrot.lane.b32.xlu0 %v9258, 127
      %v9351 = vpop.permute.xlu0 %9350
      %9352 = vrot.lane.b32.xlu0 %v9261, 127
      %v9353 = vpop.permute.xlu0 %9352
      %9354 = vrot.lane.b32.xlu0 %v9264, 127
      %v9355 = vpop.permute.xlu0 %9354
      %9356 = vrot.lane.b32.xlu0 %v9267, 127
      %v9357 = vpop.permute.xlu0 %9356
      %9358 = vrot.lane.b32.xlu0 %v9270, 127
      %v9359 = vpop.permute.xlu0 %9358
      %9360 = vrot.lane.b32.xlu0 %v9273, 127
      %v9361 = vpop.permute.xlu0 %9360
      %9362 = vrot.lane.b32.xlu0 %v9276, 127
      %v9363 = vpop.permute.xlu0 %9362
      %9364 = vrot.lane.b32.xlu0 %v9279, 127
      %v9365 = vpop.permute.xlu0 %9364
      %9366 = vrot.lane.b32.xlu0 %v9282, 127
      %v9367 = vpop.permute.xlu0 %9366
      %9368 = vrot.lane.b32.xlu0 %v9285, 127
      %v9369 = vpop.permute.xlu0 %9368
      %9370 = vrot.lane.b32.xlu0 %v9288, 127
      %v9371 = vpop.permute.xlu0 %9370
      %9372 = vrot.lane.b32.xlu0 %v9291, 127
      %v9373 = vpop.permute.xlu0 %9372
      %9374 = vrot.lane.b32.xlu0 %v9294, 127
      %v9375 = vpop.permute.xlu0 %9374
      %9376 = vrot.lane.b32.xlu0 %v9297, 127
      %v9377 = vpop.permute.xlu0 %9376
      %9378 = vrot.lane.b32.xlu0 %v9300, 127
      %v9379 = vpop.permute.xlu0 %9378
      %9380 = vrot.lane.b32.xlu0 %v9303, 127
      %v9381 = vpop.permute.xlu0 %9380
      %9382 = vrot.lane.b32.xlu0 %v9306, 127
      %v9383 = vpop.permute.xlu0 %9382
      %9384 = vrot.lane.b32.xlu0 %v9309, 127
      %v9385 = vpop.permute.xlu0 %9384
      %9386 = vrot.lane.b32.xlu0 %v9312, 127
      %v9387 = vpop.permute.xlu0 %9386
      %9388 = vrot.lane.b32.xlu0 %v9315, 127
      %v9389 = vpop.permute.xlu0 %9388
      %9390 = vrot.lane.b32.xlu0 %v9318, 127
      %v9391 = vpop.permute.xlu0 %9390
      %9392 = vrot.lane.b32.xlu0 %v9321, 127
      %v9393 = vpop.permute.xlu0 %9392
      %9394 = vrot.lane.b32.xlu0 %v9324, 127
      %v9395 = vpop.permute.xlu0 %9394
      %9396 = vrot.lane.b32.xlu0 %v9327, 127
      %v9397 = vpop.permute.xlu0 %9396
      %9398 = vrot.lane.b32.xlu0 %v9330, 127
      %v9399 = vpop.permute.xlu0 %9398
      %9400 = vrot.lane.b32.xlu0 %v9333, 127
      %v9401 = vpop.permute.xlu0 %9400
      %9402 = vrot.lane.b32.xlu0 %v9336, 127
      %v9403 = vpop.permute.xlu0 %9402
      %9404 = vrot.lane.b32.xlu0 %v9339, 127
      %v9405 = vpop.permute.xlu0 %9404
      %9406 = vrot.lane.b32.xlu0 %v9342, 127
      %v9407 = vpop.permute.xlu0 %9406
      %9408 = vrot.lane.b32.xlu0 %v9345, 127
      %v9409 = vpop.permute.xlu0 %9408
      %v9442 = vadd.f32 %v9090, %v9347
      %v9443 = vadd.f32 %v9091, %v9349
      %v9444 = vadd.f32 %v9092, %v9351
      %v9445 = vadd.f32 %v9093, %v9353
      %v9446 = vadd.f32 %v9094, %v9355
      %v9447 = vadd.f32 %v9095, %v9357
      %v9448 = vadd.f32 %v9096, %v9359
      %v9449 = vadd.f32 %v9097, %v9361
      %v9450 = vadd.f32 %v9098, %v9363
      %v9451 = vadd.f32 %v9099, %v9365
      %v9452 = vadd.f32 %v9100, %v9367
      %v9453 = vadd.f32 %v9101, %v9369
      %v9454 = vadd.f32 %v9102, %v9371
      %v9455 = vadd.f32 %v9103, %v9373
      %v9456 = vadd.f32 %v9104, %v9375
      %v9457 = vadd.f32 %v9105, %v9377
      %v9458 = vadd.f32 %v9106, %v9379
      %v9459 = vadd.f32 %v9107, %v9381
      %v9460 = vadd.f32 %v9108, %v9383
      %v9461 = vadd.f32 %v9109, %v9385
      %v9462 = vadd.f32 %v9110, %v9387
      %v9463 = vadd.f32 %v9111, %v9389
      %v9464 = vadd.f32 %v9112, %v9391
      %v9465 = vadd.f32 %v9113, %v9393
      %v9466 = vadd.f32 %v9114, %v9395
      %v9467 = vadd.f32 %v9115, %v9397
      %v9468 = vadd.f32 %v9116, %v9399
      %v9469 = vadd.f32 %v9117, %v9401
      %v9470 = vadd.f32 %v9118, %v9403
      %v9471 = vadd.f32 %v9119, %v9405
      %v9472 = vadd.f32 %v9120, %v9407
      %v9473 = vadd.f32 %v9121, %v9409
      %v9474 = vmax.f32 %v9442, 0.0
      %v9475 = vmax.f32 %v9443, 0.0
      %v9476 = vmax.f32 %v9444, 0.0
      %v9477 = vmax.f32 %v9445, 0.0
      %v9478 = vmax.f32 %v9446, 0.0
      %v9479 = vmax.f32 %v9447, 0.0
      %v9480 = vmax.f32 %v9448, 0.0
      %v9481 = vmax.f32 %v9449, 0.0
      %v9482 = vmax.f32 %v9450, 0.0
      %v9483 = vmax.f32 %v9451, 0.0
      %v9484 = vmax.f32 %v9452, 0.0
      %v9485 = vmax.f32 %v9453, 0.0
      %v9486 = vmax.f32 %v9454, 0.0
      %v9487 = vmax.f32 %v9455, 0.0
      %v9488 = vmax.f32 %v9456, 0.0
      %v9489 = vmax.f32 %v9457, 0.0
      %v9490 = vmax.f32 %v9458, 0.0
      %v9491 = vmax.f32 %v9459, 0.0
      %v9492 = vmax.f32 %v9460, 0.0
      %v9493 = vmax.f32 %v9461, 0.0
      %v9494 = vmax.f32 %v9462, 0.0
      %v9495 = vmax.f32 %v9463, 0.0
      %v9496 = vmax.f32 %v9464, 0.0
      %v9497 = vmax.f32 %v9465, 0.0
      %v9498 = vmax.f32 %v9466, 0.0
      %v9499 = vmax.f32 %v9467, 0.0
      %v9500 = vmax.f32 %v9468, 0.0
      %v9501 = vmax.f32 %v9469, 0.0
      %v9502 = vmax.f32 %v9470, 0.0
      %v9503 = vmax.f32 %v9471, 0.0
      %v9504 = vmax.f32 %v9472, 0.0
      %v9505 = vmax.f32 %v9473, 0.0
      %v9506 = vmax.f32 %v7042, %v9474
      %v9507 = vmax.f32 %v7043, %v9475
      %v9508 = vmax.f32 %v7044, %v9476
      %v9509 = vmax.f32 %v7045, %v9477
      %v9510 = vmax.f32 %v7046, %v9478
      %v9511 = vmax.f32 %v7047, %v9479
      %v9512 = vmax.f32 %v7048, %v9480
      %v9513 = vmax.f32 %v7049, %v9481
      %v9514 = vmax.f32 %v7050, %v9482
      %v9515 = vmax.f32 %v7051, %v9483
      %v9516 = vmax.f32 %v7052, %v9484
      %v9517 = vmax.f32 %v7053, %v9485
      %v9518 = vmax.f32 %v7054, %v9486
      %v9519 = vmax.f32 %v7055, %v9487
      %v9520 = vmax.f32 %v7056, %v9488
      %v9521 = vmax.f32 %v7057, %v9489
      %v9522 = vmax.f32 %v7058, %v9490
      %v9523 = vmax.f32 %v7059, %v9491
      %v9524 = vmax.f32 %v7060, %v9492
      %v9525 = vmax.f32 %v7061, %v9493
      %v9526 = vmax.f32 %v7062, %v9494
      %v9527 = vmax.f32 %v7063, %v9495
      %v9528 = vmax.f32 %v7064, %v9496
      %v9529 = vmax.f32 %v7065, %v9497
      %v9530 = vmax.f32 %v7066, %v9498
      %v9531 = vmax.f32 %v7067, %v9499
      %v9532 = vmax.f32 %v7068, %v9500
      %v9533 = vmax.f32 %v7069, %v9501
      %v9534 = vmax.f32 %v7070, %v9502
      %v9535 = vmax.f32 %v7071, %v9503
      %v9536 = vmax.f32 %v7072, %v9504
      %v9537 = vmax.f32 %v7073, %v9505
      %v9538 = vmax.f32 %v4866, %v9506
      %v9539 = vmax.f32 %v4867, %v9507
      %v9540 = vmax.f32 %v4868, %v9508
      %v9541 = vmax.f32 %v4869, %v9509
      %v9542 = vmax.f32 %v4870, %v9510
      %v9543 = vmax.f32 %v4871, %v9511
      %v9544 = vmax.f32 %v4872, %v9512
      %v9545 = vmax.f32 %v4873, %v9513
      %v9546 = vmax.f32 %v4874, %v9514
      %v9547 = vmax.f32 %v4875, %v9515
      %v9548 = vmax.f32 %v4876, %v9516
      %v9549 = vmax.f32 %v4877, %v9517
      %v9550 = vmax.f32 %v4878, %v9518
      %v9551 = vmax.f32 %v4879, %v9519
      %v9552 = vmax.f32 %v4880, %v9520
      %v9553 = vmax.f32 %v4881, %v9521
      %v9554 = vmax.f32 %v4882, %v9522
      %v9555 = vmax.f32 %v4883, %v9523
      %v9556 = vmax.f32 %v4884, %v9524
      %v9557 = vmax.f32 %v4885, %v9525
      %v9558 = vmax.f32 %v4886, %v9526
      %v9559 = vmax.f32 %v4887, %v9527
      %v9560 = vmax.f32 %v4888, %v9528
      %v9561 = vmax.f32 %v4889, %v9529
      %v9562 = vmax.f32 %v4890, %v9530
      %v9563 = vmax.f32 %v4891, %v9531
      %v9564 = vmax.f32 %v4892, %v9532
      %v9565 = vmax.f32 %v4893, %v9533
      %v9566 = vmax.f32 %v4894, %v9534
      %v9567 = vmax.f32 %v4895, %v9535
      %v9568 = vmax.f32 %v4896, %v9536
      %v9569 = vmax.f32 %v4897, %v9537
      %v9570 = vpack.c.bf16 %v9538, %v9538
      %v9571 = vpack.c.bf16 %v9539, %v9539
      %v9572 = vpack.c.bf16 %v9540, %v9540
      %v9573 = vpack.c.bf16 %v9541, %v9541
      %v9574 = vpack.c.bf16 %v9542, %v9542
      %v9575 = vpack.c.bf16 %v9543, %v9543
      %v9576 = vpack.c.bf16 %v9544, %v9544
      %v9577 = vpack.c.bf16 %v9545, %v9545
      %v9578 = vpack.c.bf16 %v9546, %v9546
      %v9579 = vpack.c.bf16 %v9547, %v9547
      %v9580 = vpack.c.bf16 %v9548, %v9548
      %v9581 = vpack.c.bf16 %v9549, %v9549
      %v9582 = vpack.c.bf16 %v9550, %v9550
      %v9583 = vpack.c.bf16 %v9551, %v9551
      %v9584 = vpack.c.bf16 %v9552, %v9552
      %v9585 = vpack.c.bf16 %v9553, %v9553
      %v9586 = vpack.c.bf16 %v9554, %v9554
      %v9587 = vpack.c.bf16 %v9555, %v9555
      %v9588 = vpack.c.bf16 %v9556, %v9556
      %v9589 = vpack.c.bf16 %v9557, %v9557
      %v9590 = vpack.c.bf16 %v9558, %v9558
      %v9591 = vpack.c.bf16 %v9559, %v9559
      %v9592 = vpack.c.bf16 %v9560, %v9560
      %v9593 = vpack.c.bf16 %v9561, %v9561
      %v9594 = vpack.c.bf16 %v9562, %v9562
      %v9595 = vpack.c.bf16 %v9563, %v9563
      %v9596 = vpack.c.bf16 %v9564, %v9564
      %v9597 = vpack.c.bf16 %v9565, %v9565
      %v9598 = vpack.c.bf16 %v9566, %v9566
      %v9599 = vpack.c.bf16 %v9567, %v9567
      %v9600 = vpack.c.bf16 %v9568, %v9568
      %v9601 = vpack.c.bf16 %v9569, %v9569
      %vm9602 = vcmask 60416
      %9603 = vst.msk [vmem:[%s177] sm:$0xf] %vm9602, %v9570
      %9604 = vst.msk [vmem:[%s177 + $0x4] sm:$0xf] %vm9602, %v9571
      %9605 = vst.msk [vmem:[%s177 + $0x8] sm:$0xf] %vm9602, %v9572
      %9606 = vst.msk [vmem:[%s177 + $0xc] sm:$0xf] %vm9602, %v9573
      %9607 = vst.msk [vmem:[%s177 + $0x10] sm:$0xf] %vm9602, %v9574
      %9608 = vst.msk [vmem:[%s177 + $0x14] sm:$0xf] %vm9602, %v9575
      %9609 = vst.msk [vmem:[%s177 + $0x18] sm:$0xf] %vm9602, %v9576
      %9610 = vst.msk [vmem:[%s177 + $0x1c] sm:$0xf] %vm9602, %v9577
      %9611 = vst.msk [vmem:[%s177 + $0x20] sm:$0xf] %vm9602, %v9578
      %9612 = vst.msk [vmem:[%s177 + $0x24] sm:$0xf] %vm9602, %v9579
      %9613 = vst.msk [vmem:[%s177 + $0x28] sm:$0xf] %vm9602, %v9580
      %9614 = vst.msk [vmem:[%s177 + $0x2c] sm:$0xf] %vm9602, %v9581
      %9615 = vst.msk [vmem:[%s177 + $0x30] sm:$0xf] %vm9602, %v9582
      %9616 = vst.msk [vmem:[%s177 + $0x34] sm:$0xf] %vm9602, %v9583
      %9617 = vst.msk [vmem:[%s177 + $0x38] sm:$0xf] %vm9602, %v9584
      %9618 = vst.msk [vmem:[%s177 + $0x3c] sm:$0xf] %vm9602, %v9585
      %9619 = vst.msk [vmem:[%s177 + $0x40] sm:$0xf] %vm9602, %v9586
      %9620 = vst.msk [vmem:[%s177 + $0x44] sm:$0xf] %vm9602, %v9587
      %9621 = vst.msk [vmem:[%s177 + $0x48] sm:$0xf] %vm9602, %v9588
      %9622 = vst.msk [vmem:[%s177 + $0x4c] sm:$0xf] %vm9602, %v9589
      %9623 = vst.msk [vmem:[%s177 + $0x50] sm:$0xf] %vm9602, %v9590
      %9624 = vst.msk [vmem:[%s177 + $0x54] sm:$0xf] %vm9602, %v9591
      %9625 = vst.msk [vmem:[%s177 + $0x58] sm:$0xf] %vm9602, %v9592
      %9626 = vst.msk [vmem:[%s177 + $0x5c] sm:$0xf] %vm9602, %v9593
      %9627 = vst.msk [vmem:[%s177 + $0x60] sm:$0xf] %vm9602, %v9594
      %9628 = vst.msk [vmem:[%s177 + $0x64] sm:$0xf] %vm9602, %v9595
      %9629 = vst.msk [vmem:[%s177 + $0x68] sm:$0xf] %vm9602, %v9596
      %9630 = vst.msk [vmem:[%s177 + $0x6c] sm:$0xf] %vm9602, %v9597
      %9631 = vst.msk [vmem:[%s177 + $0x70] sm:$0xf] %vm9602, %v9598
      %9632 = vst.msk [vmem:[%s177 + $0x74] sm:$0xf] %vm9602, %v9599
      %9633 = vst.msk [vmem:[%s177 + $0x78] sm:$0xf] %vm9602, %v9600
      %9634 = vst.msk [vmem:[%s177 + $0x7c] sm:$0xf] %vm9602, %v9601
      %p9635 = scmp.lt.s32.totalorder %s17, 1
      %s9636 = scalar_select %p9635, %s17, 1
      %p9637 = scmp.lt.s32.totalorder %s18, 0
      %s9638 = scalar_select %p9637, %s18, 0
      %s9639 = smul.addr %s9636, 32
      %s9640 = sadd.s32 %s9638, %s9639
      %s9641 = smul.addr %s9640, 4
      %s9642 = scalar_lea.vmem %s2, %s9641
      // Predicated region
      $region29: #{vgg_forward.2} parent=27 // pred_check
        %p9643 = pneg %p94
      $region30: #{vgg_forward.2} parent=27 // pred_check_branch
        %9645 = sbr.rel (%p9643) target = $region32
      $region31: #{vgg_forward.2} parent=27 // pred_region
        _
      $region32: #{vgg_forward.2} parent=27 // pred_fallthru
        _
    $region28: #{vgg_forward.2} parent=5 // pred_fallthru
      _
    %p9646 = scmp.le.s32.totalorder 2, %s8
    // Predicated region
    $region33: #{vgg_forward.2} parent=5 // pred_check
      %p9647 = pneg %p9646
    $region34: #{vgg_forward.2} parent=5 // pred_check_branch
      %9649 = sbr.rel (%p9647) target = $region36
    $region35: #{vgg_forward.2} parent=5 // pred_region
      %s9650 = ssub.s32 %s8, 2
      // Predicated region
      $region37: #{vgg_forward.2} parent=35 // pred_check
        %p9651 = pneg %p100
      $region38: #{vgg_forward.2} parent=35 // pred_check_branch
        %9653 = sbr.rel (%p9651) target = $region40
      $region39: #{vgg_forward.2} parent=35 // pred_region
        %p9654 = scmp.lt.s32.totalorder %s19, 1
        %s9655 = scalar_select %p9654, %s19, 1
        %p9656 = scmp.lt.s32.totalorder %s20, 0
        %s9657 = scalar_select %p9656, %s20, 0
        %s9658 = smul.addr %s9655, 32
        %s9659 = sadd.s32 %s9657, %s9658
        %s9660 = smul.addr %s9659, 4
        %s9661 = scalar_lea.vmem %s2, %s9660
      $region40: #{vgg_forward.2} parent=35 // pred_fallthru
        _
    $region36: #{vgg_forward.2} parent=5 // pred_fallthru
      _
  $region6: #{vgg_forward.2} parent=0 // loop_footer
    %s12 = sadd.s32 1, %s8
  $region7: #{vgg_forward.2} parent=0 // loop_footer_branch
    %7 = sbr.rel target = $region3
  $region8: #{vgg_forward.2} parent=0 // loop_exit
    _

</llo_original>
